<compile_context>
chip_gen: v7x
topology: tpu7x:2x2x1
jax: 0.10.0
libtpu: 0.0.40
codegen_flags: <defaults>
</compile_context>

<pallas_src>
import jax
import jax.numpy as jnp
from jax.experimental import pallas as pl
from jax.experimental.pallas import tpu as pltpu


BP = 8     # padded batch (full sublanes)
HP = 128   # padded hidden width (full lanes; real H is 128 or 64)
DP = 128   # padded input-feature width


# ----------------------------------------------------------------------------
# Fused kernel
# ----------------------------------------------------------------------------
def _build_fused_kernel(T_w, T_s, Bp, Hp):
    def lstm_stack(x_flat, T, wih1_ref, whh1_ref, b1_ref,
                   wih2_ref, whh2_ref, b2_ref, y_sc):
        wih1 = wih1_ref[...]
        whh1 = whh1_ref[...]
        b1 = b1_ref[...]
        wih2 = wih2_ref[...]
        whh2 = whh2_ref[...]
        b2 = b2_ref[...]

        # ---- layer 1: hoisted input projection (one MXU call for all steps)
        gx1 = jnp.dot(x_flat, wih1, preferred_element_type=jnp.float32) + b1
        h = jnp.zeros((Bp, Hp), jnp.float32)
        c = jnp.zeros((Bp, Hp), jnp.float32)
        for t in range(T):  # static, fully unrolled recurrence
            g = gx1[t * Bp:(t + 1) * Bp, :] + jnp.dot(
                h, whh1, preferred_element_type=jnp.float32)
            i_g = jax.nn.sigmoid(g[:, 0 * Hp:1 * Hp])
            f_g = jax.nn.sigmoid(g[:, 1 * Hp:2 * Hp])
            g_g = jnp.tanh(g[:, 2 * Hp:3 * Hp])
            o_g = jax.nn.sigmoid(g[:, 3 * Hp:4 * Hp])
            c = f_g * c + i_g * g_g
            h = o_g * jnp.tanh(c)
            # ReLU applies to the *output* sequence only (not the state).
            y_sc[t * Bp:(t + 1) * Bp, :] = jnp.maximum(h, 0.0)

        # ---- layer 2: hoisted input projection on the relu'd layer-1 outputs
        y1 = y_sc[0:T * Bp, :]
        gx2 = jnp.dot(y1, wih2, preferred_element_type=jnp.float32) + b2
        h2 = jnp.zeros((Bp, Hp), jnp.float32)
        c2 = jnp.zeros((Bp, Hp), jnp.float32)
        acc = jnp.zeros((Bp, Hp), jnp.float32)
        for t in range(T):
            g = gx2[t * Bp:(t + 1) * Bp, :] + jnp.dot(
                h2, whh2, preferred_element_type=jnp.float32)
            i_g = jax.nn.sigmoid(g[:, 0 * Hp:1 * Hp])
            f_g = jax.nn.sigmoid(g[:, 1 * Hp:2 * Hp])
            g_g = jnp.tanh(g[:, 2 * Hp:3 * Hp])
            o_g = jax.nn.sigmoid(g[:, 3 * Hp:4 * Hp])
            c2 = f_g * c2 + i_g * g_g
            h2 = o_g * jnp.tanh(c2)
            acc = acc + jnp.maximum(h2, 0.0)
        return acc * (1.0 / T)  # time-mean of relu(layer-2 outputs)

    def kernel(wx_ref, sx_ref,
               w_wih1, w_whh1, w_b1, w_wih2, w_whh2, w_b2,
               s_wih1, s_whh1, s_b1, s_wih2, s_whh2, s_b2,
               f1w_ref, f1s_ref, f1b_ref, f2w_ref, f2b_ref,
               o_ref, y_sc):
        w_mean = lstm_stack(wx_ref[...], T_w,
                            w_wih1, w_whh1, w_b1, w_wih2, w_whh2, w_b2, y_sc)
        s_mean = lstm_stack(sx_ref[...], T_s,
                            s_wih1, s_whh1, s_b1, s_wih2, s_whh2, s_b2, y_sc)

        # Head: fc1 split per branch (no lane-axis concat), then ReLU,
        # fc2 (64 -> 1) as a VPU multiply-reduce instead of a 1-column matmul.
        hid = (jnp.dot(w_mean, f1w_ref[...], preferred_element_type=jnp.float32)
               + jnp.dot(s_mean, f1s_ref[...], preferred_element_type=jnp.float32)
               + f1b_ref[...])
        hid = jnp.maximum(hid, 0.0)
        out_col = jnp.sum(hid * f2w_ref[...], axis=-1, keepdims=True)  # (Bp, 1)
        # Dense (Bp, Hp) store; every lane of a row carries that row's result.
        o_ref[...] = jnp.broadcast_to(out_col, (Bp, Hp)) + f2b_ref[...]

    return kernel


# ----------------------------------------------------------------------------
# Host wrapper
# ----------------------------------------------------------------------------
def word_sent_regressor(packed, word_embeds, sent_embeds):
    B, T_w, _ = word_embeds.shape
    _, T_s, _ = sent_embeds.shape

    def prep(x):
        b, t, d = x.shape
        x = jnp.pad(x, ((0, BP - b), (0, 0), (0, DP - d)))
        # time-major, flattened to (T*Bp, Dp) so the hoisted projection is one
        # matmul and per-step rows are sublane-aligned slices.
        return jnp.transpose(x, (1, 0, 2)).reshape(t * BP, DP)

    wx = prep(word_embeds)
    sx = prep(sent_embeds)

    operands = (wx, sx,
                *packed["word_lstm_1"], *packed["word_lstm_2"],
                *packed["sent_lstm_1"], *packed["sent_lstm_2"],
                *packed["fc1"], *packed["fc2"])

    kernel = _build_fused_kernel(T_w, T_s, BP, HP)
    out_full = pl.pallas_call(
        kernel,
        out_shape=jax.ShapeDtypeStruct((BP, HP), jnp.float32),
        grid_spec=pltpu.PrefetchScalarGridSpec(
            num_scalar_prefetch=0,
            grid=(1,),
            in_specs=[pl.BlockSpec(a.shape, lambda i: (0, 0)) for a in operands],
            out_specs=pl.BlockSpec((BP, HP), lambda i: (0, 0)),
            scratch_shapes=[
                pltpu.VMEM((max(T_w, T_s) * BP, HP), jnp.float32),  # layer-1 seq
            ],
        ),
        compiler_params=pltpu.CompilerParams(
            dimension_semantics=("arbitrary",)),
    )(*operands)

    return out_full[:B, 0]  # mimics torch .squeeze() on the (B, 1) output


# ----------------------------------------------------------------------------
# Parameters: raw (PyTorch layout) + packed (kernel layout)
# ----------------------------------------------------------------------------
def _uniform(key, shape, bound):
    return jax.random.uniform(key, shape, jnp.float32, -bound, bound)


def init_raw_params(key, word_dim, sent_dim):
    keys = jax.random.split(key, 6)

    def lstm_raw(k, in_dim, hidden):
        bnd = 1.0 / float(hidden) ** 0.5
        k1, k2, k3, k4 = jax.random.split(k, 4)
        return dict(wih=_uniform(k1, (4 * hidden, in_dim), bnd),
                    whh=_uniform(k2, (4 * hidden, hidden), bnd),
                    bih=_uniform(k3, (4 * hidden,), bnd),
                    bhh=_uniform(k4, (4 * hidden,), bnd))

    def linear_raw(k, in_dim, out_dim):
        bnd = 1.0 / float(in_dim) ** 0.5
        k1, k2 = jax.random.split(k)
        return dict(w=_uniform(k1, (out_dim, in_dim), bnd),
                    b=_uniform(k2, (out_dim,), bnd))

    return dict(word_lstm_1=lstm_raw(keys[0], word_dim, 128),
                word_lstm_2=lstm_raw(keys[1], 128, 64),
                sent_lstm_1=lstm_raw(keys[2], sent_dim, 128),
                sent_lstm_2=lstm_raw(keys[3], 128, 64),
                fc1=linear_raw(keys[4], 128, 64),
                fc2=linear_raw(keys[5], 64, 1))


def _pack_lstm(raw, in_pad, hid_pad):
    """Pre-transpose to (in, 4H) and give each gate a full `hid_pad` lane tile.

    Zero padding keeps padded hidden lanes identically zero through the
    recurrence (gate = 0 -> c stays 0, h stays 0)."""
    wih, whh = raw["wih"], raw["whh"]
    hidden = whh.shape[1]
    in_dim = wih.shape[1]
    bias = raw["bih"] + raw["bhh"]

    def repack(w_t, rows_real, rows_pad):
        out = jnp.zeros((rows_pad, 4 * hid_pad), jnp.float32)
        for g in range(4):  # PyTorch gate order [i, f, g, o]
            out = out.at[:rows_real, g * hid_pad:g * hid_pad + hidden].set(
                w_t[:, g * hidden:(g + 1) * hidden])
        return out

    wih_p = repack(wih.T, in_dim, in_pad)
    whh_p = repack(whh.T, hidden, hid_pad)
    b_p = jnp.zeros((1, 4 * hid_pad), jnp.float32)
    for g in range(4):
        b_p = b_p.at[0, g * hid_pad:g * hid_pad + hidden].set(
            bias[g * hidden:(g + 1) * hidden])
    return wih_p, whh_p, b_p


def _pack_head(fc1, fc2, hid_pad):
    h2 = 64
    w1t = fc1["w"].T  # (128, 64): rows 0:64 act on word mean, 64:128 on sent
    f1w = jnp.zeros((hid_pad, hid_pad), jnp.float32).at[:h2, :h2].set(w1t[:h2])
    f1s = jnp.zeros((hid_pad, hid_pad), jnp.float32).at[:h2, :h2].set(w1t[h2:])
    f1b = jnp.zeros((1, hid_pad), jnp.float32).at[0, :h2].set(fc1["b"])
    f2w = jnp.zeros((1, hid_pad), jnp.float32).at[0, :h2].set(fc2["w"][0])
    f2b = jnp.full((1, hid_pad), fc2["b"][0], jnp.float32)
    return (f1w, f1s, f1b), (f2w, f2b)


def pack_params(raw):
    fc1_p, fc2_p = _pack_head(raw["fc1"], raw["fc2"], HP)
    return dict(word_lstm_1=_pack_lstm(raw["word_lstm_1"], DP, HP),
                word_lstm_2=_pack_lstm(raw["word_lstm_2"], HP, HP),
                sent_lstm_1=_pack_lstm(raw["sent_lstm_1"], DP, HP),
                sent_lstm_2=_pack_lstm(raw["sent_lstm_2"], HP, HP),
                fc1=fc1_p, fc2=fc2_p)


# ----------------------------------------------------------------------------
# Pure-JAX reference (semantics of the PyTorch module) for validation
# ----------------------------------------------------------------------------
def _lstm_ref(x, p):
    H = p["whh"].shape[1]
    B = x.shape[0]

    def step(carry, xt):
        h, c = carry
        g = xt @ p["wih"].T + h @ p["whh"].T + p["bih"] + p["bhh"]
        i = jax.nn.sigmoid(g[:, :H])
        f = jax.nn.sigmoid(g[:, H:2 * H])
        gg = jnp.tanh(g[:, 2 * H:3 * H])
        o = jax.nn.sigmoid(g[:, 3 * H:])
        c = f * c + i * gg
        h = o * jnp.tanh(c)
        return (h, c), h

    init = (jnp.zeros((B, H), jnp.float32), jnp.zeros((B, H), jnp.float32))
    _, ys = jax.lax.scan(step, init, jnp.transpose(x, (1, 0, 2)))
    return jnp.transpose(ys, (1, 0, 2))


def reference_forward(raw, word_embeds, sent_embeds):
    w = jax.nn.relu(_lstm_ref(word_embeds, raw["word_lstm_1"]))
    w = jax.nn.relu(_lstm_ref(w, raw["word_lstm_2"]))
    s = jax.nn.relu(_lstm_ref(sent_embeds, raw["sent_lstm_1"]))
    s = jax.nn.relu(_lstm_ref(s, raw["sent_lstm_2"]))
    comb = jnp.concatenate([w.mean(axis=1), s.mean(axis=1)], axis=1)
    hid = jax.nn.relu(comb @ raw["fc1"]["w"].T + raw["fc1"]["b"])
    out = hid @ raw["fc2"]["w"].T + raw["fc2"]["b"]
    return jnp.squeeze(out)


# ----------------------------------------------------------------------------
if __name__ == "__main__":
    WORD_EMBED_DIM = 32
    SENT_EMBED_DIM = 48
    B, T_W, T_S = 2, 8, 6

    root = jax.random.PRNGKey(0)
    pkey, wkey, skey = jax.random.split(root, 3)

    raw_params = init_raw_params(pkey, WORD_EMBED_DIM, SENT_EMBED_DIM)
    packed_params = pack_params(raw_params)

    word_embeds = jax.random.normal(wkey, (B, T_W, WORD_EMBED_DIM), jnp.float32)
    sent_embeds = jax.random.normal(skey, (B, T_S, SENT_EMBED_DIM), jnp.float32)

    out = jax.jit(word_sent_regressor)(packed_params, word_embeds, sent_embeds)
    jax.block_until_ready(out)
    assert out.shape == (B,), out.shape

    ref = jax.jit(reference_forward)(raw_params, word_embeds, sent_embeds)
    assert jnp.allclose(out, ref, atol=1e-3, rtol=1e-3), (out, ref)

    print("KERNEL_OK")
</pallas_src>

<mosaic_0001>
module attributes {stable_mosaic.version = 11 : i64} {
  func.func @kernel(%arg0: i32, %arg1: memref<64x128xf32, #tpu.memory_space<vmem>>, %arg2: memref<48x128xf32, #tpu.memory_space<vmem>>, %arg3: memref<128x512xf32, #tpu.memory_space<vmem>>, %arg4: memref<128x512xf32, #tpu.memory_space<vmem>>, %arg5: memref<1x512xf32, #tpu.memory_space<vmem>>, %arg6: memref<128x512xf32, #tpu.memory_space<vmem>>, %arg7: memref<128x512xf32, #tpu.memory_space<vmem>>, %arg8: memref<1x512xf32, #tpu.memory_space<vmem>>, %arg9: memref<128x512xf32, #tpu.memory_space<vmem>>, %arg10: memref<128x512xf32, #tpu.memory_space<vmem>>, %arg11: memref<1x512xf32, #tpu.memory_space<vmem>>, %arg12: memref<128x512xf32, #tpu.memory_space<vmem>>, %arg13: memref<128x512xf32, #tpu.memory_space<vmem>>, %arg14: memref<1x512xf32, #tpu.memory_space<vmem>>, %arg15: memref<128x128xf32, #tpu.memory_space<vmem>>, %arg16: memref<128x128xf32, #tpu.memory_space<vmem>>, %arg17: memref<1x128xf32, #tpu.memory_space<vmem>>, %arg18: memref<1x128xf32, #tpu.memory_space<vmem>>, %arg19: memref<1x128xf32, #tpu.memory_space<vmem>>, %arg20: memref<8x128xf32, #tpu.memory_space<vmem>>, %arg21: memref<64x128xf32, #tpu.memory_space<vmem>>) attributes {dimension_semantics = [#tpu.dimension_semantics<arbitrary>], iteration_bounds = array<i64: 1>, scalar_prefetch = 0 : i64, scratch_operands = 1 : i64, tpu.core_type = #tpu.core_type<tc>, window_params = [{pipeline_mode = #tpu.pipeline_mode<synchronous>, transform_indices = @transform_0, window_bounds = array<i64: 64, 128>}, {pipeline_mode = #tpu.pipeline_mode<synchronous>, transform_indices = @transform_1, window_bounds = array<i64: 48, 128>}, {pipeline_mode = #tpu.pipeline_mode<synchronous>, transform_indices = @transform_2, window_bounds = array<i64: 128, 512>}, {pipeline_mode = #tpu.pipeline_mode<synchronous>, transform_indices = @transform_3, window_bounds = array<i64: 128, 512>}, {pipeline_mode = #tpu.pipeline_mode<synchronous>, transform_indices = @transform_4, window_bounds = array<i64: 1, 512>}, {pipeline_mode = #tpu.pipeline_mode<synchronous>, transform_indices = @transform_5, window_bounds = array<i64: 128, 512>}, {pipeline_mode = #tpu.pipeline_mode<synchronous>, transform_indices = @transform_6, window_bounds = array<i64: 128, 512>}, {pipeline_mode = #tpu.pipeline_mode<synchronous>, transform_indices = @transform_7, window_bounds = array<i64: 1, 512>}, {pipeline_mode = #tpu.pipeline_mode<synchronous>, transform_indices = @transform_8, window_bounds = array<i64: 128, 512>}, {pipeline_mode = #tpu.pipeline_mode<synchronous>, transform_indices = @transform_9, window_bounds = array<i64: 128, 512>}, {pipeline_mode = #tpu.pipeline_mode<synchronous>, transform_indices = @transform_10, window_bounds = array<i64: 1, 512>}, {pipeline_mode = #tpu.pipeline_mode<synchronous>, transform_indices = @transform_11, window_bounds = array<i64: 128, 512>}, {pipeline_mode = #tpu.pipeline_mode<synchronous>, transform_indices = @transform_12, window_bounds = array<i64: 128, 512>}, {pipeline_mode = #tpu.pipeline_mode<synchronous>, transform_indices = @transform_13, window_bounds = array<i64: 1, 512>}, {pipeline_mode = #tpu.pipeline_mode<synchronous>, transform_indices = @transform_14, window_bounds = array<i64: 128, 128>}, {pipeline_mode = #tpu.pipeline_mode<synchronous>, transform_indices = @transform_15, window_bounds = array<i64: 128, 128>}, {pipeline_mode = #tpu.pipeline_mode<synchronous>, transform_indices = @transform_16, window_bounds = array<i64: 1, 128>}, {pipeline_mode = #tpu.pipeline_mode<synchronous>, transform_indices = @transform_17, window_bounds = array<i64: 1, 128>}, {pipeline_mode = #tpu.pipeline_mode<synchronous>, transform_indices = @transform_18, window_bounds = array<i64: 1, 128>}, {pipeline_mode = #tpu.pipeline_mode<synchronous>, transform_indices = @transform_19, window_bounds = array<i64: 8, 128>}]} {
    %c0 = arith.constant 0 : index
    %c0_0 = arith.constant 0 : index
    %0 = vector.load %arg1[%c0, %c0_0] : memref<64x128xf32, #tpu.memory_space<vmem>>, vector<64x128xf32>
    %c0_1 = arith.constant 0 : index
    %c0_2 = arith.constant 0 : index
    %1 = vector.load %arg3[%c0_1, %c0_2] : memref<128x512xf32, #tpu.memory_space<vmem>>, vector<128x512xf32>
    %c0_3 = arith.constant 0 : index
    %c0_4 = arith.constant 0 : index
    %2 = vector.load %arg4[%c0_3, %c0_4] : memref<128x512xf32, #tpu.memory_space<vmem>>, vector<128x512xf32>
    %c0_5 = arith.constant 0 : index
    %c0_6 = arith.constant 0 : index
    %3 = vector.load %arg5[%c0_5, %c0_6] : memref<1x512xf32, #tpu.memory_space<vmem>>, vector<1x512xf32>
    %c0_7 = arith.constant 0 : index
    %c0_8 = arith.constant 0 : index
    %4 = vector.load %arg6[%c0_7, %c0_8] : memref<128x512xf32, #tpu.memory_space<vmem>>, vector<128x512xf32>
    %c0_9 = arith.constant 0 : index
    %c0_10 = arith.constant 0 : index
    %5 = vector.load %arg7[%c0_9, %c0_10] : memref<128x512xf32, #tpu.memory_space<vmem>>, vector<128x512xf32>
    %c0_11 = arith.constant 0 : index
    %c0_12 = arith.constant 0 : index
    %6 = vector.load %arg8[%c0_11, %c0_12] : memref<1x512xf32, #tpu.memory_space<vmem>>, vector<1x512xf32>
    %cst = arith.constant dense<0.000000e+00> : vector<64x512xf32>
    %7 = tpu.matmul %0, %1, %cst {dimension_numbers = #tpu.dot_dimension_numbers<[1], [0], [0], [1], [0, 0, 1, 1], [], []>} : vector<64x128xf32>, vector<128x512xf32>, vector<64x512xf32> -> vector<64x512xf32>
    %8 = vector.broadcast %3 : vector<1x512xf32> to vector<64x512xf32>
    %9 = arith.addf %7, %8 : vector<64x512xf32>
    %cst_13 = arith.constant 0.000000e+00 : f32
    %10 = vector.broadcast %cst_13 : f32 to vector<8x128xf32>
    %cst_14 = arith.constant 0.000000e+00 : f32
    %11 = vector.broadcast %cst_14 : f32 to vector<8x128xf32>
    %12 = vector.extract_strided_slice %9 {offsets = [0, 0], sizes = [8, 512], strides = [1, 1]} : vector<64x512xf32> to vector<8x512xf32>
    %cst_15 = arith.constant dense<0.000000e+00> : vector<8x512xf32>
    %13 = tpu.matmul %10, %2, %cst_15 {dimension_numbers = #tpu.dot_dimension_numbers<[1], [0], [0], [1], [0, 0, 1, 1], [], []>} : vector<8x128xf32>, vector<128x512xf32>, vector<8x512xf32> -> vector<8x512xf32>
    %14 = arith.addf %12, %13 : vector<8x512xf32>
    %15 = vector.extract_strided_slice %14 {offsets = [0, 0], sizes = [8, 128], strides = [1, 1]} : vector<8x512xf32> to vector<8x128xf32>
    %16 = arith.negf %15 : vector<8x128xf32>
    %17 = math.exp %16 : vector<8x128xf32>
    %cst_16 = arith.constant 1.000000e+00 : f32
    %18 = vector.broadcast %cst_16 : f32 to vector<8x128xf32>
    %19 = arith.addf %18, %17 : vector<8x128xf32>
    %20 = arith.divf %18, %19 : vector<8x128xf32>
    %21 = vector.extract_strided_slice %14 {offsets = [0, 128], sizes = [8, 128], strides = [1, 1]} : vector<8x512xf32> to vector<8x128xf32>
    %22 = arith.negf %21 : vector<8x128xf32>
    %23 = math.exp %22 : vector<8x128xf32>
    %cst_17 = arith.constant 1.000000e+00 : f32
    %24 = vector.broadcast %cst_17 : f32 to vector<8x128xf32>
    %25 = arith.addf %24, %23 : vector<8x128xf32>
    %26 = arith.divf %24, %25 : vector<8x128xf32>
    %27 = vector.extract_strided_slice %14 {offsets = [0, 256], sizes = [8, 128], strides = [1, 1]} : vector<8x512xf32> to vector<8x128xf32>
    %28 = math.tanh %27 : vector<8x128xf32>
    %29 = vector.extract_strided_slice %14 {offsets = [0, 384], sizes = [8, 128], strides = [1, 1]} : vector<8x512xf32> to vector<8x128xf32>
    %30 = arith.negf %29 : vector<8x128xf32>
    %31 = math.exp %30 : vector<8x128xf32>
    %cst_18 = arith.constant 1.000000e+00 : f32
    %32 = vector.broadcast %cst_18 : f32 to vector<8x128xf32>
    %33 = arith.addf %32, %31 : vector<8x128xf32>
    %34 = arith.divf %32, %33 : vector<8x128xf32>
    %35 = arith.mulf %26, %11 : vector<8x128xf32>
    %36 = arith.mulf %20, %28 : vector<8x128xf32>
    %37 = arith.addf %35, %36 : vector<8x128xf32>
    %38 = math.tanh %37 : vector<8x128xf32>
    %39 = arith.mulf %34, %38 : vector<8x128xf32>
    %cst_19 = arith.constant 0.000000e+00 : f32
    %40 = vector.broadcast %cst_19 : f32 to vector<8x128xf32>
    %41 = arith.maximumf %39, %40 : vector<8x128xf32>
    %c0_20 = arith.constant 0 : index
    %c0_21 = arith.constant 0 : index
    %42 = vector.load %arg21[%c0_20, %c0_21] : memref<64x128xf32, #tpu.memory_space<vmem>>, vector<8x128xf32>
    tpu.vector_store %arg21[%c0_20, %c0_21], %41 {strides = array<i32>} : memref<64x128xf32, #tpu.memory_space<vmem>>, vector<8x128xf32>,
    %43 = vector.extract_strided_slice %9 {offsets = [8, 0], sizes = [8, 512], strides = [1, 1]} : vector<64x512xf32> to vector<8x512xf32>
    %cst_22 = arith.constant dense<0.000000e+00> : vector<8x512xf32>
    %44 = tpu.matmul %39, %2, %cst_22 {dimension_numbers = #tpu.dot_dimension_numbers<[1], [0], [0], [1], [0, 0, 1, 1], [], []>} : vector<8x128xf32>, vector<128x512xf32>, vector<8x512xf32> -> vector<8x512xf32>
    %45 = arith.addf %43, %44 : vector<8x512xf32>
    %46 = vector.extract_strided_slice %45 {offsets = [0, 0], sizes = [8, 128], strides = [1, 1]} : vector<8x512xf32> to vector<8x128xf32>
    %47 = arith.negf %46 : vector<8x128xf32>
    %48 = math.exp %47 : vector<8x128xf32>
    %cst_23 = arith.constant 1.000000e+00 : f32
    %49 = vector.broadcast %cst_23 : f32 to vector<8x128xf32>
    %50 = arith.addf %49, %48 : vector<8x128xf32>
    %51 = arith.divf %49, %50 : vector<8x128xf32>
    %52 = vector.extract_strided_slice %45 {offsets = [0, 128], sizes = [8, 128], strides = [1, 1]} : vector<8x512xf32> to vector<8x128xf32>
    %53 = arith.negf %52 : vector<8x128xf32>
    %54 = math.exp %53 : vector<8x128xf32>
    %cst_24 = arith.constant 1.000000e+00 : f32
    %55 = vector.broadcast %cst_24 : f32 to vector<8x128xf32>
    %56 = arith.addf %55, %54 : vector<8x128xf32>
    %57 = arith.divf %55, %56 : vector<8x128xf32>
    %58 = vector.extract_strided_slice %45 {offsets = [0, 256], sizes = [8, 128], strides = [1, 1]} : vector<8x512xf32> to vector<8x128xf32>
    %59 = math.tanh %58 : vector<8x128xf32>
    %60 = vector.extract_strided_slice %45 {offsets = [0, 384], sizes = [8, 128], strides = [1, 1]} : vector<8x512xf32> to vector<8x128xf32>
    %61 = arith.negf %60 : vector<8x128xf32>
    %62 = math.exp %61 : vector<8x128xf32>
    %cst_25 = arith.constant 1.000000e+00 : f32
    %63 = vector.broadcast %cst_25 : f32 to vector<8x128xf32>
    %64 = arith.addf %63, %62 : vector<8x128xf32>
    %65 = arith.divf %63, %64 : vector<8x128xf32>
    %66 = arith.mulf %57, %37 : vector<8x128xf32>
    %67 = arith.mulf %51, %59 : vector<8x128xf32>
    %68 = arith.addf %66, %67 : vector<8x128xf32>
    %69 = math.tanh %68 : vector<8x128xf32>
    %70 = arith.mulf %65, %69 : vector<8x128xf32>
    %cst_26 = arith.constant 0.000000e+00 : f32
    %71 = vector.broadcast %cst_26 : f32 to vector<8x128xf32>
    %72 = arith.maximumf %70, %71 : vector<8x128xf32>
    %c8 = arith.constant 8 : index
    %c0_27 = arith.constant 0 : index
    %73 = vector.load %arg21[%c8, %c0_27] : memref<64x128xf32, #tpu.memory_space<vmem>>, vector<8x128xf32>
    tpu.vector_store %arg21[%c8, %c0_27], %72 {strides = array<i32>} : memref<64x128xf32, #tpu.memory_space<vmem>>, vector<8x128xf32>,
    %74 = vector.extract_strided_slice %9 {offsets = [16, 0], sizes = [8, 512], strides = [1, 1]} : vector<64x512xf32> to vector<8x512xf32>
    %cst_28 = arith.constant dense<0.000000e+00> : vector<8x512xf32>
    %75 = tpu.matmul %70, %2, %cst_28 {dimension_numbers = #tpu.dot_dimension_numbers<[1], [0], [0], [1], [0, 0, 1, 1], [], []>} : vector<8x128xf32>, vector<128x512xf32>, vector<8x512xf32> -> vector<8x512xf32>
    %76 = arith.addf %74, %75 : vector<8x512xf32>
    %77 = vector.extract_strided_slice %76 {offsets = [0, 0], sizes = [8, 128], strides = [1, 1]} : vector<8x512xf32> to vector<8x128xf32>
    %78 = arith.negf %77 : vector<8x128xf32>
    %79 = math.exp %78 : vector<8x128xf32>
    %cst_29 = arith.constant 1.000000e+00 : f32
    %80 = vector.broadcast %cst_29 : f32 to vector<8x128xf32>
    %81 = arith.addf %80, %79 : vector<8x128xf32>
    %82 = arith.divf %80, %81 : vector<8x128xf32>
    %83 = vector.extract_strided_slice %76 {offsets = [0, 128], sizes = [8, 128], strides = [1, 1]} : vector<8x512xf32> to vector<8x128xf32>
    %84 = arith.negf %83 : vector<8x128xf32>
    %85 = math.exp %84 : vector<8x128xf32>
    %cst_30 = arith.constant 1.000000e+00 : f32
    %86 = vector.broadcast %cst_30 : f32 to vector<8x128xf32>
    %87 = arith.addf %86, %85 : vector<8x128xf32>
    %88 = arith.divf %86, %87 : vector<8x128xf32>
    %89 = vector.extract_strided_slice %76 {offsets = [0, 256], sizes = [8, 128], strides = [1, 1]} : vector<8x512xf32> to vector<8x128xf32>
    %90 = math.tanh %89 : vector<8x128xf32>
    %91 = vector.extract_strided_slice %76 {offsets = [0, 384], sizes = [8, 128], strides = [1, 1]} : vector<8x512xf32> to vector<8x128xf32>
    %92 = arith.negf %91 : vector<8x128xf32>
    %93 = math.exp %92 : vector<8x128xf32>
    %cst_31 = arith.constant 1.000000e+00 : f32
    %94 = vector.broadcast %cst_31 : f32 to vector<8x128xf32>
    %95 = arith.addf %94, %93 : vector<8x128xf32>
    %96 = arith.divf %94, %95 : vector<8x128xf32>
    %97 = arith.mulf %88, %68 : vector<8x128xf32>
    %98 = arith.mulf %82, %90 : vector<8x128xf32>
    %99 = arith.addf %97, %98 : vector<8x128xf32>
    %100 = math.tanh %99 : vector<8x128xf32>
    %101 = arith.mulf %96, %100 : vector<8x128xf32>
    %cst_32 = arith.constant 0.000000e+00 : f32
    %102 = vector.broadcast %cst_32 : f32 to vector<8x128xf32>
    %103 = arith.maximumf %101, %102 : vector<8x128xf32>
    %c16 = arith.constant 16 : index
    %c0_33 = arith.constant 0 : index
    %104 = vector.load %arg21[%c16, %c0_33] : memref<64x128xf32, #tpu.memory_space<vmem>>, vector<8x128xf32>
    tpu.vector_store %arg21[%c16, %c0_33], %103 {strides = array<i32>} : memref<64x128xf32, #tpu.memory_space<vmem>>, vector<8x128xf32>,
    %105 = vector.extract_strided_slice %9 {offsets = [24, 0], sizes = [8, 512], strides = [1, 1]} : vector<64x512xf32> to vector<8x512xf32>
    %cst_34 = arith.constant dense<0.000000e+00> : vector<8x512xf32>
    %106 = tpu.matmul %101, %2, %cst_34 {dimension_numbers = #tpu.dot_dimension_numbers<[1], [0], [0], [1], [0, 0, 1, 1], [], []>} : vector<8x128xf32>, vector<128x512xf32>, vector<8x512xf32> -> vector<8x512xf32>
    %107 = arith.addf %105, %106 : vector<8x512xf32>
    %108 = vector.extract_strided_slice %107 {offsets = [0, 0], sizes = [8, 128], strides = [1, 1]} : vector<8x512xf32> to vector<8x128xf32>
    %109 = arith.negf %108 : vector<8x128xf32>
    %110 = math.exp %109 : vector<8x128xf32>
    %cst_35 = arith.constant 1.000000e+00 : f32
    %111 = vector.broadcast %cst_35 : f32 to vector<8x128xf32>
    %112 = arith.addf %111, %110 : vector<8x128xf32>
    %113 = arith.divf %111, %112 : vector<8x128xf32>
    %114 = vector.extract_strided_slice %107 {offsets = [0, 128], sizes = [8, 128], strides = [1, 1]} : vector<8x512xf32> to vector<8x128xf32>
    %115 = arith.negf %114 : vector<8x128xf32>
    %116 = math.exp %115 : vector<8x128xf32>
    %cst_36 = arith.constant 1.000000e+00 : f32
    %117 = vector.broadcast %cst_36 : f32 to vector<8x128xf32>
    %118 = arith.addf %117, %116 : vector<8x128xf32>
    %119 = arith.divf %117, %118 : vector<8x128xf32>
    %120 = vector.extract_strided_slice %107 {offsets = [0, 256], sizes = [8, 128], strides = [1, 1]} : vector<8x512xf32> to vector<8x128xf32>
    %121 = math.tanh %120 : vector<8x128xf32>
    %122 = vector.extract_strided_slice %107 {offsets = [0, 384], sizes = [8, 128], strides = [1, 1]} : vector<8x512xf32> to vector<8x128xf32>
    %123 = arith.negf %122 : vector<8x128xf32>
    %124 = math.exp %123 : vector<8x128xf32>
    %cst_37 = arith.constant 1.000000e+00 : f32
    %125 = vector.broadcast %cst_37 : f32 to vector<8x128xf32>
    %126 = arith.addf %125, %124 : vector<8x128xf32>
    %127 = arith.divf %125, %126 : vector<8x128xf32>
    %128 = arith.mulf %119, %99 : vector<8x128xf32>
    %129 = arith.mulf %113, %121 : vector<8x128xf32>
    %130 = arith.addf %128, %129 : vector<8x128xf32>
    %131 = math.tanh %130 : vector<8x128xf32>
    %132 = arith.mulf %127, %131 : vector<8x128xf32>
    %cst_38 = arith.constant 0.000000e+00 : f32
    %133 = vector.broadcast %cst_38 : f32 to vector<8x128xf32>
    %134 = arith.maximumf %132, %133 : vector<8x128xf32>
    %c24 = arith.constant 24 : index
    %c0_39 = arith.constant 0 : index
    %135 = vector.load %arg21[%c24, %c0_39] : memref<64x128xf32, #tpu.memory_space<vmem>>, vector<8x128xf32>
    tpu.vector_store %arg21[%c24, %c0_39], %134 {strides = array<i32>} : memref<64x128xf32, #tpu.memory_space<vmem>>, vector<8x128xf32>,
    %136 = vector.extract_strided_slice %9 {offsets = [32, 0], sizes = [8, 512], strides = [1, 1]} : vector<64x512xf32> to vector<8x512xf32>
    %cst_40 = arith.constant dense<0.000000e+00> : vector<8x512xf32>
    %137 = tpu.matmul %132, %2, %cst_40 {dimension_numbers = #tpu.dot_dimension_numbers<[1], [0], [0], [1], [0, 0, 1, 1], [], []>} : vector<8x128xf32>, vector<128x512xf32>, vector<8x512xf32> -> vector<8x512xf32>
    %138 = arith.addf %136, %137 : vector<8x512xf32>
    %139 = vector.extract_strided_slice %138 {offsets = [0, 0], sizes = [8, 128], strides = [1, 1]} : vector<8x512xf32> to vector<8x128xf32>
    %140 = arith.negf %139 : vector<8x128xf32>
    %141 = math.exp %140 : vector<8x128xf32>
    %cst_41 = arith.constant 1.000000e+00 : f32
    %142 = vector.broadcast %cst_41 : f32 to vector<8x128xf32>
    %143 = arith.addf %142, %141 : vector<8x128xf32>
    %144 = arith.divf %142, %143 : vector<8x128xf32>
    %145 = vector.extract_strided_slice %138 {offsets = [0, 128], sizes = [8, 128], strides = [1, 1]} : vector<8x512xf32> to vector<8x128xf32>
    %146 = arith.negf %145 : vector<8x128xf32>
    %147 = math.exp %146 : vector<8x128xf32>
    %cst_42 = arith.constant 1.000000e+00 : f32
    %148 = vector.broadcast %cst_42 : f32 to vector<8x128xf32>
    %149 = arith.addf %148, %147 : vector<8x128xf32>
    %150 = arith.divf %148, %149 : vector<8x128xf32>
    %151 = vector.extract_strided_slice %138 {offsets = [0, 256], sizes = [8, 128], strides = [1, 1]} : vector<8x512xf32> to vector<8x128xf32>
    %152 = math.tanh %151 : vector<8x128xf32>
    %153 = vector.extract_strided_slice %138 {offsets = [0, 384], sizes = [8, 128], strides = [1, 1]} : vector<8x512xf32> to vector<8x128xf32>
    %154 = arith.negf %153 : vector<8x128xf32>
    %155 = math.exp %154 : vector<8x128xf32>
    %cst_43 = arith.constant 1.000000e+00 : f32
    %156 = vector.broadcast %cst_43 : f32 to vector<8x128xf32>
    %157 = arith.addf %156, %155 : vector<8x128xf32>
    %158 = arith.divf %156, %157 : vector<8x128xf32>
    %159 = arith.mulf %150, %130 : vector<8x128xf32>
    %160 = arith.mulf %144, %152 : vector<8x128xf32>
    %161 = arith.addf %159, %160 : vector<8x128xf32>
    %162 = math.tanh %161 : vector<8x128xf32>
    %163 = arith.mulf %158, %162 : vector<8x128xf32>
    %cst_44 = arith.constant 0.000000e+00 : f32
    %164 = vector.broadcast %cst_44 : f32 to vector<8x128xf32>
    %165 = arith.maximumf %163, %164 : vector<8x128xf32>
    %c32 = arith.constant 32 : index
    %c0_45 = arith.constant 0 : index
    %166 = vector.load %arg21[%c32, %c0_45] : memref<64x128xf32, #tpu.memory_space<vmem>>, vector<8x128xf32>
    tpu.vector_store %arg21[%c32, %c0_45], %165 {strides = array<i32>} : memref<64x128xf32, #tpu.memory_space<vmem>>, vector<8x128xf32>,
    %167 = vector.extract_strided_slice %9 {offsets = [40, 0], sizes = [8, 512], strides = [1, 1]} : vector<64x512xf32> to vector<8x512xf32>
    %cst_46 = arith.constant dense<0.000000e+00> : vector<8x512xf32>
    %168 = tpu.matmul %163, %2, %cst_46 {dimension_numbers = #tpu.dot_dimension_numbers<[1], [0], [0], [1], [0, 0, 1, 1], [], []>} : vector<8x128xf32>, vector<128x512xf32>, vector<8x512xf32> -> vector<8x512xf32>
    %169 = arith.addf %167, %168 : vector<8x512xf32>
    %170 = vector.extract_strided_slice %169 {offsets = [0, 0], sizes = [8, 128], strides = [1, 1]} : vector<8x512xf32> to vector<8x128xf32>
    %171 = arith.negf %170 : vector<8x128xf32>
    %172 = math.exp %171 : vector<8x128xf32>
    %cst_47 = arith.constant 1.000000e+00 : f32
    %173 = vector.broadcast %cst_47 : f32 to vector<8x128xf32>
    %174 = arith.addf %173, %172 : vector<8x128xf32>
    %175 = arith.divf %173, %174 : vector<8x128xf32>
    %176 = vector.extract_strided_slice %169 {offsets = [0, 128], sizes = [8, 128], strides = [1, 1]} : vector<8x512xf32> to vector<8x128xf32>
    %177 = arith.negf %176 : vector<8x128xf32>
    %178 = math.exp %177 : vector<8x128xf32>
    %cst_48 = arith.constant 1.000000e+00 : f32
    %179 = vector.broadcast %cst_48 : f32 to vector<8x128xf32>
    %180 = arith.addf %179, %178 : vector<8x128xf32>
    %181 = arith.divf %179, %180 : vector<8x128xf32>
    %182 = vector.extract_strided_slice %169 {offsets = [0, 256], sizes = [8, 128], strides = [1, 1]} : vector<8x512xf32> to vector<8x128xf32>
    %183 = math.tanh %182 : vector<8x128xf32>
    %184 = vector.extract_strided_slice %169 {offsets = [0, 384], sizes = [8, 128], strides = [1, 1]} : vector<8x512xf32> to vector<8x128xf32>
    %185 = arith.negf %184 : vector<8x128xf32>
    %186 = math.exp %185 : vector<8x128xf32>
    %cst_49 = arith.constant 1.000000e+00 : f32
    %187 = vector.broadcast %cst_49 : f32 to vector<8x128xf32>
    %188 = arith.addf %187, %186 : vector<8x128xf32>
    %189 = arith.divf %187, %188 : vector<8x128xf32>
    %190 = arith.mulf %181, %161 : vector<8x128xf32>
    %191 = arith.mulf %175, %183 : vector<8x128xf32>
    %192 = arith.addf %190, %191 : vector<8x128xf32>
    %193 = math.tanh %192 : vector<8x128xf32>
    %194 = arith.mulf %189, %193 : vector<8x128xf32>
    %cst_50 = arith.constant 0.000000e+00 : f32
    %195 = vector.broadcast %cst_50 : f32 to vector<8x128xf32>
    %196 = arith.maximumf %194, %195 : vector<8x128xf32>
    %c40 = arith.constant 40 : index
    %c0_51 = arith.constant 0 : index
    %197 = vector.load %arg21[%c40, %c0_51] : memref<64x128xf32, #tpu.memory_space<vmem>>, vector<8x128xf32>
    tpu.vector_store %arg21[%c40, %c0_51], %196 {strides = array<i32>} : memref<64x128xf32, #tpu.memory_space<vmem>>, vector<8x128xf32>,
    %198 = vector.extract_strided_slice %9 {offsets = [48, 0], sizes = [8, 512], strides = [1, 1]} : vector<64x512xf32> to vector<8x512xf32>
    %cst_52 = arith.constant dense<0.000000e+00> : vector<8x512xf32>
    %199 = tpu.matmul %194, %2, %cst_52 {dimension_numbers = #tpu.dot_dimension_numbers<[1], [0], [0], [1], [0, 0, 1, 1], [], []>} : vector<8x128xf32>, vector<128x512xf32>, vector<8x512xf32> -> vector<8x512xf32>
    %200 = arith.addf %198, %199 : vector<8x512xf32>
    %201 = vector.extract_strided_slice %200 {offsets = [0, 0], sizes = [8, 128], strides = [1, 1]} : vector<8x512xf32> to vector<8x128xf32>
    %202 = arith.negf %201 : vector<8x128xf32>
    %203 = math.exp %202 : vector<8x128xf32>
    %cst_53 = arith.constant 1.000000e+00 : f32
    %204 = vector.broadcast %cst_53 : f32 to vector<8x128xf32>
    %205 = arith.addf %204, %203 : vector<8x128xf32>
    %206 = arith.divf %204, %205 : vector<8x128xf32>
    %207 = vector.extract_strided_slice %200 {offsets = [0, 128], sizes = [8, 128], strides = [1, 1]} : vector<8x512xf32> to vector<8x128xf32>
    %208 = arith.negf %207 : vector<8x128xf32>
    %209 = math.exp %208 : vector<8x128xf32>
    %cst_54 = arith.constant 1.000000e+00 : f32
    %210 = vector.broadcast %cst_54 : f32 to vector<8x128xf32>
    %211 = arith.addf %210, %209 : vector<8x128xf32>
    %212 = arith.divf %210, %211 : vector<8x128xf32>
    %213 = vector.extract_strided_slice %200 {offsets = [0, 256], sizes = [8, 128], strides = [1, 1]} : vector<8x512xf32> to vector<8x128xf32>
    %214 = math.tanh %213 : vector<8x128xf32>
    %215 = vector.extract_strided_slice %200 {offsets = [0, 384], sizes = [8, 128], strides = [1, 1]} : vector<8x512xf32> to vector<8x128xf32>
    %216 = arith.negf %215 : vector<8x128xf32>
    %217 = math.exp %216 : vector<8x128xf32>
    %cst_55 = arith.constant 1.000000e+00 : f32
    %218 = vector.broadcast %cst_55 : f32 to vector<8x128xf32>
    %219 = arith.addf %218, %217 : vector<8x128xf32>
    %220 = arith.divf %218, %219 : vector<8x128xf32>
    %221 = arith.mulf %212, %192 : vector<8x128xf32>
    %222 = arith.mulf %206, %214 : vector<8x128xf32>
    %223 = arith.addf %221, %222 : vector<8x128xf32>
    %224 = math.tanh %223 : vector<8x128xf32>
    %225 = arith.mulf %220, %224 : vector<8x128xf32>
    %cst_56 = arith.constant 0.000000e+00 : f32
    %226 = vector.broadcast %cst_56 : f32 to vector<8x128xf32>
    %227 = arith.maximumf %225, %226 : vector<8x128xf32>
    %c48 = arith.constant 48 : index
    %c0_57 = arith.constant 0 : index
    %228 = vector.load %arg21[%c48, %c0_57] : memref<64x128xf32, #tpu.memory_space<vmem>>, vector<8x128xf32>
    tpu.vector_store %arg21[%c48, %c0_57], %227 {strides = array<i32>} : memref<64x128xf32, #tpu.memory_space<vmem>>, vector<8x128xf32>,
    %229 = vector.extract_strided_slice %9 {offsets = [56, 0], sizes = [8, 512], strides = [1, 1]} : vector<64x512xf32> to vector<8x512xf32>
    %cst_58 = arith.constant dense<0.000000e+00> : vector<8x512xf32>
    %230 = tpu.matmul %225, %2, %cst_58 {dimension_numbers = #tpu.dot_dimension_numbers<[1], [0], [0], [1], [0, 0, 1, 1], [], []>} : vector<8x128xf32>, vector<128x512xf32>, vector<8x512xf32> -> vector<8x512xf32>
    %231 = arith.addf %229, %230 : vector<8x512xf32>
    %232 = vector.extract_strided_slice %231 {offsets = [0, 0], sizes = [8, 128], strides = [1, 1]} : vector<8x512xf32> to vector<8x128xf32>
    %233 = arith.negf %232 : vector<8x128xf32>
    %234 = math.exp %233 : vector<8x128xf32>
    %cst_59 = arith.constant 1.000000e+00 : f32
    %235 = vector.broadcast %cst_59 : f32 to vector<8x128xf32>
    %236 = arith.addf %235, %234 : vector<8x128xf32>
    %237 = arith.divf %235, %236 : vector<8x128xf32>
    %238 = vector.extract_strided_slice %231 {offsets = [0, 128], sizes = [8, 128], strides = [1, 1]} : vector<8x512xf32> to vector<8x128xf32>
    %239 = arith.negf %238 : vector<8x128xf32>
    %240 = math.exp %239 : vector<8x128xf32>
    %cst_60 = arith.constant 1.000000e+00 : f32
    %241 = vector.broadcast %cst_60 : f32 to vector<8x128xf32>
    %242 = arith.addf %241, %240 : vector<8x128xf32>
    %243 = arith.divf %241, %242 : vector<8x128xf32>
    %244 = vector.extract_strided_slice %231 {offsets = [0, 256], sizes = [8, 128], strides = [1, 1]} : vector<8x512xf32> to vector<8x128xf32>
    %245 = math.tanh %244 : vector<8x128xf32>
    %246 = vector.extract_strided_slice %231 {offsets = [0, 384], sizes = [8, 128], strides = [1, 1]} : vector<8x512xf32> to vector<8x128xf32>
    %247 = arith.negf %246 : vector<8x128xf32>
    %248 = math.exp %247 : vector<8x128xf32>
    %cst_61 = arith.constant 1.000000e+00 : f32
    %249 = vector.broadcast %cst_61 : f32 to vector<8x128xf32>
    %250 = arith.addf %249, %248 : vector<8x128xf32>
    %251 = arith.divf %249, %250 : vector<8x128xf32>
    %252 = arith.mulf %243, %223 : vector<8x128xf32>
    %253 = arith.mulf %237, %245 : vector<8x128xf32>
    %254 = arith.addf %252, %253 : vector<8x128xf32>
    %255 = math.tanh %254 : vector<8x128xf32>
    %256 = arith.mulf %251, %255 : vector<8x128xf32>
    %cst_62 = arith.constant 0.000000e+00 : f32
    %257 = vector.broadcast %cst_62 : f32 to vector<8x128xf32>
    %258 = arith.maximumf %256, %257 : vector<8x128xf32>
    %c56 = arith.constant 56 : index
    %c0_63 = arith.constant 0 : index
    %259 = vector.load %arg21[%c56, %c0_63] : memref<64x128xf32, #tpu.memory_space<vmem>>, vector<8x128xf32>
    tpu.vector_store %arg21[%c56, %c0_63], %258 {strides = array<i32>} : memref<64x128xf32, #tpu.memory_space<vmem>>, vector<8x128xf32>,
    %c0_64 = arith.constant 0 : index
    %c0_65 = arith.constant 0 : index
    %260 = vector.load %arg21[%c0_64, %c0_65] : memref<64x128xf32, #tpu.memory_space<vmem>>, vector<64x128xf32>
    %cst_66 = arith.constant dense<0.000000e+00> : vector<64x512xf32>
    %261 = tpu.matmul %260, %4, %cst_66 {dimension_numbers = #tpu.dot_dimension_numbers<[1], [0], [0], [1], [0, 0, 1, 1], [], []>} : vector<64x128xf32>, vector<128x512xf32>, vector<64x512xf32> -> vector<64x512xf32>
    %262 = vector.broadcast %6 : vector<1x512xf32> to vector<64x512xf32>
    %263 = arith.addf %261, %262 : vector<64x512xf32>
    %cst_67 = arith.constant 0.000000e+00 : f32
    %264 = vector.broadcast %cst_67 : f32 to vector<8x128xf32>
    %cst_68 = arith.constant 0.000000e+00 : f32
    %265 = vector.broadcast %cst_68 : f32 to vector<8x128xf32>
    %cst_69 = arith.constant 0.000000e+00 : f32
    %266 = vector.broadcast %cst_69 : f32 to vector<8x128xf32>
    %267 = vector.extract_strided_slice %263 {offsets = [0, 0], sizes = [8, 512], strides = [1, 1]} : vector<64x512xf32> to vector<8x512xf32>
    %cst_70 = arith.constant dense<0.000000e+00> : vector<8x512xf32>
    %268 = tpu.matmul %264, %5, %cst_70 {dimension_numbers = #tpu.dot_dimension_numbers<[1], [0], [0], [1], [0, 0, 1, 1], [], []>} : vector<8x128xf32>, vector<128x512xf32>, vector<8x512xf32> -> vector<8x512xf32>
    %269 = arith.addf %267, %268 : vector<8x512xf32>
    %270 = vector.extract_strided_slice %269 {offsets = [0, 0], sizes = [8, 128], strides = [1, 1]} : vector<8x512xf32> to vector<8x128xf32>
    %271 = arith.negf %270 : vector<8x128xf32>
    %272 = math.exp %271 : vector<8x128xf32>
    %cst_71 = arith.constant 1.000000e+00 : f32
    %273 = vector.broadcast %cst_71 : f32 to vector<8x128xf32>
    %274 = arith.addf %273, %272 : vector<8x128xf32>
    %275 = arith.divf %273, %274 : vector<8x128xf32>
    %276 = vector.extract_strided_slice %269 {offsets = [0, 128], sizes = [8, 128], strides = [1, 1]} : vector<8x512xf32> to vector<8x128xf32>
    %277 = arith.negf %276 : vector<8x128xf32>
    %278 = math.exp %277 : vector<8x128xf32>
    %cst_72 = arith.constant 1.000000e+00 : f32
    %279 = vector.broadcast %cst_72 : f32 to vector<8x128xf32>
    %280 = arith.addf %279, %278 : vector<8x128xf32>
    %281 = arith.divf %279, %280 : vector<8x128xf32>
    %282 = vector.extract_strided_slice %269 {offsets = [0, 256], sizes = [8, 128], strides = [1, 1]} : vector<8x512xf32> to vector<8x128xf32>
    %283 = math.tanh %282 : vector<8x128xf32>
    %284 = vector.extract_strided_slice %269 {offsets = [0, 384], sizes = [8, 128], strides = [1, 1]} : vector<8x512xf32> to vector<8x128xf32>
    %285 = arith.negf %284 : vector<8x128xf32>
    %286 = math.exp %285 : vector<8x128xf32>
    %cst_73 = arith.constant 1.000000e+00 : f32
    %287 = vector.broadcast %cst_73 : f32 to vector<8x128xf32>
    %288 = arith.addf %287, %286 : vector<8x128xf32>
    %289 = arith.divf %287, %288 : vector<8x128xf32>
    %290 = arith.mulf %281, %265 : vector<8x128xf32>
    %291 = arith.mulf %275, %283 : vector<8x128xf32>
    %292 = arith.addf %290, %291 : vector<8x128xf32>
    %293 = math.tanh %292 : vector<8x128xf32>
    %294 = arith.mulf %289, %293 : vector<8x128xf32>
    %cst_74 = arith.constant 0.000000e+00 : f32
    %295 = vector.broadcast %cst_74 : f32 to vector<8x128xf32>
    %296 = arith.maximumf %294, %295 : vector<8x128xf32>
    %297 = arith.addf %266, %296 : vector<8x128xf32>
    %298 = vector.extract_strided_slice %263 {offsets = [8, 0], sizes = [8, 512], strides = [1, 1]} : vector<64x512xf32> to vector<8x512xf32>
    %cst_75 = arith.constant dense<0.000000e+00> : vector<8x512xf32>
    %299 = tpu.matmul %294, %5, %cst_75 {dimension_numbers = #tpu.dot_dimension_numbers<[1], [0], [0], [1], [0, 0, 1, 1], [], []>} : vector<8x128xf32>, vector<128x512xf32>, vector<8x512xf32> -> vector<8x512xf32>
    %300 = arith.addf %298, %299 : vector<8x512xf32>
    %301 = vector.extract_strided_slice %300 {offsets = [0, 0], sizes = [8, 128], strides = [1, 1]} : vector<8x512xf32> to vector<8x128xf32>
    %302 = arith.negf %301 : vector<8x128xf32>
    %303 = math.exp %302 : vector<8x128xf32>
    %cst_76 = arith.constant 1.000000e+00 : f32
    %304 = vector.broadcast %cst_76 : f32 to vector<8x128xf32>
    %305 = arith.addf %304, %303 : vector<8x128xf32>
    %306 = arith.divf %304, %305 : vector<8x128xf32>
    %307 = vector.extract_strided_slice %300 {offsets = [0, 128], sizes = [8, 128], strides = [1, 1]} : vector<8x512xf32> to vector<8x128xf32>
    %308 = arith.negf %307 : vector<8x128xf32>
    %309 = math.exp %308 : vector<8x128xf32>
    %cst_77 = arith.constant 1.000000e+00 : f32
    %310 = vector.broadcast %cst_77 : f32 to vector<8x128xf32>
    %311 = arith.addf %310, %309 : vector<8x128xf32>
    %312 = arith.divf %310, %311 : vector<8x128xf32>
    %313 = vector.extract_strided_slice %300 {offsets = [0, 256], sizes = [8, 128], strides = [1, 1]} : vector<8x512xf32> to vector<8x128xf32>
    %314 = math.tanh %313 : vector<8x128xf32>
    %315 = vector.extract_strided_slice %300 {offsets = [0, 384], sizes = [8, 128], strides = [1, 1]} : vector<8x512xf32> to vector<8x128xf32>
    %316 = arith.negf %315 : vector<8x128xf32>
    %317 = math.exp %316 : vector<8x128xf32>
    %cst_78 = arith.constant 1.000000e+00 : f32
    %318 = vector.broadcast %cst_78 : f32 to vector<8x128xf32>
    %319 = arith.addf %318, %317 : vector<8x128xf32>
    %320 = arith.divf %318, %319 : vector<8x128xf32>
    %321 = arith.mulf %312, %292 : vector<8x128xf32>
    %322 = arith.mulf %306, %314 : vector<8x128xf32>
    %323 = arith.addf %321, %322 : vector<8x128xf32>
    %324 = math.tanh %323 : vector<8x128xf32>
    %325 = arith.mulf %320, %324 : vector<8x128xf32>
    %cst_79 = arith.constant 0.000000e+00 : f32
    %326 = vector.broadcast %cst_79 : f32 to vector<8x128xf32>
    %327 = arith.maximumf %325, %326 : vector<8x128xf32>
    %328 = arith.addf %297, %327 : vector<8x128xf32>
    %329 = vector.extract_strided_slice %263 {offsets = [16, 0], sizes = [8, 512], strides = [1, 1]} : vector<64x512xf32> to vector<8x512xf32>
    %cst_80 = arith.constant dense<0.000000e+00> : vector<8x512xf32>
    %330 = tpu.matmul %325, %5, %cst_80 {dimension_numbers = #tpu.dot_dimension_numbers<[1], [0], [0], [1], [0, 0, 1, 1], [], []>} : vector<8x128xf32>, vector<128x512xf32>, vector<8x512xf32> -> vector<8x512xf32>
    %331 = arith.addf %329, %330 : vector<8x512xf32>
    %332 = vector.extract_strided_slice %331 {offsets = [0, 0], sizes = [8, 128], strides = [1, 1]} : vector<8x512xf32> to vector<8x128xf32>
    %333 = arith.negf %332 : vector<8x128xf32>
    %334 = math.exp %333 : vector<8x128xf32>
    %cst_81 = arith.constant 1.000000e+00 : f32
    %335 = vector.broadcast %cst_81 : f32 to vector<8x128xf32>
    %336 = arith.addf %335, %334 : vector<8x128xf32>
    %337 = arith.divf %335, %336 : vector<8x128xf32>
    %338 = vector.extract_strided_slice %331 {offsets = [0, 128], sizes = [8, 128], strides = [1, 1]} : vector<8x512xf32> to vector<8x128xf32>
    %339 = arith.negf %338 : vector<8x128xf32>
    %340 = math.exp %339 : vector<8x128xf32>
    %cst_82 = arith.constant 1.000000e+00 : f32
    %341 = vector.broadcast %cst_82 : f32 to vector<8x128xf32>
    %342 = arith.addf %341, %340 : vector<8x128xf32>
    %343 = arith.divf %341, %342 : vector<8x128xf32>
    %344 = vector.extract_strided_slice %331 {offsets = [0, 256], sizes = [8, 128], strides = [1, 1]} : vector<8x512xf32> to vector<8x128xf32>
    %345 = math.tanh %344 : vector<8x128xf32>
    %346 = vector.extract_strided_slice %331 {offsets = [0, 384], sizes = [8, 128], strides = [1, 1]} : vector<8x512xf32> to vector<8x128xf32>
    %347 = arith.negf %346 : vector<8x128xf32>
    %348 = math.exp %347 : vector<8x128xf32>
    %cst_83 = arith.constant 1.000000e+00 : f32
    %349 = vector.broadcast %cst_83 : f32 to vector<8x128xf32>
    %350 = arith.addf %349, %348 : vector<8x128xf32>
    %351 = arith.divf %349, %350 : vector<8x128xf32>
    %352 = arith.mulf %343, %323 : vector<8x128xf32>
    %353 = arith.mulf %337, %345 : vector<8x128xf32>
    %354 = arith.addf %352, %353 : vector<8x128xf32>
    %355 = math.tanh %354 : vector<8x128xf32>
    %356 = arith.mulf %351, %355 : vector<8x128xf32>
    %cst_84 = arith.constant 0.000000e+00 : f32
    %357 = vector.broadcast %cst_84 : f32 to vector<8x128xf32>
    %358 = arith.maximumf %356, %357 : vector<8x128xf32>
    %359 = arith.addf %328, %358 : vector<8x128xf32>
    %360 = vector.extract_strided_slice %263 {offsets = [24, 0], sizes = [8, 512], strides = [1, 1]} : vector<64x512xf32> to vector<8x512xf32>
    %cst_85 = arith.constant dense<0.000000e+00> : vector<8x512xf32>
    %361 = tpu.matmul %356, %5, %cst_85 {dimension_numbers = #tpu.dot_dimension_numbers<[1], [0], [0], [1], [0, 0, 1, 1], [], []>} : vector<8x128xf32>, vector<128x512xf32>, vector<8x512xf32> -> vector<8x512xf32>
    %362 = arith.addf %360, %361 : vector<8x512xf32>
    %363 = vector.extract_strided_slice %362 {offsets = [0, 0], sizes = [8, 128], strides = [1, 1]} : vector<8x512xf32> to vector<8x128xf32>
    %364 = arith.negf %363 : vector<8x128xf32>
    %365 = math.exp %364 : vector<8x128xf32>
    %cst_86 = arith.constant 1.000000e+00 : f32
    %366 = vector.broadcast %cst_86 : f32 to vector<8x128xf32>
    %367 = arith.addf %366, %365 : vector<8x128xf32>
    %368 = arith.divf %366, %367 : vector<8x128xf32>
    %369 = vector.extract_strided_slice %362 {offsets = [0, 128], sizes = [8, 128], strides = [1, 1]} : vector<8x512xf32> to vector<8x128xf32>
    %370 = arith.negf %369 : vector<8x128xf32>
    %371 = math.exp %370 : vector<8x128xf32>
    %cst_87 = arith.constant 1.000000e+00 : f32
    %372 = vector.broadcast %cst_87 : f32 to vector<8x128xf32>
    %373 = arith.addf %372, %371 : vector<8x128xf32>
    %374 = arith.divf %372, %373 : vector<8x128xf32>
    %375 = vector.extract_strided_slice %362 {offsets = [0, 256], sizes = [8, 128], strides = [1, 1]} : vector<8x512xf32> to vector<8x128xf32>
    %376 = math.tanh %375 : vector<8x128xf32>
    %377 = vector.extract_strided_slice %362 {offsets = [0, 384], sizes = [8, 128], strides = [1, 1]} : vector<8x512xf32> to vector<8x128xf32>
    %378 = arith.negf %377 : vector<8x128xf32>
    %379 = math.exp %378 : vector<8x128xf32>
    %cst_88 = arith.constant 1.000000e+00 : f32
    %380 = vector.broadcast %cst_88 : f32 to vector<8x128xf32>
    %381 = arith.addf %380, %379 : vector<8x128xf32>
    %382 = arith.divf %380, %381 : vector<8x128xf32>
    %383 = arith.mulf %374, %354 : vector<8x128xf32>
    %384 = arith.mulf %368, %376 : vector<8x128xf32>
    %385 = arith.addf %383, %384 : vector<8x128xf32>
    %386 = math.tanh %385 : vector<8x128xf32>
    %387 = arith.mulf %382, %386 : vector<8x128xf32>
    %cst_89 = arith.constant 0.000000e+00 : f32
    %388 = vector.broadcast %cst_89 : f32 to vector<8x128xf32>
    %389 = arith.maximumf %387, %388 : vector<8x128xf32>
    %390 = arith.addf %359, %389 : vector<8x128xf32>
    %391 = vector.extract_strided_slice %263 {offsets = [32, 0], sizes = [8, 512], strides = [1, 1]} : vector<64x512xf32> to vector<8x512xf32>
    %cst_90 = arith.constant dense<0.000000e+00> : vector<8x512xf32>
    %392 = tpu.matmul %387, %5, %cst_90 {dimension_numbers = #tpu.dot_dimension_numbers<[1], [0], [0], [1], [0, 0, 1, 1], [], []>} : vector<8x128xf32>, vector<128x512xf32>, vector<8x512xf32> -> vector<8x512xf32>
    %393 = arith.addf %391, %392 : vector<8x512xf32>
    %394 = vector.extract_strided_slice %393 {offsets = [0, 0], sizes = [8, 128], strides = [1, 1]} : vector<8x512xf32> to vector<8x128xf32>
    %395 = arith.negf %394 : vector<8x128xf32>
    %396 = math.exp %395 : vector<8x128xf32>
    %cst_91 = arith.constant 1.000000e+00 : f32
    %397 = vector.broadcast %cst_91 : f32 to vector<8x128xf32>
    %398 = arith.addf %397, %396 : vector<8x128xf32>
    %399 = arith.divf %397, %398 : vector<8x128xf32>
    %400 = vector.extract_strided_slice %393 {offsets = [0, 128], sizes = [8, 128], strides = [1, 1]} : vector<8x512xf32> to vector<8x128xf32>
    %401 = arith.negf %400 : vector<8x128xf32>
    %402 = math.exp %401 : vector<8x128xf32>
    %cst_92 = arith.constant 1.000000e+00 : f32
    %403 = vector.broadcast %cst_92 : f32 to vector<8x128xf32>
    %404 = arith.addf %403, %402 : vector<8x128xf32>
    %405 = arith.divf %403, %404 : vector<8x128xf32>
    %406 = vector.extract_strided_slice %393 {offsets = [0, 256], sizes = [8, 128], strides = [1, 1]} : vector<8x512xf32> to vector<8x128xf32>
    %407 = math.tanh %406 : vector<8x128xf32>
    %408 = vector.extract_strided_slice %393 {offsets = [0, 384], sizes = [8, 128], strides = [1, 1]} : vector<8x512xf32> to vector<8x128xf32>
    %409 = arith.negf %408 : vector<8x128xf32>
    %410 = math.exp %409 : vector<8x128xf32>
    %cst_93 = arith.constant 1.000000e+00 : f32
    %411 = vector.broadcast %cst_93 : f32 to vector<8x128xf32>
    %412 = arith.addf %411, %410 : vector<8x128xf32>
    %413 = arith.divf %411, %412 : vector<8x128xf32>
    %414 = arith.mulf %405, %385 : vector<8x128xf32>
    %415 = arith.mulf %399, %407 : vector<8x128xf32>
    %416 = arith.addf %414, %415 : vector<8x128xf32>
    %417 = math.tanh %416 : vector<8x128xf32>
    %418 = arith.mulf %413, %417 : vector<8x128xf32>
    %cst_94 = arith.constant 0.000000e+00 : f32
    %419 = vector.broadcast %cst_94 : f32 to vector<8x128xf32>
    %420 = arith.maximumf %418, %419 : vector<8x128xf32>
    %421 = arith.addf %390, %420 : vector<8x128xf32>
    %422 = vector.extract_strided_slice %263 {offsets = [40, 0], sizes = [8, 512], strides = [1, 1]} : vector<64x512xf32> to vector<8x512xf32>
    %cst_95 = arith.constant dense<0.000000e+00> : vector<8x512xf32>
    %423 = tpu.matmul %418, %5, %cst_95 {dimension_numbers = #tpu.dot_dimension_numbers<[1], [0], [0], [1], [0, 0, 1, 1], [], []>} : vector<8x128xf32>, vector<128x512xf32>, vector<8x512xf32> -> vector<8x512xf32>
    %424 = arith.addf %422, %423 : vector<8x512xf32>
    %425 = vector.extract_strided_slice %424 {offsets = [0, 0], sizes = [8, 128], strides = [1, 1]} : vector<8x512xf32> to vector<8x128xf32>
    %426 = arith.negf %425 : vector<8x128xf32>
    %427 = math.exp %426 : vector<8x128xf32>
    %cst_96 = arith.constant 1.000000e+00 : f32
    %428 = vector.broadcast %cst_96 : f32 to vector<8x128xf32>
    %429 = arith.addf %428, %427 : vector<8x128xf32>
    %430 = arith.divf %428, %429 : vector<8x128xf32>
    %431 = vector.extract_strided_slice %424 {offsets = [0, 128], sizes = [8, 128], strides = [1, 1]} : vector<8x512xf32> to vector<8x128xf32>
    %432 = arith.negf %431 : vector<8x128xf32>
    %433 = math.exp %432 : vector<8x128xf32>
    %cst_97 = arith.constant 1.000000e+00 : f32
    %434 = vector.broadcast %cst_97 : f32 to vector<8x128xf32>
    %435 = arith.addf %434, %433 : vector<8x128xf32>
    %436 = arith.divf %434, %435 : vector<8x128xf32>
    %437 = vector.extract_strided_slice %424 {offsets = [0, 256], sizes = [8, 128], strides = [1, 1]} : vector<8x512xf32> to vector<8x128xf32>
    %438 = math.tanh %437 : vector<8x128xf32>
    %439 = vector.extract_strided_slice %424 {offsets = [0, 384], sizes = [8, 128], strides = [1, 1]} : vector<8x512xf32> to vector<8x128xf32>
    %440 = arith.negf %439 : vector<8x128xf32>
    %441 = math.exp %440 : vector<8x128xf32>
    %cst_98 = arith.constant 1.000000e+00 : f32
    %442 = vector.broadcast %cst_98 : f32 to vector<8x128xf32>
    %443 = arith.addf %442, %441 : vector<8x128xf32>
    %444 = arith.divf %442, %443 : vector<8x128xf32>
    %445 = arith.mulf %436, %416 : vector<8x128xf32>
    %446 = arith.mulf %430, %438 : vector<8x128xf32>
    %447 = arith.addf %445, %446 : vector<8x128xf32>
    %448 = math.tanh %447 : vector<8x128xf32>
    %449 = arith.mulf %444, %448 : vector<8x128xf32>
    %cst_99 = arith.constant 0.000000e+00 : f32
    %450 = vector.broadcast %cst_99 : f32 to vector<8x128xf32>
    %451 = arith.maximumf %449, %450 : vector<8x128xf32>
    %452 = arith.addf %421, %451 : vector<8x128xf32>
    %453 = vector.extract_strided_slice %263 {offsets = [48, 0], sizes = [8, 512], strides = [1, 1]} : vector<64x512xf32> to vector<8x512xf32>
    %cst_100 = arith.constant dense<0.000000e+00> : vector<8x512xf32>
    %454 = tpu.matmul %449, %5, %cst_100 {dimension_numbers = #tpu.dot_dimension_numbers<[1], [0], [0], [1], [0, 0, 1, 1], [], []>} : vector<8x128xf32>, vector<128x512xf32>, vector<8x512xf32> -> vector<8x512xf32>
    %455 = arith.addf %453, %454 : vector<8x512xf32>
    %456 = vector.extract_strided_slice %455 {offsets = [0, 0], sizes = [8, 128], strides = [1, 1]} : vector<8x512xf32> to vector<8x128xf32>
    %457 = arith.negf %456 : vector<8x128xf32>
    %458 = math.exp %457 : vector<8x128xf32>
    %cst_101 = arith.constant 1.000000e+00 : f32
    %459 = vector.broadcast %cst_101 : f32 to vector<8x128xf32>
    %460 = arith.addf %459, %458 : vector<8x128xf32>
    %461 = arith.divf %459, %460 : vector<8x128xf32>
    %462 = vector.extract_strided_slice %455 {offsets = [0, 128], sizes = [8, 128], strides = [1, 1]} : vector<8x512xf32> to vector<8x128xf32>
    %463 = arith.negf %462 : vector<8x128xf32>
    %464 = math.exp %463 : vector<8x128xf32>
    %cst_102 = arith.constant 1.000000e+00 : f32
    %465 = vector.broadcast %cst_102 : f32 to vector<8x128xf32>
    %466 = arith.addf %465, %464 : vector<8x128xf32>
    %467 = arith.divf %465, %466 : vector<8x128xf32>
    %468 = vector.extract_strided_slice %455 {offsets = [0, 256], sizes = [8, 128], strides = [1, 1]} : vector<8x512xf32> to vector<8x128xf32>
    %469 = math.tanh %468 : vector<8x128xf32>
    %470 = vector.extract_strided_slice %455 {offsets = [0, 384], sizes = [8, 128], strides = [1, 1]} : vector<8x512xf32> to vector<8x128xf32>
    %471 = arith.negf %470 : vector<8x128xf32>
    %472 = math.exp %471 : vector<8x128xf32>
    %cst_103 = arith.constant 1.000000e+00 : f32
    %473 = vector.broadcast %cst_103 : f32 to vector<8x128xf32>
    %474 = arith.addf %473, %472 : vector<8x128xf32>
    %475 = arith.divf %473, %474 : vector<8x128xf32>
    %476 = arith.mulf %467, %447 : vector<8x128xf32>
    %477 = arith.mulf %461, %469 : vector<8x128xf32>
    %478 = arith.addf %476, %477 : vector<8x128xf32>
    %479 = math.tanh %478 : vector<8x128xf32>
    %480 = arith.mulf %475, %479 : vector<8x128xf32>
    %cst_104 = arith.constant 0.000000e+00 : f32
    %481 = vector.broadcast %cst_104 : f32 to vector<8x128xf32>
    %482 = arith.maximumf %480, %481 : vector<8x128xf32>
    %483 = arith.addf %452, %482 : vector<8x128xf32>
    %484 = vector.extract_strided_slice %263 {offsets = [56, 0], sizes = [8, 512], strides = [1, 1]} : vector<64x512xf32> to vector<8x512xf32>
    %cst_105 = arith.constant dense<0.000000e+00> : vector<8x512xf32>
    %485 = tpu.matmul %480, %5, %cst_105 {dimension_numbers = #tpu.dot_dimension_numbers<[1], [0], [0], [1], [0, 0, 1, 1], [], []>} : vector<8x128xf32>, vector<128x512xf32>, vector<8x512xf32> -> vector<8x512xf32>
    %486 = arith.addf %484, %485 : vector<8x512xf32>
    %487 = vector.extract_strided_slice %486 {offsets = [0, 0], sizes = [8, 128], strides = [1, 1]} : vector<8x512xf32> to vector<8x128xf32>
    %488 = arith.negf %487 : vector<8x128xf32>
    %489 = math.exp %488 : vector<8x128xf32>
    %cst_106 = arith.constant 1.000000e+00 : f32
    %490 = vector.broadcast %cst_106 : f32 to vector<8x128xf32>
    %491 = arith.addf %490, %489 : vector<8x128xf32>
    %492 = arith.divf %490, %491 : vector<8x128xf32>
    %493 = vector.extract_strided_slice %486 {offsets = [0, 128], sizes = [8, 128], strides = [1, 1]} : vector<8x512xf32> to vector<8x128xf32>
    %494 = arith.negf %493 : vector<8x128xf32>
    %495 = math.exp %494 : vector<8x128xf32>
    %cst_107 = arith.constant 1.000000e+00 : f32
    %496 = vector.broadcast %cst_107 : f32 to vector<8x128xf32>
    %497 = arith.addf %496, %495 : vector<8x128xf32>
    %498 = arith.divf %496, %497 : vector<8x128xf32>
    %499 = vector.extract_strided_slice %486 {offsets = [0, 256], sizes = [8, 128], strides = [1, 1]} : vector<8x512xf32> to vector<8x128xf32>
    %500 = math.tanh %499 : vector<8x128xf32>
    %501 = vector.extract_strided_slice %486 {offsets = [0, 384], sizes = [8, 128], strides = [1, 1]} : vector<8x512xf32> to vector<8x128xf32>
    %502 = arith.negf %501 : vector<8x128xf32>
    %503 = math.exp %502 : vector<8x128xf32>
    %cst_108 = arith.constant 1.000000e+00 : f32
    %504 = vector.broadcast %cst_108 : f32 to vector<8x128xf32>
    %505 = arith.addf %504, %503 : vector<8x128xf32>
    %506 = arith.divf %504, %505 : vector<8x128xf32>
    %507 = arith.mulf %498, %478 : vector<8x128xf32>
    %508 = arith.mulf %492, %500 : vector<8x128xf32>
    %509 = arith.addf %507, %508 : vector<8x128xf32>
    %510 = math.tanh %509 : vector<8x128xf32>
    %511 = arith.mulf %506, %510 : vector<8x128xf32>
    %cst_109 = arith.constant 0.000000e+00 : f32
    %512 = vector.broadcast %cst_109 : f32 to vector<8x128xf32>
    %513 = arith.maximumf %511, %512 : vector<8x128xf32>
    %514 = arith.addf %483, %513 : vector<8x128xf32>
    %cst_110 = arith.constant 1.250000e-01 : f32
    %515 = vector.broadcast %cst_110 : f32 to vector<8x128xf32>
    %516 = arith.mulf %514, %515 : vector<8x128xf32>
    %c0_111 = arith.constant 0 : index
    %c0_112 = arith.constant 0 : index
    %517 = vector.load %arg2[%c0_111, %c0_112] : memref<48x128xf32, #tpu.memory_space<vmem>>, vector<48x128xf32>
    %c0_113 = arith.constant 0 : index
    %c0_114 = arith.constant 0 : index
    %518 = vector.load %arg9[%c0_113, %c0_114] : memref<128x512xf32, #tpu.memory_space<vmem>>, vector<128x512xf32>
    %c0_115 = arith.constant 0 : index
    %c0_116 = arith.constant 0 : index
    %519 = vector.load %arg10[%c0_115, %c0_116] : memref<128x512xf32, #tpu.memory_space<vmem>>, vector<128x512xf32>
    %c0_117 = arith.constant 0 : index
    %c0_118 = arith.constant 0 : index
    %520 = vector.load %arg11[%c0_117, %c0_118] : memref<1x512xf32, #tpu.memory_space<vmem>>, vector<1x512xf32>
    %c0_119 = arith.constant 0 : index
    %c0_120 = arith.constant 0 : index
    %521 = vector.load %arg12[%c0_119, %c0_120] : memref<128x512xf32, #tpu.memory_space<vmem>>, vector<128x512xf32>
    %c0_121 = arith.constant 0 : index
    %c0_122 = arith.constant 0 : index
    %522 = vector.load %arg13[%c0_121, %c0_122] : memref<128x512xf32, #tpu.memory_space<vmem>>, vector<128x512xf32>
    %c0_123 = arith.constant 0 : index
    %c0_124 = arith.constant 0 : index
    %523 = vector.load %arg14[%c0_123, %c0_124] : memref<1x512xf32, #tpu.memory_space<vmem>>, vector<1x512xf32>
    %cst_125 = arith.constant dense<0.000000e+00> : vector<48x512xf32>
    %524 = tpu.matmul %517, %518, %cst_125 {dimension_numbers = #tpu.dot_dimension_numbers<[1], [0], [0], [1], [0, 0, 1, 1], [], []>} : vector<48x128xf32>, vector<128x512xf32>, vector<48x512xf32> -> vector<48x512xf32>
    %525 = vector.broadcast %520 : vector<1x512xf32> to vector<48x512xf32>
    %526 = arith.addf %524, %525 : vector<48x512xf32>
    %cst_126 = arith.constant 0.000000e+00 : f32
    %527 = vector.broadcast %cst_126 : f32 to vector<8x128xf32>
    %cst_127 = arith.constant 0.000000e+00 : f32
    %528 = vector.broadcast %cst_127 : f32 to vector<8x128xf32>
    %529 = vector.extract_strided_slice %526 {offsets = [0, 0], sizes = [8, 512], strides = [1, 1]} : vector<48x512xf32> to vector<8x512xf32>
    %cst_128 = arith.constant dense<0.000000e+00> : vector<8x512xf32>
    %530 = tpu.matmul %527, %519, %cst_128 {dimension_numbers = #tpu.dot_dimension_numbers<[1], [0], [0], [1], [0, 0, 1, 1], [], []>} : vector<8x128xf32>, vector<128x512xf32>, vector<8x512xf32> -> vector<8x512xf32>
    %531 = arith.addf %529, %530 : vector<8x512xf32>
    %532 = vector.extract_strided_slice %531 {offsets = [0, 0], sizes = [8, 128], strides = [1, 1]} : vector<8x512xf32> to vector<8x128xf32>
    %533 = arith.negf %532 : vector<8x128xf32>
    %534 = math.exp %533 : vector<8x128xf32>
    %cst_129 = arith.constant 1.000000e+00 : f32
    %535 = vector.broadcast %cst_129 : f32 to vector<8x128xf32>
    %536 = arith.addf %535, %534 : vector<8x128xf32>
    %537 = arith.divf %535, %536 : vector<8x128xf32>
    %538 = vector.extract_strided_slice %531 {offsets = [0, 128], sizes = [8, 128], strides = [1, 1]} : vector<8x512xf32> to vector<8x128xf32>
    %539 = arith.negf %538 : vector<8x128xf32>
    %540 = math.exp %539 : vector<8x128xf32>
    %cst_130 = arith.constant 1.000000e+00 : f32
    %541 = vector.broadcast %cst_130 : f32 to vector<8x128xf32>
    %542 = arith.addf %541, %540 : vector<8x128xf32>
    %543 = arith.divf %541, %542 : vector<8x128xf32>
    %544 = vector.extract_strided_slice %531 {offsets = [0, 256], sizes = [8, 128], strides = [1, 1]} : vector<8x512xf32> to vector<8x128xf32>
    %545 = math.tanh %544 : vector<8x128xf32>
    %546 = vector.extract_strided_slice %531 {offsets = [0, 384], sizes = [8, 128], strides = [1, 1]} : vector<8x512xf32> to vector<8x128xf32>
    %547 = arith.negf %546 : vector<8x128xf32>
    %548 = math.exp %547 : vector<8x128xf32>
    %cst_131 = arith.constant 1.000000e+00 : f32
    %549 = vector.broadcast %cst_131 : f32 to vector<8x128xf32>
    %550 = arith.addf %549, %548 : vector<8x128xf32>
    %551 = arith.divf %549, %550 : vector<8x128xf32>
    %552 = arith.mulf %543, %528 : vector<8x128xf32>
    %553 = arith.mulf %537, %545 : vector<8x128xf32>
    %554 = arith.addf %552, %553 : vector<8x128xf32>
    %555 = math.tanh %554 : vector<8x128xf32>
    %556 = arith.mulf %551, %555 : vector<8x128xf32>
    %cst_132 = arith.constant 0.000000e+00 : f32
    %557 = vector.broadcast %cst_132 : f32 to vector<8x128xf32>
    %558 = arith.maximumf %556, %557 : vector<8x128xf32>
    %c0_133 = arith.constant 0 : index
    %c0_134 = arith.constant 0 : index
    %559 = vector.load %arg21[%c0_133, %c0_134] : memref<64x128xf32, #tpu.memory_space<vmem>>, vector<8x128xf32>
    tpu.vector_store %arg21[%c0_133, %c0_134], %558 {strides = array<i32>} : memref<64x128xf32, #tpu.memory_space<vmem>>, vector<8x128xf32>,
    %560 = vector.extract_strided_slice %526 {offsets = [8, 0], sizes = [8, 512], strides = [1, 1]} : vector<48x512xf32> to vector<8x512xf32>
    %cst_135 = arith.constant dense<0.000000e+00> : vector<8x512xf32>
    %561 = tpu.matmul %556, %519, %cst_135 {dimension_numbers = #tpu.dot_dimension_numbers<[1], [0], [0], [1], [0, 0, 1, 1], [], []>} : vector<8x128xf32>, vector<128x512xf32>, vector<8x512xf32> -> vector<8x512xf32>
    %562 = arith.addf %560, %561 : vector<8x512xf32>
    %563 = vector.extract_strided_slice %562 {offsets = [0, 0], sizes = [8, 128], strides = [1, 1]} : vector<8x512xf32> to vector<8x128xf32>
    %564 = arith.negf %563 : vector<8x128xf32>
    %565 = math.exp %564 : vector<8x128xf32>
    %cst_136 = arith.constant 1.000000e+00 : f32
    %566 = vector.broadcast %cst_136 : f32 to vector<8x128xf32>
    %567 = arith.addf %566, %565 : vector<8x128xf32>
    %568 = arith.divf %566, %567 : vector<8x128xf32>
    %569 = vector.extract_strided_slice %562 {offsets = [0, 128], sizes = [8, 128], strides = [1, 1]} : vector<8x512xf32> to vector<8x128xf32>
    %570 = arith.negf %569 : vector<8x128xf32>
    %571 = math.exp %570 : vector<8x128xf32>
    %cst_137 = arith.constant 1.000000e+00 : f32
    %572 = vector.broadcast %cst_137 : f32 to vector<8x128xf32>
    %573 = arith.addf %572, %571 : vector<8x128xf32>
    %574 = arith.divf %572, %573 : vector<8x128xf32>
    %575 = vector.extract_strided_slice %562 {offsets = [0, 256], sizes = [8, 128], strides = [1, 1]} : vector<8x512xf32> to vector<8x128xf32>
    %576 = math.tanh %575 : vector<8x128xf32>
    %577 = vector.extract_strided_slice %562 {offsets = [0, 384], sizes = [8, 128], strides = [1, 1]} : vector<8x512xf32> to vector<8x128xf32>
    %578 = arith.negf %577 : vector<8x128xf32>
    %579 = math.exp %578 : vector<8x128xf32>
    %cst_138 = arith.constant 1.000000e+00 : f32
    %580 = vector.broadcast %cst_138 : f32 to vector<8x128xf32>
    %581 = arith.addf %580, %579 : vector<8x128xf32>
    %582 = arith.divf %580, %581 : vector<8x128xf32>
    %583 = arith.mulf %574, %554 : vector<8x128xf32>
    %584 = arith.mulf %568, %576 : vector<8x128xf32>
    %585 = arith.addf %583, %584 : vector<8x128xf32>
    %586 = math.tanh %585 : vector<8x128xf32>
    %587 = arith.mulf %582, %586 : vector<8x128xf32>
    %cst_139 = arith.constant 0.000000e+00 : f32
    %588 = vector.broadcast %cst_139 : f32 to vector<8x128xf32>
    %589 = arith.maximumf %587, %588 : vector<8x128xf32>
    %c8_140 = arith.constant 8 : index
    %c0_141 = arith.constant 0 : index
    %590 = vector.load %arg21[%c8_140, %c0_141] : memref<64x128xf32, #tpu.memory_space<vmem>>, vector<8x128xf32>
    tpu.vector_store %arg21[%c8_140, %c0_141], %589 {strides = array<i32>} : memref<64x128xf32, #tpu.memory_space<vmem>>, vector<8x128xf32>,
    %591 = vector.extract_strided_slice %526 {offsets = [16, 0], sizes = [8, 512], strides = [1, 1]} : vector<48x512xf32> to vector<8x512xf32>
    %cst_142 = arith.constant dense<0.000000e+00> : vector<8x512xf32>
    %592 = tpu.matmul %587, %519, %cst_142 {dimension_numbers = #tpu.dot_dimension_numbers<[1], [0], [0], [1], [0, 0, 1, 1], [], []>} : vector<8x128xf32>, vector<128x512xf32>, vector<8x512xf32> -> vector<8x512xf32>
    %593 = arith.addf %591, %592 : vector<8x512xf32>
    %594 = vector.extract_strided_slice %593 {offsets = [0, 0], sizes = [8, 128], strides = [1, 1]} : vector<8x512xf32> to vector<8x128xf32>
    %595 = arith.negf %594 : vector<8x128xf32>
    %596 = math.exp %595 : vector<8x128xf32>
    %cst_143 = arith.constant 1.000000e+00 : f32
    %597 = vector.broadcast %cst_143 : f32 to vector<8x128xf32>
    %598 = arith.addf %597, %596 : vector<8x128xf32>
    %599 = arith.divf %597, %598 : vector<8x128xf32>
    %600 = vector.extract_strided_slice %593 {offsets = [0, 128], sizes = [8, 128], strides = [1, 1]} : vector<8x512xf32> to vector<8x128xf32>
    %601 = arith.negf %600 : vector<8x128xf32>
    %602 = math.exp %601 : vector<8x128xf32>
    %cst_144 = arith.constant 1.000000e+00 : f32
    %603 = vector.broadcast %cst_144 : f32 to vector<8x128xf32>
    %604 = arith.addf %603, %602 : vector<8x128xf32>
    %605 = arith.divf %603, %604 : vector<8x128xf32>
    %606 = vector.extract_strided_slice %593 {offsets = [0, 256], sizes = [8, 128], strides = [1, 1]} : vector<8x512xf32> to vector<8x128xf32>
    %607 = math.tanh %606 : vector<8x128xf32>
    %608 = vector.extract_strided_slice %593 {offsets = [0, 384], sizes = [8, 128], strides = [1, 1]} : vector<8x512xf32> to vector<8x128xf32>
    %609 = arith.negf %608 : vector<8x128xf32>
    %610 = math.exp %609 : vector<8x128xf32>
    %cst_145 = arith.constant 1.000000e+00 : f32
    %611 = vector.broadcast %cst_145 : f32 to vector<8x128xf32>
    %612 = arith.addf %611, %610 : vector<8x128xf32>
    %613 = arith.divf %611, %612 : vector<8x128xf32>
    %614 = arith.mulf %605, %585 : vector<8x128xf32>
    %615 = arith.mulf %599, %607 : vector<8x128xf32>
    %616 = arith.addf %614, %615 : vector<8x128xf32>
    %617 = math.tanh %616 : vector<8x128xf32>
    %618 = arith.mulf %613, %617 : vector<8x128xf32>
    %cst_146 = arith.constant 0.000000e+00 : f32
    %619 = vector.broadcast %cst_146 : f32 to vector<8x128xf32>
    %620 = arith.maximumf %618, %619 : vector<8x128xf32>
    %c16_147 = arith.constant 16 : index
    %c0_148 = arith.constant 0 : index
    %621 = vector.load %arg21[%c16_147, %c0_148] : memref<64x128xf32, #tpu.memory_space<vmem>>, vector<8x128xf32>
    tpu.vector_store %arg21[%c16_147, %c0_148], %620 {strides = array<i32>} : memref<64x128xf32, #tpu.memory_space<vmem>>, vector<8x128xf32>,
    %622 = vector.extract_strided_slice %526 {offsets = [24, 0], sizes = [8, 512], strides = [1, 1]} : vector<48x512xf32> to vector<8x512xf32>
    %cst_149 = arith.constant dense<0.000000e+00> : vector<8x512xf32>
    %623 = tpu.matmul %618, %519, %cst_149 {dimension_numbers = #tpu.dot_dimension_numbers<[1], [0], [0], [1], [0, 0, 1, 1], [], []>} : vector<8x128xf32>, vector<128x512xf32>, vector<8x512xf32> -> vector<8x512xf32>
    %624 = arith.addf %622, %623 : vector<8x512xf32>
    %625 = vector.extract_strided_slice %624 {offsets = [0, 0], sizes = [8, 128], strides = [1, 1]} : vector<8x512xf32> to vector<8x128xf32>
    %626 = arith.negf %625 : vector<8x128xf32>
    %627 = math.exp %626 : vector<8x128xf32>
    %cst_150 = arith.constant 1.000000e+00 : f32
    %628 = vector.broadcast %cst_150 : f32 to vector<8x128xf32>
    %629 = arith.addf %628, %627 : vector<8x128xf32>
    %630 = arith.divf %628, %629 : vector<8x128xf32>
    %631 = vector.extract_strided_slice %624 {offsets = [0, 128], sizes = [8, 128], strides = [1, 1]} : vector<8x512xf32> to vector<8x128xf32>
    %632 = arith.negf %631 : vector<8x128xf32>
    %633 = math.exp %632 : vector<8x128xf32>
    %cst_151 = arith.constant 1.000000e+00 : f32
    %634 = vector.broadcast %cst_151 : f32 to vector<8x128xf32>
    %635 = arith.addf %634, %633 : vector<8x128xf32>
    %636 = arith.divf %634, %635 : vector<8x128xf32>
    %637 = vector.extract_strided_slice %624 {offsets = [0, 256], sizes = [8, 128], strides = [1, 1]} : vector<8x512xf32> to vector<8x128xf32>
    %638 = math.tanh %637 : vector<8x128xf32>
    %639 = vector.extract_strided_slice %624 {offsets = [0, 384], sizes = [8, 128], strides = [1, 1]} : vector<8x512xf32> to vector<8x128xf32>
    %640 = arith.negf %639 : vector<8x128xf32>
    %641 = math.exp %640 : vector<8x128xf32>
    %cst_152 = arith.constant 1.000000e+00 : f32
    %642 = vector.broadcast %cst_152 : f32 to vector<8x128xf32>
    %643 = arith.addf %642, %641 : vector<8x128xf32>
    %644 = arith.divf %642, %643 : vector<8x128xf32>
    %645 = arith.mulf %636, %616 : vector<8x128xf32>
    %646 = arith.mulf %630, %638 : vector<8x128xf32>
    %647 = arith.addf %645, %646 : vector<8x128xf32>
    %648 = math.tanh %647 : vector<8x128xf32>
    %649 = arith.mulf %644, %648 : vector<8x128xf32>
    %cst_153 = arith.constant 0.000000e+00 : f32
    %650 = vector.broadcast %cst_153 : f32 to vector<8x128xf32>
    %651 = arith.maximumf %649, %650 : vector<8x128xf32>
    %c24_154 = arith.constant 24 : index
    %c0_155 = arith.constant 0 : index
    %652 = vector.load %arg21[%c24_154, %c0_155] : memref<64x128xf32, #tpu.memory_space<vmem>>, vector<8x128xf32>
    tpu.vector_store %arg21[%c24_154, %c0_155], %651 {strides = array<i32>} : memref<64x128xf32, #tpu.memory_space<vmem>>, vector<8x128xf32>,
    %653 = vector.extract_strided_slice %526 {offsets = [32, 0], sizes = [8, 512], strides = [1, 1]} : vector<48x512xf32> to vector<8x512xf32>
    %cst_156 = arith.constant dense<0.000000e+00> : vector<8x512xf32>
    %654 = tpu.matmul %649, %519, %cst_156 {dimension_numbers = #tpu.dot_dimension_numbers<[1], [0], [0], [1], [0, 0, 1, 1], [], []>} : vector<8x128xf32>, vector<128x512xf32>, vector<8x512xf32> -> vector<8x512xf32>
    %655 = arith.addf %653, %654 : vector<8x512xf32>
    %656 = vector.extract_strided_slice %655 {offsets = [0, 0], sizes = [8, 128], strides = [1, 1]} : vector<8x512xf32> to vector<8x128xf32>
    %657 = arith.negf %656 : vector<8x128xf32>
    %658 = math.exp %657 : vector<8x128xf32>
    %cst_157 = arith.constant 1.000000e+00 : f32
    %659 = vector.broadcast %cst_157 : f32 to vector<8x128xf32>
    %660 = arith.addf %659, %658 : vector<8x128xf32>
    %661 = arith.divf %659, %660 : vector<8x128xf32>
    %662 = vector.extract_strided_slice %655 {offsets = [0, 128], sizes = [8, 128], strides = [1, 1]} : vector<8x512xf32> to vector<8x128xf32>
    %663 = arith.negf %662 : vector<8x128xf32>
    %664 = math.exp %663 : vector<8x128xf32>
    %cst_158 = arith.constant 1.000000e+00 : f32
    %665 = vector.broadcast %cst_158 : f32 to vector<8x128xf32>
    %666 = arith.addf %665, %664 : vector<8x128xf32>
    %667 = arith.divf %665, %666 : vector<8x128xf32>
    %668 = vector.extract_strided_slice %655 {offsets = [0, 256], sizes = [8, 128], strides = [1, 1]} : vector<8x512xf32> to vector<8x128xf32>
    %669 = math.tanh %668 : vector<8x128xf32>
    %670 = vector.extract_strided_slice %655 {offsets = [0, 384], sizes = [8, 128], strides = [1, 1]} : vector<8x512xf32> to vector<8x128xf32>
    %671 = arith.negf %670 : vector<8x128xf32>
    %672 = math.exp %671 : vector<8x128xf32>
    %cst_159 = arith.constant 1.000000e+00 : f32
    %673 = vector.broadcast %cst_159 : f32 to vector<8x128xf32>
    %674 = arith.addf %673, %672 : vector<8x128xf32>
    %675 = arith.divf %673, %674 : vector<8x128xf32>
    %676 = arith.mulf %667, %647 : vector<8x128xf32>
    %677 = arith.mulf %661, %669 : vector<8x128xf32>
    %678 = arith.addf %676, %677 : vector<8x128xf32>
    %679 = math.tanh %678 : vector<8x128xf32>
    %680 = arith.mulf %675, %679 : vector<8x128xf32>
    %cst_160 = arith.constant 0.000000e+00 : f32
    %681 = vector.broadcast %cst_160 : f32 to vector<8x128xf32>
    %682 = arith.maximumf %680, %681 : vector<8x128xf32>
    %c32_161 = arith.constant 32 : index
    %c0_162 = arith.constant 0 : index
    %683 = vector.load %arg21[%c32_161, %c0_162] : memref<64x128xf32, #tpu.memory_space<vmem>>, vector<8x128xf32>
    tpu.vector_store %arg21[%c32_161, %c0_162], %682 {strides = array<i32>} : memref<64x128xf32, #tpu.memory_space<vmem>>, vector<8x128xf32>,
    %684 = vector.extract_strided_slice %526 {offsets = [40, 0], sizes = [8, 512], strides = [1, 1]} : vector<48x512xf32> to vector<8x512xf32>
    %cst_163 = arith.constant dense<0.000000e+00> : vector<8x512xf32>
    %685 = tpu.matmul %680, %519, %cst_163 {dimension_numbers = #tpu.dot_dimension_numbers<[1], [0], [0], [1], [0, 0, 1, 1], [], []>} : vector<8x128xf32>, vector<128x512xf32>, vector<8x512xf32> -> vector<8x512xf32>
    %686 = arith.addf %684, %685 : vector<8x512xf32>
    %687 = vector.extract_strided_slice %686 {offsets = [0, 0], sizes = [8, 128], strides = [1, 1]} : vector<8x512xf32> to vector<8x128xf32>
    %688 = arith.negf %687 : vector<8x128xf32>
    %689 = math.exp %688 : vector<8x128xf32>
    %cst_164 = arith.constant 1.000000e+00 : f32
    %690 = vector.broadcast %cst_164 : f32 to vector<8x128xf32>
    %691 = arith.addf %690, %689 : vector<8x128xf32>
    %692 = arith.divf %690, %691 : vector<8x128xf32>
    %693 = vector.extract_strided_slice %686 {offsets = [0, 128], sizes = [8, 128], strides = [1, 1]} : vector<8x512xf32> to vector<8x128xf32>
    %694 = arith.negf %693 : vector<8x128xf32>
    %695 = math.exp %694 : vector<8x128xf32>
    %cst_165 = arith.constant 1.000000e+00 : f32
    %696 = vector.broadcast %cst_165 : f32 to vector<8x128xf32>
    %697 = arith.addf %696, %695 : vector<8x128xf32>
    %698 = arith.divf %696, %697 : vector<8x128xf32>
    %699 = vector.extract_strided_slice %686 {offsets = [0, 256], sizes = [8, 128], strides = [1, 1]} : vector<8x512xf32> to vector<8x128xf32>
    %700 = math.tanh %699 : vector<8x128xf32>
    %701 = vector.extract_strided_slice %686 {offsets = [0, 384], sizes = [8, 128], strides = [1, 1]} : vector<8x512xf32> to vector<8x128xf32>
    %702 = arith.negf %701 : vector<8x128xf32>
    %703 = math.exp %702 : vector<8x128xf32>
    %cst_166 = arith.constant 1.000000e+00 : f32
    %704 = vector.broadcast %cst_166 : f32 to vector<8x128xf32>
    %705 = arith.addf %704, %703 : vector<8x128xf32>
    %706 = arith.divf %704, %705 : vector<8x128xf32>
    %707 = arith.mulf %698, %678 : vector<8x128xf32>
    %708 = arith.mulf %692, %700 : vector<8x128xf32>
    %709 = arith.addf %707, %708 : vector<8x128xf32>
    %710 = math.tanh %709 : vector<8x128xf32>
    %711 = arith.mulf %706, %710 : vector<8x128xf32>
    %cst_167 = arith.constant 0.000000e+00 : f32
    %712 = vector.broadcast %cst_167 : f32 to vector<8x128xf32>
    %713 = arith.maximumf %711, %712 : vector<8x128xf32>
    %c40_168 = arith.constant 40 : index
    %c0_169 = arith.constant 0 : index
    %714 = vector.load %arg21[%c40_168, %c0_169] : memref<64x128xf32, #tpu.memory_space<vmem>>, vector<8x128xf32>
    tpu.vector_store %arg21[%c40_168, %c0_169], %713 {strides = array<i32>} : memref<64x128xf32, #tpu.memory_space<vmem>>, vector<8x128xf32>,
    %c0_170 = arith.constant 0 : index
    %c0_171 = arith.constant 0 : index
    %715 = vector.load %arg21[%c0_170, %c0_171] : memref<64x128xf32, #tpu.memory_space<vmem>>, vector<48x128xf32>
    %cst_172 = arith.constant dense<0.000000e+00> : vector<48x512xf32>
    %716 = tpu.matmul %715, %521, %cst_172 {dimension_numbers = #tpu.dot_dimension_numbers<[1], [0], [0], [1], [0, 0, 1, 1], [], []>} : vector<48x128xf32>, vector<128x512xf32>, vector<48x512xf32> -> vector<48x512xf32>
    %717 = vector.broadcast %523 : vector<1x512xf32> to vector<48x512xf32>
    %718 = arith.addf %716, %717 : vector<48x512xf32>
    %cst_173 = arith.constant 0.000000e+00 : f32
    %719 = vector.broadcast %cst_173 : f32 to vector<8x128xf32>
    %cst_174 = arith.constant 0.000000e+00 : f32
    %720 = vector.broadcast %cst_174 : f32 to vector<8x128xf32>
    %cst_175 = arith.constant 0.000000e+00 : f32
    %721 = vector.broadcast %cst_175 : f32 to vector<8x128xf32>
    %722 = vector.extract_strided_slice %718 {offsets = [0, 0], sizes = [8, 512], strides = [1, 1]} : vector<48x512xf32> to vector<8x512xf32>
    %cst_176 = arith.constant dense<0.000000e+00> : vector<8x512xf32>
    %723 = tpu.matmul %719, %522, %cst_176 {dimension_numbers = #tpu.dot_dimension_numbers<[1], [0], [0], [1], [0, 0, 1, 1], [], []>} : vector<8x128xf32>, vector<128x512xf32>, vector<8x512xf32> -> vector<8x512xf32>
    %724 = arith.addf %722, %723 : vector<8x512xf32>
    %725 = vector.extract_strided_slice %724 {offsets = [0, 0], sizes = [8, 128], strides = [1, 1]} : vector<8x512xf32> to vector<8x128xf32>
    %726 = arith.negf %725 : vector<8x128xf32>
    %727 = math.exp %726 : vector<8x128xf32>
    %cst_177 = arith.constant 1.000000e+00 : f32
    %728 = vector.broadcast %cst_177 : f32 to vector<8x128xf32>
    %729 = arith.addf %728, %727 : vector<8x128xf32>
    %730 = arith.divf %728, %729 : vector<8x128xf32>
    %731 = vector.extract_strided_slice %724 {offsets = [0, 128], sizes = [8, 128], strides = [1, 1]} : vector<8x512xf32> to vector<8x128xf32>
    %732 = arith.negf %731 : vector<8x128xf32>
    %733 = math.exp %732 : vector<8x128xf32>
    %cst_178 = arith.constant 1.000000e+00 : f32
    %734 = vector.broadcast %cst_178 : f32 to vector<8x128xf32>
    %735 = arith.addf %734, %733 : vector<8x128xf32>
    %736 = arith.divf %734, %735 : vector<8x128xf32>
    %737 = vector.extract_strided_slice %724 {offsets = [0, 256], sizes = [8, 128], strides = [1, 1]} : vector<8x512xf32> to vector<8x128xf32>
    %738 = math.tanh %737 : vector<8x128xf32>
    %739 = vector.extract_strided_slice %724 {offsets = [0, 384], sizes = [8, 128], strides = [1, 1]} : vector<8x512xf32> to vector<8x128xf32>
    %740 = arith.negf %739 : vector<8x128xf32>
    %741 = math.exp %740 : vector<8x128xf32>
    %cst_179 = arith.constant 1.000000e+00 : f32
    %742 = vector.broadcast %cst_179 : f32 to vector<8x128xf32>
    %743 = arith.addf %742, %741 : vector<8x128xf32>
    %744 = arith.divf %742, %743 : vector<8x128xf32>
    %745 = arith.mulf %736, %720 : vector<8x128xf32>
    %746 = arith.mulf %730, %738 : vector<8x128xf32>
    %747 = arith.addf %745, %746 : vector<8x128xf32>
    %748 = math.tanh %747 : vector<8x128xf32>
    %749 = arith.mulf %744, %748 : vector<8x128xf32>
    %cst_180 = arith.constant 0.000000e+00 : f32
    %750 = vector.broadcast %cst_180 : f32 to vector<8x128xf32>
    %751 = arith.maximumf %749, %750 : vector<8x128xf32>
    %752 = arith.addf %721, %751 : vector<8x128xf32>
    %753 = vector.extract_strided_slice %718 {offsets = [8, 0], sizes = [8, 512], strides = [1, 1]} : vector<48x512xf32> to vector<8x512xf32>
    %cst_181 = arith.constant dense<0.000000e+00> : vector<8x512xf32>
    %754 = tpu.matmul %749, %522, %cst_181 {dimension_numbers = #tpu.dot_dimension_numbers<[1], [0], [0], [1], [0, 0, 1, 1], [], []>} : vector<8x128xf32>, vector<128x512xf32>, vector<8x512xf32> -> vector<8x512xf32>
    %755 = arith.addf %753, %754 : vector<8x512xf32>
    %756 = vector.extract_strided_slice %755 {offsets = [0, 0], sizes = [8, 128], strides = [1, 1]} : vector<8x512xf32> to vector<8x128xf32>
    %757 = arith.negf %756 : vector<8x128xf32>
    %758 = math.exp %757 : vector<8x128xf32>
    %cst_182 = arith.constant 1.000000e+00 : f32
    %759 = vector.broadcast %cst_182 : f32 to vector<8x128xf32>
    %760 = arith.addf %759, %758 : vector<8x128xf32>
    %761 = arith.divf %759, %760 : vector<8x128xf32>
    %762 = vector.extract_strided_slice %755 {offsets = [0, 128], sizes = [8, 128], strides = [1, 1]} : vector<8x512xf32> to vector<8x128xf32>
    %763 = arith.negf %762 : vector<8x128xf32>
    %764 = math.exp %763 : vector<8x128xf32>
    %cst_183 = arith.constant 1.000000e+00 : f32
    %765 = vector.broadcast %cst_183 : f32 to vector<8x128xf32>
    %766 = arith.addf %765, %764 : vector<8x128xf32>
    %767 = arith.divf %765, %766 : vector<8x128xf32>
    %768 = vector.extract_strided_slice %755 {offsets = [0, 256], sizes = [8, 128], strides = [1, 1]} : vector<8x512xf32> to vector<8x128xf32>
    %769 = math.tanh %768 : vector<8x128xf32>
    %770 = vector.extract_strided_slice %755 {offsets = [0, 384], sizes = [8, 128], strides = [1, 1]} : vector<8x512xf32> to vector<8x128xf32>
    %771 = arith.negf %770 : vector<8x128xf32>
    %772 = math.exp %771 : vector<8x128xf32>
    %cst_184 = arith.constant 1.000000e+00 : f32
    %773 = vector.broadcast %cst_184 : f32 to vector<8x128xf32>
    %774 = arith.addf %773, %772 : vector<8x128xf32>
    %775 = arith.divf %773, %774 : vector<8x128xf32>
    %776 = arith.mulf %767, %747 : vector<8x128xf32>
    %777 = arith.mulf %761, %769 : vector<8x128xf32>
    %778 = arith.addf %776, %777 : vector<8x128xf32>
    %779 = math.tanh %778 : vector<8x128xf32>
    %780 = arith.mulf %775, %779 : vector<8x128xf32>
    %cst_185 = arith.constant 0.000000e+00 : f32
    %781 = vector.broadcast %cst_185 : f32 to vector<8x128xf32>
    %782 = arith.maximumf %780, %781 : vector<8x128xf32>
    %783 = arith.addf %752, %782 : vector<8x128xf32>
    %784 = vector.extract_strided_slice %718 {offsets = [16, 0], sizes = [8, 512], strides = [1, 1]} : vector<48x512xf32> to vector<8x512xf32>
    %cst_186 = arith.constant dense<0.000000e+00> : vector<8x512xf32>
    %785 = tpu.matmul %780, %522, %cst_186 {dimension_numbers = #tpu.dot_dimension_numbers<[1], [0], [0], [1], [0, 0, 1, 1], [], []>} : vector<8x128xf32>, vector<128x512xf32>, vector<8x512xf32> -> vector<8x512xf32>
    %786 = arith.addf %784, %785 : vector<8x512xf32>
    %787 = vector.extract_strided_slice %786 {offsets = [0, 0], sizes = [8, 128], strides = [1, 1]} : vector<8x512xf32> to vector<8x128xf32>
    %788 = arith.negf %787 : vector<8x128xf32>
    %789 = math.exp %788 : vector<8x128xf32>
    %cst_187 = arith.constant 1.000000e+00 : f32
    %790 = vector.broadcast %cst_187 : f32 to vector<8x128xf32>
    %791 = arith.addf %790, %789 : vector<8x128xf32>
    %792 = arith.divf %790, %791 : vector<8x128xf32>
    %793 = vector.extract_strided_slice %786 {offsets = [0, 128], sizes = [8, 128], strides = [1, 1]} : vector<8x512xf32> to vector<8x128xf32>
    %794 = arith.negf %793 : vector<8x128xf32>
    %795 = math.exp %794 : vector<8x128xf32>
    %cst_188 = arith.constant 1.000000e+00 : f32
    %796 = vector.broadcast %cst_188 : f32 to vector<8x128xf32>
    %797 = arith.addf %796, %795 : vector<8x128xf32>
    %798 = arith.divf %796, %797 : vector<8x128xf32>
    %799 = vector.extract_strided_slice %786 {offsets = [0, 256], sizes = [8, 128], strides = [1, 1]} : vector<8x512xf32> to vector<8x128xf32>
    %800 = math.tanh %799 : vector<8x128xf32>
    %801 = vector.extract_strided_slice %786 {offsets = [0, 384], sizes = [8, 128], strides = [1, 1]} : vector<8x512xf32> to vector<8x128xf32>
    %802 = arith.negf %801 : vector<8x128xf32>
    %803 = math.exp %802 : vector<8x128xf32>
    %cst_189 = arith.constant 1.000000e+00 : f32
    %804 = vector.broadcast %cst_189 : f32 to vector<8x128xf32>
    %805 = arith.addf %804, %803 : vector<8x128xf32>
    %806 = arith.divf %804, %805 : vector<8x128xf32>
    %807 = arith.mulf %798, %778 : vector<8x128xf32>
    %808 = arith.mulf %792, %800 : vector<8x128xf32>
    %809 = arith.addf %807, %808 : vector<8x128xf32>
    %810 = math.tanh %809 : vector<8x128xf32>
    %811 = arith.mulf %806, %810 : vector<8x128xf32>
    %cst_190 = arith.constant 0.000000e+00 : f32
    %812 = vector.broadcast %cst_190 : f32 to vector<8x128xf32>
    %813 = arith.maximumf %811, %812 : vector<8x128xf32>
    %814 = arith.addf %783, %813 : vector<8x128xf32>
    %815 = vector.extract_strided_slice %718 {offsets = [24, 0], sizes = [8, 512], strides = [1, 1]} : vector<48x512xf32> to vector<8x512xf32>
    %cst_191 = arith.constant dense<0.000000e+00> : vector<8x512xf32>
    %816 = tpu.matmul %811, %522, %cst_191 {dimension_numbers = #tpu.dot_dimension_numbers<[1], [0], [0], [1], [0, 0, 1, 1], [], []>} : vector<8x128xf32>, vector<128x512xf32>, vector<8x512xf32> -> vector<8x512xf32>
    %817 = arith.addf %815, %816 : vector<8x512xf32>
    %818 = vector.extract_strided_slice %817 {offsets = [0, 0], sizes = [8, 128], strides = [1, 1]} : vector<8x512xf32> to vector<8x128xf32>
    %819 = arith.negf %818 : vector<8x128xf32>
    %820 = math.exp %819 : vector<8x128xf32>
    %cst_192 = arith.constant 1.000000e+00 : f32
    %821 = vector.broadcast %cst_192 : f32 to vector<8x128xf32>
    %822 = arith.addf %821, %820 : vector<8x128xf32>
    %823 = arith.divf %821, %822 : vector<8x128xf32>
    %824 = vector.extract_strided_slice %817 {offsets = [0, 128], sizes = [8, 128], strides = [1, 1]} : vector<8x512xf32> to vector<8x128xf32>
    %825 = arith.negf %824 : vector<8x128xf32>
    %826 = math.exp %825 : vector<8x128xf32>
    %cst_193 = arith.constant 1.000000e+00 : f32
    %827 = vector.broadcast %cst_193 : f32 to vector<8x128xf32>
    %828 = arith.addf %827, %826 : vector<8x128xf32>
    %829 = arith.divf %827, %828 : vector<8x128xf32>
    %830 = vector.extract_strided_slice %817 {offsets = [0, 256], sizes = [8, 128], strides = [1, 1]} : vector<8x512xf32> to vector<8x128xf32>
    %831 = math.tanh %830 : vector<8x128xf32>
    %832 = vector.extract_strided_slice %817 {offsets = [0, 384], sizes = [8, 128], strides = [1, 1]} : vector<8x512xf32> to vector<8x128xf32>
    %833 = arith.negf %832 : vector<8x128xf32>
    %834 = math.exp %833 : vector<8x128xf32>
    %cst_194 = arith.constant 1.000000e+00 : f32
    %835 = vector.broadcast %cst_194 : f32 to vector<8x128xf32>
    %836 = arith.addf %835, %834 : vector<8x128xf32>
    %837 = arith.divf %835, %836 : vector<8x128xf32>
    %838 = arith.mulf %829, %809 : vector<8x128xf32>
    %839 = arith.mulf %823, %831 : vector<8x128xf32>
    %840 = arith.addf %838, %839 : vector<8x128xf32>
    %841 = math.tanh %840 : vector<8x128xf32>
    %842 = arith.mulf %837, %841 : vector<8x128xf32>
    %cst_195 = arith.constant 0.000000e+00 : f32
    %843 = vector.broadcast %cst_195 : f32 to vector<8x128xf32>
    %844 = arith.maximumf %842, %843 : vector<8x128xf32>
    %845 = arith.addf %814, %844 : vector<8x128xf32>
    %846 = vector.extract_strided_slice %718 {offsets = [32, 0], sizes = [8, 512], strides = [1, 1]} : vector<48x512xf32> to vector<8x512xf32>
    %cst_196 = arith.constant dense<0.000000e+00> : vector<8x512xf32>
    %847 = tpu.matmul %842, %522, %cst_196 {dimension_numbers = #tpu.dot_dimension_numbers<[1], [0], [0], [1], [0, 0, 1, 1], [], []>} : vector<8x128xf32>, vector<128x512xf32>, vector<8x512xf32> -> vector<8x512xf32>
    %848 = arith.addf %846, %847 : vector<8x512xf32>
    %849 = vector.extract_strided_slice %848 {offsets = [0, 0], sizes = [8, 128], strides = [1, 1]} : vector<8x512xf32> to vector<8x128xf32>
    %850 = arith.negf %849 : vector<8x128xf32>
    %851 = math.exp %850 : vector<8x128xf32>
    %cst_197 = arith.constant 1.000000e+00 : f32
    %852 = vector.broadcast %cst_197 : f32 to vector<8x128xf32>
    %853 = arith.addf %852, %851 : vector<8x128xf32>
    %854 = arith.divf %852, %853 : vector<8x128xf32>
    %855 = vector.extract_strided_slice %848 {offsets = [0, 128], sizes = [8, 128], strides = [1, 1]} : vector<8x512xf32> to vector<8x128xf32>
    %856 = arith.negf %855 : vector<8x128xf32>
    %857 = math.exp %856 : vector<8x128xf32>
    %cst_198 = arith.constant 1.000000e+00 : f32
    %858 = vector.broadcast %cst_198 : f32 to vector<8x128xf32>
    %859 = arith.addf %858, %857 : vector<8x128xf32>
    %860 = arith.divf %858, %859 : vector<8x128xf32>
    %861 = vector.extract_strided_slice %848 {offsets = [0, 256], sizes = [8, 128], strides = [1, 1]} : vector<8x512xf32> to vector<8x128xf32>
    %862 = math.tanh %861 : vector<8x128xf32>
    %863 = vector.extract_strided_slice %848 {offsets = [0, 384], sizes = [8, 128], strides = [1, 1]} : vector<8x512xf32> to vector<8x128xf32>
    %864 = arith.negf %863 : vector<8x128xf32>
    %865 = math.exp %864 : vector<8x128xf32>
    %cst_199 = arith.constant 1.000000e+00 : f32
    %866 = vector.broadcast %cst_199 : f32 to vector<8x128xf32>
    %867 = arith.addf %866, %865 : vector<8x128xf32>
    %868 = arith.divf %866, %867 : vector<8x128xf32>
    %869 = arith.mulf %860, %840 : vector<8x128xf32>
    %870 = arith.mulf %854, %862 : vector<8x128xf32>
    %871 = arith.addf %869, %870 : vector<8x128xf32>
    %872 = math.tanh %871 : vector<8x128xf32>
    %873 = arith.mulf %868, %872 : vector<8x128xf32>
    %cst_200 = arith.constant 0.000000e+00 : f32
    %874 = vector.broadcast %cst_200 : f32 to vector<8x128xf32>
    %875 = arith.maximumf %873, %874 : vector<8x128xf32>
    %876 = arith.addf %845, %875 : vector<8x128xf32>
    %877 = vector.extract_strided_slice %718 {offsets = [40, 0], sizes = [8, 512], strides = [1, 1]} : vector<48x512xf32> to vector<8x512xf32>
    %cst_201 = arith.constant dense<0.000000e+00> : vector<8x512xf32>
    %878 = tpu.matmul %873, %522, %cst_201 {dimension_numbers = #tpu.dot_dimension_numbers<[1], [0], [0], [1], [0, 0, 1, 1], [], []>} : vector<8x128xf32>, vector<128x512xf32>, vector<8x512xf32> -> vector<8x512xf32>
    %879 = arith.addf %877, %878 : vector<8x512xf32>
    %880 = vector.extract_strided_slice %879 {offsets = [0, 0], sizes = [8, 128], strides = [1, 1]} : vector<8x512xf32> to vector<8x128xf32>
    %881 = arith.negf %880 : vector<8x128xf32>
    %882 = math.exp %881 : vector<8x128xf32>
    %cst_202 = arith.constant 1.000000e+00 : f32
    %883 = vector.broadcast %cst_202 : f32 to vector<8x128xf32>
    %884 = arith.addf %883, %882 : vector<8x128xf32>
    %885 = arith.divf %883, %884 : vector<8x128xf32>
    %886 = vector.extract_strided_slice %879 {offsets = [0, 128], sizes = [8, 128], strides = [1, 1]} : vector<8x512xf32> to vector<8x128xf32>
    %887 = arith.negf %886 : vector<8x128xf32>
    %888 = math.exp %887 : vector<8x128xf32>
    %cst_203 = arith.constant 1.000000e+00 : f32
    %889 = vector.broadcast %cst_203 : f32 to vector<8x128xf32>
    %890 = arith.addf %889, %888 : vector<8x128xf32>
    %891 = arith.divf %889, %890 : vector<8x128xf32>
    %892 = vector.extract_strided_slice %879 {offsets = [0, 256], sizes = [8, 128], strides = [1, 1]} : vector<8x512xf32> to vector<8x128xf32>
    %893 = math.tanh %892 : vector<8x128xf32>
    %894 = vector.extract_strided_slice %879 {offsets = [0, 384], sizes = [8, 128], strides = [1, 1]} : vector<8x512xf32> to vector<8x128xf32>
    %895 = arith.negf %894 : vector<8x128xf32>
    %896 = math.exp %895 : vector<8x128xf32>
    %cst_204 = arith.constant 1.000000e+00 : f32
    %897 = vector.broadcast %cst_204 : f32 to vector<8x128xf32>
    %898 = arith.addf %897, %896 : vector<8x128xf32>
    %899 = arith.divf %897, %898 : vector<8x128xf32>
    %900 = arith.mulf %891, %871 : vector<8x128xf32>
    %901 = arith.mulf %885, %893 : vector<8x128xf32>
    %902 = arith.addf %900, %901 : vector<8x128xf32>
    %903 = math.tanh %902 : vector<8x128xf32>
    %904 = arith.mulf %899, %903 : vector<8x128xf32>
    %cst_205 = arith.constant 0.000000e+00 : f32
    %905 = vector.broadcast %cst_205 : f32 to vector<8x128xf32>
    %906 = arith.maximumf %904, %905 : vector<8x128xf32>
    %907 = arith.addf %876, %906 : vector<8x128xf32>
    %cst_206 = arith.constant 0.166666672 : f32
    %908 = vector.broadcast %cst_206 : f32 to vector<8x128xf32>
    %909 = arith.mulf %907, %908 : vector<8x128xf32>
    %c0_207 = arith.constant 0 : index
    %c0_208 = arith.constant 0 : index
    %910 = vector.load %arg15[%c0_207, %c0_208] : memref<128x128xf32, #tpu.memory_space<vmem>>, vector<128x128xf32>
    %cst_209 = arith.constant dense<0.000000e+00> : vector<8x128xf32>
    %911 = tpu.matmul %516, %910, %cst_209 {dimension_numbers = #tpu.dot_dimension_numbers<[1], [0], [0], [1], [0, 0, 1, 1], [], []>} : vector<8x128xf32>, vector<128x128xf32>, vector<8x128xf32> -> vector<8x128xf32>
    %c0_210 = arith.constant 0 : index
    %c0_211 = arith.constant 0 : index
    %912 = vector.load %arg16[%c0_210, %c0_211] : memref<128x128xf32, #tpu.memory_space<vmem>>, vector<128x128xf32>
    %cst_212 = arith.constant dense<0.000000e+00> : vector<8x128xf32>
    %913 = tpu.matmul %909, %912, %cst_212 {dimension_numbers = #tpu.dot_dimension_numbers<[1], [0], [0], [1], [0, 0, 1, 1], [], []>} : vector<8x128xf32>, vector<128x128xf32>, vector<8x128xf32> -> vector<8x128xf32>
    %914 = arith.addf %911, %913 : vector<8x128xf32>
    %c0_213 = arith.constant 0 : index
    %c0_214 = arith.constant 0 : index
    %915 = vector.load %arg17[%c0_213, %c0_214] : memref<1x128xf32, #tpu.memory_space<vmem>>, vector<1x128xf32>
    %916 = vector.broadcast %915 : vector<1x128xf32> to vector<8x128xf32>
    %917 = arith.addf %914, %916 : vector<8x128xf32>
    %cst_215 = arith.constant 0.000000e+00 : f32
    %918 = vector.broadcast %cst_215 : f32 to vector<8x128xf32>
    %919 = arith.maximumf %917, %918 : vector<8x128xf32>
    %c0_216 = arith.constant 0 : index
    %c0_217 = arith.constant 0 : index
    %920 = vector.load %arg18[%c0_216, %c0_217] : memref<1x128xf32, #tpu.memory_space<vmem>>, vector<1x128xf32>
    %921 = vector.broadcast %920 : vector<1x128xf32> to vector<8x128xf32>
    %922 = arith.mulf %919, %921 : vector<8x128xf32>
    %cst_218 = arith.constant dense<0.000000e+00> : vector<8xf32>
    %923 = vector.multi_reduction <add>, %922, %cst_218 [1] : vector<8x128xf32> to vector<8xf32>
    %924 = vector.shape_cast %923 : vector<8xf32> to vector<8x1xf32>
    %925 = vector.shape_cast %924 : vector<8x1xf32> to vector<8x1xf32>
    %926 = vector.broadcast %925 : vector<8x1xf32> to vector<8x128xf32>
    %c0_219 = arith.constant 0 : index
    %c0_220 = arith.constant 0 : index
    %927 = vector.load %arg19[%c0_219, %c0_220] : memref<1x128xf32, #tpu.memory_space<vmem>>, vector<1x128xf32>
    %928 = vector.broadcast %927 : vector<1x128xf32> to vector<8x128xf32>
    %929 = arith.addf %926, %928 : vector<8x128xf32>
    %c0_221 = arith.constant 0 : index
    %c0_222 = arith.constant 0 : index
    %930 = vector.load %arg20[%c0_221, %c0_222] : memref<8x128xf32, #tpu.memory_space<vmem>>, vector<8x128xf32>
    tpu.vector_store %arg20[%c0_221, %c0_222], %929 {strides = array<i32>} : memref<8x128xf32, #tpu.memory_space<vmem>>, vector<8x128xf32>,
    return
  }
  func.func @transform_0(%arg0: i32) -> (i32, i32) {
    %c0_i32 = arith.constant 0 : i32
    %c0_i32_0 = arith.constant 0 : i32
    %c0_i32_1 = arith.constant 0 : i32
    return %c0_i32, %c0_i32_0 : i32, i32
  }
  func.func @transform_1(%arg0: i32) -> (i32, i32) {
    %c0_i32 = arith.constant 0 : i32
    %c0_i32_0 = arith.constant 0 : i32
    %c0_i32_1 = arith.constant 0 : i32
    return %c0_i32, %c0_i32_0 : i32, i32
  }
  func.func @transform_2(%arg0: i32) -> (i32, i32) {
    %c0_i32 = arith.constant 0 : i32
    %c0_i32_0 = arith.constant 0 : i32
    %c0_i32_1 = arith.constant 0 : i32
    return %c0_i32, %c0_i32_0 : i32, i32
  }
  func.func @transform_3(%arg0: i32) -> (i32, i32) {
    %c0_i32 = arith.constant 0 : i32
    %c0_i32_0 = arith.constant 0 : i32
    %c0_i32_1 = arith.constant 0 : i32
    return %c0_i32, %c0_i32_0 : i32, i32
  }
  func.func @transform_4(%arg0: i32) -> (i32, i32) {
    %c0_i32 = arith.constant 0 : i32
    %c0_i32_0 = arith.constant 0 : i32
    %c0_i32_1 = arith.constant 0 : i32
    return %c0_i32, %c0_i32_0 : i32, i32
  }
  func.func @transform_5(%arg0: i32) -> (i32, i32) {
    %c0_i32 = arith.constant 0 : i32
    %c0_i32_0 = arith.constant 0 : i32
    %c0_i32_1 = arith.constant 0 : i32
    return %c0_i32, %c0_i32_0 : i32, i32
  }
  func.func @transform_6(%arg0: i32) -> (i32, i32) {
    %c0_i32 = arith.constant 0 : i32
    %c0_i32_0 = arith.constant 0 : i32
    %c0_i32_1 = arith.constant 0 : i32
    return %c0_i32, %c0_i32_0 : i32, i32
  }
  func.func @transform_7(%arg0: i32) -> (i32, i32) {
    %c0_i32 = arith.constant 0 : i32
    %c0_i32_0 = arith.constant 0 : i32
    %c0_i32_1 = arith.constant 0 : i32
    return %c0_i32, %c0_i32_0 : i32, i32
  }
  func.func @transform_8(%arg0: i32) -> (i32, i32) {
    %c0_i32 = arith.constant 0 : i32
    %c0_i32_0 = arith.constant 0 : i32
    %c0_i32_1 = arith.constant 0 : i32
    return %c0_i32, %c0_i32_0 : i32, i32
  }
  func.func @transform_9(%arg0: i32) -> (i32, i32) {
    %c0_i32 = arith.constant 0 : i32
    %c0_i32_0 = arith.constant 0 : i32
    %c0_i32_1 = arith.constant 0 : i32
    return %c0_i32, %c0_i32_0 : i32, i32
  }
  func.func @transform_10(%arg0: i32) -> (i32, i32) {
    %c0_i32 = arith.constant 0 : i32
    %c0_i32_0 = arith.constant 0 : i32
    %c0_i32_1 = arith.constant 0 : i32
    return %c0_i32, %c0_i32_0 : i32, i32
  }
  func.func @transform_11(%arg0: i32) -> (i32, i32) {
    %c0_i32 = arith.constant 0 : i32
    %c0_i32_0 = arith.constant 0 : i32
    %c0_i32_1 = arith.constant 0 : i32
    return %c0_i32, %c0_i32_0 : i32, i32
  }
  func.func @transform_12(%arg0: i32) -> (i32, i32) {
    %c0_i32 = arith.constant 0 : i32
    %c0_i32_0 = arith.constant 0 : i32
    %c0_i32_1 = arith.constant 0 : i32
    return %c0_i32, %c0_i32_0 : i32, i32
  }
  func.func @transform_13(%arg0: i32) -> (i32, i32) {
    %c0_i32 = arith.constant 0 : i32
    %c0_i32_0 = arith.constant 0 : i32
    %c0_i32_1 = arith.constant 0 : i32
    return %c0_i32, %c0_i32_0 : i32, i32
  }
  func.func @transform_14(%arg0: i32) -> (i32, i32) {
    %c0_i32 = arith.constant 0 : i32
    %c0_i32_0 = arith.constant 0 : i32
    %c0_i32_1 = arith.constant 0 : i32
    return %c0_i32, %c0_i32_0 : i32, i32
  }
  func.func @transform_15(%arg0: i32) -> (i32, i32) {
    %c0_i32 = arith.constant 0 : i32
    %c0_i32_0 = arith.constant 0 : i32
    %c0_i32_1 = arith.constant 0 : i32
    return %c0_i32, %c0_i32_0 : i32, i32
  }
  func.func @transform_16(%arg0: i32) -> (i32, i32) {
    %c0_i32 = arith.constant 0 : i32
    %c0_i32_0 = arith.constant 0 : i32
    %c0_i32_1 = arith.constant 0 : i32
    return %c0_i32, %c0_i32_0 : i32, i32
  }
  func.func @transform_17(%arg0: i32) -> (i32, i32) {
    %c0_i32 = arith.constant 0 : i32
    %c0_i32_0 = arith.constant 0 : i32
    %c0_i32_1 = arith.constant 0 : i32
    return %c0_i32, %c0_i32_0 : i32, i32
  }
  func.func @transform_18(%arg0: i32) -> (i32, i32) {
    %c0_i32 = arith.constant 0 : i32
    %c0_i32_0 = arith.constant 0 : i32
    %c0_i32_1 = arith.constant 0 : i32
    return %c0_i32, %c0_i32_0 : i32, i32
  }
  func.func @transform_19(%arg0: i32) -> (i32, i32) {
    %c0_i32 = arith.constant 0 : i32
    %c0_i32_0 = arith.constant 0 : i32
    %c0_i32_1 = arith.constant 0 : i32
    return %c0_i32, %c0_i32_0 : i32, i32
  }
}

</mosaic_0001>

<llo_original>
// kernel: word_sent_regressor.1
$region0: #{word_sent_regressor.1}
  #allocation0 [shape = 'u32[]', space=smem, size = 0x4, offset = 0x4, fixed_abs, tag = 'smem constant byte address 0x4 - core index']
  #allocation1 [shape = 'u32[144,128]{1,0:T(1,128)}', space=vmem, size = 0x12000, scoped, tag = 'internal scratch']
  #allocation2 [shape = 'f32[64,128]{1,0:T(8,128)}', space=vmem, size = 0x8000, scoped, tag = 'scratch operand']
  %s0 = inlined_call_operand.vmem [shape: f32[64,128], index: 0, kind: input, shape index: {}]
  %s1 = inlined_call_operand.vmem [shape: f32[48,128], index: 1, kind: input, shape index: {}]
  %s2 = inlined_call_operand.hbm [shape: f32[128,512], index: 2, kind: input, shape index: {}]
  %s3 = inlined_call_operand.hbm [shape: f32[128,512], index: 3, kind: input, shape index: {}]
  %s4 = inlined_call_operand.vmem [shape: f32[1,512], index: 4, kind: input, shape index: {}]
  %s5 = inlined_call_operand.hbm [shape: f32[128,512], index: 5, kind: input, shape index: {}]
  %s6 = inlined_call_operand.hbm [shape: f32[128,512], index: 6, kind: input, shape index: {}]
  %s7 = inlined_call_operand.hbm [shape: f32[1,512], index: 7, kind: input, shape index: {}]
  %s8 = inlined_call_operand.hbm [shape: f32[128,512], index: 8, kind: input, shape index: {}]
  %s9 = inlined_call_operand.hbm [shape: f32[128,512], index: 9, kind: input, shape index: {}]
  %s10 = inlined_call_operand.vmem [shape: f32[1,512], index: 10, kind: input, shape index: {}]
  %s11 = inlined_call_operand.hbm [shape: f32[128,512], index: 11, kind: input, shape index: {}]
  %s12 = inlined_call_operand.hbm [shape: f32[128,512], index: 12, kind: input, shape index: {}]
  %s13 = inlined_call_operand.vmem [shape: f32[1,512], index: 13, kind: input, shape index: {}]
  %s14 = inlined_call_operand.vmem [shape: f32[128,128], index: 14, kind: input, shape index: {}]
  %s15 = inlined_call_operand.vmem [shape: f32[128,128], index: 15, kind: input, shape index: {}]
  %s16 = inlined_call_operand.vmem [shape: f32[1,128], index: 16, kind: input, shape index: {}]
  %s17 = inlined_call_operand.vmem [shape: f32[1,128], index: 17, kind: input, shape index: {}]
  %s18 = inlined_call_operand.vmem [shape: f32[1,128], index: 18, kind: input, shape index: {}]
  %s19 = inlined_call_operand.vmem [shape: f32[8,128], index: 19, kind: output, shape index: {}]
  %s20 = sld [smem:[#allocation0]]
  $region122: #{word_sent_regressor.1} parent=0
    _
  %s22 = ssub.s32 1, %s20
  %s23 = scalar_select 0, %s22, %s20
  $region1: #{word_sent_regressor.1} parent=0
    #allocation3 [shape = 'u8[262144]{0}', space=vmem, size = 0x40000, scoped, tag = 'input window, operand 2, single buffered']
    #allocation4 [shape = 's32[1]{0}', space=sflag, size = 0x4, scoped, tag = 'scoped memory for word_sent_regressor.1']
    #allocation5 [shape = 'u8[262144]{0}', space=vmem, size = 0x40000, scoped, tag = 'input window, operand 3, single buffered']
    #allocation6 [shape = 's32[1]{0}', space=sflag, size = 0x4, scoped, tag = 'scoped memory for word_sent_regressor.1']
    #allocation7 [shape = 'u8[262144]{0}', space=vmem, size = 0x40000, scoped, tag = 'input window, operand 5, single buffered']
    #allocation8 [shape = 'u8[262144]{0}', space=vmem, size = 0x40000, scoped, tag = 'input window, operand 6, single buffered']
    #allocation9 [shape = 's32[1]{0}', space=sflag, size = 0x4, scoped, tag = 'scoped memory for word_sent_regressor.1']
    #allocation10 [shape = 'u8[2048]{0}', space=vmem, size = 0x800, scoped, tag = 'input window, operand 7, single buffered']
    #allocation11 [shape = 'u8[262144]{0}', space=vmem, size = 0x40000, scoped, tag = 'input window, operand 8, single buffered']
    #allocation12 [shape = 's32[1]{0}', space=sflag, size = 0x4, scoped, tag = 'scoped memory for word_sent_regressor.1']
    #allocation13 [shape = 'u8[262144]{0}', space=vmem, size = 0x40000, scoped, tag = 'input window, operand 9, single buffered']
    #allocation14 [shape = 'u8[262144]{0}', space=vmem, size = 0x40000, scoped, tag = 'input window, operand 11, single buffered']
    #allocation15 [shape = 's32[1]{0}', space=sflag, size = 0x4, scoped, tag = 'scoped memory for word_sent_regressor.1']
    #allocation16 [shape = 'u8[262144]{0}', space=vmem, size = 0x40000, scoped, tag = 'input window, operand 12, single buffered']
    %24 = vsyncpa [#allocation4], 0
    %25 = vsyncpa [#allocation6], 0
    %26 = vsyncpa [#allocation9], 0
    %27 = vsyncpa [#allocation12], 0
    %28 = vsyncpa [#allocation15], 0
    // Predicated region
    $region2: #{word_sent_regressor.1} parent=1 // pred_check
      _
    $region3: #{word_sent_regressor.1} parent=1 // pred_check_branch
      %30 = sbr.rel (0) target = $region5
    $region4: #{word_sent_regressor.1} parent=1 // pred_region
      _
    $region5: #{word_sent_regressor.1} parent=1 // pred_fallthru
      _
    // Predicated region
    $region6: #{word_sent_regressor.1} parent=1 // pred_check
      _
    $region7: #{word_sent_regressor.1} parent=1 // pred_check_branch
      %32 = sbr.rel (0) target = $region9
    $region8: #{word_sent_regressor.1} parent=1 // pred_region
      _
    $region9: #{word_sent_regressor.1} parent=1 // pred_fallthru
      _
    // Predicated region
    $region10: #{word_sent_regressor.1} parent=1 // pred_check
      _
    $region11: #{word_sent_regressor.1} parent=1 // pred_check_branch
      %34 = sbr.rel (0) target = $region13
    $region12: #{word_sent_regressor.1} parent=1 // pred_region
      %s36 = ssub.s32 8192, 8192
      %37 = vsyncadd [#allocation4], %s36
      %s38 = sshll.u32 [#allocation3], 4
      %s39 = int_to_ptr.vmem [resolvable:$true] %s38
      %44 = dma.hbm_to_vmem [thread:$0]  %s2, 8192, %s39, [#allocation4], 512, 512, 32
    $region13: #{word_sent_regressor.1} parent=1 // pred_fallthru
      _
    // Predicated region
    $region14: #{word_sent_regressor.1} parent=1 // pred_check
      _
    $region15: #{word_sent_regressor.1} parent=1 // pred_check_branch
      %46 = sbr.rel (0) target = $region17
    $region16: #{word_sent_regressor.1} parent=1 // pred_region
      %s48 = ssub.s32 8192, 8192
      %49 = vsyncadd [#allocation6], %s48
      %s50 = sshll.u32 [#allocation5], 4
      %s51 = int_to_ptr.vmem [resolvable:$true] %s50
      %56 = dma.hbm_to_vmem [thread:$0]  %s3, 8192, %s51, [#allocation6], 512, 512, 32
    $region17: #{word_sent_regressor.1} parent=1 // pred_fallthru
      _
    // Predicated region
    $region18: #{word_sent_regressor.1} parent=1 // pred_check
      _
    $region19: #{word_sent_regressor.1} parent=1 // pred_check_branch
      %58 = sbr.rel (0) target = $region21
    $region20: #{word_sent_regressor.1} parent=1 // pred_region
      _
    $region21: #{word_sent_regressor.1} parent=1 // pred_fallthru
      _
    // Predicated region
    $region22: #{word_sent_regressor.1} parent=1 // pred_check
      _
    $region23: #{word_sent_regressor.1} parent=1 // pred_check_branch
      %60 = sbr.rel (0) target = $region25
    $region24: #{word_sent_regressor.1} parent=1 // pred_region
      %s62 = ssub.s32 8192, 8192
      %63 = vsyncadd [#allocation6], %s62
      %s64 = sshll.u32 [#allocation7], 4
      %s65 = int_to_ptr.vmem [resolvable:$true] %s64
      %70 = dma.hbm_to_vmem [thread:$0]  %s5, 8192, %s65, [#allocation6], 512, 512, 32
    $region25: #{word_sent_regressor.1} parent=1 // pred_fallthru
      _
    // Predicated region
    $region26: #{word_sent_regressor.1} parent=1 // pred_check
      _
    $region27: #{word_sent_regressor.1} parent=1 // pred_check_branch
      %72 = sbr.rel (0) target = $region29
    $region28: #{word_sent_regressor.1} parent=1 // pred_region
      %s74 = ssub.s32 8192, 8192
      %75 = vsyncadd [#allocation9], %s74
      %s76 = sshll.u32 [#allocation8], 4
      %s77 = int_to_ptr.vmem [resolvable:$true] %s76
      %82 = dma.hbm_to_vmem [thread:$0]  %s6, 8192, %s77, [#allocation9], 512, 512, 32
    $region29: #{word_sent_regressor.1} parent=1 // pred_fallthru
      _
    // Predicated region
    $region30: #{word_sent_regressor.1} parent=1 // pred_check
      _
    $region31: #{word_sent_regressor.1} parent=1 // pred_check_branch
      %84 = sbr.rel (0) target = $region33
    $region32: #{word_sent_regressor.1} parent=1 // pred_region
      %s86 = ssub.s32 64, 64
      %87 = vsyncadd [#allocation9], %s86
      %s89 = sshll.u32 [#allocation10], 4
      %s90 = int_to_ptr.vmem [resolvable:$true] %s89
      %92 = dma.hbm_to_vmem [thread:$0]  %s7, 64, %s90, [#allocation9]
    $region33: #{word_sent_regressor.1} parent=1 // pred_fallthru
      _
    // Predicated region
    $region34: #{word_sent_regressor.1} parent=1 // pred_check
      _
    $region35: #{word_sent_regressor.1} parent=1 // pred_check_branch
      %94 = sbr.rel (0) target = $region37
    $region36: #{word_sent_regressor.1} parent=1 // pred_region
      %s96 = ssub.s32 8192, 8192
      %97 = vsyncadd [#allocation12], %s96
      %s98 = sshll.u32 [#allocation11], 4
      %s99 = int_to_ptr.vmem [resolvable:$true] %s98
      %104 = dma.hbm_to_vmem [thread:$0]  %s8, 8192, %s99, [#allocation12], 512, 512, 32
    $region37: #{word_sent_regressor.1} parent=1 // pred_fallthru
      _
    // Predicated region
    $region38: #{word_sent_regressor.1} parent=1 // pred_check
      _
    $region39: #{word_sent_regressor.1} parent=1 // pred_check_branch
      %106 = sbr.rel (0) target = $region41
    $region40: #{word_sent_regressor.1} parent=1 // pred_region
      %s108 = ssub.s32 8192, 8192
      %109 = vsyncadd [#allocation12], %s108
      %s110 = sshll.u32 [#allocation13], 4
      %s111 = int_to_ptr.vmem [resolvable:$true] %s110
      %116 = dma.hbm_to_vmem [thread:$0]  %s9, 8192, %s111, [#allocation12], 512, 512, 32
    $region41: #{word_sent_regressor.1} parent=1 // pred_fallthru
      _
    // Predicated region
    $region42: #{word_sent_regressor.1} parent=1 // pred_check
      _
    $region43: #{word_sent_regressor.1} parent=1 // pred_check_branch
      %118 = sbr.rel (0) target = $region45
    $region44: #{word_sent_regressor.1} parent=1 // pred_region
      _
    $region45: #{word_sent_regressor.1} parent=1 // pred_fallthru
      _
    // Predicated region
    $region46: #{word_sent_regressor.1} parent=1 // pred_check
      _
    $region47: #{word_sent_regressor.1} parent=1 // pred_check_branch
      %120 = sbr.rel (0) target = $region49
    $region48: #{word_sent_regressor.1} parent=1 // pred_region
      %s122 = ssub.s32 8192, 8192
      %123 = vsyncadd [#allocation15], %s122
      %s124 = sshll.u32 [#allocation14], 4
      %s125 = int_to_ptr.vmem [resolvable:$true] %s124
      %130 = dma.hbm_to_vmem [thread:$0]  %s11, 8192, %s125, [#allocation15], 512, 512, 32
    $region49: #{word_sent_regressor.1} parent=1 // pred_fallthru
      _
    // Predicated region
    $region50: #{word_sent_regressor.1} parent=1 // pred_check
      _
    $region51: #{word_sent_regressor.1} parent=1 // pred_check_branch
      %132 = sbr.rel (0) target = $region53
    $region52: #{word_sent_regressor.1} parent=1 // pred_region
      %s134 = ssub.s32 8192, 8192
      %135 = vsyncadd [#allocation15], %s134
      %s136 = sshll.u32 [#allocation16], 4
      %s137 = int_to_ptr.vmem [resolvable:$true] %s136
      %142 = dma.hbm_to_vmem [thread:$0]  %s12, 8192, %s137, [#allocation15], 512, 512, 32
    $region53: #{word_sent_regressor.1} parent=1 // pred_fallthru
      _
    // Predicated region
    $region54: #{word_sent_regressor.1} parent=1 // pred_check
      _
    $region55: #{word_sent_regressor.1} parent=1 // pred_check_branch
      %144 = sbr.rel (0) target = $region57
    $region56: #{word_sent_regressor.1} parent=1 // pred_region
      _
    $region57: #{word_sent_regressor.1} parent=1 // pred_fallthru
      _
    // Predicated region
    $region58: #{word_sent_regressor.1} parent=1 // pred_check
      _
    $region59: #{word_sent_regressor.1} parent=1 // pred_check_branch
      %146 = sbr.rel (0) target = $region61
    $region60: #{word_sent_regressor.1} parent=1 // pred_region
      _
    $region61: #{word_sent_regressor.1} parent=1 // pred_fallthru
      _
    // Predicated region
    $region62: #{word_sent_regressor.1} parent=1 // pred_check
      _
    $region63: #{word_sent_regressor.1} parent=1 // pred_check_branch
      %148 = sbr.rel (0) target = $region65
    $region64: #{word_sent_regressor.1} parent=1 // pred_region
      _
    $region65: #{word_sent_regressor.1} parent=1 // pred_fallthru
      _
    // Predicated region
    $region66: #{word_sent_regressor.1} parent=1 // pred_check
      _
    $region67: #{word_sent_regressor.1} parent=1 // pred_check_branch
      %150 = sbr.rel (0) target = $region69
    $region68: #{word_sent_regressor.1} parent=1 // pred_region
      _
    $region69: #{word_sent_regressor.1} parent=1 // pred_fallthru
      _
    // Predicated region
    $region70: #{word_sent_regressor.1} parent=1 // pred_check
      _
    $region71: #{word_sent_regressor.1} parent=1 // pred_check_branch
      %152 = sbr.rel (0) target = $region73
    $region72: #{word_sent_regressor.1} parent=1 // pred_region
      _
    $region73: #{word_sent_regressor.1} parent=1 // pred_fallthru
      _
    // Predicated region
    $region74: #{word_sent_regressor.1} parent=1 // pred_check
      _
    $region75: #{word_sent_regressor.1} parent=1 // pred_check_branch
      %154 = sbr.rel (0) target = $region77
    $region76: #{word_sent_regressor.1} parent=1 // pred_region
      _
    $region77: #{word_sent_regressor.1} parent=1 // pred_fallthru
      _
    // Predicated region
    $region78: #{word_sent_regressor.1} parent=1 // pred_check
      _
    $region79: #{word_sent_regressor.1} parent=1 // pred_check_branch
      %156 = sbr.rel (0) target = $region81
    $region80: #{word_sent_regressor.1} parent=1 // pred_region
      %157 = dma.done [#allocation4], 8192
    $region81: #{word_sent_regressor.1} parent=1 // pred_fallthru
      _
    // Predicated region
    $region82: #{word_sent_regressor.1} parent=1 // pred_check
      _
    $region83: #{word_sent_regressor.1} parent=1 // pred_check_branch
      %159 = sbr.rel (0) target = $region85
    $region84: #{word_sent_regressor.1} parent=1 // pred_region
      %160 = dma.done [#allocation6], 8192
    $region85: #{word_sent_regressor.1} parent=1 // pred_fallthru
      _
    // Predicated region
    $region86: #{word_sent_regressor.1} parent=1 // pred_check
      _
    $region87: #{word_sent_regressor.1} parent=1 // pred_check_branch
      %162 = sbr.rel (0) target = $region89
    $region88: #{word_sent_regressor.1} parent=1 // pred_region
      %163 = dma.done [#allocation6], 8192
    $region89: #{word_sent_regressor.1} parent=1 // pred_fallthru
      _
    // Predicated region
    $region90: #{word_sent_regressor.1} parent=1 // pred_check
      _
    $region91: #{word_sent_regressor.1} parent=1 // pred_check_branch
      %165 = sbr.rel (0) target = $region93
    $region92: #{word_sent_regressor.1} parent=1 // pred_region
      %166 = dma.done [#allocation9], 8192
    $region93: #{word_sent_regressor.1} parent=1 // pred_fallthru
      _
    // Predicated region
    $region94: #{word_sent_regressor.1} parent=1 // pred_check
      _
    $region95: #{word_sent_regressor.1} parent=1 // pred_check_branch
      %168 = sbr.rel (0) target = $region97
    $region96: #{word_sent_regressor.1} parent=1 // pred_region
      %169 = dma.done [#allocation9], 64
    $region97: #{word_sent_regressor.1} parent=1 // pred_fallthru
      _
    // Predicated region
    $region98: #{word_sent_regressor.1} parent=1 // pred_check
      _
    $region99: #{word_sent_regressor.1} parent=1 // pred_check_branch
      %171 = sbr.rel (0) target = $region101
    $region100: #{word_sent_regressor.1} parent=1 // pred_region
      %172 = dma.done [#allocation12], 8192
    $region101: #{word_sent_regressor.1} parent=1 // pred_fallthru
      _
    // Predicated region
    $region102: #{word_sent_regressor.1} parent=1 // pred_check
      _
    $region103: #{word_sent_regressor.1} parent=1 // pred_check_branch
      %174 = sbr.rel (0) target = $region105
    $region104: #{word_sent_regressor.1} parent=1 // pred_region
      %175 = dma.done [#allocation12], 8192
    $region105: #{word_sent_regressor.1} parent=1 // pred_fallthru
      _
    // Predicated region
    $region106: #{word_sent_regressor.1} parent=1 // pred_check
      _
    $region107: #{word_sent_regressor.1} parent=1 // pred_check_branch
      %177 = sbr.rel (0) target = $region109
    $region108: #{word_sent_regressor.1} parent=1 // pred_region
      %178 = dma.done [#allocation15], 8192
    $region109: #{word_sent_regressor.1} parent=1 // pred_fallthru
      _
    // Predicated region
    $region110: #{word_sent_regressor.1} parent=1 // pred_check
      _
    $region111: #{word_sent_regressor.1} parent=1 // pred_check_branch
      %180 = sbr.rel (0) target = $region113
    $region112: #{word_sent_regressor.1} parent=1 // pred_region
      %181 = dma.done [#allocation15], 8192
    $region113: #{word_sent_regressor.1} parent=1 // pred_fallthru
      _
    %v182 = vld [vmem:[%s0] sm:$0xff]
    %v183 = vld [vmem:[%s0 + $0x8] sm:$0xff]
    %v184 = vld [vmem:[%s0 + $0x10] sm:$0xff]
    %v185 = vld [vmem:[%s0 + $0x18] sm:$0xff]
    %v186 = vld [vmem:[%s0 + $0x20] sm:$0xff]
    %v187 = vld [vmem:[%s0 + $0x28] sm:$0xff]
    %v188 = vld [vmem:[%s0 + $0x30] sm:$0xff]
    %v189 = vld [vmem:[%s0 + $0x38] sm:$0xff]
    %v190 = vld [vmem:[#allocation3] sm:$0xff]
    %v191 = vld [vmem:[#allocation3 + $0x8] sm:$0xff]
    %v192 = vld [vmem:[#allocation3 + $0x10] sm:$0xff]
    %v193 = vld [vmem:[#allocation3 + $0x18] sm:$0xff]
    %v194 = vld [vmem:[#allocation3 + $0x20] sm:$0xff]
    %v195 = vld [vmem:[#allocation3 + $0x28] sm:$0xff]
    %v196 = vld [vmem:[#allocation3 + $0x30] sm:$0xff]
    %v197 = vld [vmem:[#allocation3 + $0x38] sm:$0xff]
    %v198 = vld [vmem:[#allocation3 + $0x40] sm:$0xff]
    %v199 = vld [vmem:[#allocation3 + $0x48] sm:$0xff]
    %v200 = vld [vmem:[#allocation3 + $0x50] sm:$0xff]
    %v201 = vld [vmem:[#allocation3 + $0x58] sm:$0xff]
    %v202 = vld [vmem:[#allocation3 + $0x60] sm:$0xff]
    %v203 = vld [vmem:[#allocation3 + $0x68] sm:$0xff]
    %v204 = vld [vmem:[#allocation3 + $0x70] sm:$0xff]
    %v205 = vld [vmem:[#allocation3 + $0x78] sm:$0xff]
    %v206 = vld [vmem:[#allocation3 + $0x80] sm:$0xff]
    %v207 = vld [vmem:[#allocation3 + $0x88] sm:$0xff]
    %v208 = vld [vmem:[#allocation3 + $0x90] sm:$0xff]
    %v209 = vld [vmem:[#allocation3 + $0x98] sm:$0xff]
    %v210 = vld [vmem:[#allocation3 + $0xa0] sm:$0xff]
    %v211 = vld [vmem:[#allocation3 + $0xa8] sm:$0xff]
    %v212 = vld [vmem:[#allocation3 + $0xb0] sm:$0xff]
    %v213 = vld [vmem:[#allocation3 + $0xb8] sm:$0xff]
    %v214 = vld [vmem:[#allocation3 + $0xc0] sm:$0xff]
    %v215 = vld [vmem:[#allocation3 + $0xc8] sm:$0xff]
    %v216 = vld [vmem:[#allocation3 + $0xd0] sm:$0xff]
    %v217 = vld [vmem:[#allocation3 + $0xd8] sm:$0xff]
    %v218 = vld [vmem:[#allocation3 + $0xe0] sm:$0xff]
    %v219 = vld [vmem:[#allocation3 + $0xe8] sm:$0xff]
    %v220 = vld [vmem:[#allocation3 + $0xf0] sm:$0xff]
    %v221 = vld [vmem:[#allocation3 + $0xf8] sm:$0xff]
    %v222 = vld [vmem:[#allocation3 + $0x100] sm:$0xff]
    %v223 = vld [vmem:[#allocation3 + $0x108] sm:$0xff]
    %v224 = vld [vmem:[#allocation3 + $0x110] sm:$0xff]
    %v225 = vld [vmem:[#allocation3 + $0x118] sm:$0xff]
    %v226 = vld [vmem:[#allocation3 + $0x120] sm:$0xff]
    %v227 = vld [vmem:[#allocation3 + $0x128] sm:$0xff]
    %v228 = vld [vmem:[#allocation3 + $0x130] sm:$0xff]
    %v229 = vld [vmem:[#allocation3 + $0x138] sm:$0xff]
    %v230 = vld [vmem:[#allocation3 + $0x140] sm:$0xff]
    %v231 = vld [vmem:[#allocation3 + $0x148] sm:$0xff]
    %v232 = vld [vmem:[#allocation3 + $0x150] sm:$0xff]
    %v233 = vld [vmem:[#allocation3 + $0x158] sm:$0xff]
    %v234 = vld [vmem:[#allocation3 + $0x160] sm:$0xff]
    %v235 = vld [vmem:[#allocation3 + $0x168] sm:$0xff]
    %v236 = vld [vmem:[#allocation3 + $0x170] sm:$0xff]
    %v237 = vld [vmem:[#allocation3 + $0x178] sm:$0xff]
    %v238 = vld [vmem:[#allocation3 + $0x180] sm:$0xff]
    %v239 = vld [vmem:[#allocation3 + $0x188] sm:$0xff]
    %v240 = vld [vmem:[#allocation3 + $0x190] sm:$0xff]
    %v241 = vld [vmem:[#allocation3 + $0x198] sm:$0xff]
    %v242 = vld [vmem:[#allocation3 + $0x1a0] sm:$0xff]
    %v243 = vld [vmem:[#allocation3 + $0x1a8] sm:$0xff]
    %v244 = vld [vmem:[#allocation3 + $0x1b0] sm:$0xff]
    %v245 = vld [vmem:[#allocation3 + $0x1b8] sm:$0xff]
    %v246 = vld [vmem:[#allocation3 + $0x1c0] sm:$0xff]
    %v247 = vld [vmem:[#allocation3 + $0x1c8] sm:$0xff]
    %v248 = vld [vmem:[#allocation3 + $0x1d0] sm:$0xff]
    %v249 = vld [vmem:[#allocation3 + $0x1d8] sm:$0xff]
    %v250 = vld [vmem:[#allocation3 + $0x1e0] sm:$0xff]
    %v251 = vld [vmem:[#allocation3 + $0x1e8] sm:$0xff]
    %v252 = vld [vmem:[#allocation3 + $0x1f0] sm:$0xff]
    %v253 = vld [vmem:[#allocation3 + $0x1f8] sm:$0xff]
    %v254 = vld [vmem:[#allocation5] sm:$0xff]
    %v255 = vld [vmem:[#allocation5 + $0x8] sm:$0xff]
    %v256 = vld [vmem:[#allocation5 + $0x10] sm:$0xff]
    %v257 = vld [vmem:[#allocation5 + $0x18] sm:$0xff]
    %v258 = vld [vmem:[#allocation5 + $0x20] sm:$0xff]
    %v259 = vld [vmem:[#allocation5 + $0x28] sm:$0xff]
    %v260 = vld [vmem:[#allocation5 + $0x30] sm:$0xff]
    %v261 = vld [vmem:[#allocation5 + $0x38] sm:$0xff]
    %v262 = vld [vmem:[#allocation5 + $0x40] sm:$0xff]
    %v263 = vld [vmem:[#allocation5 + $0x48] sm:$0xff]
    %v264 = vld [vmem:[#allocation5 + $0x50] sm:$0xff]
    %v265 = vld [vmem:[#allocation5 + $0x58] sm:$0xff]
    %v266 = vld [vmem:[#allocation5 + $0x60] sm:$0xff]
    %v267 = vld [vmem:[#allocation5 + $0x68] sm:$0xff]
    %v268 = vld [vmem:[#allocation5 + $0x70] sm:$0xff]
    %v269 = vld [vmem:[#allocation5 + $0x78] sm:$0xff]
    %v270 = vld [vmem:[#allocation5 + $0x80] sm:$0xff]
    %v271 = vld [vmem:[#allocation5 + $0x88] sm:$0xff]
    %v272 = vld [vmem:[#allocation5 + $0x90] sm:$0xff]
    %v273 = vld [vmem:[#allocation5 + $0x98] sm:$0xff]
    %v274 = vld [vmem:[#allocation5 + $0xa0] sm:$0xff]
    %v275 = vld [vmem:[#allocation5 + $0xa8] sm:$0xff]
    %v276 = vld [vmem:[#allocation5 + $0xb0] sm:$0xff]
    %v277 = vld [vmem:[#allocation5 + $0xb8] sm:$0xff]
    %v278 = vld [vmem:[#allocation5 + $0xc0] sm:$0xff]
    %v279 = vld [vmem:[#allocation5 + $0xc8] sm:$0xff]
    %v280 = vld [vmem:[#allocation5 + $0xd0] sm:$0xff]
    %v281 = vld [vmem:[#allocation5 + $0xd8] sm:$0xff]
    %v282 = vld [vmem:[#allocation5 + $0xe0] sm:$0xff]
    %v283 = vld [vmem:[#allocation5 + $0xe8] sm:$0xff]
    %v284 = vld [vmem:[#allocation5 + $0xf0] sm:$0xff]
    %v285 = vld [vmem:[#allocation5 + $0xf8] sm:$0xff]
    %v286 = vld [vmem:[#allocation5 + $0x100] sm:$0xff]
    %v287 = vld [vmem:[#allocation5 + $0x108] sm:$0xff]
    %v288 = vld [vmem:[#allocation5 + $0x110] sm:$0xff]
    %v289 = vld [vmem:[#allocation5 + $0x118] sm:$0xff]
    %v290 = vld [vmem:[#allocation5 + $0x120] sm:$0xff]
    %v291 = vld [vmem:[#allocation5 + $0x128] sm:$0xff]
    %v292 = vld [vmem:[#allocation5 + $0x130] sm:$0xff]
    %v293 = vld [vmem:[#allocation5 + $0x138] sm:$0xff]
    %v294 = vld [vmem:[#allocation5 + $0x140] sm:$0xff]
    %v295 = vld [vmem:[#allocation5 + $0x148] sm:$0xff]
    %v296 = vld [vmem:[#allocation5 + $0x150] sm:$0xff]
    %v297 = vld [vmem:[#allocation5 + $0x158] sm:$0xff]
    %v298 = vld [vmem:[#allocation5 + $0x160] sm:$0xff]
    %v299 = vld [vmem:[#allocation5 + $0x168] sm:$0xff]
    %v300 = vld [vmem:[#allocation5 + $0x170] sm:$0xff]
    %v301 = vld [vmem:[#allocation5 + $0x178] sm:$0xff]
    %v302 = vld [vmem:[#allocation5 + $0x180] sm:$0xff]
    %v303 = vld [vmem:[#allocation5 + $0x188] sm:$0xff]
    %v304 = vld [vmem:[#allocation5 + $0x190] sm:$0xff]
    %v305 = vld [vmem:[#allocation5 + $0x198] sm:$0xff]
    %v306 = vld [vmem:[#allocation5 + $0x1a0] sm:$0xff]
    %v307 = vld [vmem:[#allocation5 + $0x1a8] sm:$0xff]
    %v308 = vld [vmem:[#allocation5 + $0x1b0] sm:$0xff]
    %v309 = vld [vmem:[#allocation5 + $0x1b8] sm:$0xff]
    %v310 = vld [vmem:[#allocation5 + $0x1c0] sm:$0xff]
    %v311 = vld [vmem:[#allocation5 + $0x1c8] sm:$0xff]
    %v312 = vld [vmem:[#allocation5 + $0x1d0] sm:$0xff]
    %v313 = vld [vmem:[#allocation5 + $0x1d8] sm:$0xff]
    %v314 = vld [vmem:[#allocation5 + $0x1e0] sm:$0xff]
    %v315 = vld [vmem:[#allocation5 + $0x1e8] sm:$0xff]
    %v316 = vld [vmem:[#allocation5 + $0x1f0] sm:$0xff]
    %v317 = vld [vmem:[#allocation5 + $0x1f8] sm:$0xff]
    %v318 = vld [vmem:[%s4] sm:$0xf]
    %v319 = vld [vmem:[#allocation7] sm:$0xff]
    %v320 = vld [vmem:[#allocation7 + $0x8] sm:$0xff]
    %v321 = vld [vmem:[#allocation7 + $0x10] sm:$0xff]
    %v322 = vld [vmem:[#allocation7 + $0x18] sm:$0xff]
    %v323 = vld [vmem:[#allocation7 + $0x20] sm:$0xff]
    %v324 = vld [vmem:[#allocation7 + $0x28] sm:$0xff]
    %v325 = vld [vmem:[#allocation7 + $0x30] sm:$0xff]
    %v326 = vld [vmem:[#allocation7 + $0x38] sm:$0xff]
    %v327 = vld [vmem:[#allocation7 + $0x40] sm:$0xff]
    %v328 = vld [vmem:[#allocation7 + $0x48] sm:$0xff]
    %v329 = vld [vmem:[#allocation7 + $0x50] sm:$0xff]
    %v330 = vld [vmem:[#allocation7 + $0x58] sm:$0xff]
    %v331 = vld [vmem:[#allocation7 + $0x60] sm:$0xff]
    %v332 = vld [vmem:[#allocation7 + $0x68] sm:$0xff]
    %v333 = vld [vmem:[#allocation7 + $0x70] sm:$0xff]
    %v334 = vld [vmem:[#allocation7 + $0x78] sm:$0xff]
    %v335 = vld [vmem:[#allocation7 + $0x80] sm:$0xff]
    %v336 = vld [vmem:[#allocation7 + $0x88] sm:$0xff]
    %v337 = vld [vmem:[#allocation7 + $0x90] sm:$0xff]
    %v338 = vld [vmem:[#allocation7 + $0x98] sm:$0xff]
    %v339 = vld [vmem:[#allocation7 + $0xa0] sm:$0xff]
    %v340 = vld [vmem:[#allocation7 + $0xa8] sm:$0xff]
    %v341 = vld [vmem:[#allocation7 + $0xb0] sm:$0xff]
    %v342 = vld [vmem:[#allocation7 + $0xb8] sm:$0xff]
    %v343 = vld [vmem:[#allocation7 + $0xc0] sm:$0xff]
    %v344 = vld [vmem:[#allocation7 + $0xc8] sm:$0xff]
    %v345 = vld [vmem:[#allocation7 + $0xd0] sm:$0xff]
    %v346 = vld [vmem:[#allocation7 + $0xd8] sm:$0xff]
    %v347 = vld [vmem:[#allocation7 + $0xe0] sm:$0xff]
    %v348 = vld [vmem:[#allocation7 + $0xe8] sm:$0xff]
    %v349 = vld [vmem:[#allocation7 + $0xf0] sm:$0xff]
    %v350 = vld [vmem:[#allocation7 + $0xf8] sm:$0xff]
    %v351 = vld [vmem:[#allocation7 + $0x100] sm:$0xff]
    %v352 = vld [vmem:[#allocation7 + $0x108] sm:$0xff]
    %v353 = vld [vmem:[#allocation7 + $0x110] sm:$0xff]
    %v354 = vld [vmem:[#allocation7 + $0x118] sm:$0xff]
    %v355 = vld [vmem:[#allocation7 + $0x120] sm:$0xff]
    %v356 = vld [vmem:[#allocation7 + $0x128] sm:$0xff]
    %v357 = vld [vmem:[#allocation7 + $0x130] sm:$0xff]
    %v358 = vld [vmem:[#allocation7 + $0x138] sm:$0xff]
    %v359 = vld [vmem:[#allocation7 + $0x140] sm:$0xff]
    %v360 = vld [vmem:[#allocation7 + $0x148] sm:$0xff]
    %v361 = vld [vmem:[#allocation7 + $0x150] sm:$0xff]
    %v362 = vld [vmem:[#allocation7 + $0x158] sm:$0xff]
    %v363 = vld [vmem:[#allocation7 + $0x160] sm:$0xff]
    %v364 = vld [vmem:[#allocation7 + $0x168] sm:$0xff]
    %v365 = vld [vmem:[#allocation7 + $0x170] sm:$0xff]
    %v366 = vld [vmem:[#allocation7 + $0x178] sm:$0xff]
    %v367 = vld [vmem:[#allocation7 + $0x180] sm:$0xff]
    %v368 = vld [vmem:[#allocation7 + $0x188] sm:$0xff]
    %v369 = vld [vmem:[#allocation7 + $0x190] sm:$0xff]
    %v370 = vld [vmem:[#allocation7 + $0x198] sm:$0xff]
    %v371 = vld [vmem:[#allocation7 + $0x1a0] sm:$0xff]
    %v372 = vld [vmem:[#allocation7 + $0x1a8] sm:$0xff]
    %v373 = vld [vmem:[#allocation7 + $0x1b0] sm:$0xff]
    %v374 = vld [vmem:[#allocation7 + $0x1b8] sm:$0xff]
    %v375 = vld [vmem:[#allocation7 + $0x1c0] sm:$0xff]
    %v376 = vld [vmem:[#allocation7 + $0x1c8] sm:$0xff]
    %v377 = vld [vmem:[#allocation7 + $0x1d0] sm:$0xff]
    %v378 = vld [vmem:[#allocation7 + $0x1d8] sm:$0xff]
    %v379 = vld [vmem:[#allocation7 + $0x1e0] sm:$0xff]
    %v380 = vld [vmem:[#allocation7 + $0x1e8] sm:$0xff]
    %v381 = vld [vmem:[#allocation7 + $0x1f0] sm:$0xff]
    %v382 = vld [vmem:[#allocation7 + $0x1f8] sm:$0xff]
    %v383 = vld [vmem:[#allocation8] sm:$0xff]
    %v384 = vld [vmem:[#allocation8 + $0x8] sm:$0xff]
    %v385 = vld [vmem:[#allocation8 + $0x10] sm:$0xff]
    %v386 = vld [vmem:[#allocation8 + $0x18] sm:$0xff]
    %v387 = vld [vmem:[#allocation8 + $0x20] sm:$0xff]
    %v388 = vld [vmem:[#allocation8 + $0x28] sm:$0xff]
    %v389 = vld [vmem:[#allocation8 + $0x30] sm:$0xff]
    %v390 = vld [vmem:[#allocation8 + $0x38] sm:$0xff]
    %v391 = vld [vmem:[#allocation8 + $0x40] sm:$0xff]
    %v392 = vld [vmem:[#allocation8 + $0x48] sm:$0xff]
    %v393 = vld [vmem:[#allocation8 + $0x50] sm:$0xff]
    %v394 = vld [vmem:[#allocation8 + $0x58] sm:$0xff]
    %v395 = vld [vmem:[#allocation8 + $0x60] sm:$0xff]
    %v396 = vld [vmem:[#allocation8 + $0x68] sm:$0xff]
    %v397 = vld [vmem:[#allocation8 + $0x70] sm:$0xff]
    %v398 = vld [vmem:[#allocation8 + $0x78] sm:$0xff]
    %v399 = vld [vmem:[#allocation8 + $0x80] sm:$0xff]
    %v400 = vld [vmem:[#allocation8 + $0x88] sm:$0xff]
    %v401 = vld [vmem:[#allocation8 + $0x90] sm:$0xff]
    %v402 = vld [vmem:[#allocation8 + $0x98] sm:$0xff]
    %v403 = vld [vmem:[#allocation8 + $0xa0] sm:$0xff]
    %v404 = vld [vmem:[#allocation8 + $0xa8] sm:$0xff]
    %v405 = vld [vmem:[#allocation8 + $0xb0] sm:$0xff]
    %v406 = vld [vmem:[#allocation8 + $0xb8] sm:$0xff]
    %v407 = vld [vmem:[#allocation8 + $0xc0] sm:$0xff]
    %v408 = vld [vmem:[#allocation8 + $0xc8] sm:$0xff]
    %v409 = vld [vmem:[#allocation8 + $0xd0] sm:$0xff]
    %v410 = vld [vmem:[#allocation8 + $0xd8] sm:$0xff]
    %v411 = vld [vmem:[#allocation8 + $0xe0] sm:$0xff]
    %v412 = vld [vmem:[#allocation8 + $0xe8] sm:$0xff]
    %v413 = vld [vmem:[#allocation8 + $0xf0] sm:$0xff]
    %v414 = vld [vmem:[#allocation8 + $0xf8] sm:$0xff]
    %v415 = vld [vmem:[#allocation8 + $0x100] sm:$0xff]
    %v416 = vld [vmem:[#allocation8 + $0x108] sm:$0xff]
    %v417 = vld [vmem:[#allocation8 + $0x110] sm:$0xff]
    %v418 = vld [vmem:[#allocation8 + $0x118] sm:$0xff]
    %v419 = vld [vmem:[#allocation8 + $0x120] sm:$0xff]
    %v420 = vld [vmem:[#allocation8 + $0x128] sm:$0xff]
    %v421 = vld [vmem:[#allocation8 + $0x130] sm:$0xff]
    %v422 = vld [vmem:[#allocation8 + $0x138] sm:$0xff]
    %v423 = vld [vmem:[#allocation8 + $0x140] sm:$0xff]
    %v424 = vld [vmem:[#allocation8 + $0x148] sm:$0xff]
    %v425 = vld [vmem:[#allocation8 + $0x150] sm:$0xff]
    %v426 = vld [vmem:[#allocation8 + $0x158] sm:$0xff]
    %v427 = vld [vmem:[#allocation8 + $0x160] sm:$0xff]
    %v428 = vld [vmem:[#allocation8 + $0x168] sm:$0xff]
    %v429 = vld [vmem:[#allocation8 + $0x170] sm:$0xff]
    %v430 = vld [vmem:[#allocation8 + $0x178] sm:$0xff]
    %v431 = vld [vmem:[#allocation8 + $0x180] sm:$0xff]
    %v432 = vld [vmem:[#allocation8 + $0x188] sm:$0xff]
    %v433 = vld [vmem:[#allocation8 + $0x190] sm:$0xff]
    %v434 = vld [vmem:[#allocation8 + $0x198] sm:$0xff]
    %v435 = vld [vmem:[#allocation8 + $0x1a0] sm:$0xff]
    %v436 = vld [vmem:[#allocation8 + $0x1a8] sm:$0xff]
    %v437 = vld [vmem:[#allocation8 + $0x1b0] sm:$0xff]
    %v438 = vld [vmem:[#allocation8 + $0x1b8] sm:$0xff]
    %v439 = vld [vmem:[#allocation8 + $0x1c0] sm:$0xff]
    %v440 = vld [vmem:[#allocation8 + $0x1c8] sm:$0xff]
    %v441 = vld [vmem:[#allocation8 + $0x1d0] sm:$0xff]
    %v442 = vld [vmem:[#allocation8 + $0x1d8] sm:$0xff]
    %v443 = vld [vmem:[#allocation8 + $0x1e0] sm:$0xff]
    %v444 = vld [vmem:[#allocation8 + $0x1e8] sm:$0xff]
    %v445 = vld [vmem:[#allocation8 + $0x1f0] sm:$0xff]
    %v446 = vld [vmem:[#allocation8 + $0x1f8] sm:$0xff]
    %v447 = vld [vmem:[#allocation10] sm:$0xf]
    %v449 = vlaneseq
    %v450 = vshrl.u32 %v449, 7
    %v451 = vsub.s32 0, %v450
    %v452 = vrot.slane %v318, %v451
    %v453 = vlaneseq
    %v454 = vshrl.u32 %v453, 7
    %v455 = vsub.s32 1, %v454
    %v456 = vrot.slane %v318, %v455
    %v457 = vlaneseq
    %v458 = vshrl.u32 %v457, 7
    %v459 = vsub.s32 2, %v458
    %v460 = vrot.slane %v318, %v459
    %v461 = vlaneseq
    %v462 = vshrl.u32 %v461, 7
    %v463 = vsub.s32 3, %v462
    %v464 = vrot.slane %v318, %v463
    %469 = vmatprep.subr.mxu0 %v191
    %470 = vmatpush1.msra.mxu0 %v190
    %471 = vmatprep.subr.mxu0 %v195
    %472 = vmatpush1.msra.mxu0 %v194
    %473 = vmatprep.subr.mxu0 %v199
    %474 = vmatpush1.msra.mxu0 %v198
    %475 = vmatprep.subr.mxu0 %v203
    %476 = vmatpush1.msra.mxu0 %v202
    %477 = vmatprep.subr.mxu0 %v207
    %478 = vmatpush1.msra.mxu0 %v206
    %479 = vmatprep.subr.mxu0 %v211
    %480 = vmatpush1.msra.mxu0 %v210
    %481 = vmatprep.subr.mxu0 %v215
    %482 = vmatpush1.msra.mxu0 %v214
    %483 = vmatprep.subr.mxu0 %v219
    %484 = vmatpush1.msra.mxu0 %v218
    %485 = vmatprep.subr.mxu0 %v223
    %486 = vmatpush1.msra.mxu0 %v222
    %487 = vmatprep.subr.mxu0 %v227
    %488 = vmatpush1.msra.mxu0 %v226
    %489 = vmatprep.subr.mxu0 %v231
    %490 = vmatpush1.msra.mxu0 %v230
    %491 = vmatprep.subr.mxu0 %v235
    %492 = vmatpush1.msra.mxu0 %v234
    %493 = vmatprep.subr.mxu0 %v239
    %494 = vmatpush1.msra.mxu0 %v238
    %495 = vmatprep.subr.mxu0 %v243
    %496 = vmatpush1.msra.mxu0 %v242
    %497 = vmatprep.subr.mxu0 %v247
    %498 = vmatpush1.msra.mxu0 %v246
    %499 = vmatprep.subr.mxu0 %v251
    %500 = vmatpush1.msra.mxu0 %v250
    %501 = vmatprep.subr.mxu0 0.0
    %502 = vmatpush1.msra.mxu0 0.0
    %503 = vmatprep.subr.mxu0 0.0
    %504 = vmatpush1.msra.mxu0 0.0
    %505 = vmatprep.subr.mxu0 0.0
    %506 = vmatpush1.msra.mxu0 0.0
    %507 = vmatprep.subr.mxu0 0.0
    %508 = vmatpush1.msra.mxu0 0.0
    %509 = vmatprep.subr.mxu0 0.0
    %510 = vmatpush1.msra.mxu0 0.0
    %511 = vmatprep.subr.mxu0 0.0
    %512 = vmatpush1.msra.mxu0 0.0
    %513 = vmatprep.subr.mxu0 0.0
    %514 = vmatpush1.msra.mxu0 0.0
    %515 = vmatprep.subr.mxu0 0.0
    %516 = vmatpush1.msra.mxu0 0.0
    %517 = vmatprep.subr.mxu0 0.0
    %518 = vmatpush1.msra.mxu0 0.0
    %519 = vmatprep.subr.mxu0 0.0
    %520 = vmatpush1.msra.mxu0 0.0
    %521 = vmatprep.subr.mxu0 0.0
    %522 = vmatpush1.msra.mxu0 0.0
    %523 = vmatprep.subr.mxu0 0.0
    %524 = vmatpush1.msra.mxu0 0.0
    %525 = vmatprep.subr.mxu0 0.0
    %526 = vmatpush1.msra.mxu0 0.0
    %527 = vmatprep.subr.mxu0 0.0
    %528 = vmatpush1.msra.mxu0 0.0
    %529 = vmatprep.subr.mxu0 0.0
    %530 = vmatpush1.msra.mxu0 0.0
    %531 = vmatprep.subr.mxu0 0.0
    %532 = vmatpush1.msra.mxu0 0.0
    %533 = vmatprep.mubr.f32.mxu0 0.0
    %534 = vmatmul.mubr.f32.gmra.mrb[0].mxu0 %v182
    %v535 = vpop.f32.mrb[0].mxu0
    %v536 = vadd.f32 %v452, %v535
    %v537 = vpop.f32.mrb[0].mxu0
    %v538 = vadd.f32 %v456, %v537
    %539 = vmatprep.mubr.f32.mxu0 0.0
    %540 = vmatmul.mubr.f32.gmra.mrb[0].mxu0 %v183
    %v541 = vpop.f32.mrb[0].mxu0
    %v542 = vadd.f32 %v452, %v541
    %v543 = vpop.f32.mrb[0].mxu0
    %v544 = vadd.f32 %v456, %v543
    %545 = vmatprep.mubr.f32.mxu0 0.0
    %546 = vmatmul.mubr.f32.gmra.mrb[0].mxu0 %v184
    %v547 = vpop.f32.mrb[0].mxu0
    %v548 = vadd.f32 %v452, %v547
    %v549 = vpop.f32.mrb[0].mxu0
    %v550 = vadd.f32 %v456, %v549
    %551 = vmatprep.mubr.f32.mxu0 0.0
    %552 = vmatmul.mubr.f32.gmra.mrb[0].mxu0 %v185
    %v553 = vpop.f32.mrb[0].mxu0
    %v554 = vadd.f32 %v452, %v553
    %v555 = vpop.f32.mrb[0].mxu0
    %v556 = vadd.f32 %v456, %v555
    %557 = vmatprep.mubr.f32.mxu0 0.0
    %558 = vmatmul.mubr.f32.gmra.mrb[0].mxu0 %v186
    %v559 = vpop.f32.mrb[0].mxu0
    %v560 = vadd.f32 %v452, %v559
    %v561 = vpop.f32.mrb[0].mxu0
    %v562 = vadd.f32 %v456, %v561
    %563 = vmatprep.mubr.f32.mxu0 0.0
    %564 = vmatmul.mubr.f32.gmra.mrb[0].mxu0 %v187
    %v565 = vpop.f32.mrb[0].mxu0
    %v566 = vadd.f32 %v452, %v565
    %v567 = vpop.f32.mrb[0].mxu0
    %v568 = vadd.f32 %v456, %v567
    %569 = vmatprep.mubr.f32.mxu0 0.0
    %570 = vmatmul.mubr.f32.gmra.mrb[0].mxu0 %v188
    %v571 = vpop.f32.mrb[0].mxu0
    %v572 = vadd.f32 %v452, %v571
    %v573 = vpop.f32.mrb[0].mxu0
    %v574 = vadd.f32 %v456, %v573
    %575 = vmatprep.mubr.f32.mxu0 0.0
    %576 = vmatmul.mubr.f32.gmra.mrb[0].mxu0 %v189
    %v577 = vpop.f32.mrb[0].mxu0
    %v578 = vadd.f32 %v452, %v577
    %v579 = vpop.f32.mrb[0].mxu0
    %v580 = vadd.f32 %v456, %v579
    %581 = vdwg.mxu0
    %582 = vmatprep.subr.mxu0 %v193
    %583 = vmatpush1.msra.mxu0 %v192
    %584 = vmatprep.subr.mxu0 %v197
    %585 = vmatpush1.msra.mxu0 %v196
    %586 = vmatprep.subr.mxu0 %v201
    %587 = vmatpush1.msra.mxu0 %v200
    %588 = vmatprep.subr.mxu0 %v205
    %589 = vmatpush1.msra.mxu0 %v204
    %590 = vmatprep.subr.mxu0 %v209
    %591 = vmatpush1.msra.mxu0 %v208
    %592 = vmatprep.subr.mxu0 %v213
    %593 = vmatpush1.msra.mxu0 %v212
    %594 = vmatprep.subr.mxu0 %v217
    %595 = vmatpush1.msra.mxu0 %v216
    %596 = vmatprep.subr.mxu0 %v221
    %597 = vmatpush1.msra.mxu0 %v220
    %598 = vmatprep.subr.mxu0 %v225
    %599 = vmatpush1.msra.mxu0 %v224
    %600 = vmatprep.subr.mxu0 %v229
    %601 = vmatpush1.msra.mxu0 %v228
    %602 = vmatprep.subr.mxu0 %v233
    %603 = vmatpush1.msra.mxu0 %v232
    %604 = vmatprep.subr.mxu0 %v237
    %605 = vmatpush1.msra.mxu0 %v236
    %606 = vmatprep.subr.mxu0 %v241
    %607 = vmatpush1.msra.mxu0 %v240
    %608 = vmatprep.subr.mxu0 %v245
    %609 = vmatpush1.msra.mxu0 %v244
    %610 = vmatprep.subr.mxu0 %v249
    %611 = vmatpush1.msra.mxu0 %v248
    %612 = vmatprep.subr.mxu0 %v253
    %613 = vmatpush1.msra.mxu0 %v252
    %614 = vmatprep.subr.mxu0 0.0
    %615 = vmatpush1.msra.mxu0 0.0
    %616 = vmatprep.subr.mxu0 0.0
    %617 = vmatpush1.msra.mxu0 0.0
    %618 = vmatprep.subr.mxu0 0.0
    %619 = vmatpush1.msra.mxu0 0.0
    %620 = vmatprep.subr.mxu0 0.0
    %621 = vmatpush1.msra.mxu0 0.0
    %622 = vmatprep.subr.mxu0 0.0
    %623 = vmatpush1.msra.mxu0 0.0
    %624 = vmatprep.subr.mxu0 0.0
    %625 = vmatpush1.msra.mxu0 0.0
    %626 = vmatprep.subr.mxu0 0.0
    %627 = vmatpush1.msra.mxu0 0.0
    %628 = vmatprep.subr.mxu0 0.0
    %629 = vmatpush1.msra.mxu0 0.0
    %630 = vmatprep.subr.mxu0 0.0
    %631 = vmatpush1.msra.mxu0 0.0
    %632 = vmatprep.subr.mxu0 0.0
    %633 = vmatpush1.msra.mxu0 0.0
    %634 = vmatprep.subr.mxu0 0.0
    %635 = vmatpush1.msra.mxu0 0.0
    %636 = vmatprep.subr.mxu0 0.0
    %637 = vmatpush1.msra.mxu0 0.0
    %638 = vmatprep.subr.mxu0 0.0
    %639 = vmatpush1.msra.mxu0 0.0
    %640 = vmatprep.subr.mxu0 0.0
    %641 = vmatpush1.msra.mxu0 0.0
    %642 = vmatprep.subr.mxu0 0.0
    %643 = vmatpush1.msra.mxu0 0.0
    %644 = vmatprep.subr.mxu0 0.0
    %645 = vmatpush1.msra.mxu0 0.0
    %646 = vmatprep.mubr.f32.mxu0 0.0
    %647 = vmatmul.mubr.f32.gmra.mrb[0].mxu0 %v182
    %v648 = vpop.f32.mrb[0].mxu0
    %v649 = vadd.f32 %v460, %v648
    %v650 = vpop.f32.mrb[0].mxu0
    %v651 = vadd.f32 %v464, %v650
    %652 = vmatprep.mubr.f32.mxu0 0.0
    %653 = vmatmul.mubr.f32.gmra.mrb[0].mxu0 %v183
    %v654 = vpop.f32.mrb[0].mxu0
    %v655 = vadd.f32 %v460, %v654
    %v656 = vpop.f32.mrb[0].mxu0
    %v657 = vadd.f32 %v464, %v656
    %658 = vmatprep.mubr.f32.mxu0 0.0
    %659 = vmatmul.mubr.f32.gmra.mrb[0].mxu0 %v184
    %v660 = vpop.f32.mrb[0].mxu0
    %v661 = vadd.f32 %v460, %v660
    %v662 = vpop.f32.mrb[0].mxu0
    %v663 = vadd.f32 %v464, %v662
    %664 = vmatprep.mubr.f32.mxu0 0.0
    %665 = vmatmul.mubr.f32.gmra.mrb[0].mxu0 %v185
    %v666 = vpop.f32.mrb[0].mxu0
    %v667 = vadd.f32 %v460, %v666
    %v668 = vpop.f32.mrb[0].mxu0
    %v669 = vadd.f32 %v464, %v668
    %670 = vmatprep.mubr.f32.mxu0 0.0
    %671 = vmatmul.mubr.f32.gmra.mrb[0].mxu0 %v186
    %v672 = vpop.f32.mrb[0].mxu0
    %v673 = vadd.f32 %v460, %v672
    %v674 = vpop.f32.mrb[0].mxu0
    %v675 = vadd.f32 %v464, %v674
    %676 = vmatprep.mubr.f32.mxu0 0.0
    %677 = vmatmul.mubr.f32.gmra.mrb[0].mxu0 %v187
    %v678 = vpop.f32.mrb[0].mxu0
    %v679 = vadd.f32 %v460, %v678
    %v680 = vpop.f32.mrb[0].mxu0
    %v681 = vadd.f32 %v464, %v680
    %682 = vmatprep.mubr.f32.mxu0 0.0
    %683 = vmatmul.mubr.f32.gmra.mrb[0].mxu0 %v188
    %v684 = vpop.f32.mrb[0].mxu0
    %v685 = vadd.f32 %v460, %v684
    %v686 = vpop.f32.mrb[0].mxu0
    %v687 = vadd.f32 %v464, %v686
    %688 = vmatprep.mubr.f32.mxu0 0.0
    %689 = vmatmul.mubr.f32.gmra.mrb[0].mxu0 %v189
    %v690 = vpop.f32.mrb[0].mxu0
    %v691 = vadd.f32 %v460, %v690
    %v692 = vpop.f32.mrb[0].mxu0
    %v693 = vadd.f32 %v464, %v692
    %694 = vdwg.mxu0
    %695 = vmatprep.subr.mxu0 %v255
    %696 = vmatpush1.msra.mxu0 %v254
    %697 = vmatprep.subr.mxu0 %v259
    %698 = vmatpush1.msra.mxu0 %v258
    %699 = vmatprep.subr.mxu0 %v263
    %700 = vmatpush1.msra.mxu0 %v262
    %701 = vmatprep.subr.mxu0 %v267
    %702 = vmatpush1.msra.mxu0 %v266
    %703 = vmatprep.subr.mxu0 %v271
    %704 = vmatpush1.msra.mxu0 %v270
    %705 = vmatprep.subr.mxu0 %v275
    %706 = vmatpush1.msra.mxu0 %v274
    %707 = vmatprep.subr.mxu0 %v279
    %708 = vmatpush1.msra.mxu0 %v278
    %709 = vmatprep.subr.mxu0 %v283
    %710 = vmatpush1.msra.mxu0 %v282
    %711 = vmatprep.subr.mxu0 %v287
    %712 = vmatpush1.msra.mxu0 %v286
    %713 = vmatprep.subr.mxu0 %v291
    %714 = vmatpush1.msra.mxu0 %v290
    %715 = vmatprep.subr.mxu0 %v295
    %716 = vmatpush1.msra.mxu0 %v294
    %717 = vmatprep.subr.mxu0 %v299
    %718 = vmatpush1.msra.mxu0 %v298
    %719 = vmatprep.subr.mxu0 %v303
    %720 = vmatpush1.msra.mxu0 %v302
    %721 = vmatprep.subr.mxu0 %v307
    %722 = vmatpush1.msra.mxu0 %v306
    %723 = vmatprep.subr.mxu0 %v311
    %724 = vmatpush1.msra.mxu0 %v310
    %725 = vmatprep.subr.mxu0 %v315
    %726 = vmatpush1.msra.mxu0 %v314
    %727 = vmatprep.subr.mxu0 0.0
    %728 = vmatpush1.msra.mxu0 0.0
    %729 = vmatprep.subr.mxu0 0.0
    %730 = vmatpush1.msra.mxu0 0.0
    %731 = vmatprep.subr.mxu0 0.0
    %732 = vmatpush1.msra.mxu0 0.0
    %733 = vmatprep.subr.mxu0 0.0
    %734 = vmatpush1.msra.mxu0 0.0
    %735 = vmatprep.subr.mxu0 0.0
    %736 = vmatpush1.msra.mxu0 0.0
    %737 = vmatprep.subr.mxu0 0.0
    %738 = vmatpush1.msra.mxu0 0.0
    %739 = vmatprep.subr.mxu0 0.0
    %740 = vmatpush1.msra.mxu0 0.0
    %741 = vmatprep.subr.mxu0 0.0
    %742 = vmatpush1.msra.mxu0 0.0
    %743 = vmatprep.subr.mxu0 0.0
    %744 = vmatpush1.msra.mxu0 0.0
    %745 = vmatprep.subr.mxu0 0.0
    %746 = vmatpush1.msra.mxu0 0.0
    %747 = vmatprep.subr.mxu0 0.0
    %748 = vmatpush1.msra.mxu0 0.0
    %749 = vmatprep.subr.mxu0 0.0
    %750 = vmatpush1.msra.mxu0 0.0
    %751 = vmatprep.subr.mxu0 0.0
    %752 = vmatpush1.msra.mxu0 0.0
    %753 = vmatprep.subr.mxu0 0.0
    %754 = vmatpush1.msra.mxu0 0.0
    %755 = vmatprep.subr.mxu0 0.0
    %756 = vmatpush1.msra.mxu0 0.0
    %757 = vmatprep.subr.mxu0 0.0
    %758 = vmatpush1.msra.mxu0 0.0
    %759 = vmatprep.mubr.f32.mxu0 0.0
    %760 = vmatmul.mubr.f32.gmra.mrb[0].mxu0 0.0
    %v761 = vpop.f32.mrb[0].mxu0
    %v762 = vadd.f32 0.0, %v761
    %v763 = vpop.f32.mrb[0].mxu0
    %v764 = vadd.f32 0.0, %v763
    %765 = vdwg.mxu0
    %766 = vmatprep.subr.mxu0 %v257
    %767 = vmatpush1.msra.mxu0 %v256
    %768 = vmatprep.subr.mxu0 %v261
    %769 = vmatpush1.msra.mxu0 %v260
    %770 = vmatprep.subr.mxu0 %v265
    %771 = vmatpush1.msra.mxu0 %v264
    %772 = vmatprep.subr.mxu0 %v269
    %773 = vmatpush1.msra.mxu0 %v268
    %774 = vmatprep.subr.mxu0 %v273
    %775 = vmatpush1.msra.mxu0 %v272
    %776 = vmatprep.subr.mxu0 %v277
    %777 = vmatpush1.msra.mxu0 %v276
    %778 = vmatprep.subr.mxu0 %v281
    %779 = vmatpush1.msra.mxu0 %v280
    %780 = vmatprep.subr.mxu0 %v285
    %781 = vmatpush1.msra.mxu0 %v284
    %782 = vmatprep.subr.mxu0 %v289
    %783 = vmatpush1.msra.mxu0 %v288
    %784 = vmatprep.subr.mxu0 %v293
    %785 = vmatpush1.msra.mxu0 %v292
    %786 = vmatprep.subr.mxu0 %v297
    %787 = vmatpush1.msra.mxu0 %v296
    %788 = vmatprep.subr.mxu0 %v301
    %789 = vmatpush1.msra.mxu0 %v300
    %790 = vmatprep.subr.mxu0 %v305
    %791 = vmatpush1.msra.mxu0 %v304
    %792 = vmatprep.subr.mxu0 %v309
    %793 = vmatpush1.msra.mxu0 %v308
    %794 = vmatprep.subr.mxu0 %v313
    %795 = vmatpush1.msra.mxu0 %v312
    %796 = vmatprep.subr.mxu0 %v317
    %797 = vmatpush1.msra.mxu0 %v316
    %798 = vmatprep.subr.mxu0 0.0
    %799 = vmatpush1.msra.mxu0 0.0
    %800 = vmatprep.subr.mxu0 0.0
    %801 = vmatpush1.msra.mxu0 0.0
    %802 = vmatprep.subr.mxu0 0.0
    %803 = vmatpush1.msra.mxu0 0.0
    %804 = vmatprep.subr.mxu0 0.0
    %805 = vmatpush1.msra.mxu0 0.0
    %806 = vmatprep.subr.mxu0 0.0
    %807 = vmatpush1.msra.mxu0 0.0
    %808 = vmatprep.subr.mxu0 0.0
    %809 = vmatpush1.msra.mxu0 0.0
    %810 = vmatprep.subr.mxu0 0.0
    %811 = vmatpush1.msra.mxu0 0.0
    %812 = vmatprep.subr.mxu0 0.0
    %813 = vmatpush1.msra.mxu0 0.0
    %814 = vmatprep.subr.mxu0 0.0
    %815 = vmatpush1.msra.mxu0 0.0
    %816 = vmatprep.subr.mxu0 0.0
    %817 = vmatpush1.msra.mxu0 0.0
    %818 = vmatprep.subr.mxu0 0.0
    %819 = vmatpush1.msra.mxu0 0.0
    %820 = vmatprep.subr.mxu0 0.0
    %821 = vmatpush1.msra.mxu0 0.0
    %822 = vmatprep.subr.mxu0 0.0
    %823 = vmatpush1.msra.mxu0 0.0
    %824 = vmatprep.subr.mxu0 0.0
    %825 = vmatpush1.msra.mxu0 0.0
    %826 = vmatprep.subr.mxu0 0.0
    %827 = vmatpush1.msra.mxu0 0.0
    %828 = vmatprep.subr.mxu0 0.0
    %829 = vmatpush1.msra.mxu0 0.0
    %830 = vmatprep.mubr.f32.mxu0 0.0
    %831 = vmatmul.mubr.f32.gmra.mrb[0].mxu0 0.0
    %v832 = vpop.f32.mrb[0].mxu0
    %v833 = vadd.f32 0.0, %v832
    %v834 = vpop.f32.mrb[0].mxu0
    %v835 = vadd.f32 0.0, %v834
    %836 = vdwg.mxu0
    %v837 = vadd.f32 %v536, %v762
    %v838 = vadd.f32 %v538, %v764
    %v839 = vadd.f32 %v649, %v833
    %v840 = vadd.f32 %v651, %v835
    %v841 = vxor.u32 %v837, 2147483648
    %v842 = vmul.f32 %v841, 1.442695
    %v843 = vpow.pop %v842
    %v844 = vadd.f32 %v843, 1.0
    %v845 = vrcp.pop %v844
    %v846 = vmul.f32 1.0, %v845
    %v847 = vxor.u32 %v838, 2147483648
    %v848 = vmul.f32 %v847, 1.442695
    %v849 = vpow.pop %v848
    %v850 = vadd.f32 %v849, 1.0
    %v851 = vrcp.pop %v850
    %v852 = vmul.f32 1.0, %v851
    %v853 = vtanh.pop %v839
    %v854 = vxor.u32 %v840, 2147483648
    %v855 = vmul.f32 %v854, 1.442695
    %v856 = vpow.pop %v855
    %v857 = vadd.f32 %v856, 1.0
    %v858 = vrcp.pop %v857
    %v859 = vmul.f32 1.0, %v858
    %v860 = vmul.f32 %v852, 0.0
    %v861 = vmul.f32 %v846, %v853
    %v862 = vadd.f32 %v860, %v861
    %v863 = vtanh.pop %v862
    %v864 = vmul.f32 %v859, %v863
    %v865 = vmax.f32 %v864, 0.0
    %866 = vst [vmem:[#allocation2] sm:$0xff] %v865
    %867 = vmatprep.subr.mxu0 %v255
    %868 = vmatpush1.msra.mxu0 %v254
    %869 = vmatprep.subr.mxu0 %v259
    %870 = vmatpush1.msra.mxu0 %v258
    %871 = vmatprep.subr.mxu0 %v263
    %872 = vmatpush1.msra.mxu0 %v262
    %873 = vmatprep.subr.mxu0 %v267
    %874 = vmatpush1.msra.mxu0 %v266
    %875 = vmatprep.subr.mxu0 %v271
    %876 = vmatpush1.msra.mxu0 %v270
    %877 = vmatprep.subr.mxu0 %v275
    %878 = vmatpush1.msra.mxu0 %v274
    %879 = vmatprep.subr.mxu0 %v279
    %880 = vmatpush1.msra.mxu0 %v278
    %881 = vmatprep.subr.mxu0 %v283
    %882 = vmatpush1.msra.mxu0 %v282
    %883 = vmatprep.subr.mxu0 %v287
    %884 = vmatpush1.msra.mxu0 %v286
    %885 = vmatprep.subr.mxu0 %v291
    %886 = vmatpush1.msra.mxu0 %v290
    %887 = vmatprep.subr.mxu0 %v295
    %888 = vmatpush1.msra.mxu0 %v294
    %889 = vmatprep.subr.mxu0 %v299
    %890 = vmatpush1.msra.mxu0 %v298
    %891 = vmatprep.subr.mxu0 %v303
    %892 = vmatpush1.msra.mxu0 %v302
    %893 = vmatprep.subr.mxu0 %v307
    %894 = vmatpush1.msra.mxu0 %v306
    %895 = vmatprep.subr.mxu0 %v311
    %896 = vmatpush1.msra.mxu0 %v310
    %897 = vmatprep.subr.mxu0 %v315
    %898 = vmatpush1.msra.mxu0 %v314
    %899 = vmatprep.subr.mxu0 0.0
    %900 = vmatpush1.msra.mxu0 0.0
    %901 = vmatprep.subr.mxu0 0.0
    %902 = vmatpush1.msra.mxu0 0.0
    %903 = vmatprep.subr.mxu0 0.0
    %904 = vmatpush1.msra.mxu0 0.0
    %905 = vmatprep.subr.mxu0 0.0
    %906 = vmatpush1.msra.mxu0 0.0
    %907 = vmatprep.subr.mxu0 0.0
    %908 = vmatpush1.msra.mxu0 0.0
    %909 = vmatprep.subr.mxu0 0.0
    %910 = vmatpush1.msra.mxu0 0.0
    %911 = vmatprep.subr.mxu0 0.0
    %912 = vmatpush1.msra.mxu0 0.0
    %913 = vmatprep.subr.mxu0 0.0
    %914 = vmatpush1.msra.mxu0 0.0
    %915 = vmatprep.subr.mxu0 0.0
    %916 = vmatpush1.msra.mxu0 0.0
    %917 = vmatprep.subr.mxu0 0.0
    %918 = vmatpush1.msra.mxu0 0.0
    %919 = vmatprep.subr.mxu0 0.0
    %920 = vmatpush1.msra.mxu0 0.0
    %921 = vmatprep.subr.mxu0 0.0
    %922 = vmatpush1.msra.mxu0 0.0
    %923 = vmatprep.subr.mxu0 0.0
    %924 = vmatpush1.msra.mxu0 0.0
    %925 = vmatprep.subr.mxu0 0.0
    %926 = vmatpush1.msra.mxu0 0.0
    %927 = vmatprep.subr.mxu0 0.0
    %928 = vmatpush1.msra.mxu0 0.0
    %929 = vmatprep.subr.mxu0 0.0
    %930 = vmatpush1.msra.mxu0 0.0
    %931 = vmatprep.mubr.f32.mxu0 0.0
    %932 = vmatmul.mubr.f32.gmra.mrb[0].mxu0 %v864
    %v933 = vpop.f32.mrb[0].mxu0
    %v934 = vadd.f32 0.0, %v933
    %v935 = vpop.f32.mrb[0].mxu0
    %v936 = vadd.f32 0.0, %v935
    %937 = vdwg.mxu0
    %938 = vmatprep.subr.mxu0 %v257
    %939 = vmatpush1.msra.mxu0 %v256
    %940 = vmatprep.subr.mxu0 %v261
    %941 = vmatpush1.msra.mxu0 %v260
    %942 = vmatprep.subr.mxu0 %v265
    %943 = vmatpush1.msra.mxu0 %v264
    %944 = vmatprep.subr.mxu0 %v269
    %945 = vmatpush1.msra.mxu0 %v268
    %946 = vmatprep.subr.mxu0 %v273
    %947 = vmatpush1.msra.mxu0 %v272
    %948 = vmatprep.subr.mxu0 %v277
    %949 = vmatpush1.msra.mxu0 %v276
    %950 = vmatprep.subr.mxu0 %v281
    %951 = vmatpush1.msra.mxu0 %v280
    %952 = vmatprep.subr.mxu0 %v285
    %953 = vmatpush1.msra.mxu0 %v284
    %954 = vmatprep.subr.mxu0 %v289
    %955 = vmatpush1.msra.mxu0 %v288
    %956 = vmatprep.subr.mxu0 %v293
    %957 = vmatpush1.msra.mxu0 %v292
    %958 = vmatprep.subr.mxu0 %v297
    %959 = vmatpush1.msra.mxu0 %v296
    %960 = vmatprep.subr.mxu0 %v301
    %961 = vmatpush1.msra.mxu0 %v300
    %962 = vmatprep.subr.mxu0 %v305
    %963 = vmatpush1.msra.mxu0 %v304
    %964 = vmatprep.subr.mxu0 %v309
    %965 = vmatpush1.msra.mxu0 %v308
    %966 = vmatprep.subr.mxu0 %v313
    %967 = vmatpush1.msra.mxu0 %v312
    %968 = vmatprep.subr.mxu0 %v317
    %969 = vmatpush1.msra.mxu0 %v316
    %970 = vmatprep.subr.mxu0 0.0
    %971 = vmatpush1.msra.mxu0 0.0
    %972 = vmatprep.subr.mxu0 0.0
    %973 = vmatpush1.msra.mxu0 0.0
    %974 = vmatprep.subr.mxu0 0.0
    %975 = vmatpush1.msra.mxu0 0.0
    %976 = vmatprep.subr.mxu0 0.0
    %977 = vmatpush1.msra.mxu0 0.0
    %978 = vmatprep.subr.mxu0 0.0
    %979 = vmatpush1.msra.mxu0 0.0
    %980 = vmatprep.subr.mxu0 0.0
    %981 = vmatpush1.msra.mxu0 0.0
    %982 = vmatprep.subr.mxu0 0.0
    %983 = vmatpush1.msra.mxu0 0.0
    %984 = vmatprep.subr.mxu0 0.0
    %985 = vmatpush1.msra.mxu0 0.0
    %986 = vmatprep.subr.mxu0 0.0
    %987 = vmatpush1.msra.mxu0 0.0
    %988 = vmatprep.subr.mxu0 0.0
    %989 = vmatpush1.msra.mxu0 0.0
    %990 = vmatprep.subr.mxu0 0.0
    %991 = vmatpush1.msra.mxu0 0.0
    %992 = vmatprep.subr.mxu0 0.0
    %993 = vmatpush1.msra.mxu0 0.0
    %994 = vmatprep.subr.mxu0 0.0
    %995 = vmatpush1.msra.mxu0 0.0
    %996 = vmatprep.subr.mxu0 0.0
    %997 = vmatpush1.msra.mxu0 0.0
    %998 = vmatprep.subr.mxu0 0.0
    %999 = vmatpush1.msra.mxu0 0.0
    %1000 = vmatprep.subr.mxu0 0.0
    %1001 = vmatpush1.msra.mxu0 0.0
    %1002 = vmatprep.mubr.f32.mxu0 0.0
    %1003 = vmatmul.mubr.f32.gmra.mrb[0].mxu0 %v864
    %v1004 = vpop.f32.mrb[0].mxu0
    %v1005 = vadd.f32 0.0, %v1004
    %v1006 = vpop.f32.mrb[0].mxu0
    %v1007 = vadd.f32 0.0, %v1006
    %1008 = vdwg.mxu0
    %v1009 = vadd.f32 %v542, %v934
    %v1010 = vadd.f32 %v544, %v936
    %v1011 = vadd.f32 %v655, %v1005
    %v1012 = vadd.f32 %v657, %v1007
    %v1013 = vxor.u32 %v1009, 2147483648
    %v1014 = vmul.f32 %v1013, 1.442695
    %v1015 = vpow.pop %v1014
    %v1016 = vadd.f32 %v1015, 1.0
    %v1017 = vrcp.pop %v1016
    %v1018 = vmul.f32 1.0, %v1017
    %v1019 = vxor.u32 %v1010, 2147483648
    %v1020 = vmul.f32 %v1019, 1.442695
    %v1021 = vpow.pop %v1020
    %v1022 = vadd.f32 %v1021, 1.0
    %v1023 = vrcp.pop %v1022
    %v1024 = vmul.f32 1.0, %v1023
    %v1025 = vtanh.pop %v1011
    %v1026 = vxor.u32 %v1012, 2147483648
    %v1027 = vmul.f32 %v1026, 1.442695
    %v1028 = vpow.pop %v1027
    %v1029 = vadd.f32 %v1028, 1.0
    %v1030 = vrcp.pop %v1029
    %v1031 = vmul.f32 1.0, %v1030
    %v1032 = vmul.f32 %v1024, %v862
    %v1033 = vmul.f32 %v1018, %v1025
    %v1034 = vadd.f32 %v1032, %v1033
    %v1035 = vtanh.pop %v1034
    %v1036 = vmul.f32 %v1031, %v1035
    %v1037 = vmax.f32 %v1036, 0.0
    %1038 = vst [vmem:[#allocation2 + $0x8] sm:$0xff] %v1037
    %1039 = vmatprep.subr.mxu0 %v255
    %1040 = vmatpush1.msra.mxu0 %v254
    %1041 = vmatprep.subr.mxu0 %v259
    %1042 = vmatpush1.msra.mxu0 %v258
    %1043 = vmatprep.subr.mxu0 %v263
    %1044 = vmatpush1.msra.mxu0 %v262
    %1045 = vmatprep.subr.mxu0 %v267
    %1046 = vmatpush1.msra.mxu0 %v266
    %1047 = vmatprep.subr.mxu0 %v271
    %1048 = vmatpush1.msra.mxu0 %v270
    %1049 = vmatprep.subr.mxu0 %v275
    %1050 = vmatpush1.msra.mxu0 %v274
    %1051 = vmatprep.subr.mxu0 %v279
    %1052 = vmatpush1.msra.mxu0 %v278
    %1053 = vmatprep.subr.mxu0 %v283
    %1054 = vmatpush1.msra.mxu0 %v282
    %1055 = vmatprep.subr.mxu0 %v287
    %1056 = vmatpush1.msra.mxu0 %v286
    %1057 = vmatprep.subr.mxu0 %v291
    %1058 = vmatpush1.msra.mxu0 %v290
    %1059 = vmatprep.subr.mxu0 %v295
    %1060 = vmatpush1.msra.mxu0 %v294
    %1061 = vmatprep.subr.mxu0 %v299
    %1062 = vmatpush1.msra.mxu0 %v298
    %1063 = vmatprep.subr.mxu0 %v303
    %1064 = vmatpush1.msra.mxu0 %v302
    %1065 = vmatprep.subr.mxu0 %v307
    %1066 = vmatpush1.msra.mxu0 %v306
    %1067 = vmatprep.subr.mxu0 %v311
    %1068 = vmatpush1.msra.mxu0 %v310
    %1069 = vmatprep.subr.mxu0 %v315
    %1070 = vmatpush1.msra.mxu0 %v314
    %1071 = vmatprep.subr.mxu0 0.0
    %1072 = vmatpush1.msra.mxu0 0.0
    %1073 = vmatprep.subr.mxu0 0.0
    %1074 = vmatpush1.msra.mxu0 0.0
    %1075 = vmatprep.subr.mxu0 0.0
    %1076 = vmatpush1.msra.mxu0 0.0
    %1077 = vmatprep.subr.mxu0 0.0
    %1078 = vmatpush1.msra.mxu0 0.0
    %1079 = vmatprep.subr.mxu0 0.0
    %1080 = vmatpush1.msra.mxu0 0.0
    %1081 = vmatprep.subr.mxu0 0.0
    %1082 = vmatpush1.msra.mxu0 0.0
    %1083 = vmatprep.subr.mxu0 0.0
    %1084 = vmatpush1.msra.mxu0 0.0
    %1085 = vmatprep.subr.mxu0 0.0
    %1086 = vmatpush1.msra.mxu0 0.0
    %1087 = vmatprep.subr.mxu0 0.0
    %1088 = vmatpush1.msra.mxu0 0.0
    %1089 = vmatprep.subr.mxu0 0.0
    %1090 = vmatpush1.msra.mxu0 0.0
    %1091 = vmatprep.subr.mxu0 0.0
    %1092 = vmatpush1.msra.mxu0 0.0
    %1093 = vmatprep.subr.mxu0 0.0
    %1094 = vmatpush1.msra.mxu0 0.0
    %1095 = vmatprep.subr.mxu0 0.0
    %1096 = vmatpush1.msra.mxu0 0.0
    %1097 = vmatprep.subr.mxu0 0.0
    %1098 = vmatpush1.msra.mxu0 0.0
    %1099 = vmatprep.subr.mxu0 0.0
    %1100 = vmatpush1.msra.mxu0 0.0
    %1101 = vmatprep.subr.mxu0 0.0
    %1102 = vmatpush1.msra.mxu0 0.0
    %1103 = vmatprep.mubr.f32.mxu0 0.0
    %1104 = vmatmul.mubr.f32.gmra.mrb[0].mxu0 %v1036
    %v1105 = vpop.f32.mrb[0].mxu0
    %v1106 = vadd.f32 0.0, %v1105
    %v1107 = vpop.f32.mrb[0].mxu0
    %v1108 = vadd.f32 0.0, %v1107
    %1109 = vdwg.mxu0
    %1110 = vmatprep.subr.mxu0 %v257
    %1111 = vmatpush1.msra.mxu0 %v256
    %1112 = vmatprep.subr.mxu0 %v261
    %1113 = vmatpush1.msra.mxu0 %v260
    %1114 = vmatprep.subr.mxu0 %v265
    %1115 = vmatpush1.msra.mxu0 %v264
    %1116 = vmatprep.subr.mxu0 %v269
    %1117 = vmatpush1.msra.mxu0 %v268
    %1118 = vmatprep.subr.mxu0 %v273
    %1119 = vmatpush1.msra.mxu0 %v272
    %1120 = vmatprep.subr.mxu0 %v277
    %1121 = vmatpush1.msra.mxu0 %v276
    %1122 = vmatprep.subr.mxu0 %v281
    %1123 = vmatpush1.msra.mxu0 %v280
    %1124 = vmatprep.subr.mxu0 %v285
    %1125 = vmatpush1.msra.mxu0 %v284
    %1126 = vmatprep.subr.mxu0 %v289
    %1127 = vmatpush1.msra.mxu0 %v288
    %1128 = vmatprep.subr.mxu0 %v293
    %1129 = vmatpush1.msra.mxu0 %v292
    %1130 = vmatprep.subr.mxu0 %v297
    %1131 = vmatpush1.msra.mxu0 %v296
    %1132 = vmatprep.subr.mxu0 %v301
    %1133 = vmatpush1.msra.mxu0 %v300
    %1134 = vmatprep.subr.mxu0 %v305
    %1135 = vmatpush1.msra.mxu0 %v304
    %1136 = vmatprep.subr.mxu0 %v309
    %1137 = vmatpush1.msra.mxu0 %v308
    %1138 = vmatprep.subr.mxu0 %v313
    %1139 = vmatpush1.msra.mxu0 %v312
    %1140 = vmatprep.subr.mxu0 %v317
    %1141 = vmatpush1.msra.mxu0 %v316
    %1142 = vmatprep.subr.mxu0 0.0
    %1143 = vmatpush1.msra.mxu0 0.0
    %1144 = vmatprep.subr.mxu0 0.0
    %1145 = vmatpush1.msra.mxu0 0.0
    %1146 = vmatprep.subr.mxu0 0.0
    %1147 = vmatpush1.msra.mxu0 0.0
    %1148 = vmatprep.subr.mxu0 0.0
    %1149 = vmatpush1.msra.mxu0 0.0
    %1150 = vmatprep.subr.mxu0 0.0
    %1151 = vmatpush1.msra.mxu0 0.0
    %1152 = vmatprep.subr.mxu0 0.0
    %1153 = vmatpush1.msra.mxu0 0.0
    %1154 = vmatprep.subr.mxu0 0.0
    %1155 = vmatpush1.msra.mxu0 0.0
    %1156 = vmatprep.subr.mxu0 0.0
    %1157 = vmatpush1.msra.mxu0 0.0
    %1158 = vmatprep.subr.mxu0 0.0
    %1159 = vmatpush1.msra.mxu0 0.0
    %1160 = vmatprep.subr.mxu0 0.0
    %1161 = vmatpush1.msra.mxu0 0.0
    %1162 = vmatprep.subr.mxu0 0.0
    %1163 = vmatpush1.msra.mxu0 0.0
    %1164 = vmatprep.subr.mxu0 0.0
    %1165 = vmatpush1.msra.mxu0 0.0
    %1166 = vmatprep.subr.mxu0 0.0
    %1167 = vmatpush1.msra.mxu0 0.0
    %1168 = vmatprep.subr.mxu0 0.0
    %1169 = vmatpush1.msra.mxu0 0.0
    %1170 = vmatprep.subr.mxu0 0.0
    %1171 = vmatpush1.msra.mxu0 0.0
    %1172 = vmatprep.subr.mxu0 0.0
    %1173 = vmatpush1.msra.mxu0 0.0
    %1174 = vmatprep.mubr.f32.mxu0 0.0
    %1175 = vmatmul.mubr.f32.gmra.mrb[0].mxu0 %v1036
    %v1176 = vpop.f32.mrb[0].mxu0
    %v1177 = vadd.f32 0.0, %v1176
    %v1178 = vpop.f32.mrb[0].mxu0
    %v1179 = vadd.f32 0.0, %v1178
    %1180 = vdwg.mxu0
    %v1181 = vadd.f32 %v548, %v1106
    %v1182 = vadd.f32 %v550, %v1108
    %v1183 = vadd.f32 %v661, %v1177
    %v1184 = vadd.f32 %v663, %v1179
    %v1185 = vxor.u32 %v1181, 2147483648
    %v1186 = vmul.f32 %v1185, 1.442695
    %v1187 = vpow.pop %v1186
    %v1188 = vadd.f32 %v1187, 1.0
    %v1189 = vrcp.pop %v1188
    %v1190 = vmul.f32 1.0, %v1189
    %v1191 = vxor.u32 %v1182, 2147483648
    %v1192 = vmul.f32 %v1191, 1.442695
    %v1193 = vpow.pop %v1192
    %v1194 = vadd.f32 %v1193, 1.0
    %v1195 = vrcp.pop %v1194
    %v1196 = vmul.f32 1.0, %v1195
    %v1197 = vtanh.pop %v1183
    %v1198 = vxor.u32 %v1184, 2147483648
    %v1199 = vmul.f32 %v1198, 1.442695
    %v1200 = vpow.pop %v1199
    %v1201 = vadd.f32 %v1200, 1.0
    %v1202 = vrcp.pop %v1201
    %v1203 = vmul.f32 1.0, %v1202
    %v1204 = vmul.f32 %v1196, %v1034
    %v1205 = vmul.f32 %v1190, %v1197
    %v1206 = vadd.f32 %v1204, %v1205
    %v1207 = vtanh.pop %v1206
    %v1208 = vmul.f32 %v1203, %v1207
    %v1209 = vmax.f32 %v1208, 0.0
    %1210 = vst [vmem:[#allocation2 + $0x10] sm:$0xff] %v1209
    %1211 = vmatprep.subr.mxu0 %v255
    %1212 = vmatpush1.msra.mxu0 %v254
    %1213 = vmatprep.subr.mxu0 %v259
    %1214 = vmatpush1.msra.mxu0 %v258
    %1215 = vmatprep.subr.mxu0 %v263
    %1216 = vmatpush1.msra.mxu0 %v262
    %1217 = vmatprep.subr.mxu0 %v267
    %1218 = vmatpush1.msra.mxu0 %v266
    %1219 = vmatprep.subr.mxu0 %v271
    %1220 = vmatpush1.msra.mxu0 %v270
    %1221 = vmatprep.subr.mxu0 %v275
    %1222 = vmatpush1.msra.mxu0 %v274
    %1223 = vmatprep.subr.mxu0 %v279
    %1224 = vmatpush1.msra.mxu0 %v278
    %1225 = vmatprep.subr.mxu0 %v283
    %1226 = vmatpush1.msra.mxu0 %v282
    %1227 = vmatprep.subr.mxu0 %v287
    %1228 = vmatpush1.msra.mxu0 %v286
    %1229 = vmatprep.subr.mxu0 %v291
    %1230 = vmatpush1.msra.mxu0 %v290
    %1231 = vmatprep.subr.mxu0 %v295
    %1232 = vmatpush1.msra.mxu0 %v294
    %1233 = vmatprep.subr.mxu0 %v299
    %1234 = vmatpush1.msra.mxu0 %v298
    %1235 = vmatprep.subr.mxu0 %v303
    %1236 = vmatpush1.msra.mxu0 %v302
    %1237 = vmatprep.subr.mxu0 %v307
    %1238 = vmatpush1.msra.mxu0 %v306
    %1239 = vmatprep.subr.mxu0 %v311
    %1240 = vmatpush1.msra.mxu0 %v310
    %1241 = vmatprep.subr.mxu0 %v315
    %1242 = vmatpush1.msra.mxu0 %v314
    %1243 = vmatprep.subr.mxu0 0.0
    %1244 = vmatpush1.msra.mxu0 0.0
    %1245 = vmatprep.subr.mxu0 0.0
    %1246 = vmatpush1.msra.mxu0 0.0
    %1247 = vmatprep.subr.mxu0 0.0
    %1248 = vmatpush1.msra.mxu0 0.0
    %1249 = vmatprep.subr.mxu0 0.0
    %1250 = vmatpush1.msra.mxu0 0.0
    %1251 = vmatprep.subr.mxu0 0.0
    %1252 = vmatpush1.msra.mxu0 0.0
    %1253 = vmatprep.subr.mxu0 0.0
    %1254 = vmatpush1.msra.mxu0 0.0
    %1255 = vmatprep.subr.mxu0 0.0
    %1256 = vmatpush1.msra.mxu0 0.0
    %1257 = vmatprep.subr.mxu0 0.0
    %1258 = vmatpush1.msra.mxu0 0.0
    %1259 = vmatprep.subr.mxu0 0.0
    %1260 = vmatpush1.msra.mxu0 0.0
    %1261 = vmatprep.subr.mxu0 0.0
    %1262 = vmatpush1.msra.mxu0 0.0
    %1263 = vmatprep.subr.mxu0 0.0
    %1264 = vmatpush1.msra.mxu0 0.0
    %1265 = vmatprep.subr.mxu0 0.0
    %1266 = vmatpush1.msra.mxu0 0.0
    %1267 = vmatprep.subr.mxu0 0.0
    %1268 = vmatpush1.msra.mxu0 0.0
    %1269 = vmatprep.subr.mxu0 0.0
    %1270 = vmatpush1.msra.mxu0 0.0
    %1271 = vmatprep.subr.mxu0 0.0
    %1272 = vmatpush1.msra.mxu0 0.0
    %1273 = vmatprep.subr.mxu0 0.0
    %1274 = vmatpush1.msra.mxu0 0.0
    %1275 = vmatprep.mubr.f32.mxu0 0.0
    %1276 = vmatmul.mubr.f32.gmra.mrb[0].mxu0 %v1208
    %v1277 = vpop.f32.mrb[0].mxu0
    %v1278 = vadd.f32 0.0, %v1277
    %v1279 = vpop.f32.mrb[0].mxu0
    %v1280 = vadd.f32 0.0, %v1279
    %1281 = vdwg.mxu0
    %1282 = vmatprep.subr.mxu0 %v257
    %1283 = vmatpush1.msra.mxu0 %v256
    %1284 = vmatprep.subr.mxu0 %v261
    %1285 = vmatpush1.msra.mxu0 %v260
    %1286 = vmatprep.subr.mxu0 %v265
    %1287 = vmatpush1.msra.mxu0 %v264
    %1288 = vmatprep.subr.mxu0 %v269
    %1289 = vmatpush1.msra.mxu0 %v268
    %1290 = vmatprep.subr.mxu0 %v273
    %1291 = vmatpush1.msra.mxu0 %v272
    %1292 = vmatprep.subr.mxu0 %v277
    %1293 = vmatpush1.msra.mxu0 %v276
    %1294 = vmatprep.subr.mxu0 %v281
    %1295 = vmatpush1.msra.mxu0 %v280
    %1296 = vmatprep.subr.mxu0 %v285
    %1297 = vmatpush1.msra.mxu0 %v284
    %1298 = vmatprep.subr.mxu0 %v289
    %1299 = vmatpush1.msra.mxu0 %v288
    %1300 = vmatprep.subr.mxu0 %v293
    %1301 = vmatpush1.msra.mxu0 %v292
    %1302 = vmatprep.subr.mxu0 %v297
    %1303 = vmatpush1.msra.mxu0 %v296
    %1304 = vmatprep.subr.mxu0 %v301
    %1305 = vmatpush1.msra.mxu0 %v300
    %1306 = vmatprep.subr.mxu0 %v305
    %1307 = vmatpush1.msra.mxu0 %v304
    %1308 = vmatprep.subr.mxu0 %v309
    %1309 = vmatpush1.msra.mxu0 %v308
    %1310 = vmatprep.subr.mxu0 %v313
    %1311 = vmatpush1.msra.mxu0 %v312
    %1312 = vmatprep.subr.mxu0 %v317
    %1313 = vmatpush1.msra.mxu0 %v316
    %1314 = vmatprep.subr.mxu0 0.0
    %1315 = vmatpush1.msra.mxu0 0.0
    %1316 = vmatprep.subr.mxu0 0.0
    %1317 = vmatpush1.msra.mxu0 0.0
    %1318 = vmatprep.subr.mxu0 0.0
    %1319 = vmatpush1.msra.mxu0 0.0
    %1320 = vmatprep.subr.mxu0 0.0
    %1321 = vmatpush1.msra.mxu0 0.0
    %1322 = vmatprep.subr.mxu0 0.0
    %1323 = vmatpush1.msra.mxu0 0.0
    %1324 = vmatprep.subr.mxu0 0.0
    %1325 = vmatpush1.msra.mxu0 0.0
    %1326 = vmatprep.subr.mxu0 0.0
    %1327 = vmatpush1.msra.mxu0 0.0
    %1328 = vmatprep.subr.mxu0 0.0
    %1329 = vmatpush1.msra.mxu0 0.0
    %1330 = vmatprep.subr.mxu0 0.0
    %1331 = vmatpush1.msra.mxu0 0.0
    %1332 = vmatprep.subr.mxu0 0.0
    %1333 = vmatpush1.msra.mxu0 0.0
    %1334 = vmatprep.subr.mxu0 0.0
    %1335 = vmatpush1.msra.mxu0 0.0
    %1336 = vmatprep.subr.mxu0 0.0
    %1337 = vmatpush1.msra.mxu0 0.0
    %1338 = vmatprep.subr.mxu0 0.0
    %1339 = vmatpush1.msra.mxu0 0.0
    %1340 = vmatprep.subr.mxu0 0.0
    %1341 = vmatpush1.msra.mxu0 0.0
    %1342 = vmatprep.subr.mxu0 0.0
    %1343 = vmatpush1.msra.mxu0 0.0
    %1344 = vmatprep.subr.mxu0 0.0
    %1345 = vmatpush1.msra.mxu0 0.0
    %1346 = vmatprep.mubr.f32.mxu0 0.0
    %1347 = vmatmul.mubr.f32.gmra.mrb[0].mxu0 %v1208
    %v1348 = vpop.f32.mrb[0].mxu0
    %v1349 = vadd.f32 0.0, %v1348
    %v1350 = vpop.f32.mrb[0].mxu0
    %v1351 = vadd.f32 0.0, %v1350
    %1352 = vdwg.mxu0
    %v1353 = vadd.f32 %v554, %v1278
    %v1354 = vadd.f32 %v556, %v1280
    %v1355 = vadd.f32 %v667, %v1349
    %v1356 = vadd.f32 %v669, %v1351
    %v1357 = vxor.u32 %v1353, 2147483648
    %v1358 = vmul.f32 %v1357, 1.442695
    %v1359 = vpow.pop %v1358
    %v1360 = vadd.f32 %v1359, 1.0
    %v1361 = vrcp.pop %v1360
    %v1362 = vmul.f32 1.0, %v1361
    %v1363 = vxor.u32 %v1354, 2147483648
    %v1364 = vmul.f32 %v1363, 1.442695
    %v1365 = vpow.pop %v1364
    %v1366 = vadd.f32 %v1365, 1.0
    %v1367 = vrcp.pop %v1366
    %v1368 = vmul.f32 1.0, %v1367
    %v1369 = vtanh.pop %v1355
    %v1370 = vxor.u32 %v1356, 2147483648
    %v1371 = vmul.f32 %v1370, 1.442695
    %v1372 = vpow.pop %v1371
    %v1373 = vadd.f32 %v1372, 1.0
    %v1374 = vrcp.pop %v1373
    %v1375 = vmul.f32 1.0, %v1374
    %v1376 = vmul.f32 %v1368, %v1206
    %v1377 = vmul.f32 %v1362, %v1369
    %v1378 = vadd.f32 %v1376, %v1377
    %v1379 = vtanh.pop %v1378
    %v1380 = vmul.f32 %v1375, %v1379
    %v1381 = vmax.f32 %v1380, 0.0
    %1382 = vst [vmem:[#allocation2 + $0x18] sm:$0xff] %v1381
    %1383 = vmatprep.subr.mxu0 %v255
    %1384 = vmatpush1.msra.mxu0 %v254
    %1385 = vmatprep.subr.mxu0 %v259
    %1386 = vmatpush1.msra.mxu0 %v258
    %1387 = vmatprep.subr.mxu0 %v263
    %1388 = vmatpush1.msra.mxu0 %v262
    %1389 = vmatprep.subr.mxu0 %v267
    %1390 = vmatpush1.msra.mxu0 %v266
    %1391 = vmatprep.subr.mxu0 %v271
    %1392 = vmatpush1.msra.mxu0 %v270
    %1393 = vmatprep.subr.mxu0 %v275
    %1394 = vmatpush1.msra.mxu0 %v274
    %1395 = vmatprep.subr.mxu0 %v279
    %1396 = vmatpush1.msra.mxu0 %v278
    %1397 = vmatprep.subr.mxu0 %v283
    %1398 = vmatpush1.msra.mxu0 %v282
    %1399 = vmatprep.subr.mxu0 %v287
    %1400 = vmatpush1.msra.mxu0 %v286
    %1401 = vmatprep.subr.mxu0 %v291
    %1402 = vmatpush1.msra.mxu0 %v290
    %1403 = vmatprep.subr.mxu0 %v295
    %1404 = vmatpush1.msra.mxu0 %v294
    %1405 = vmatprep.subr.mxu0 %v299
    %1406 = vmatpush1.msra.mxu0 %v298
    %1407 = vmatprep.subr.mxu0 %v303
    %1408 = vmatpush1.msra.mxu0 %v302
    %1409 = vmatprep.subr.mxu0 %v307
    %1410 = vmatpush1.msra.mxu0 %v306
    %1411 = vmatprep.subr.mxu0 %v311
    %1412 = vmatpush1.msra.mxu0 %v310
    %1413 = vmatprep.subr.mxu0 %v315
    %1414 = vmatpush1.msra.mxu0 %v314
    %1415 = vmatprep.subr.mxu0 0.0
    %1416 = vmatpush1.msra.mxu0 0.0
    %1417 = vmatprep.subr.mxu0 0.0
    %1418 = vmatpush1.msra.mxu0 0.0
    %1419 = vmatprep.subr.mxu0 0.0
    %1420 = vmatpush1.msra.mxu0 0.0
    %1421 = vmatprep.subr.mxu0 0.0
    %1422 = vmatpush1.msra.mxu0 0.0
    %1423 = vmatprep.subr.mxu0 0.0
    %1424 = vmatpush1.msra.mxu0 0.0
    %1425 = vmatprep.subr.mxu0 0.0
    %1426 = vmatpush1.msra.mxu0 0.0
    %1427 = vmatprep.subr.mxu0 0.0
    %1428 = vmatpush1.msra.mxu0 0.0
    %1429 = vmatprep.subr.mxu0 0.0
    %1430 = vmatpush1.msra.mxu0 0.0
    %1431 = vmatprep.subr.mxu0 0.0
    %1432 = vmatpush1.msra.mxu0 0.0
    %1433 = vmatprep.subr.mxu0 0.0
    %1434 = vmatpush1.msra.mxu0 0.0
    %1435 = vmatprep.subr.mxu0 0.0
    %1436 = vmatpush1.msra.mxu0 0.0
    %1437 = vmatprep.subr.mxu0 0.0
    %1438 = vmatpush1.msra.mxu0 0.0
    %1439 = vmatprep.subr.mxu0 0.0
    %1440 = vmatpush1.msra.mxu0 0.0
    %1441 = vmatprep.subr.mxu0 0.0
    %1442 = vmatpush1.msra.mxu0 0.0
    %1443 = vmatprep.subr.mxu0 0.0
    %1444 = vmatpush1.msra.mxu0 0.0
    %1445 = vmatprep.subr.mxu0 0.0
    %1446 = vmatpush1.msra.mxu0 0.0
    %1447 = vmatprep.mubr.f32.mxu0 0.0
    %1448 = vmatmul.mubr.f32.gmra.mrb[0].mxu0 %v1380
    %v1449 = vpop.f32.mrb[0].mxu0
    %v1450 = vadd.f32 0.0, %v1449
    %v1451 = vpop.f32.mrb[0].mxu0
    %v1452 = vadd.f32 0.0, %v1451
    %1453 = vdwg.mxu0
    %1454 = vmatprep.subr.mxu0 %v257
    %1455 = vmatpush1.msra.mxu0 %v256
    %1456 = vmatprep.subr.mxu0 %v261
    %1457 = vmatpush1.msra.mxu0 %v260
    %1458 = vmatprep.subr.mxu0 %v265
    %1459 = vmatpush1.msra.mxu0 %v264
    %1460 = vmatprep.subr.mxu0 %v269
    %1461 = vmatpush1.msra.mxu0 %v268
    %1462 = vmatprep.subr.mxu0 %v273
    %1463 = vmatpush1.msra.mxu0 %v272
    %1464 = vmatprep.subr.mxu0 %v277
    %1465 = vmatpush1.msra.mxu0 %v276
    %1466 = vmatprep.subr.mxu0 %v281
    %1467 = vmatpush1.msra.mxu0 %v280
    %1468 = vmatprep.subr.mxu0 %v285
    %1469 = vmatpush1.msra.mxu0 %v284
    %1470 = vmatprep.subr.mxu0 %v289
    %1471 = vmatpush1.msra.mxu0 %v288
    %1472 = vmatprep.subr.mxu0 %v293
    %1473 = vmatpush1.msra.mxu0 %v292
    %1474 = vmatprep.subr.mxu0 %v297
    %1475 = vmatpush1.msra.mxu0 %v296
    %1476 = vmatprep.subr.mxu0 %v301
    %1477 = vmatpush1.msra.mxu0 %v300
    %1478 = vmatprep.subr.mxu0 %v305
    %1479 = vmatpush1.msra.mxu0 %v304
    %1480 = vmatprep.subr.mxu0 %v309
    %1481 = vmatpush1.msra.mxu0 %v308
    %1482 = vmatprep.subr.mxu0 %v313
    %1483 = vmatpush1.msra.mxu0 %v312
    %1484 = vmatprep.subr.mxu0 %v317
    %1485 = vmatpush1.msra.mxu0 %v316
    %1486 = vmatprep.subr.mxu0 0.0
    %1487 = vmatpush1.msra.mxu0 0.0
    %1488 = vmatprep.subr.mxu0 0.0
    %1489 = vmatpush1.msra.mxu0 0.0
    %1490 = vmatprep.subr.mxu0 0.0
    %1491 = vmatpush1.msra.mxu0 0.0
    %1492 = vmatprep.subr.mxu0 0.0
    %1493 = vmatpush1.msra.mxu0 0.0
    %1494 = vmatprep.subr.mxu0 0.0
    %1495 = vmatpush1.msra.mxu0 0.0
    %1496 = vmatprep.subr.mxu0 0.0
    %1497 = vmatpush1.msra.mxu0 0.0
    %1498 = vmatprep.subr.mxu0 0.0
    %1499 = vmatpush1.msra.mxu0 0.0
    %1500 = vmatprep.subr.mxu0 0.0
    %1501 = vmatpush1.msra.mxu0 0.0
    %1502 = vmatprep.subr.mxu0 0.0
    %1503 = vmatpush1.msra.mxu0 0.0
    %1504 = vmatprep.subr.mxu0 0.0
    %1505 = vmatpush1.msra.mxu0 0.0
    %1506 = vmatprep.subr.mxu0 0.0
    %1507 = vmatpush1.msra.mxu0 0.0
    %1508 = vmatprep.subr.mxu0 0.0
    %1509 = vmatpush1.msra.mxu0 0.0
    %1510 = vmatprep.subr.mxu0 0.0
    %1511 = vmatpush1.msra.mxu0 0.0
    %1512 = vmatprep.subr.mxu0 0.0
    %1513 = vmatpush1.msra.mxu0 0.0
    %1514 = vmatprep.subr.mxu0 0.0
    %1515 = vmatpush1.msra.mxu0 0.0
    %1516 = vmatprep.subr.mxu0 0.0
    %1517 = vmatpush1.msra.mxu0 0.0
    %1518 = vmatprep.mubr.f32.mxu0 0.0
    %1519 = vmatmul.mubr.f32.gmra.mrb[0].mxu0 %v1380
    %v1520 = vpop.f32.mrb[0].mxu0
    %v1521 = vadd.f32 0.0, %v1520
    %v1522 = vpop.f32.mrb[0].mxu0
    %v1523 = vadd.f32 0.0, %v1522
    %1524 = vdwg.mxu0
    %v1525 = vadd.f32 %v560, %v1450
    %v1526 = vadd.f32 %v562, %v1452
    %v1527 = vadd.f32 %v673, %v1521
    %v1528 = vadd.f32 %v675, %v1523
    %v1529 = vxor.u32 %v1525, 2147483648
    %v1530 = vmul.f32 %v1529, 1.442695
    %v1531 = vpow.pop %v1530
    %v1532 = vadd.f32 %v1531, 1.0
    %v1533 = vrcp.pop %v1532
    %v1534 = vmul.f32 1.0, %v1533
    %v1535 = vxor.u32 %v1526, 2147483648
    %v1536 = vmul.f32 %v1535, 1.442695
    %v1537 = vpow.pop %v1536
    %v1538 = vadd.f32 %v1537, 1.0
    %v1539 = vrcp.pop %v1538
    %v1540 = vmul.f32 1.0, %v1539
    %v1541 = vtanh.pop %v1527
    %v1542 = vxor.u32 %v1528, 2147483648
    %v1543 = vmul.f32 %v1542, 1.442695
    %v1544 = vpow.pop %v1543
    %v1545 = vadd.f32 %v1544, 1.0
    %v1546 = vrcp.pop %v1545
    %v1547 = vmul.f32 1.0, %v1546
    %v1548 = vmul.f32 %v1540, %v1378
    %v1549 = vmul.f32 %v1534, %v1541
    %v1550 = vadd.f32 %v1548, %v1549
    %v1551 = vtanh.pop %v1550
    %v1552 = vmul.f32 %v1547, %v1551
    %v1553 = vmax.f32 %v1552, 0.0
    %1554 = vst [vmem:[#allocation2 + $0x20] sm:$0xff] %v1553
    %1555 = vmatprep.subr.mxu0 %v255
    %1556 = vmatpush1.msra.mxu0 %v254
    %1557 = vmatprep.subr.mxu0 %v259
    %1558 = vmatpush1.msra.mxu0 %v258
    %1559 = vmatprep.subr.mxu0 %v263
    %1560 = vmatpush1.msra.mxu0 %v262
    %1561 = vmatprep.subr.mxu0 %v267
    %1562 = vmatpush1.msra.mxu0 %v266
    %1563 = vmatprep.subr.mxu0 %v271
    %1564 = vmatpush1.msra.mxu0 %v270
    %1565 = vmatprep.subr.mxu0 %v275
    %1566 = vmatpush1.msra.mxu0 %v274
    %1567 = vmatprep.subr.mxu0 %v279
    %1568 = vmatpush1.msra.mxu0 %v278
    %1569 = vmatprep.subr.mxu0 %v283
    %1570 = vmatpush1.msra.mxu0 %v282
    %1571 = vmatprep.subr.mxu0 %v287
    %1572 = vmatpush1.msra.mxu0 %v286
    %1573 = vmatprep.subr.mxu0 %v291
    %1574 = vmatpush1.msra.mxu0 %v290
    %1575 = vmatprep.subr.mxu0 %v295
    %1576 = vmatpush1.msra.mxu0 %v294
    %1577 = vmatprep.subr.mxu0 %v299
    %1578 = vmatpush1.msra.mxu0 %v298
    %1579 = vmatprep.subr.mxu0 %v303
    %1580 = vmatpush1.msra.mxu0 %v302
    %1581 = vmatprep.subr.mxu0 %v307
    %1582 = vmatpush1.msra.mxu0 %v306
    %1583 = vmatprep.subr.mxu0 %v311
    %1584 = vmatpush1.msra.mxu0 %v310
    %1585 = vmatprep.subr.mxu0 %v315
    %1586 = vmatpush1.msra.mxu0 %v314
    %1587 = vmatprep.subr.mxu0 0.0
    %1588 = vmatpush1.msra.mxu0 0.0
    %1589 = vmatprep.subr.mxu0 0.0
    %1590 = vmatpush1.msra.mxu0 0.0
    %1591 = vmatprep.subr.mxu0 0.0
    %1592 = vmatpush1.msra.mxu0 0.0
    %1593 = vmatprep.subr.mxu0 0.0
    %1594 = vmatpush1.msra.mxu0 0.0
    %1595 = vmatprep.subr.mxu0 0.0
    %1596 = vmatpush1.msra.mxu0 0.0
    %1597 = vmatprep.subr.mxu0 0.0
    %1598 = vmatpush1.msra.mxu0 0.0
    %1599 = vmatprep.subr.mxu0 0.0
    %1600 = vmatpush1.msra.mxu0 0.0
    %1601 = vmatprep.subr.mxu0 0.0
    %1602 = vmatpush1.msra.mxu0 0.0
    %1603 = vmatprep.subr.mxu0 0.0
    %1604 = vmatpush1.msra.mxu0 0.0
    %1605 = vmatprep.subr.mxu0 0.0
    %1606 = vmatpush1.msra.mxu0 0.0
    %1607 = vmatprep.subr.mxu0 0.0
    %1608 = vmatpush1.msra.mxu0 0.0
    %1609 = vmatprep.subr.mxu0 0.0
    %1610 = vmatpush1.msra.mxu0 0.0
    %1611 = vmatprep.subr.mxu0 0.0
    %1612 = vmatpush1.msra.mxu0 0.0
    %1613 = vmatprep.subr.mxu0 0.0
    %1614 = vmatpush1.msra.mxu0 0.0
    %1615 = vmatprep.subr.mxu0 0.0
    %1616 = vmatpush1.msra.mxu0 0.0
    %1617 = vmatprep.subr.mxu0 0.0
    %1618 = vmatpush1.msra.mxu0 0.0
    %1619 = vmatprep.mubr.f32.mxu0 0.0
    %1620 = vmatmul.mubr.f32.gmra.mrb[0].mxu0 %v1552
    %v1621 = vpop.f32.mrb[0].mxu0
    %v1622 = vadd.f32 0.0, %v1621
    %v1623 = vpop.f32.mrb[0].mxu0
    %v1624 = vadd.f32 0.0, %v1623
    %1625 = vdwg.mxu0
    %1626 = vmatprep.subr.mxu0 %v257
    %1627 = vmatpush1.msra.mxu0 %v256
    %1628 = vmatprep.subr.mxu0 %v261
    %1629 = vmatpush1.msra.mxu0 %v260
    %1630 = vmatprep.subr.mxu0 %v265
    %1631 = vmatpush1.msra.mxu0 %v264
    %1632 = vmatprep.subr.mxu0 %v269
    %1633 = vmatpush1.msra.mxu0 %v268
    %1634 = vmatprep.subr.mxu0 %v273
    %1635 = vmatpush1.msra.mxu0 %v272
    %1636 = vmatprep.subr.mxu0 %v277
    %1637 = vmatpush1.msra.mxu0 %v276
    %1638 = vmatprep.subr.mxu0 %v281
    %1639 = vmatpush1.msra.mxu0 %v280
    %1640 = vmatprep.subr.mxu0 %v285
    %1641 = vmatpush1.msra.mxu0 %v284
    %1642 = vmatprep.subr.mxu0 %v289
    %1643 = vmatpush1.msra.mxu0 %v288
    %1644 = vmatprep.subr.mxu0 %v293
    %1645 = vmatpush1.msra.mxu0 %v292
    %1646 = vmatprep.subr.mxu0 %v297
    %1647 = vmatpush1.msra.mxu0 %v296
    %1648 = vmatprep.subr.mxu0 %v301
    %1649 = vmatpush1.msra.mxu0 %v300
    %1650 = vmatprep.subr.mxu0 %v305
    %1651 = vmatpush1.msra.mxu0 %v304
    %1652 = vmatprep.subr.mxu0 %v309
    %1653 = vmatpush1.msra.mxu0 %v308
    %1654 = vmatprep.subr.mxu0 %v313
    %1655 = vmatpush1.msra.mxu0 %v312
    %1656 = vmatprep.subr.mxu0 %v317
    %1657 = vmatpush1.msra.mxu0 %v316
    %1658 = vmatprep.subr.mxu0 0.0
    %1659 = vmatpush1.msra.mxu0 0.0
    %1660 = vmatprep.subr.mxu0 0.0
    %1661 = vmatpush1.msra.mxu0 0.0
    %1662 = vmatprep.subr.mxu0 0.0
    %1663 = vmatpush1.msra.mxu0 0.0
    %1664 = vmatprep.subr.mxu0 0.0
    %1665 = vmatpush1.msra.mxu0 0.0
    %1666 = vmatprep.subr.mxu0 0.0
    %1667 = vmatpush1.msra.mxu0 0.0
    %1668 = vmatprep.subr.mxu0 0.0
    %1669 = vmatpush1.msra.mxu0 0.0
    %1670 = vmatprep.subr.mxu0 0.0
    %1671 = vmatpush1.msra.mxu0 0.0
    %1672 = vmatprep.subr.mxu0 0.0
    %1673 = vmatpush1.msra.mxu0 0.0
    %1674 = vmatprep.subr.mxu0 0.0
    %1675 = vmatpush1.msra.mxu0 0.0
    %1676 = vmatprep.subr.mxu0 0.0
    %1677 = vmatpush1.msra.mxu0 0.0
    %1678 = vmatprep.subr.mxu0 0.0
    %1679 = vmatpush1.msra.mxu0 0.0
    %1680 = vmatprep.subr.mxu0 0.0
    %1681 = vmatpush1.msra.mxu0 0.0
    %1682 = vmatprep.subr.mxu0 0.0
    %1683 = vmatpush1.msra.mxu0 0.0
    %1684 = vmatprep.subr.mxu0 0.0
    %1685 = vmatpush1.msra.mxu0 0.0
    %1686 = vmatprep.subr.mxu0 0.0
    %1687 = vmatpush1.msra.mxu0 0.0
    %1688 = vmatprep.subr.mxu0 0.0
    %1689 = vmatpush1.msra.mxu0 0.0
    %1690 = vmatprep.mubr.f32.mxu0 0.0
    %1691 = vmatmul.mubr.f32.gmra.mrb[0].mxu0 %v1552
    %v1692 = vpop.f32.mrb[0].mxu0
    %v1693 = vadd.f32 0.0, %v1692
    %v1694 = vpop.f32.mrb[0].mxu0
    %v1695 = vadd.f32 0.0, %v1694
    %1696 = vdwg.mxu0
    %v1697 = vadd.f32 %v566, %v1622
    %v1698 = vadd.f32 %v568, %v1624
    %v1699 = vadd.f32 %v679, %v1693
    %v1700 = vadd.f32 %v681, %v1695
    %v1701 = vxor.u32 %v1697, 2147483648
    %v1702 = vmul.f32 %v1701, 1.442695
    %v1703 = vpow.pop %v1702
    %v1704 = vadd.f32 %v1703, 1.0
    %v1705 = vrcp.pop %v1704
    %v1706 = vmul.f32 1.0, %v1705
    %v1707 = vxor.u32 %v1698, 2147483648
    %v1708 = vmul.f32 %v1707, 1.442695
    %v1709 = vpow.pop %v1708
    %v1710 = vadd.f32 %v1709, 1.0
    %v1711 = vrcp.pop %v1710
    %v1712 = vmul.f32 1.0, %v1711
    %v1713 = vtanh.pop %v1699
    %v1714 = vxor.u32 %v1700, 2147483648
    %v1715 = vmul.f32 %v1714, 1.442695
    %v1716 = vpow.pop %v1715
    %v1717 = vadd.f32 %v1716, 1.0
    %v1718 = vrcp.pop %v1717
    %v1719 = vmul.f32 1.0, %v1718
    %v1720 = vmul.f32 %v1712, %v1550
    %v1721 = vmul.f32 %v1706, %v1713
    %v1722 = vadd.f32 %v1720, %v1721
    %v1723 = vtanh.pop %v1722
    %v1724 = vmul.f32 %v1719, %v1723
    %v1725 = vmax.f32 %v1724, 0.0
    %1726 = vst [vmem:[#allocation2 + $0x28] sm:$0xff] %v1725
    %1727 = vmatprep.subr.mxu0 %v255
    %1728 = vmatpush1.msra.mxu0 %v254
    %1729 = vmatprep.subr.mxu0 %v259
    %1730 = vmatpush1.msra.mxu0 %v258
    %1731 = vmatprep.subr.mxu0 %v263
    %1732 = vmatpush1.msra.mxu0 %v262
    %1733 = vmatprep.subr.mxu0 %v267
    %1734 = vmatpush1.msra.mxu0 %v266
    %1735 = vmatprep.subr.mxu0 %v271
    %1736 = vmatpush1.msra.mxu0 %v270
    %1737 = vmatprep.subr.mxu0 %v275
    %1738 = vmatpush1.msra.mxu0 %v274
    %1739 = vmatprep.subr.mxu0 %v279
    %1740 = vmatpush1.msra.mxu0 %v278
    %1741 = vmatprep.subr.mxu0 %v283
    %1742 = vmatpush1.msra.mxu0 %v282
    %1743 = vmatprep.subr.mxu0 %v287
    %1744 = vmatpush1.msra.mxu0 %v286
    %1745 = vmatprep.subr.mxu0 %v291
    %1746 = vmatpush1.msra.mxu0 %v290
    %1747 = vmatprep.subr.mxu0 %v295
    %1748 = vmatpush1.msra.mxu0 %v294
    %1749 = vmatprep.subr.mxu0 %v299
    %1750 = vmatpush1.msra.mxu0 %v298
    %1751 = vmatprep.subr.mxu0 %v303
    %1752 = vmatpush1.msra.mxu0 %v302
    %1753 = vmatprep.subr.mxu0 %v307
    %1754 = vmatpush1.msra.mxu0 %v306
    %1755 = vmatprep.subr.mxu0 %v311
    %1756 = vmatpush1.msra.mxu0 %v310
    %1757 = vmatprep.subr.mxu0 %v315
    %1758 = vmatpush1.msra.mxu0 %v314
    %1759 = vmatprep.subr.mxu0 0.0
    %1760 = vmatpush1.msra.mxu0 0.0
    %1761 = vmatprep.subr.mxu0 0.0
    %1762 = vmatpush1.msra.mxu0 0.0
    %1763 = vmatprep.subr.mxu0 0.0
    %1764 = vmatpush1.msra.mxu0 0.0
    %1765 = vmatprep.subr.mxu0 0.0
    %1766 = vmatpush1.msra.mxu0 0.0
    %1767 = vmatprep.subr.mxu0 0.0
    %1768 = vmatpush1.msra.mxu0 0.0
    %1769 = vmatprep.subr.mxu0 0.0
    %1770 = vmatpush1.msra.mxu0 0.0
    %1771 = vmatprep.subr.mxu0 0.0
    %1772 = vmatpush1.msra.mxu0 0.0
    %1773 = vmatprep.subr.mxu0 0.0
    %1774 = vmatpush1.msra.mxu0 0.0
    %1775 = vmatprep.subr.mxu0 0.0
    %1776 = vmatpush1.msra.mxu0 0.0
    %1777 = vmatprep.subr.mxu0 0.0
    %1778 = vmatpush1.msra.mxu0 0.0
    %1779 = vmatprep.subr.mxu0 0.0
    %1780 = vmatpush1.msra.mxu0 0.0
    %1781 = vmatprep.subr.mxu0 0.0
    %1782 = vmatpush1.msra.mxu0 0.0
    %1783 = vmatprep.subr.mxu0 0.0
    %1784 = vmatpush1.msra.mxu0 0.0
    %1785 = vmatprep.subr.mxu0 0.0
    %1786 = vmatpush1.msra.mxu0 0.0
    %1787 = vmatprep.subr.mxu0 0.0
    %1788 = vmatpush1.msra.mxu0 0.0
    %1789 = vmatprep.subr.mxu0 0.0
    %1790 = vmatpush1.msra.mxu0 0.0
    %1791 = vmatprep.mubr.f32.mxu0 0.0
    %1792 = vmatmul.mubr.f32.gmra.mrb[0].mxu0 %v1724
    %v1793 = vpop.f32.mrb[0].mxu0
    %v1794 = vadd.f32 0.0, %v1793
    %v1795 = vpop.f32.mrb[0].mxu0
    %v1796 = vadd.f32 0.0, %v1795
    %1797 = vdwg.mxu0
    %1798 = vmatprep.subr.mxu0 %v257
    %1799 = vmatpush1.msra.mxu0 %v256
    %1800 = vmatprep.subr.mxu0 %v261
    %1801 = vmatpush1.msra.mxu0 %v260
    %1802 = vmatprep.subr.mxu0 %v265
    %1803 = vmatpush1.msra.mxu0 %v264
    %1804 = vmatprep.subr.mxu0 %v269
    %1805 = vmatpush1.msra.mxu0 %v268
    %1806 = vmatprep.subr.mxu0 %v273
    %1807 = vmatpush1.msra.mxu0 %v272
    %1808 = vmatprep.subr.mxu0 %v277
    %1809 = vmatpush1.msra.mxu0 %v276
    %1810 = vmatprep.subr.mxu0 %v281
    %1811 = vmatpush1.msra.mxu0 %v280
    %1812 = vmatprep.subr.mxu0 %v285
    %1813 = vmatpush1.msra.mxu0 %v284
    %1814 = vmatprep.subr.mxu0 %v289
    %1815 = vmatpush1.msra.mxu0 %v288
    %1816 = vmatprep.subr.mxu0 %v293
    %1817 = vmatpush1.msra.mxu0 %v292
    %1818 = vmatprep.subr.mxu0 %v297
    %1819 = vmatpush1.msra.mxu0 %v296
    %1820 = vmatprep.subr.mxu0 %v301
    %1821 = vmatpush1.msra.mxu0 %v300
    %1822 = vmatprep.subr.mxu0 %v305
    %1823 = vmatpush1.msra.mxu0 %v304
    %1824 = vmatprep.subr.mxu0 %v309
    %1825 = vmatpush1.msra.mxu0 %v308
    %1826 = vmatprep.subr.mxu0 %v313
    %1827 = vmatpush1.msra.mxu0 %v312
    %1828 = vmatprep.subr.mxu0 %v317
    %1829 = vmatpush1.msra.mxu0 %v316
    %1830 = vmatprep.subr.mxu0 0.0
    %1831 = vmatpush1.msra.mxu0 0.0
    %1832 = vmatprep.subr.mxu0 0.0
    %1833 = vmatpush1.msra.mxu0 0.0
    %1834 = vmatprep.subr.mxu0 0.0
    %1835 = vmatpush1.msra.mxu0 0.0
    %1836 = vmatprep.subr.mxu0 0.0
    %1837 = vmatpush1.msra.mxu0 0.0
    %1838 = vmatprep.subr.mxu0 0.0
    %1839 = vmatpush1.msra.mxu0 0.0
    %1840 = vmatprep.subr.mxu0 0.0
    %1841 = vmatpush1.msra.mxu0 0.0
    %1842 = vmatprep.subr.mxu0 0.0
    %1843 = vmatpush1.msra.mxu0 0.0
    %1844 = vmatprep.subr.mxu0 0.0
    %1845 = vmatpush1.msra.mxu0 0.0
    %1846 = vmatprep.subr.mxu0 0.0
    %1847 = vmatpush1.msra.mxu0 0.0
    %1848 = vmatprep.subr.mxu0 0.0
    %1849 = vmatpush1.msra.mxu0 0.0
    %1850 = vmatprep.subr.mxu0 0.0
    %1851 = vmatpush1.msra.mxu0 0.0
    %1852 = vmatprep.subr.mxu0 0.0
    %1853 = vmatpush1.msra.mxu0 0.0
    %1854 = vmatprep.subr.mxu0 0.0
    %1855 = vmatpush1.msra.mxu0 0.0
    %1856 = vmatprep.subr.mxu0 0.0
    %1857 = vmatpush1.msra.mxu0 0.0
    %1858 = vmatprep.subr.mxu0 0.0
    %1859 = vmatpush1.msra.mxu0 0.0
    %1860 = vmatprep.subr.mxu0 0.0
    %1861 = vmatpush1.msra.mxu0 0.0
    %1862 = vmatprep.mubr.f32.mxu0 0.0
    %1863 = vmatmul.mubr.f32.gmra.mrb[0].mxu0 %v1724
    %v1864 = vpop.f32.mrb[0].mxu0
    %v1865 = vadd.f32 0.0, %v1864
    %v1866 = vpop.f32.mrb[0].mxu0
    %v1867 = vadd.f32 0.0, %v1866
    %1868 = vdwg.mxu0
    %v1869 = vadd.f32 %v572, %v1794
    %v1870 = vadd.f32 %v574, %v1796
    %v1871 = vadd.f32 %v685, %v1865
    %v1872 = vadd.f32 %v687, %v1867
    %v1873 = vxor.u32 %v1869, 2147483648
    %v1874 = vmul.f32 %v1873, 1.442695
    %v1875 = vpow.pop %v1874
    %v1876 = vadd.f32 %v1875, 1.0
    %v1877 = vrcp.pop %v1876
    %v1878 = vmul.f32 1.0, %v1877
    %v1879 = vxor.u32 %v1870, 2147483648
    %v1880 = vmul.f32 %v1879, 1.442695
    %v1881 = vpow.pop %v1880
    %v1882 = vadd.f32 %v1881, 1.0
    %v1883 = vrcp.pop %v1882
    %v1884 = vmul.f32 1.0, %v1883
    %v1885 = vtanh.pop %v1871
    %v1886 = vxor.u32 %v1872, 2147483648
    %v1887 = vmul.f32 %v1886, 1.442695
    %v1888 = vpow.pop %v1887
    %v1889 = vadd.f32 %v1888, 1.0
    %v1890 = vrcp.pop %v1889
    %v1891 = vmul.f32 1.0, %v1890
    %v1892 = vmul.f32 %v1884, %v1722
    %v1893 = vmul.f32 %v1878, %v1885
    %v1894 = vadd.f32 %v1892, %v1893
    %v1895 = vtanh.pop %v1894
    %v1896 = vmul.f32 %v1891, %v1895
    %v1897 = vmax.f32 %v1896, 0.0
    %1898 = vst [vmem:[#allocation2 + $0x30] sm:$0xff] %v1897
    %1899 = vmatprep.subr.mxu0 %v255
    %1900 = vmatpush1.msra.mxu0 %v254
    %1901 = vmatprep.subr.mxu0 %v259
    %1902 = vmatpush1.msra.mxu0 %v258
    %1903 = vmatprep.subr.mxu0 %v263
    %1904 = vmatpush1.msra.mxu0 %v262
    %1905 = vmatprep.subr.mxu0 %v267
    %1906 = vmatpush1.msra.mxu0 %v266
    %1907 = vmatprep.subr.mxu0 %v271
    %1908 = vmatpush1.msra.mxu0 %v270
    %1909 = vmatprep.subr.mxu0 %v275
    %1910 = vmatpush1.msra.mxu0 %v274
    %1911 = vmatprep.subr.mxu0 %v279
    %1912 = vmatpush1.msra.mxu0 %v278
    %1913 = vmatprep.subr.mxu0 %v283
    %1914 = vmatpush1.msra.mxu0 %v282
    %1915 = vmatprep.subr.mxu0 %v287
    %1916 = vmatpush1.msra.mxu0 %v286
    %1917 = vmatprep.subr.mxu0 %v291
    %1918 = vmatpush1.msra.mxu0 %v290
    %1919 = vmatprep.subr.mxu0 %v295
    %1920 = vmatpush1.msra.mxu0 %v294
    %1921 = vmatprep.subr.mxu0 %v299
    %1922 = vmatpush1.msra.mxu0 %v298
    %1923 = vmatprep.subr.mxu0 %v303
    %1924 = vmatpush1.msra.mxu0 %v302
    %1925 = vmatprep.subr.mxu0 %v307
    %1926 = vmatpush1.msra.mxu0 %v306
    %1927 = vmatprep.subr.mxu0 %v311
    %1928 = vmatpush1.msra.mxu0 %v310
    %1929 = vmatprep.subr.mxu0 %v315
    %1930 = vmatpush1.msra.mxu0 %v314
    %1931 = vmatprep.subr.mxu0 0.0
    %1932 = vmatpush1.msra.mxu0 0.0
    %1933 = vmatprep.subr.mxu0 0.0
    %1934 = vmatpush1.msra.mxu0 0.0
    %1935 = vmatprep.subr.mxu0 0.0
    %1936 = vmatpush1.msra.mxu0 0.0
    %1937 = vmatprep.subr.mxu0 0.0
    %1938 = vmatpush1.msra.mxu0 0.0
    %1939 = vmatprep.subr.mxu0 0.0
    %1940 = vmatpush1.msra.mxu0 0.0
    %1941 = vmatprep.subr.mxu0 0.0
    %1942 = vmatpush1.msra.mxu0 0.0
    %1943 = vmatprep.subr.mxu0 0.0
    %1944 = vmatpush1.msra.mxu0 0.0
    %1945 = vmatprep.subr.mxu0 0.0
    %1946 = vmatpush1.msra.mxu0 0.0
    %1947 = vmatprep.subr.mxu0 0.0
    %1948 = vmatpush1.msra.mxu0 0.0
    %1949 = vmatprep.subr.mxu0 0.0
    %1950 = vmatpush1.msra.mxu0 0.0
    %1951 = vmatprep.subr.mxu0 0.0
    %1952 = vmatpush1.msra.mxu0 0.0
    %1953 = vmatprep.subr.mxu0 0.0
    %1954 = vmatpush1.msra.mxu0 0.0
    %1955 = vmatprep.subr.mxu0 0.0
    %1956 = vmatpush1.msra.mxu0 0.0
    %1957 = vmatprep.subr.mxu0 0.0
    %1958 = vmatpush1.msra.mxu0 0.0
    %1959 = vmatprep.subr.mxu0 0.0
    %1960 = vmatpush1.msra.mxu0 0.0
    %1961 = vmatprep.subr.mxu0 0.0
    %1962 = vmatpush1.msra.mxu0 0.0
    %1963 = vmatprep.mubr.f32.mxu0 0.0
    %1964 = vmatmul.mubr.f32.gmra.mrb[0].mxu0 %v1896
    %v1965 = vpop.f32.mrb[0].mxu0
    %v1966 = vadd.f32 0.0, %v1965
    %v1967 = vpop.f32.mrb[0].mxu0
    %v1968 = vadd.f32 0.0, %v1967
    %1969 = vdwg.mxu0
    %1970 = vmatprep.subr.mxu0 %v257
    %1971 = vmatpush1.msra.mxu0 %v256
    %1972 = vmatprep.subr.mxu0 %v261
    %1973 = vmatpush1.msra.mxu0 %v260
    %1974 = vmatprep.subr.mxu0 %v265
    %1975 = vmatpush1.msra.mxu0 %v264
    %1976 = vmatprep.subr.mxu0 %v269
    %1977 = vmatpush1.msra.mxu0 %v268
    %1978 = vmatprep.subr.mxu0 %v273
    %1979 = vmatpush1.msra.mxu0 %v272
    %1980 = vmatprep.subr.mxu0 %v277
    %1981 = vmatpush1.msra.mxu0 %v276
    %1982 = vmatprep.subr.mxu0 %v281
    %1983 = vmatpush1.msra.mxu0 %v280
    %1984 = vmatprep.subr.mxu0 %v285
    %1985 = vmatpush1.msra.mxu0 %v284
    %1986 = vmatprep.subr.mxu0 %v289
    %1987 = vmatpush1.msra.mxu0 %v288
    %1988 = vmatprep.subr.mxu0 %v293
    %1989 = vmatpush1.msra.mxu0 %v292
    %1990 = vmatprep.subr.mxu0 %v297
    %1991 = vmatpush1.msra.mxu0 %v296
    %1992 = vmatprep.subr.mxu0 %v301
    %1993 = vmatpush1.msra.mxu0 %v300
    %1994 = vmatprep.subr.mxu0 %v305
    %1995 = vmatpush1.msra.mxu0 %v304
    %1996 = vmatprep.subr.mxu0 %v309
    %1997 = vmatpush1.msra.mxu0 %v308
    %1998 = vmatprep.subr.mxu0 %v313
    %1999 = vmatpush1.msra.mxu0 %v312
    %2000 = vmatprep.subr.mxu0 %v317
    %2001 = vmatpush1.msra.mxu0 %v316
    %2002 = vmatprep.subr.mxu0 0.0
    %2003 = vmatpush1.msra.mxu0 0.0
    %2004 = vmatprep.subr.mxu0 0.0
    %2005 = vmatpush1.msra.mxu0 0.0
    %2006 = vmatprep.subr.mxu0 0.0
    %2007 = vmatpush1.msra.mxu0 0.0
    %2008 = vmatprep.subr.mxu0 0.0
    %2009 = vmatpush1.msra.mxu0 0.0
    %2010 = vmatprep.subr.mxu0 0.0
    %2011 = vmatpush1.msra.mxu0 0.0
    %2012 = vmatprep.subr.mxu0 0.0
    %2013 = vmatpush1.msra.mxu0 0.0
    %2014 = vmatprep.subr.mxu0 0.0
    %2015 = vmatpush1.msra.mxu0 0.0
    %2016 = vmatprep.subr.mxu0 0.0
    %2017 = vmatpush1.msra.mxu0 0.0
    %2018 = vmatprep.subr.mxu0 0.0
    %2019 = vmatpush1.msra.mxu0 0.0
    %2020 = vmatprep.subr.mxu0 0.0
    %2021 = vmatpush1.msra.mxu0 0.0
    %2022 = vmatprep.subr.mxu0 0.0
    %2023 = vmatpush1.msra.mxu0 0.0
    %2024 = vmatprep.subr.mxu0 0.0
    %2025 = vmatpush1.msra.mxu0 0.0
    %2026 = vmatprep.subr.mxu0 0.0
    %2027 = vmatpush1.msra.mxu0 0.0
    %2028 = vmatprep.subr.mxu0 0.0
    %2029 = vmatpush1.msra.mxu0 0.0
    %2030 = vmatprep.subr.mxu0 0.0
    %2031 = vmatpush1.msra.mxu0 0.0
    %2032 = vmatprep.subr.mxu0 0.0
    %2033 = vmatpush1.msra.mxu0 0.0
    %2034 = vmatprep.mubr.f32.mxu0 0.0
    %2035 = vmatmul.mubr.f32.gmra.mrb[0].mxu0 %v1896
    %v2036 = vpop.f32.mrb[0].mxu0
    %v2037 = vadd.f32 0.0, %v2036
    %v2038 = vpop.f32.mrb[0].mxu0
    %v2039 = vadd.f32 0.0, %v2038
    %2040 = vdwg.mxu0
    %v2041 = vadd.f32 %v578, %v1966
    %v2042 = vadd.f32 %v580, %v1968
    %v2043 = vadd.f32 %v691, %v2037
    %v2044 = vadd.f32 %v693, %v2039
    %v2045 = vxor.u32 %v2041, 2147483648
    %v2046 = vmul.f32 %v2045, 1.442695
    %v2047 = vpow.pop %v2046
    %v2048 = vadd.f32 %v2047, 1.0
    %v2049 = vrcp.pop %v2048
    %v2050 = vmul.f32 1.0, %v2049
    %v2051 = vxor.u32 %v2042, 2147483648
    %v2052 = vmul.f32 %v2051, 1.442695
    %v2053 = vpow.pop %v2052
    %v2054 = vadd.f32 %v2053, 1.0
    %v2055 = vrcp.pop %v2054
    %v2056 = vmul.f32 1.0, %v2055
    %v2057 = vtanh.pop %v2043
    %v2058 = vxor.u32 %v2044, 2147483648
    %v2059 = vmul.f32 %v2058, 1.442695
    %v2060 = vpow.pop %v2059
    %v2061 = vadd.f32 %v2060, 1.0
    %v2062 = vrcp.pop %v2061
    %v2063 = vmul.f32 1.0, %v2062
    %v2064 = vmul.f32 %v2056, %v1894
    %v2065 = vmul.f32 %v2050, %v2057
    %v2066 = vadd.f32 %v2064, %v2065
    %v2067 = vtanh.pop %v2066
    %v2068 = vmul.f32 %v2063, %v2067
    %v2069 = vmax.f32 %v2068, 0.0
    %2070 = vst [vmem:[#allocation2 + $0x38] sm:$0xff] %v2069
    %v2071 = vld [vmem:[#allocation2] sm:$0xff]
    %v2072 = vld [vmem:[#allocation2 + $0x8] sm:$0xff]
    %v2073 = vld [vmem:[#allocation2 + $0x10] sm:$0xff]
    %v2074 = vld [vmem:[#allocation2 + $0x18] sm:$0xff]
    %v2075 = vld [vmem:[#allocation2 + $0x20] sm:$0xff]
    %v2076 = vld [vmem:[#allocation2 + $0x28] sm:$0xff]
    %v2077 = vld [vmem:[#allocation2 + $0x30] sm:$0xff]
    %v2078 = vld [vmem:[#allocation2 + $0x38] sm:$0xff]
    %v2080 = vlaneseq
    %v2081 = vshrl.u32 %v2080, 7
    %v2082 = vsub.s32 0, %v2081
    %v2083 = vrot.slane %v447, %v2082
    %v2084 = vlaneseq
    %v2085 = vshrl.u32 %v2084, 7
    %v2086 = vsub.s32 1, %v2085
    %v2087 = vrot.slane %v447, %v2086
    %v2088 = vlaneseq
    %v2089 = vshrl.u32 %v2088, 7
    %v2090 = vsub.s32 2, %v2089
    %v2091 = vrot.slane %v447, %v2090
    %v2092 = vlaneseq
    %v2093 = vshrl.u32 %v2092, 7
    %v2094 = vsub.s32 3, %v2093
    %v2095 = vrot.slane %v447, %v2094
    %2100 = vmatprep.subr.mxu0 %v320
    %2101 = vmatpush1.msra.mxu0 %v319
    %2102 = vmatprep.subr.mxu0 %v324
    %2103 = vmatpush1.msra.mxu0 %v323
    %2104 = vmatprep.subr.mxu0 %v328
    %2105 = vmatpush1.msra.mxu0 %v327
    %2106 = vmatprep.subr.mxu0 %v332
    %2107 = vmatpush1.msra.mxu0 %v331
    %2108 = vmatprep.subr.mxu0 %v336
    %2109 = vmatpush1.msra.mxu0 %v335
    %2110 = vmatprep.subr.mxu0 %v340
    %2111 = vmatpush1.msra.mxu0 %v339
    %2112 = vmatprep.subr.mxu0 %v344
    %2113 = vmatpush1.msra.mxu0 %v343
    %2114 = vmatprep.subr.mxu0 %v348
    %2115 = vmatpush1.msra.mxu0 %v347
    %2116 = vmatprep.subr.mxu0 %v352
    %2117 = vmatpush1.msra.mxu0 %v351
    %2118 = vmatprep.subr.mxu0 %v356
    %2119 = vmatpush1.msra.mxu0 %v355
    %2120 = vmatprep.subr.mxu0 %v360
    %2121 = vmatpush1.msra.mxu0 %v359
    %2122 = vmatprep.subr.mxu0 %v364
    %2123 = vmatpush1.msra.mxu0 %v363
    %2124 = vmatprep.subr.mxu0 %v368
    %2125 = vmatpush1.msra.mxu0 %v367
    %2126 = vmatprep.subr.mxu0 %v372
    %2127 = vmatpush1.msra.mxu0 %v371
    %2128 = vmatprep.subr.mxu0 %v376
    %2129 = vmatpush1.msra.mxu0 %v375
    %2130 = vmatprep.subr.mxu0 %v380
    %2131 = vmatpush1.msra.mxu0 %v379
    %2132 = vmatprep.subr.mxu0 0.0
    %2133 = vmatpush1.msra.mxu0 0.0
    %2134 = vmatprep.subr.mxu0 0.0
    %2135 = vmatpush1.msra.mxu0 0.0
    %2136 = vmatprep.subr.mxu0 0.0
    %2137 = vmatpush1.msra.mxu0 0.0
    %2138 = vmatprep.subr.mxu0 0.0
    %2139 = vmatpush1.msra.mxu0 0.0
    %2140 = vmatprep.subr.mxu0 0.0
    %2141 = vmatpush1.msra.mxu0 0.0
    %2142 = vmatprep.subr.mxu0 0.0
    %2143 = vmatpush1.msra.mxu0 0.0
    %2144 = vmatprep.subr.mxu0 0.0
    %2145 = vmatpush1.msra.mxu0 0.0
    %2146 = vmatprep.subr.mxu0 0.0
    %2147 = vmatpush1.msra.mxu0 0.0
    %2148 = vmatprep.subr.mxu0 0.0
    %2149 = vmatpush1.msra.mxu0 0.0
    %2150 = vmatprep.subr.mxu0 0.0
    %2151 = vmatpush1.msra.mxu0 0.0
    %2152 = vmatprep.subr.mxu0 0.0
    %2153 = vmatpush1.msra.mxu0 0.0
    %2154 = vmatprep.subr.mxu0 0.0
    %2155 = vmatpush1.msra.mxu0 0.0
    %2156 = vmatprep.subr.mxu0 0.0
    %2157 = vmatpush1.msra.mxu0 0.0
    %2158 = vmatprep.subr.mxu0 0.0
    %2159 = vmatpush1.msra.mxu0 0.0
    %2160 = vmatprep.subr.mxu0 0.0
    %2161 = vmatpush1.msra.mxu0 0.0
    %2162 = vmatprep.subr.mxu0 0.0
    %2163 = vmatpush1.msra.mxu0 0.0
    %2164 = vmatprep.mubr.f32.mxu0 0.0
    %2165 = vmatmul.mubr.f32.gmra.mrb[0].mxu0 %v2071
    %v2166 = vpop.f32.mrb[0].mxu0
    %v2167 = vadd.f32 %v2083, %v2166
    %v2168 = vpop.f32.mrb[0].mxu0
    %v2169 = vadd.f32 %v2087, %v2168
    %2170 = vmatprep.mubr.f32.mxu0 0.0
    %2171 = vmatmul.mubr.f32.gmra.mrb[0].mxu0 %v2072
    %v2172 = vpop.f32.mrb[0].mxu0
    %v2173 = vadd.f32 %v2083, %v2172
    %v2174 = vpop.f32.mrb[0].mxu0
    %v2175 = vadd.f32 %v2087, %v2174
    %2176 = vmatprep.mubr.f32.mxu0 0.0
    %2177 = vmatmul.mubr.f32.gmra.mrb[0].mxu0 %v2073
    %v2178 = vpop.f32.mrb[0].mxu0
    %v2179 = vadd.f32 %v2083, %v2178
    %v2180 = vpop.f32.mrb[0].mxu0
    %v2181 = vadd.f32 %v2087, %v2180
    %2182 = vmatprep.mubr.f32.mxu0 0.0
    %2183 = vmatmul.mubr.f32.gmra.mrb[0].mxu0 %v2074
    %v2184 = vpop.f32.mrb[0].mxu0
    %v2185 = vadd.f32 %v2083, %v2184
    %v2186 = vpop.f32.mrb[0].mxu0
    %v2187 = vadd.f32 %v2087, %v2186
    %2188 = vmatprep.mubr.f32.mxu0 0.0
    %2189 = vmatmul.mubr.f32.gmra.mrb[0].mxu0 %v2075
    %v2190 = vpop.f32.mrb[0].mxu0
    %v2191 = vadd.f32 %v2083, %v2190
    %v2192 = vpop.f32.mrb[0].mxu0
    %v2193 = vadd.f32 %v2087, %v2192
    %2194 = vmatprep.mubr.f32.mxu0 0.0
    %2195 = vmatmul.mubr.f32.gmra.mrb[0].mxu0 %v2076
    %v2196 = vpop.f32.mrb[0].mxu0
    %v2197 = vadd.f32 %v2083, %v2196
    %v2198 = vpop.f32.mrb[0].mxu0
    %v2199 = vadd.f32 %v2087, %v2198
    %2200 = vmatprep.mubr.f32.mxu0 0.0
    %2201 = vmatmul.mubr.f32.gmra.mrb[0].mxu0 %v2077
    %v2202 = vpop.f32.mrb[0].mxu0
    %v2203 = vadd.f32 %v2083, %v2202
    %v2204 = vpop.f32.mrb[0].mxu0
    %v2205 = vadd.f32 %v2087, %v2204
    %2206 = vmatprep.mubr.f32.mxu0 0.0
    %2207 = vmatmul.mubr.f32.gmra.mrb[0].mxu0 %v2078
    %v2208 = vpop.f32.mrb[0].mxu0
    %v2209 = vadd.f32 %v2083, %v2208
    %v2210 = vpop.f32.mrb[0].mxu0
    %v2211 = vadd.f32 %v2087, %v2210
    %2212 = vdwg.mxu0
    %2213 = vmatprep.subr.mxu0 %v322
    %2214 = vmatpush1.msra.mxu0 %v321
    %2215 = vmatprep.subr.mxu0 %v326
    %2216 = vmatpush1.msra.mxu0 %v325
    %2217 = vmatprep.subr.mxu0 %v330
    %2218 = vmatpush1.msra.mxu0 %v329
    %2219 = vmatprep.subr.mxu0 %v334
    %2220 = vmatpush1.msra.mxu0 %v333
    %2221 = vmatprep.subr.mxu0 %v338
    %2222 = vmatpush1.msra.mxu0 %v337
    %2223 = vmatprep.subr.mxu0 %v342
    %2224 = vmatpush1.msra.mxu0 %v341
    %2225 = vmatprep.subr.mxu0 %v346
    %2226 = vmatpush1.msra.mxu0 %v345
    %2227 = vmatprep.subr.mxu0 %v350
    %2228 = vmatpush1.msra.mxu0 %v349
    %2229 = vmatprep.subr.mxu0 %v354
    %2230 = vmatpush1.msra.mxu0 %v353
    %2231 = vmatprep.subr.mxu0 %v358
    %2232 = vmatpush1.msra.mxu0 %v357
    %2233 = vmatprep.subr.mxu0 %v362
    %2234 = vmatpush1.msra.mxu0 %v361
    %2235 = vmatprep.subr.mxu0 %v366
    %2236 = vmatpush1.msra.mxu0 %v365
    %2237 = vmatprep.subr.mxu0 %v370
    %2238 = vmatpush1.msra.mxu0 %v369
    %2239 = vmatprep.subr.mxu0 %v374
    %2240 = vmatpush1.msra.mxu0 %v373
    %2241 = vmatprep.subr.mxu0 %v378
    %2242 = vmatpush1.msra.mxu0 %v377
    %2243 = vmatprep.subr.mxu0 %v382
    %2244 = vmatpush1.msra.mxu0 %v381
    %2245 = vmatprep.subr.mxu0 0.0
    %2246 = vmatpush1.msra.mxu0 0.0
    %2247 = vmatprep.subr.mxu0 0.0
    %2248 = vmatpush1.msra.mxu0 0.0
    %2249 = vmatprep.subr.mxu0 0.0
    %2250 = vmatpush1.msra.mxu0 0.0
    %2251 = vmatprep.subr.mxu0 0.0
    %2252 = vmatpush1.msra.mxu0 0.0
    %2253 = vmatprep.subr.mxu0 0.0
    %2254 = vmatpush1.msra.mxu0 0.0
    %2255 = vmatprep.subr.mxu0 0.0
    %2256 = vmatpush1.msra.mxu0 0.0
    %2257 = vmatprep.subr.mxu0 0.0
    %2258 = vmatpush1.msra.mxu0 0.0
    %2259 = vmatprep.subr.mxu0 0.0
    %2260 = vmatpush1.msra.mxu0 0.0
    %2261 = vmatprep.subr.mxu0 0.0
    %2262 = vmatpush1.msra.mxu0 0.0
    %2263 = vmatprep.subr.mxu0 0.0
    %2264 = vmatpush1.msra.mxu0 0.0
    %2265 = vmatprep.subr.mxu0 0.0
    %2266 = vmatpush1.msra.mxu0 0.0
    %2267 = vmatprep.subr.mxu0 0.0
    %2268 = vmatpush1.msra.mxu0 0.0
    %2269 = vmatprep.subr.mxu0 0.0
    %2270 = vmatpush1.msra.mxu0 0.0
    %2271 = vmatprep.subr.mxu0 0.0
    %2272 = vmatpush1.msra.mxu0 0.0
    %2273 = vmatprep.subr.mxu0 0.0
    %2274 = vmatpush1.msra.mxu0 0.0
    %2275 = vmatprep.subr.mxu0 0.0
    %2276 = vmatpush1.msra.mxu0 0.0
    %2277 = vmatprep.mubr.f32.mxu0 0.0
    %2278 = vmatmul.mubr.f32.gmra.mrb[0].mxu0 %v2071
    %v2279 = vpop.f32.mrb[0].mxu0
    %v2280 = vadd.f32 %v2091, %v2279
    %v2281 = vpop.f32.mrb[0].mxu0
    %v2282 = vadd.f32 %v2095, %v2281
    %2283 = vmatprep.mubr.f32.mxu0 0.0
    %2284 = vmatmul.mubr.f32.gmra.mrb[0].mxu0 %v2072
    %v2285 = vpop.f32.mrb[0].mxu0
    %v2286 = vadd.f32 %v2091, %v2285
    %v2287 = vpop.f32.mrb[0].mxu0
    %v2288 = vadd.f32 %v2095, %v2287
    %2289 = vmatprep.mubr.f32.mxu0 0.0
    %2290 = vmatmul.mubr.f32.gmra.mrb[0].mxu0 %v2073
    %v2291 = vpop.f32.mrb[0].mxu0
    %v2292 = vadd.f32 %v2091, %v2291
    %v2293 = vpop.f32.mrb[0].mxu0
    %v2294 = vadd.f32 %v2095, %v2293
    %2295 = vmatprep.mubr.f32.mxu0 0.0
    %2296 = vmatmul.mubr.f32.gmra.mrb[0].mxu0 %v2074
    %v2297 = vpop.f32.mrb[0].mxu0
    %v2298 = vadd.f32 %v2091, %v2297
    %v2299 = vpop.f32.mrb[0].mxu0
    %v2300 = vadd.f32 %v2095, %v2299
    %2301 = vmatprep.mubr.f32.mxu0 0.0
    %2302 = vmatmul.mubr.f32.gmra.mrb[0].mxu0 %v2075
    %v2303 = vpop.f32.mrb[0].mxu0
    %v2304 = vadd.f32 %v2091, %v2303
    %v2305 = vpop.f32.mrb[0].mxu0
    %v2306 = vadd.f32 %v2095, %v2305
    %2307 = vmatprep.mubr.f32.mxu0 0.0
    %2308 = vmatmul.mubr.f32.gmra.mrb[0].mxu0 %v2076
    %v2309 = vpop.f32.mrb[0].mxu0
    %v2310 = vadd.f32 %v2091, %v2309
    %v2311 = vpop.f32.mrb[0].mxu0
    %v2312 = vadd.f32 %v2095, %v2311
    %2313 = vmatprep.mubr.f32.mxu0 0.0
    %2314 = vmatmul.mubr.f32.gmra.mrb[0].mxu0 %v2077
    %v2315 = vpop.f32.mrb[0].mxu0
    %v2316 = vadd.f32 %v2091, %v2315
    %v2317 = vpop.f32.mrb[0].mxu0
    %v2318 = vadd.f32 %v2095, %v2317
    %2319 = vmatprep.mubr.f32.mxu0 0.0
    %2320 = vmatmul.mubr.f32.gmra.mrb[0].mxu0 %v2078
    %v2321 = vpop.f32.mrb[0].mxu0
    %v2322 = vadd.f32 %v2091, %v2321
    %v2323 = vpop.f32.mrb[0].mxu0
    %v2324 = vadd.f32 %v2095, %v2323
    %2325 = vdwg.mxu0
    %2326 = vmatprep.subr.mxu0 %v384
    %2327 = vmatpush1.msra.mxu0 %v383
    %2328 = vmatprep.subr.mxu0 %v388
    %2329 = vmatpush1.msra.mxu0 %v387
    %2330 = vmatprep.subr.mxu0 %v392
    %2331 = vmatpush1.msra.mxu0 %v391
    %2332 = vmatprep.subr.mxu0 %v396
    %2333 = vmatpush1.msra.mxu0 %v395
    %2334 = vmatprep.subr.mxu0 %v400
    %2335 = vmatpush1.msra.mxu0 %v399
    %2336 = vmatprep.subr.mxu0 %v404
    %2337 = vmatpush1.msra.mxu0 %v403
    %2338 = vmatprep.subr.mxu0 %v408
    %2339 = vmatpush1.msra.mxu0 %v407
    %2340 = vmatprep.subr.mxu0 %v412
    %2341 = vmatpush1.msra.mxu0 %v411
    %2342 = vmatprep.subr.mxu0 %v416
    %2343 = vmatpush1.msra.mxu0 %v415
    %2344 = vmatprep.subr.mxu0 %v420
    %2345 = vmatpush1.msra.mxu0 %v419
    %2346 = vmatprep.subr.mxu0 %v424
    %2347 = vmatpush1.msra.mxu0 %v423
    %2348 = vmatprep.subr.mxu0 %v428
    %2349 = vmatpush1.msra.mxu0 %v427
    %2350 = vmatprep.subr.mxu0 %v432
    %2351 = vmatpush1.msra.mxu0 %v431
    %2352 = vmatprep.subr.mxu0 %v436
    %2353 = vmatpush1.msra.mxu0 %v435
    %2354 = vmatprep.subr.mxu0 %v440
    %2355 = vmatpush1.msra.mxu0 %v439
    %2356 = vmatprep.subr.mxu0 %v444
    %2357 = vmatpush1.msra.mxu0 %v443
    %2358 = vmatprep.subr.mxu0 0.0
    %2359 = vmatpush1.msra.mxu0 0.0
    %2360 = vmatprep.subr.mxu0 0.0
    %2361 = vmatpush1.msra.mxu0 0.0
    %2362 = vmatprep.subr.mxu0 0.0
    %2363 = vmatpush1.msra.mxu0 0.0
    %2364 = vmatprep.subr.mxu0 0.0
    %2365 = vmatpush1.msra.mxu0 0.0
    %2366 = vmatprep.subr.mxu0 0.0
    %2367 = vmatpush1.msra.mxu0 0.0
    %2368 = vmatprep.subr.mxu0 0.0
    %2369 = vmatpush1.msra.mxu0 0.0
    %2370 = vmatprep.subr.mxu0 0.0
    %2371 = vmatpush1.msra.mxu0 0.0
    %2372 = vmatprep.subr.mxu0 0.0
    %2373 = vmatpush1.msra.mxu0 0.0
    %2374 = vmatprep.subr.mxu0 0.0
    %2375 = vmatpush1.msra.mxu0 0.0
    %2376 = vmatprep.subr.mxu0 0.0
    %2377 = vmatpush1.msra.mxu0 0.0
    %2378 = vmatprep.subr.mxu0 0.0
    %2379 = vmatpush1.msra.mxu0 0.0
    %2380 = vmatprep.subr.mxu0 0.0
    %2381 = vmatpush1.msra.mxu0 0.0
    %2382 = vmatprep.subr.mxu0 0.0
    %2383 = vmatpush1.msra.mxu0 0.0
    %2384 = vmatprep.subr.mxu0 0.0
    %2385 = vmatpush1.msra.mxu0 0.0
    %2386 = vmatprep.subr.mxu0 0.0
    %2387 = vmatpush1.msra.mxu0 0.0
    %2388 = vmatprep.subr.mxu0 0.0
    %2389 = vmatpush1.msra.mxu0 0.0
    %2390 = vmatprep.mubr.f32.mxu0 0.0
    %2391 = vmatmul.mubr.f32.gmra.mrb[0].mxu0 0.0
    %v2392 = vpop.f32.mrb[0].mxu0
    %v2393 = vadd.f32 0.0, %v2392
    %v2394 = vpop.f32.mrb[0].mxu0
    %v2395 = vadd.f32 0.0, %v2394
    %2396 = vdwg.mxu0
    %2397 = vmatprep.subr.mxu0 %v386
    %2398 = vmatpush1.msra.mxu0 %v385
    %2399 = vmatprep.subr.mxu0 %v390
    %2400 = vmatpush1.msra.mxu0 %v389
    %2401 = vmatprep.subr.mxu0 %v394
    %2402 = vmatpush1.msra.mxu0 %v393
    %2403 = vmatprep.subr.mxu0 %v398
    %2404 = vmatpush1.msra.mxu0 %v397
    %2405 = vmatprep.subr.mxu0 %v402
    %2406 = vmatpush1.msra.mxu0 %v401
    %2407 = vmatprep.subr.mxu0 %v406
    %2408 = vmatpush1.msra.mxu0 %v405
    %2409 = vmatprep.subr.mxu0 %v410
    %2410 = vmatpush1.msra.mxu0 %v409
    %2411 = vmatprep.subr.mxu0 %v414
    %2412 = vmatpush1.msra.mxu0 %v413
    %2413 = vmatprep.subr.mxu0 %v418
    %2414 = vmatpush1.msra.mxu0 %v417
    %2415 = vmatprep.subr.mxu0 %v422
    %2416 = vmatpush1.msra.mxu0 %v421
    %2417 = vmatprep.subr.mxu0 %v426
    %2418 = vmatpush1.msra.mxu0 %v425
    %2419 = vmatprep.subr.mxu0 %v430
    %2420 = vmatpush1.msra.mxu0 %v429
    %2421 = vmatprep.subr.mxu0 %v434
    %2422 = vmatpush1.msra.mxu0 %v433
    %2423 = vmatprep.subr.mxu0 %v438
    %2424 = vmatpush1.msra.mxu0 %v437
    %2425 = vmatprep.subr.mxu0 %v442
    %2426 = vmatpush1.msra.mxu0 %v441
    %2427 = vmatprep.subr.mxu0 %v446
    %2428 = vmatpush1.msra.mxu0 %v445
    %2429 = vmatprep.subr.mxu0 0.0
    %2430 = vmatpush1.msra.mxu0 0.0
    %2431 = vmatprep.subr.mxu0 0.0
    %2432 = vmatpush1.msra.mxu0 0.0
    %2433 = vmatprep.subr.mxu0 0.0
    %2434 = vmatpush1.msra.mxu0 0.0
    %2435 = vmatprep.subr.mxu0 0.0
    %2436 = vmatpush1.msra.mxu0 0.0
    %2437 = vmatprep.subr.mxu0 0.0
    %2438 = vmatpush1.msra.mxu0 0.0
    %2439 = vmatprep.subr.mxu0 0.0
    %2440 = vmatpush1.msra.mxu0 0.0
    %2441 = vmatprep.subr.mxu0 0.0
    %2442 = vmatpush1.msra.mxu0 0.0
    %2443 = vmatprep.subr.mxu0 0.0
    %2444 = vmatpush1.msra.mxu0 0.0
    %2445 = vmatprep.subr.mxu0 0.0
    %2446 = vmatpush1.msra.mxu0 0.0
    %2447 = vmatprep.subr.mxu0 0.0
    %2448 = vmatpush1.msra.mxu0 0.0
    %2449 = vmatprep.subr.mxu0 0.0
    %2450 = vmatpush1.msra.mxu0 0.0
    %2451 = vmatprep.subr.mxu0 0.0
    %2452 = vmatpush1.msra.mxu0 0.0
    %2453 = vmatprep.subr.mxu0 0.0
    %2454 = vmatpush1.msra.mxu0 0.0
    %2455 = vmatprep.subr.mxu0 0.0
    %2456 = vmatpush1.msra.mxu0 0.0
    %2457 = vmatprep.subr.mxu0 0.0
    %2458 = vmatpush1.msra.mxu0 0.0
    %2459 = vmatprep.subr.mxu0 0.0
    %2460 = vmatpush1.msra.mxu0 0.0
    %2461 = vmatprep.mubr.f32.mxu0 0.0
    %2462 = vmatmul.mubr.f32.gmra.mrb[0].mxu0 0.0
    %v2463 = vpop.f32.mrb[0].mxu0
    %v2464 = vadd.f32 0.0, %v2463
    %v2465 = vpop.f32.mrb[0].mxu0
    %v2466 = vadd.f32 0.0, %v2465
    %2467 = vdwg.mxu0
    %v2468 = vadd.f32 %v2167, %v2393
    %v2469 = vadd.f32 %v2169, %v2395
    %v2470 = vadd.f32 %v2280, %v2464
    %v2471 = vadd.f32 %v2282, %v2466
    %v2472 = vxor.u32 %v2468, 2147483648
    %v2473 = vmul.f32 %v2472, 1.442695
    %v2474 = vpow.pop %v2473
    %v2475 = vadd.f32 %v2474, 1.0
    %v2476 = vrcp.pop %v2475
    %v2477 = vmul.f32 1.0, %v2476
    %v2478 = vxor.u32 %v2469, 2147483648
    %v2479 = vmul.f32 %v2478, 1.442695
    %v2480 = vpow.pop %v2479
    %v2481 = vadd.f32 %v2480, 1.0
    %v2482 = vrcp.pop %v2481
    %v2483 = vmul.f32 1.0, %v2482
    %v2484 = vtanh.pop %v2470
    %v2485 = vxor.u32 %v2471, 2147483648
    %v2486 = vmul.f32 %v2485, 1.442695
    %v2487 = vpow.pop %v2486
    %v2488 = vadd.f32 %v2487, 1.0
    %v2489 = vrcp.pop %v2488
    %v2490 = vmul.f32 1.0, %v2489
    %v2491 = vmul.f32 %v2483, 0.0
    %v2492 = vmul.f32 %v2477, %v2484
    %v2493 = vadd.f32 %v2491, %v2492
    %v2494 = vtanh.pop %v2493
    %v2495 = vmul.f32 %v2490, %v2494
    %v2496 = vmax.f32 %v2495, 0.0
    %v2497 = vadd.f32 %v2496, 0.0
    %2498 = vmatprep.subr.mxu0 %v384
    %2499 = vmatpush1.msra.mxu0 %v383
    %2500 = vmatprep.subr.mxu0 %v388
    %2501 = vmatpush1.msra.mxu0 %v387
    %2502 = vmatprep.subr.mxu0 %v392
    %2503 = vmatpush1.msra.mxu0 %v391
    %2504 = vmatprep.subr.mxu0 %v396
    %2505 = vmatpush1.msra.mxu0 %v395
    %2506 = vmatprep.subr.mxu0 %v400
    %2507 = vmatpush1.msra.mxu0 %v399
    %2508 = vmatprep.subr.mxu0 %v404
    %2509 = vmatpush1.msra.mxu0 %v403
    %2510 = vmatprep.subr.mxu0 %v408
    %2511 = vmatpush1.msra.mxu0 %v407
    %2512 = vmatprep.subr.mxu0 %v412
    %2513 = vmatpush1.msra.mxu0 %v411
    %2514 = vmatprep.subr.mxu0 %v416
    %2515 = vmatpush1.msra.mxu0 %v415
    %2516 = vmatprep.subr.mxu0 %v420
    %2517 = vmatpush1.msra.mxu0 %v419
    %2518 = vmatprep.subr.mxu0 %v424
    %2519 = vmatpush1.msra.mxu0 %v423
    %2520 = vmatprep.subr.mxu0 %v428
    %2521 = vmatpush1.msra.mxu0 %v427
    %2522 = vmatprep.subr.mxu0 %v432
    %2523 = vmatpush1.msra.mxu0 %v431
    %2524 = vmatprep.subr.mxu0 %v436
    %2525 = vmatpush1.msra.mxu0 %v435
    %2526 = vmatprep.subr.mxu0 %v440
    %2527 = vmatpush1.msra.mxu0 %v439
    %2528 = vmatprep.subr.mxu0 %v444
    %2529 = vmatpush1.msra.mxu0 %v443
    %2530 = vmatprep.subr.mxu0 0.0
    %2531 = vmatpush1.msra.mxu0 0.0
    %2532 = vmatprep.subr.mxu0 0.0
    %2533 = vmatpush1.msra.mxu0 0.0
    %2534 = vmatprep.subr.mxu0 0.0
    %2535 = vmatpush1.msra.mxu0 0.0
    %2536 = vmatprep.subr.mxu0 0.0
    %2537 = vmatpush1.msra.mxu0 0.0
    %2538 = vmatprep.subr.mxu0 0.0
    %2539 = vmatpush1.msra.mxu0 0.0
    %2540 = vmatprep.subr.mxu0 0.0
    %2541 = vmatpush1.msra.mxu0 0.0
    %2542 = vmatprep.subr.mxu0 0.0
    %2543 = vmatpush1.msra.mxu0 0.0
    %2544 = vmatprep.subr.mxu0 0.0
    %2545 = vmatpush1.msra.mxu0 0.0
    %2546 = vmatprep.subr.mxu0 0.0
    %2547 = vmatpush1.msra.mxu0 0.0
    %2548 = vmatprep.subr.mxu0 0.0
    %2549 = vmatpush1.msra.mxu0 0.0
    %2550 = vmatprep.subr.mxu0 0.0
    %2551 = vmatpush1.msra.mxu0 0.0
    %2552 = vmatprep.subr.mxu0 0.0
    %2553 = vmatpush1.msra.mxu0 0.0
    %2554 = vmatprep.subr.mxu0 0.0
    %2555 = vmatpush1.msra.mxu0 0.0
    %2556 = vmatprep.subr.mxu0 0.0
    %2557 = vmatpush1.msra.mxu0 0.0
    %2558 = vmatprep.subr.mxu0 0.0
    %2559 = vmatpush1.msra.mxu0 0.0
    %2560 = vmatprep.subr.mxu0 0.0
    %2561 = vmatpush1.msra.mxu0 0.0
    %2562 = vmatprep.mubr.f32.mxu0 0.0
    %2563 = vmatmul.mubr.f32.gmra.mrb[0].mxu0 %v2495
    %v2564 = vpop.f32.mrb[0].mxu0
    %v2565 = vadd.f32 0.0, %v2564
    %v2566 = vpop.f32.mrb[0].mxu0
    %v2567 = vadd.f32 0.0, %v2566
    %2568 = vdwg.mxu0
    %2569 = vmatprep.subr.mxu0 %v386
    %2570 = vmatpush1.msra.mxu0 %v385
    %2571 = vmatprep.subr.mxu0 %v390
    %2572 = vmatpush1.msra.mxu0 %v389
    %2573 = vmatprep.subr.mxu0 %v394
    %2574 = vmatpush1.msra.mxu0 %v393
    %2575 = vmatprep.subr.mxu0 %v398
    %2576 = vmatpush1.msra.mxu0 %v397
    %2577 = vmatprep.subr.mxu0 %v402
    %2578 = vmatpush1.msra.mxu0 %v401
    %2579 = vmatprep.subr.mxu0 %v406
    %2580 = vmatpush1.msra.mxu0 %v405
    %2581 = vmatprep.subr.mxu0 %v410
    %2582 = vmatpush1.msra.mxu0 %v409
    %2583 = vmatprep.subr.mxu0 %v414
    %2584 = vmatpush1.msra.mxu0 %v413
    %2585 = vmatprep.subr.mxu0 %v418
    %2586 = vmatpush1.msra.mxu0 %v417
    %2587 = vmatprep.subr.mxu0 %v422
    %2588 = vmatpush1.msra.mxu0 %v421
    %2589 = vmatprep.subr.mxu0 %v426
    %2590 = vmatpush1.msra.mxu0 %v425
    %2591 = vmatprep.subr.mxu0 %v430
    %2592 = vmatpush1.msra.mxu0 %v429
    %2593 = vmatprep.subr.mxu0 %v434
    %2594 = vmatpush1.msra.mxu0 %v433
    %2595 = vmatprep.subr.mxu0 %v438
    %2596 = vmatpush1.msra.mxu0 %v437
    %2597 = vmatprep.subr.mxu0 %v442
    %2598 = vmatpush1.msra.mxu0 %v441
    %2599 = vmatprep.subr.mxu0 %v446
    %2600 = vmatpush1.msra.mxu0 %v445
    %2601 = vmatprep.subr.mxu0 0.0
    %2602 = vmatpush1.msra.mxu0 0.0
    %2603 = vmatprep.subr.mxu0 0.0
    %2604 = vmatpush1.msra.mxu0 0.0
    %2605 = vmatprep.subr.mxu0 0.0
    %2606 = vmatpush1.msra.mxu0 0.0
    %2607 = vmatprep.subr.mxu0 0.0
    %2608 = vmatpush1.msra.mxu0 0.0
    %2609 = vmatprep.subr.mxu0 0.0
    %2610 = vmatpush1.msra.mxu0 0.0
    %2611 = vmatprep.subr.mxu0 0.0
    %2612 = vmatpush1.msra.mxu0 0.0
    %2613 = vmatprep.subr.mxu0 0.0
    %2614 = vmatpush1.msra.mxu0 0.0
    %2615 = vmatprep.subr.mxu0 0.0
    %2616 = vmatpush1.msra.mxu0 0.0
    %2617 = vmatprep.subr.mxu0 0.0
    %2618 = vmatpush1.msra.mxu0 0.0
    %2619 = vmatprep.subr.mxu0 0.0
    %2620 = vmatpush1.msra.mxu0 0.0
    %2621 = vmatprep.subr.mxu0 0.0
    %2622 = vmatpush1.msra.mxu0 0.0
    %2623 = vmatprep.subr.mxu0 0.0
    %2624 = vmatpush1.msra.mxu0 0.0
    %2625 = vmatprep.subr.mxu0 0.0
    %2626 = vmatpush1.msra.mxu0 0.0
    %2627 = vmatprep.subr.mxu0 0.0
    %2628 = vmatpush1.msra.mxu0 0.0
    %2629 = vmatprep.subr.mxu0 0.0
    %2630 = vmatpush1.msra.mxu0 0.0
    %2631 = vmatprep.subr.mxu0 0.0
    %2632 = vmatpush1.msra.mxu0 0.0
    %2633 = vmatprep.mubr.f32.mxu0 0.0
    %2634 = vmatmul.mubr.f32.gmra.mrb[0].mxu0 %v2495
    %v2635 = vpop.f32.mrb[0].mxu0
    %v2636 = vadd.f32 0.0, %v2635
    %v2637 = vpop.f32.mrb[0].mxu0
    %v2638 = vadd.f32 0.0, %v2637
    %2639 = vdwg.mxu0
    %v2640 = vadd.f32 %v2173, %v2565
    %v2641 = vadd.f32 %v2175, %v2567
    %v2642 = vadd.f32 %v2286, %v2636
    %v2643 = vadd.f32 %v2288, %v2638
    %v2644 = vxor.u32 %v2640, 2147483648
    %v2645 = vmul.f32 %v2644, 1.442695
    %v2646 = vpow.pop %v2645
    %v2647 = vadd.f32 %v2646, 1.0
    %v2648 = vrcp.pop %v2647
    %v2649 = vmul.f32 1.0, %v2648
    %v2650 = vxor.u32 %v2641, 2147483648
    %v2651 = vmul.f32 %v2650, 1.442695
    %v2652 = vpow.pop %v2651
    %v2653 = vadd.f32 %v2652, 1.0
    %v2654 = vrcp.pop %v2653
    %v2655 = vmul.f32 1.0, %v2654
    %v2656 = vtanh.pop %v2642
    %v2657 = vxor.u32 %v2643, 2147483648
    %v2658 = vmul.f32 %v2657, 1.442695
    %v2659 = vpow.pop %v2658
    %v2660 = vadd.f32 %v2659, 1.0
    %v2661 = vrcp.pop %v2660
    %v2662 = vmul.f32 1.0, %v2661
    %v2663 = vmul.f32 %v2655, %v2493
    %v2664 = vmul.f32 %v2649, %v2656
    %v2665 = vadd.f32 %v2663, %v2664
    %v2666 = vtanh.pop %v2665
    %v2667 = vmul.f32 %v2662, %v2666
    %v2668 = vmax.f32 %v2667, 0.0
    %v2669 = vadd.f32 %v2497, %v2668
    %2670 = vmatprep.subr.mxu0 %v384
    %2671 = vmatpush1.msra.mxu0 %v383
    %2672 = vmatprep.subr.mxu0 %v388
    %2673 = vmatpush1.msra.mxu0 %v387
    %2674 = vmatprep.subr.mxu0 %v392
    %2675 = vmatpush1.msra.mxu0 %v391
    %2676 = vmatprep.subr.mxu0 %v396
    %2677 = vmatpush1.msra.mxu0 %v395
    %2678 = vmatprep.subr.mxu0 %v400
    %2679 = vmatpush1.msra.mxu0 %v399
    %2680 = vmatprep.subr.mxu0 %v404
    %2681 = vmatpush1.msra.mxu0 %v403
    %2682 = vmatprep.subr.mxu0 %v408
    %2683 = vmatpush1.msra.mxu0 %v407
    %2684 = vmatprep.subr.mxu0 %v412
    %2685 = vmatpush1.msra.mxu0 %v411
    %2686 = vmatprep.subr.mxu0 %v416
    %2687 = vmatpush1.msra.mxu0 %v415
    %2688 = vmatprep.subr.mxu0 %v420
    %2689 = vmatpush1.msra.mxu0 %v419
    %2690 = vmatprep.subr.mxu0 %v424
    %2691 = vmatpush1.msra.mxu0 %v423
    %2692 = vmatprep.subr.mxu0 %v428
    %2693 = vmatpush1.msra.mxu0 %v427
    %2694 = vmatprep.subr.mxu0 %v432
    %2695 = vmatpush1.msra.mxu0 %v431
    %2696 = vmatprep.subr.mxu0 %v436
    %2697 = vmatpush1.msra.mxu0 %v435
    %2698 = vmatprep.subr.mxu0 %v440
    %2699 = vmatpush1.msra.mxu0 %v439
    %2700 = vmatprep.subr.mxu0 %v444
    %2701 = vmatpush1.msra.mxu0 %v443
    %2702 = vmatprep.subr.mxu0 0.0
    %2703 = vmatpush1.msra.mxu0 0.0
    %2704 = vmatprep.subr.mxu0 0.0
    %2705 = vmatpush1.msra.mxu0 0.0
    %2706 = vmatprep.subr.mxu0 0.0
    %2707 = vmatpush1.msra.mxu0 0.0
    %2708 = vmatprep.subr.mxu0 0.0
    %2709 = vmatpush1.msra.mxu0 0.0
    %2710 = vmatprep.subr.mxu0 0.0
    %2711 = vmatpush1.msra.mxu0 0.0
    %2712 = vmatprep.subr.mxu0 0.0
    %2713 = vmatpush1.msra.mxu0 0.0
    %2714 = vmatprep.subr.mxu0 0.0
    %2715 = vmatpush1.msra.mxu0 0.0
    %2716 = vmatprep.subr.mxu0 0.0
    %2717 = vmatpush1.msra.mxu0 0.0
    %2718 = vmatprep.subr.mxu0 0.0
    %2719 = vmatpush1.msra.mxu0 0.0
    %2720 = vmatprep.subr.mxu0 0.0
    %2721 = vmatpush1.msra.mxu0 0.0
    %2722 = vmatprep.subr.mxu0 0.0
    %2723 = vmatpush1.msra.mxu0 0.0
    %2724 = vmatprep.subr.mxu0 0.0
    %2725 = vmatpush1.msra.mxu0 0.0
    %2726 = vmatprep.subr.mxu0 0.0
    %2727 = vmatpush1.msra.mxu0 0.0
    %2728 = vmatprep.subr.mxu0 0.0
    %2729 = vmatpush1.msra.mxu0 0.0
    %2730 = vmatprep.subr.mxu0 0.0
    %2731 = vmatpush1.msra.mxu0 0.0
    %2732 = vmatprep.subr.mxu0 0.0
    %2733 = vmatpush1.msra.mxu0 0.0
    %2734 = vmatprep.mubr.f32.mxu0 0.0
    %2735 = vmatmul.mubr.f32.gmra.mrb[0].mxu0 %v2667
    %v2736 = vpop.f32.mrb[0].mxu0
    %v2737 = vadd.f32 0.0, %v2736
    %v2738 = vpop.f32.mrb[0].mxu0
    %v2739 = vadd.f32 0.0, %v2738
    %2740 = vdwg.mxu0
    %2741 = vmatprep.subr.mxu0 %v386
    %2742 = vmatpush1.msra.mxu0 %v385
    %2743 = vmatprep.subr.mxu0 %v390
    %2744 = vmatpush1.msra.mxu0 %v389
    %2745 = vmatprep.subr.mxu0 %v394
    %2746 = vmatpush1.msra.mxu0 %v393
    %2747 = vmatprep.subr.mxu0 %v398
    %2748 = vmatpush1.msra.mxu0 %v397
    %2749 = vmatprep.subr.mxu0 %v402
    %2750 = vmatpush1.msra.mxu0 %v401
    %2751 = vmatprep.subr.mxu0 %v406
    %2752 = vmatpush1.msra.mxu0 %v405
    %2753 = vmatprep.subr.mxu0 %v410
    %2754 = vmatpush1.msra.mxu0 %v409
    %2755 = vmatprep.subr.mxu0 %v414
    %2756 = vmatpush1.msra.mxu0 %v413
    %2757 = vmatprep.subr.mxu0 %v418
    %2758 = vmatpush1.msra.mxu0 %v417
    %2759 = vmatprep.subr.mxu0 %v422
    %2760 = vmatpush1.msra.mxu0 %v421
    %2761 = vmatprep.subr.mxu0 %v426
    %2762 = vmatpush1.msra.mxu0 %v425
    %2763 = vmatprep.subr.mxu0 %v430
    %2764 = vmatpush1.msra.mxu0 %v429
    %2765 = vmatprep.subr.mxu0 %v434
    %2766 = vmatpush1.msra.mxu0 %v433
    %2767 = vmatprep.subr.mxu0 %v438
    %2768 = vmatpush1.msra.mxu0 %v437
    %2769 = vmatprep.subr.mxu0 %v442
    %2770 = vmatpush1.msra.mxu0 %v441
    %2771 = vmatprep.subr.mxu0 %v446
    %2772 = vmatpush1.msra.mxu0 %v445
    %2773 = vmatprep.subr.mxu0 0.0
    %2774 = vmatpush1.msra.mxu0 0.0
    %2775 = vmatprep.subr.mxu0 0.0
    %2776 = vmatpush1.msra.mxu0 0.0
    %2777 = vmatprep.subr.mxu0 0.0
    %2778 = vmatpush1.msra.mxu0 0.0
    %2779 = vmatprep.subr.mxu0 0.0
    %2780 = vmatpush1.msra.mxu0 0.0
    %2781 = vmatprep.subr.mxu0 0.0
    %2782 = vmatpush1.msra.mxu0 0.0
    %2783 = vmatprep.subr.mxu0 0.0
    %2784 = vmatpush1.msra.mxu0 0.0
    %2785 = vmatprep.subr.mxu0 0.0
    %2786 = vmatpush1.msra.mxu0 0.0
    %2787 = vmatprep.subr.mxu0 0.0
    %2788 = vmatpush1.msra.mxu0 0.0
    %2789 = vmatprep.subr.mxu0 0.0
    %2790 = vmatpush1.msra.mxu0 0.0
    %2791 = vmatprep.subr.mxu0 0.0
    %2792 = vmatpush1.msra.mxu0 0.0
    %2793 = vmatprep.subr.mxu0 0.0
    %2794 = vmatpush1.msra.mxu0 0.0
    %2795 = vmatprep.subr.mxu0 0.0
    %2796 = vmatpush1.msra.mxu0 0.0
    %2797 = vmatprep.subr.mxu0 0.0
    %2798 = vmatpush1.msra.mxu0 0.0
    %2799 = vmatprep.subr.mxu0 0.0
    %2800 = vmatpush1.msra.mxu0 0.0
    %2801 = vmatprep.subr.mxu0 0.0
    %2802 = vmatpush1.msra.mxu0 0.0
    %2803 = vmatprep.subr.mxu0 0.0
    %2804 = vmatpush1.msra.mxu0 0.0
    %2805 = vmatprep.mubr.f32.mxu0 0.0
    %2806 = vmatmul.mubr.f32.gmra.mrb[0].mxu0 %v2667
    %v2807 = vpop.f32.mrb[0].mxu0
    %v2808 = vadd.f32 0.0, %v2807
    %v2809 = vpop.f32.mrb[0].mxu0
    %v2810 = vadd.f32 0.0, %v2809
    %2811 = vdwg.mxu0
    %v2812 = vadd.f32 %v2179, %v2737
    %v2813 = vadd.f32 %v2181, %v2739
    %v2814 = vadd.f32 %v2292, %v2808
    %v2815 = vadd.f32 %v2294, %v2810
    %v2816 = vxor.u32 %v2812, 2147483648
    %v2817 = vmul.f32 %v2816, 1.442695
    %v2818 = vpow.pop %v2817
    %v2819 = vadd.f32 %v2818, 1.0
    %v2820 = vrcp.pop %v2819
    %v2821 = vmul.f32 1.0, %v2820
    %v2822 = vxor.u32 %v2813, 2147483648
    %v2823 = vmul.f32 %v2822, 1.442695
    %v2824 = vpow.pop %v2823
    %v2825 = vadd.f32 %v2824, 1.0
    %v2826 = vrcp.pop %v2825
    %v2827 = vmul.f32 1.0, %v2826
    %v2828 = vtanh.pop %v2814
    %v2829 = vxor.u32 %v2815, 2147483648
    %v2830 = vmul.f32 %v2829, 1.442695
    %v2831 = vpow.pop %v2830
    %v2832 = vadd.f32 %v2831, 1.0
    %v2833 = vrcp.pop %v2832
    %v2834 = vmul.f32 1.0, %v2833
    %v2835 = vmul.f32 %v2827, %v2665
    %v2836 = vmul.f32 %v2821, %v2828
    %v2837 = vadd.f32 %v2835, %v2836
    %v2838 = vtanh.pop %v2837
    %v2839 = vmul.f32 %v2834, %v2838
    %v2840 = vmax.f32 %v2839, 0.0
    %v2841 = vadd.f32 %v2669, %v2840
    %2842 = vmatprep.subr.mxu0 %v384
    %2843 = vmatpush1.msra.mxu0 %v383
    %2844 = vmatprep.subr.mxu0 %v388
    %2845 = vmatpush1.msra.mxu0 %v387
    %2846 = vmatprep.subr.mxu0 %v392
    %2847 = vmatpush1.msra.mxu0 %v391
    %2848 = vmatprep.subr.mxu0 %v396
    %2849 = vmatpush1.msra.mxu0 %v395
    %2850 = vmatprep.subr.mxu0 %v400
    %2851 = vmatpush1.msra.mxu0 %v399
    %2852 = vmatprep.subr.mxu0 %v404
    %2853 = vmatpush1.msra.mxu0 %v403
    %2854 = vmatprep.subr.mxu0 %v408
    %2855 = vmatpush1.msra.mxu0 %v407
    %2856 = vmatprep.subr.mxu0 %v412
    %2857 = vmatpush1.msra.mxu0 %v411
    %2858 = vmatprep.subr.mxu0 %v416
    %2859 = vmatpush1.msra.mxu0 %v415
    %2860 = vmatprep.subr.mxu0 %v420
    %2861 = vmatpush1.msra.mxu0 %v419
    %2862 = vmatprep.subr.mxu0 %v424
    %2863 = vmatpush1.msra.mxu0 %v423
    %2864 = vmatprep.subr.mxu0 %v428
    %2865 = vmatpush1.msra.mxu0 %v427
    %2866 = vmatprep.subr.mxu0 %v432
    %2867 = vmatpush1.msra.mxu0 %v431
    %2868 = vmatprep.subr.mxu0 %v436
    %2869 = vmatpush1.msra.mxu0 %v435
    %2870 = vmatprep.subr.mxu0 %v440
    %2871 = vmatpush1.msra.mxu0 %v439
    %2872 = vmatprep.subr.mxu0 %v444
    %2873 = vmatpush1.msra.mxu0 %v443
    %2874 = vmatprep.subr.mxu0 0.0
    %2875 = vmatpush1.msra.mxu0 0.0
    %2876 = vmatprep.subr.mxu0 0.0
    %2877 = vmatpush1.msra.mxu0 0.0
    %2878 = vmatprep.subr.mxu0 0.0
    %2879 = vmatpush1.msra.mxu0 0.0
    %2880 = vmatprep.subr.mxu0 0.0
    %2881 = vmatpush1.msra.mxu0 0.0
    %2882 = vmatprep.subr.mxu0 0.0
    %2883 = vmatpush1.msra.mxu0 0.0
    %2884 = vmatprep.subr.mxu0 0.0
    %2885 = vmatpush1.msra.mxu0 0.0
    %2886 = vmatprep.subr.mxu0 0.0
    %2887 = vmatpush1.msra.mxu0 0.0
    %2888 = vmatprep.subr.mxu0 0.0
    %2889 = vmatpush1.msra.mxu0 0.0
    %2890 = vmatprep.subr.mxu0 0.0
    %2891 = vmatpush1.msra.mxu0 0.0
    %2892 = vmatprep.subr.mxu0 0.0
    %2893 = vmatpush1.msra.mxu0 0.0
    %2894 = vmatprep.subr.mxu0 0.0
    %2895 = vmatpush1.msra.mxu0 0.0
    %2896 = vmatprep.subr.mxu0 0.0
    %2897 = vmatpush1.msra.mxu0 0.0
    %2898 = vmatprep.subr.mxu0 0.0
    %2899 = vmatpush1.msra.mxu0 0.0
    %2900 = vmatprep.subr.mxu0 0.0
    %2901 = vmatpush1.msra.mxu0 0.0
    %2902 = vmatprep.subr.mxu0 0.0
    %2903 = vmatpush1.msra.mxu0 0.0
    %2904 = vmatprep.subr.mxu0 0.0
    %2905 = vmatpush1.msra.mxu0 0.0
    %2906 = vmatprep.mubr.f32.mxu0 0.0
    %2907 = vmatmul.mubr.f32.gmra.mrb[0].mxu0 %v2839
    %v2908 = vpop.f32.mrb[0].mxu0
    %v2909 = vadd.f32 0.0, %v2908
    %v2910 = vpop.f32.mrb[0].mxu0
    %v2911 = vadd.f32 0.0, %v2910
    %2912 = vdwg.mxu0
    %2913 = vmatprep.subr.mxu0 %v386
    %2914 = vmatpush1.msra.mxu0 %v385
    %2915 = vmatprep.subr.mxu0 %v390
    %2916 = vmatpush1.msra.mxu0 %v389
    %2917 = vmatprep.subr.mxu0 %v394
    %2918 = vmatpush1.msra.mxu0 %v393
    %2919 = vmatprep.subr.mxu0 %v398
    %2920 = vmatpush1.msra.mxu0 %v397
    %2921 = vmatprep.subr.mxu0 %v402
    %2922 = vmatpush1.msra.mxu0 %v401
    %2923 = vmatprep.subr.mxu0 %v406
    %2924 = vmatpush1.msra.mxu0 %v405
    %2925 = vmatprep.subr.mxu0 %v410
    %2926 = vmatpush1.msra.mxu0 %v409
    %2927 = vmatprep.subr.mxu0 %v414
    %2928 = vmatpush1.msra.mxu0 %v413
    %2929 = vmatprep.subr.mxu0 %v418
    %2930 = vmatpush1.msra.mxu0 %v417
    %2931 = vmatprep.subr.mxu0 %v422
    %2932 = vmatpush1.msra.mxu0 %v421
    %2933 = vmatprep.subr.mxu0 %v426
    %2934 = vmatpush1.msra.mxu0 %v425
    %2935 = vmatprep.subr.mxu0 %v430
    %2936 = vmatpush1.msra.mxu0 %v429
    %2937 = vmatprep.subr.mxu0 %v434
    %2938 = vmatpush1.msra.mxu0 %v433
    %2939 = vmatprep.subr.mxu0 %v438
    %2940 = vmatpush1.msra.mxu0 %v437
    %2941 = vmatprep.subr.mxu0 %v442
    %2942 = vmatpush1.msra.mxu0 %v441
    %2943 = vmatprep.subr.mxu0 %v446
    %2944 = vmatpush1.msra.mxu0 %v445
    %2945 = vmatprep.subr.mxu0 0.0
    %2946 = vmatpush1.msra.mxu0 0.0
    %2947 = vmatprep.subr.mxu0 0.0
    %2948 = vmatpush1.msra.mxu0 0.0
    %2949 = vmatprep.subr.mxu0 0.0
    %2950 = vmatpush1.msra.mxu0 0.0
    %2951 = vmatprep.subr.mxu0 0.0
    %2952 = vmatpush1.msra.mxu0 0.0
    %2953 = vmatprep.subr.mxu0 0.0
    %2954 = vmatpush1.msra.mxu0 0.0
    %2955 = vmatprep.subr.mxu0 0.0
    %2956 = vmatpush1.msra.mxu0 0.0
    %2957 = vmatprep.subr.mxu0 0.0
    %2958 = vmatpush1.msra.mxu0 0.0
    %2959 = vmatprep.subr.mxu0 0.0
    %2960 = vmatpush1.msra.mxu0 0.0
    %2961 = vmatprep.subr.mxu0 0.0
    %2962 = vmatpush1.msra.mxu0 0.0
    %2963 = vmatprep.subr.mxu0 0.0
    %2964 = vmatpush1.msra.mxu0 0.0
    %2965 = vmatprep.subr.mxu0 0.0
    %2966 = vmatpush1.msra.mxu0 0.0
    %2967 = vmatprep.subr.mxu0 0.0
    %2968 = vmatpush1.msra.mxu0 0.0
    %2969 = vmatprep.subr.mxu0 0.0
    %2970 = vmatpush1.msra.mxu0 0.0
    %2971 = vmatprep.subr.mxu0 0.0
    %2972 = vmatpush1.msra.mxu0 0.0
    %2973 = vmatprep.subr.mxu0 0.0
    %2974 = vmatpush1.msra.mxu0 0.0
    %2975 = vmatprep.subr.mxu0 0.0
    %2976 = vmatpush1.msra.mxu0 0.0
    %2977 = vmatprep.mubr.f32.mxu0 0.0
    %2978 = vmatmul.mubr.f32.gmra.mrb[0].mxu0 %v2839
    %v2979 = vpop.f32.mrb[0].mxu0
    %v2980 = vadd.f32 0.0, %v2979
    %v2981 = vpop.f32.mrb[0].mxu0
    %v2982 = vadd.f32 0.0, %v2981
    %2983 = vdwg.mxu0
    %v2984 = vadd.f32 %v2185, %v2909
    %v2985 = vadd.f32 %v2187, %v2911
    %v2986 = vadd.f32 %v2298, %v2980
    %v2987 = vadd.f32 %v2300, %v2982
    %v2988 = vxor.u32 %v2984, 2147483648
    %v2989 = vmul.f32 %v2988, 1.442695
    %v2990 = vpow.pop %v2989
    %v2991 = vadd.f32 %v2990, 1.0
    %v2992 = vrcp.pop %v2991
    %v2993 = vmul.f32 1.0, %v2992
    %v2994 = vxor.u32 %v2985, 2147483648
    %v2995 = vmul.f32 %v2994, 1.442695
    %v2996 = vpow.pop %v2995
    %v2997 = vadd.f32 %v2996, 1.0
    %v2998 = vrcp.pop %v2997
    %v2999 = vmul.f32 1.0, %v2998
    %v3000 = vtanh.pop %v2986
    %v3001 = vxor.u32 %v2987, 2147483648
    %v3002 = vmul.f32 %v3001, 1.442695
    %v3003 = vpow.pop %v3002
    %v3004 = vadd.f32 %v3003, 1.0
    %v3005 = vrcp.pop %v3004
    %v3006 = vmul.f32 1.0, %v3005
    %v3007 = vmul.f32 %v2999, %v2837
    %v3008 = vmul.f32 %v2993, %v3000
    %v3009 = vadd.f32 %v3007, %v3008
    %v3010 = vtanh.pop %v3009
    %v3011 = vmul.f32 %v3006, %v3010
    %v3012 = vmax.f32 %v3011, 0.0
    %v3013 = vadd.f32 %v2841, %v3012
    %3014 = vmatprep.subr.mxu0 %v384
    %3015 = vmatpush1.msra.mxu0 %v383
    %3016 = vmatprep.subr.mxu0 %v388
    %3017 = vmatpush1.msra.mxu0 %v387
    %3018 = vmatprep.subr.mxu0 %v392
    %3019 = vmatpush1.msra.mxu0 %v391
    %3020 = vmatprep.subr.mxu0 %v396
    %3021 = vmatpush1.msra.mxu0 %v395
    %3022 = vmatprep.subr.mxu0 %v400
    %3023 = vmatpush1.msra.mxu0 %v399
    %3024 = vmatprep.subr.mxu0 %v404
    %3025 = vmatpush1.msra.mxu0 %v403
    %3026 = vmatprep.subr.mxu0 %v408
    %3027 = vmatpush1.msra.mxu0 %v407
    %3028 = vmatprep.subr.mxu0 %v412
    %3029 = vmatpush1.msra.mxu0 %v411
    %3030 = vmatprep.subr.mxu0 %v416
    %3031 = vmatpush1.msra.mxu0 %v415
    %3032 = vmatprep.subr.mxu0 %v420
    %3033 = vmatpush1.msra.mxu0 %v419
    %3034 = vmatprep.subr.mxu0 %v424
    %3035 = vmatpush1.msra.mxu0 %v423
    %3036 = vmatprep.subr.mxu0 %v428
    %3037 = vmatpush1.msra.mxu0 %v427
    %3038 = vmatprep.subr.mxu0 %v432
    %3039 = vmatpush1.msra.mxu0 %v431
    %3040 = vmatprep.subr.mxu0 %v436
    %3041 = vmatpush1.msra.mxu0 %v435
    %3042 = vmatprep.subr.mxu0 %v440
    %3043 = vmatpush1.msra.mxu0 %v439
    %3044 = vmatprep.subr.mxu0 %v444
    %3045 = vmatpush1.msra.mxu0 %v443
    %3046 = vmatprep.subr.mxu0 0.0
    %3047 = vmatpush1.msra.mxu0 0.0
    %3048 = vmatprep.subr.mxu0 0.0
    %3049 = vmatpush1.msra.mxu0 0.0
    %3050 = vmatprep.subr.mxu0 0.0
    %3051 = vmatpush1.msra.mxu0 0.0
    %3052 = vmatprep.subr.mxu0 0.0
    %3053 = vmatpush1.msra.mxu0 0.0
    %3054 = vmatprep.subr.mxu0 0.0
    %3055 = vmatpush1.msra.mxu0 0.0
    %3056 = vmatprep.subr.mxu0 0.0
    %3057 = vmatpush1.msra.mxu0 0.0
    %3058 = vmatprep.subr.mxu0 0.0
    %3059 = vmatpush1.msra.mxu0 0.0
    %3060 = vmatprep.subr.mxu0 0.0
    %3061 = vmatpush1.msra.mxu0 0.0
    %3062 = vmatprep.subr.mxu0 0.0
    %3063 = vmatpush1.msra.mxu0 0.0
    %3064 = vmatprep.subr.mxu0 0.0
    %3065 = vmatpush1.msra.mxu0 0.0
    %3066 = vmatprep.subr.mxu0 0.0
    %3067 = vmatpush1.msra.mxu0 0.0
    %3068 = vmatprep.subr.mxu0 0.0
    %3069 = vmatpush1.msra.mxu0 0.0
    %3070 = vmatprep.subr.mxu0 0.0
    %3071 = vmatpush1.msra.mxu0 0.0
    %3072 = vmatprep.subr.mxu0 0.0
    %3073 = vmatpush1.msra.mxu0 0.0
    %3074 = vmatprep.subr.mxu0 0.0
    %3075 = vmatpush1.msra.mxu0 0.0
    %3076 = vmatprep.subr.mxu0 0.0
    %3077 = vmatpush1.msra.mxu0 0.0
    %3078 = vmatprep.mubr.f32.mxu0 0.0
    %3079 = vmatmul.mubr.f32.gmra.mrb[0].mxu0 %v3011
    %v3080 = vpop.f32.mrb[0].mxu0
    %v3081 = vadd.f32 0.0, %v3080
    %v3082 = vpop.f32.mrb[0].mxu0
    %v3083 = vadd.f32 0.0, %v3082
    %3084 = vdwg.mxu0
    %3085 = vmatprep.subr.mxu0 %v386
    %3086 = vmatpush1.msra.mxu0 %v385
    %3087 = vmatprep.subr.mxu0 %v390
    %3088 = vmatpush1.msra.mxu0 %v389
    %3089 = vmatprep.subr.mxu0 %v394
    %3090 = vmatpush1.msra.mxu0 %v393
    %3091 = vmatprep.subr.mxu0 %v398
    %3092 = vmatpush1.msra.mxu0 %v397
    %3093 = vmatprep.subr.mxu0 %v402
    %3094 = vmatpush1.msra.mxu0 %v401
    %3095 = vmatprep.subr.mxu0 %v406
    %3096 = vmatpush1.msra.mxu0 %v405
    %3097 = vmatprep.subr.mxu0 %v410
    %3098 = vmatpush1.msra.mxu0 %v409
    %3099 = vmatprep.subr.mxu0 %v414
    %3100 = vmatpush1.msra.mxu0 %v413
    %3101 = vmatprep.subr.mxu0 %v418
    %3102 = vmatpush1.msra.mxu0 %v417
    %3103 = vmatprep.subr.mxu0 %v422
    %3104 = vmatpush1.msra.mxu0 %v421
    %3105 = vmatprep.subr.mxu0 %v426
    %3106 = vmatpush1.msra.mxu0 %v425
    %3107 = vmatprep.subr.mxu0 %v430
    %3108 = vmatpush1.msra.mxu0 %v429
    %3109 = vmatprep.subr.mxu0 %v434
    %3110 = vmatpush1.msra.mxu0 %v433
    %3111 = vmatprep.subr.mxu0 %v438
    %3112 = vmatpush1.msra.mxu0 %v437
    %3113 = vmatprep.subr.mxu0 %v442
    %3114 = vmatpush1.msra.mxu0 %v441
    %3115 = vmatprep.subr.mxu0 %v446
    %3116 = vmatpush1.msra.mxu0 %v445
    %3117 = vmatprep.subr.mxu0 0.0
    %3118 = vmatpush1.msra.mxu0 0.0
    %3119 = vmatprep.subr.mxu0 0.0
    %3120 = vmatpush1.msra.mxu0 0.0
    %3121 = vmatprep.subr.mxu0 0.0
    %3122 = vmatpush1.msra.mxu0 0.0
    %3123 = vmatprep.subr.mxu0 0.0
    %3124 = vmatpush1.msra.mxu0 0.0
    %3125 = vmatprep.subr.mxu0 0.0
    %3126 = vmatpush1.msra.mxu0 0.0
    %3127 = vmatprep.subr.mxu0 0.0
    %3128 = vmatpush1.msra.mxu0 0.0
    %3129 = vmatprep.subr.mxu0 0.0
    %3130 = vmatpush1.msra.mxu0 0.0
    %3131 = vmatprep.subr.mxu0 0.0
    %3132 = vmatpush1.msra.mxu0 0.0
    %3133 = vmatprep.subr.mxu0 0.0
    %3134 = vmatpush1.msra.mxu0 0.0
    %3135 = vmatprep.subr.mxu0 0.0
    %3136 = vmatpush1.msra.mxu0 0.0
    %3137 = vmatprep.subr.mxu0 0.0
    %3138 = vmatpush1.msra.mxu0 0.0
    %3139 = vmatprep.subr.mxu0 0.0
    %3140 = vmatpush1.msra.mxu0 0.0
    %3141 = vmatprep.subr.mxu0 0.0
    %3142 = vmatpush1.msra.mxu0 0.0
    %3143 = vmatprep.subr.mxu0 0.0
    %3144 = vmatpush1.msra.mxu0 0.0
    %3145 = vmatprep.subr.mxu0 0.0
    %3146 = vmatpush1.msra.mxu0 0.0
    %3147 = vmatprep.subr.mxu0 0.0
    %3148 = vmatpush1.msra.mxu0 0.0
    %3149 = vmatprep.mubr.f32.mxu0 0.0
    %3150 = vmatmul.mubr.f32.gmra.mrb[0].mxu0 %v3011
    %v3151 = vpop.f32.mrb[0].mxu0
    %v3152 = vadd.f32 0.0, %v3151
    %v3153 = vpop.f32.mrb[0].mxu0
    %v3154 = vadd.f32 0.0, %v3153
    %3155 = vdwg.mxu0
    %v3156 = vadd.f32 %v2191, %v3081
    %v3157 = vadd.f32 %v2193, %v3083
    %v3158 = vadd.f32 %v2304, %v3152
    %v3159 = vadd.f32 %v2306, %v3154
    %v3160 = vxor.u32 %v3156, 2147483648
    %v3161 = vmul.f32 %v3160, 1.442695
    %v3162 = vpow.pop %v3161
    %v3163 = vadd.f32 %v3162, 1.0
    %v3164 = vrcp.pop %v3163
    %v3165 = vmul.f32 1.0, %v3164
    %v3166 = vxor.u32 %v3157, 2147483648
    %v3167 = vmul.f32 %v3166, 1.442695
    %v3168 = vpow.pop %v3167
    %v3169 = vadd.f32 %v3168, 1.0
    %v3170 = vrcp.pop %v3169
    %v3171 = vmul.f32 1.0, %v3170
    %v3172 = vtanh.pop %v3158
    %v3173 = vxor.u32 %v3159, 2147483648
    %v3174 = vmul.f32 %v3173, 1.442695
    %v3175 = vpow.pop %v3174
    %v3176 = vadd.f32 %v3175, 1.0
    %v3177 = vrcp.pop %v3176
    %v3178 = vmul.f32 1.0, %v3177
    %v3179 = vmul.f32 %v3171, %v3009
    %v3180 = vmul.f32 %v3165, %v3172
    %v3181 = vadd.f32 %v3179, %v3180
    %v3182 = vtanh.pop %v3181
    %v3183 = vmul.f32 %v3178, %v3182
    %v3184 = vmax.f32 %v3183, 0.0
    %v3185 = vadd.f32 %v3013, %v3184
    %3186 = vmatprep.subr.mxu0 %v384
    %3187 = vmatpush1.msra.mxu0 %v383
    %3188 = vmatprep.subr.mxu0 %v388
    %3189 = vmatpush1.msra.mxu0 %v387
    %3190 = vmatprep.subr.mxu0 %v392
    %3191 = vmatpush1.msra.mxu0 %v391
    %3192 = vmatprep.subr.mxu0 %v396
    %3193 = vmatpush1.msra.mxu0 %v395
    %3194 = vmatprep.subr.mxu0 %v400
    %3195 = vmatpush1.msra.mxu0 %v399
    %3196 = vmatprep.subr.mxu0 %v404
    %3197 = vmatpush1.msra.mxu0 %v403
    %3198 = vmatprep.subr.mxu0 %v408
    %3199 = vmatpush1.msra.mxu0 %v407
    %3200 = vmatprep.subr.mxu0 %v412
    %3201 = vmatpush1.msra.mxu0 %v411
    %3202 = vmatprep.subr.mxu0 %v416
    %3203 = vmatpush1.msra.mxu0 %v415
    %3204 = vmatprep.subr.mxu0 %v420
    %3205 = vmatpush1.msra.mxu0 %v419
    %3206 = vmatprep.subr.mxu0 %v424
    %3207 = vmatpush1.msra.mxu0 %v423
    %3208 = vmatprep.subr.mxu0 %v428
    %3209 = vmatpush1.msra.mxu0 %v427
    %3210 = vmatprep.subr.mxu0 %v432
    %3211 = vmatpush1.msra.mxu0 %v431
    %3212 = vmatprep.subr.mxu0 %v436
    %3213 = vmatpush1.msra.mxu0 %v435
    %3214 = vmatprep.subr.mxu0 %v440
    %3215 = vmatpush1.msra.mxu0 %v439
    %3216 = vmatprep.subr.mxu0 %v444
    %3217 = vmatpush1.msra.mxu0 %v443
    %3218 = vmatprep.subr.mxu0 0.0
    %3219 = vmatpush1.msra.mxu0 0.0
    %3220 = vmatprep.subr.mxu0 0.0
    %3221 = vmatpush1.msra.mxu0 0.0
    %3222 = vmatprep.subr.mxu0 0.0
    %3223 = vmatpush1.msra.mxu0 0.0
    %3224 = vmatprep.subr.mxu0 0.0
    %3225 = vmatpush1.msra.mxu0 0.0
    %3226 = vmatprep.subr.mxu0 0.0
    %3227 = vmatpush1.msra.mxu0 0.0
    %3228 = vmatprep.subr.mxu0 0.0
    %3229 = vmatpush1.msra.mxu0 0.0
    %3230 = vmatprep.subr.mxu0 0.0
    %3231 = vmatpush1.msra.mxu0 0.0
    %3232 = vmatprep.subr.mxu0 0.0
    %3233 = vmatpush1.msra.mxu0 0.0
    %3234 = vmatprep.subr.mxu0 0.0
    %3235 = vmatpush1.msra.mxu0 0.0
    %3236 = vmatprep.subr.mxu0 0.0
    %3237 = vmatpush1.msra.mxu0 0.0
    %3238 = vmatprep.subr.mxu0 0.0
    %3239 = vmatpush1.msra.mxu0 0.0
    %3240 = vmatprep.subr.mxu0 0.0
    %3241 = vmatpush1.msra.mxu0 0.0
    %3242 = vmatprep.subr.mxu0 0.0
    %3243 = vmatpush1.msra.mxu0 0.0
    %3244 = vmatprep.subr.mxu0 0.0
    %3245 = vmatpush1.msra.mxu0 0.0
    %3246 = vmatprep.subr.mxu0 0.0
    %3247 = vmatpush1.msra.mxu0 0.0
    %3248 = vmatprep.subr.mxu0 0.0
    %3249 = vmatpush1.msra.mxu0 0.0
    %3250 = vmatprep.mubr.f32.mxu0 0.0
    %3251 = vmatmul.mubr.f32.gmra.mrb[0].mxu0 %v3183
    %v3252 = vpop.f32.mrb[0].mxu0
    %v3253 = vadd.f32 0.0, %v3252
    %v3254 = vpop.f32.mrb[0].mxu0
    %v3255 = vadd.f32 0.0, %v3254
    %3256 = vdwg.mxu0
    %3257 = vmatprep.subr.mxu0 %v386
    %3258 = vmatpush1.msra.mxu0 %v385
    %3259 = vmatprep.subr.mxu0 %v390
    %3260 = vmatpush1.msra.mxu0 %v389
    %3261 = vmatprep.subr.mxu0 %v394
    %3262 = vmatpush1.msra.mxu0 %v393
    %3263 = vmatprep.subr.mxu0 %v398
    %3264 = vmatpush1.msra.mxu0 %v397
    %3265 = vmatprep.subr.mxu0 %v402
    %3266 = vmatpush1.msra.mxu0 %v401
    %3267 = vmatprep.subr.mxu0 %v406
    %3268 = vmatpush1.msra.mxu0 %v405
    %3269 = vmatprep.subr.mxu0 %v410
    %3270 = vmatpush1.msra.mxu0 %v409
    %3271 = vmatprep.subr.mxu0 %v414
    %3272 = vmatpush1.msra.mxu0 %v413
    %3273 = vmatprep.subr.mxu0 %v418
    %3274 = vmatpush1.msra.mxu0 %v417
    %3275 = vmatprep.subr.mxu0 %v422
    %3276 = vmatpush1.msra.mxu0 %v421
    %3277 = vmatprep.subr.mxu0 %v426
    %3278 = vmatpush1.msra.mxu0 %v425
    %3279 = vmatprep.subr.mxu0 %v430
    %3280 = vmatpush1.msra.mxu0 %v429
    %3281 = vmatprep.subr.mxu0 %v434
    %3282 = vmatpush1.msra.mxu0 %v433
    %3283 = vmatprep.subr.mxu0 %v438
    %3284 = vmatpush1.msra.mxu0 %v437
    %3285 = vmatprep.subr.mxu0 %v442
    %3286 = vmatpush1.msra.mxu0 %v441
    %3287 = vmatprep.subr.mxu0 %v446
    %3288 = vmatpush1.msra.mxu0 %v445
    %3289 = vmatprep.subr.mxu0 0.0
    %3290 = vmatpush1.msra.mxu0 0.0
    %3291 = vmatprep.subr.mxu0 0.0
    %3292 = vmatpush1.msra.mxu0 0.0
    %3293 = vmatprep.subr.mxu0 0.0
    %3294 = vmatpush1.msra.mxu0 0.0
    %3295 = vmatprep.subr.mxu0 0.0
    %3296 = vmatpush1.msra.mxu0 0.0
    %3297 = vmatprep.subr.mxu0 0.0
    %3298 = vmatpush1.msra.mxu0 0.0
    %3299 = vmatprep.subr.mxu0 0.0
    %3300 = vmatpush1.msra.mxu0 0.0
    %3301 = vmatprep.subr.mxu0 0.0
    %3302 = vmatpush1.msra.mxu0 0.0
    %3303 = vmatprep.subr.mxu0 0.0
    %3304 = vmatpush1.msra.mxu0 0.0
    %3305 = vmatprep.subr.mxu0 0.0
    %3306 = vmatpush1.msra.mxu0 0.0
    %3307 = vmatprep.subr.mxu0 0.0
    %3308 = vmatpush1.msra.mxu0 0.0
    %3309 = vmatprep.subr.mxu0 0.0
    %3310 = vmatpush1.msra.mxu0 0.0
    %3311 = vmatprep.subr.mxu0 0.0
    %3312 = vmatpush1.msra.mxu0 0.0
    %3313 = vmatprep.subr.mxu0 0.0
    %3314 = vmatpush1.msra.mxu0 0.0
    %3315 = vmatprep.subr.mxu0 0.0
    %3316 = vmatpush1.msra.mxu0 0.0
    %3317 = vmatprep.subr.mxu0 0.0
    %3318 = vmatpush1.msra.mxu0 0.0
    %3319 = vmatprep.subr.mxu0 0.0
    %3320 = vmatpush1.msra.mxu0 0.0
    %3321 = vmatprep.mubr.f32.mxu0 0.0
    %3322 = vmatmul.mubr.f32.gmra.mrb[0].mxu0 %v3183
    %v3323 = vpop.f32.mrb[0].mxu0
    %v3324 = vadd.f32 0.0, %v3323
    %v3325 = vpop.f32.mrb[0].mxu0
    %v3326 = vadd.f32 0.0, %v3325
    %3327 = vdwg.mxu0
    %v3328 = vadd.f32 %v2197, %v3253
    %v3329 = vadd.f32 %v2199, %v3255
    %v3330 = vadd.f32 %v2310, %v3324
    %v3331 = vadd.f32 %v2312, %v3326
    %v3332 = vxor.u32 %v3328, 2147483648
    %v3333 = vmul.f32 %v3332, 1.442695
    %v3334 = vpow.pop %v3333
    %v3335 = vadd.f32 %v3334, 1.0
    %v3336 = vrcp.pop %v3335
    %v3337 = vmul.f32 1.0, %v3336
    %v3338 = vxor.u32 %v3329, 2147483648
    %v3339 = vmul.f32 %v3338, 1.442695
    %v3340 = vpow.pop %v3339
    %v3341 = vadd.f32 %v3340, 1.0
    %v3342 = vrcp.pop %v3341
    %v3343 = vmul.f32 1.0, %v3342
    %v3344 = vtanh.pop %v3330
    %v3345 = vxor.u32 %v3331, 2147483648
    %v3346 = vmul.f32 %v3345, 1.442695
    %v3347 = vpow.pop %v3346
    %v3348 = vadd.f32 %v3347, 1.0
    %v3349 = vrcp.pop %v3348
    %v3350 = vmul.f32 1.0, %v3349
    %v3351 = vmul.f32 %v3343, %v3181
    %v3352 = vmul.f32 %v3337, %v3344
    %v3353 = vadd.f32 %v3351, %v3352
    %v3354 = vtanh.pop %v3353
    %v3355 = vmul.f32 %v3350, %v3354
    %v3356 = vmax.f32 %v3355, 0.0
    %v3357 = vadd.f32 %v3185, %v3356
    %3358 = vmatprep.subr.mxu0 %v384
    %3359 = vmatpush1.msra.mxu0 %v383
    %3360 = vmatprep.subr.mxu0 %v388
    %3361 = vmatpush1.msra.mxu0 %v387
    %3362 = vmatprep.subr.mxu0 %v392
    %3363 = vmatpush1.msra.mxu0 %v391
    %3364 = vmatprep.subr.mxu0 %v396
    %3365 = vmatpush1.msra.mxu0 %v395
    %3366 = vmatprep.subr.mxu0 %v400
    %3367 = vmatpush1.msra.mxu0 %v399
    %3368 = vmatprep.subr.mxu0 %v404
    %3369 = vmatpush1.msra.mxu0 %v403
    %3370 = vmatprep.subr.mxu0 %v408
    %3371 = vmatpush1.msra.mxu0 %v407
    %3372 = vmatprep.subr.mxu0 %v412
    %3373 = vmatpush1.msra.mxu0 %v411
    %3374 = vmatprep.subr.mxu0 %v416
    %3375 = vmatpush1.msra.mxu0 %v415
    %3376 = vmatprep.subr.mxu0 %v420
    %3377 = vmatpush1.msra.mxu0 %v419
    %3378 = vmatprep.subr.mxu0 %v424
    %3379 = vmatpush1.msra.mxu0 %v423
    %3380 = vmatprep.subr.mxu0 %v428
    %3381 = vmatpush1.msra.mxu0 %v427
    %3382 = vmatprep.subr.mxu0 %v432
    %3383 = vmatpush1.msra.mxu0 %v431
    %3384 = vmatprep.subr.mxu0 %v436
    %3385 = vmatpush1.msra.mxu0 %v435
    %3386 = vmatprep.subr.mxu0 %v440
    %3387 = vmatpush1.msra.mxu0 %v439
    %3388 = vmatprep.subr.mxu0 %v444
    %3389 = vmatpush1.msra.mxu0 %v443
    %3390 = vmatprep.subr.mxu0 0.0
    %3391 = vmatpush1.msra.mxu0 0.0
    %3392 = vmatprep.subr.mxu0 0.0
    %3393 = vmatpush1.msra.mxu0 0.0
    %3394 = vmatprep.subr.mxu0 0.0
    %3395 = vmatpush1.msra.mxu0 0.0
    %3396 = vmatprep.subr.mxu0 0.0
    %3397 = vmatpush1.msra.mxu0 0.0
    %3398 = vmatprep.subr.mxu0 0.0
    %3399 = vmatpush1.msra.mxu0 0.0
    %3400 = vmatprep.subr.mxu0 0.0
    %3401 = vmatpush1.msra.mxu0 0.0
    %3402 = vmatprep.subr.mxu0 0.0
    %3403 = vmatpush1.msra.mxu0 0.0
    %3404 = vmatprep.subr.mxu0 0.0
    %3405 = vmatpush1.msra.mxu0 0.0
    %3406 = vmatprep.subr.mxu0 0.0
    %3407 = vmatpush1.msra.mxu0 0.0
    %3408 = vmatprep.subr.mxu0 0.0
    %3409 = vmatpush1.msra.mxu0 0.0
    %3410 = vmatprep.subr.mxu0 0.0
    %3411 = vmatpush1.msra.mxu0 0.0
    %3412 = vmatprep.subr.mxu0 0.0
    %3413 = vmatpush1.msra.mxu0 0.0
    %3414 = vmatprep.subr.mxu0 0.0
    %3415 = vmatpush1.msra.mxu0 0.0
    %3416 = vmatprep.subr.mxu0 0.0
    %3417 = vmatpush1.msra.mxu0 0.0
    %3418 = vmatprep.subr.mxu0 0.0
    %3419 = vmatpush1.msra.mxu0 0.0
    %3420 = vmatprep.subr.mxu0 0.0
    %3421 = vmatpush1.msra.mxu0 0.0
    %3422 = vmatprep.mubr.f32.mxu0 0.0
    %3423 = vmatmul.mubr.f32.gmra.mrb[0].mxu0 %v3355
    %v3424 = vpop.f32.mrb[0].mxu0
    %v3425 = vadd.f32 0.0, %v3424
    %v3426 = vpop.f32.mrb[0].mxu0
    %v3427 = vadd.f32 0.0, %v3426
    %3428 = vdwg.mxu0
    %3429 = vmatprep.subr.mxu0 %v386
    %3430 = vmatpush1.msra.mxu0 %v385
    %3431 = vmatprep.subr.mxu0 %v390
    %3432 = vmatpush1.msra.mxu0 %v389
    %3433 = vmatprep.subr.mxu0 %v394
    %3434 = vmatpush1.msra.mxu0 %v393
    %3435 = vmatprep.subr.mxu0 %v398
    %3436 = vmatpush1.msra.mxu0 %v397
    %3437 = vmatprep.subr.mxu0 %v402
    %3438 = vmatpush1.msra.mxu0 %v401
    %3439 = vmatprep.subr.mxu0 %v406
    %3440 = vmatpush1.msra.mxu0 %v405
    %3441 = vmatprep.subr.mxu0 %v410
    %3442 = vmatpush1.msra.mxu0 %v409
    %3443 = vmatprep.subr.mxu0 %v414
    %3444 = vmatpush1.msra.mxu0 %v413
    %3445 = vmatprep.subr.mxu0 %v418
    %3446 = vmatpush1.msra.mxu0 %v417
    %3447 = vmatprep.subr.mxu0 %v422
    %3448 = vmatpush1.msra.mxu0 %v421
    %3449 = vmatprep.subr.mxu0 %v426
    %3450 = vmatpush1.msra.mxu0 %v425
    %3451 = vmatprep.subr.mxu0 %v430
    %3452 = vmatpush1.msra.mxu0 %v429
    %3453 = vmatprep.subr.mxu0 %v434
    %3454 = vmatpush1.msra.mxu0 %v433
    %3455 = vmatprep.subr.mxu0 %v438
    %3456 = vmatpush1.msra.mxu0 %v437
    %3457 = vmatprep.subr.mxu0 %v442
    %3458 = vmatpush1.msra.mxu0 %v441
    %3459 = vmatprep.subr.mxu0 %v446
    %3460 = vmatpush1.msra.mxu0 %v445
    %3461 = vmatprep.subr.mxu0 0.0
    %3462 = vmatpush1.msra.mxu0 0.0
    %3463 = vmatprep.subr.mxu0 0.0
    %3464 = vmatpush1.msra.mxu0 0.0
    %3465 = vmatprep.subr.mxu0 0.0
    %3466 = vmatpush1.msra.mxu0 0.0
    %3467 = vmatprep.subr.mxu0 0.0
    %3468 = vmatpush1.msra.mxu0 0.0
    %3469 = vmatprep.subr.mxu0 0.0
    %3470 = vmatpush1.msra.mxu0 0.0
    %3471 = vmatprep.subr.mxu0 0.0
    %3472 = vmatpush1.msra.mxu0 0.0
    %3473 = vmatprep.subr.mxu0 0.0
    %3474 = vmatpush1.msra.mxu0 0.0
    %3475 = vmatprep.subr.mxu0 0.0
    %3476 = vmatpush1.msra.mxu0 0.0
    %3477 = vmatprep.subr.mxu0 0.0
    %3478 = vmatpush1.msra.mxu0 0.0
    %3479 = vmatprep.subr.mxu0 0.0
    %3480 = vmatpush1.msra.mxu0 0.0
    %3481 = vmatprep.subr.mxu0 0.0
    %3482 = vmatpush1.msra.mxu0 0.0
    %3483 = vmatprep.subr.mxu0 0.0
    %3484 = vmatpush1.msra.mxu0 0.0
    %3485 = vmatprep.subr.mxu0 0.0
    %3486 = vmatpush1.msra.mxu0 0.0
    %3487 = vmatprep.subr.mxu0 0.0
    %3488 = vmatpush1.msra.mxu0 0.0
    %3489 = vmatprep.subr.mxu0 0.0
    %3490 = vmatpush1.msra.mxu0 0.0
    %3491 = vmatprep.subr.mxu0 0.0
    %3492 = vmatpush1.msra.mxu0 0.0
    %3493 = vmatprep.mubr.f32.mxu0 0.0
    %3494 = vmatmul.mubr.f32.gmra.mrb[0].mxu0 %v3355
    %v3495 = vpop.f32.mrb[0].mxu0
    %v3496 = vadd.f32 0.0, %v3495
    %v3497 = vpop.f32.mrb[0].mxu0
    %v3498 = vadd.f32 0.0, %v3497
    %3499 = vdwg.mxu0
    %v3500 = vadd.f32 %v2203, %v3425
    %v3501 = vadd.f32 %v2205, %v3427
    %v3502 = vadd.f32 %v2316, %v3496
    %v3503 = vadd.f32 %v2318, %v3498
    %v3504 = vxor.u32 %v3500, 2147483648
    %v3505 = vmul.f32 %v3504, 1.442695
    %v3506 = vpow.pop %v3505
    %v3507 = vadd.f32 %v3506, 1.0
    %v3508 = vrcp.pop %v3507
    %v3509 = vmul.f32 1.0, %v3508
    %v3510 = vxor.u32 %v3501, 2147483648
    %v3511 = vmul.f32 %v3510, 1.442695
    %v3512 = vpow.pop %v3511
    %v3513 = vadd.f32 %v3512, 1.0
    %v3514 = vrcp.pop %v3513
    %v3515 = vmul.f32 1.0, %v3514
    %v3516 = vtanh.pop %v3502
    %v3517 = vxor.u32 %v3503, 2147483648
    %v3518 = vmul.f32 %v3517, 1.442695
    %v3519 = vpow.pop %v3518
    %v3520 = vadd.f32 %v3519, 1.0
    %v3521 = vrcp.pop %v3520
    %v3522 = vmul.f32 1.0, %v3521
    %v3523 = vmul.f32 %v3515, %v3353
    %v3524 = vmul.f32 %v3509, %v3516
    %v3525 = vadd.f32 %v3523, %v3524
    %v3526 = vtanh.pop %v3525
    %v3527 = vmul.f32 %v3522, %v3526
    %v3528 = vmax.f32 %v3527, 0.0
    %v3529 = vadd.f32 %v3357, %v3528
    %3530 = vmatprep.subr.mxu0 %v384
    %3531 = vmatpush1.msra.mxu0 %v383
    %3532 = vmatprep.subr.mxu0 %v388
    %3533 = vmatpush1.msra.mxu0 %v387
    %3534 = vmatprep.subr.mxu0 %v392
    %3535 = vmatpush1.msra.mxu0 %v391
    %3536 = vmatprep.subr.mxu0 %v396
    %3537 = vmatpush1.msra.mxu0 %v395
    %3538 = vmatprep.subr.mxu0 %v400
    %3539 = vmatpush1.msra.mxu0 %v399
    %3540 = vmatprep.subr.mxu0 %v404
    %3541 = vmatpush1.msra.mxu0 %v403
    %3542 = vmatprep.subr.mxu0 %v408
    %3543 = vmatpush1.msra.mxu0 %v407
    %3544 = vmatprep.subr.mxu0 %v412
    %3545 = vmatpush1.msra.mxu0 %v411
    %3546 = vmatprep.subr.mxu0 %v416
    %3547 = vmatpush1.msra.mxu0 %v415
    %3548 = vmatprep.subr.mxu0 %v420
    %3549 = vmatpush1.msra.mxu0 %v419
    %3550 = vmatprep.subr.mxu0 %v424
    %3551 = vmatpush1.msra.mxu0 %v423
    %3552 = vmatprep.subr.mxu0 %v428
    %3553 = vmatpush1.msra.mxu0 %v427
    %3554 = vmatprep.subr.mxu0 %v432
    %3555 = vmatpush1.msra.mxu0 %v431
    %3556 = vmatprep.subr.mxu0 %v436
    %3557 = vmatpush1.msra.mxu0 %v435
    %3558 = vmatprep.subr.mxu0 %v440
    %3559 = vmatpush1.msra.mxu0 %v439
    %3560 = vmatprep.subr.mxu0 %v444
    %3561 = vmatpush1.msra.mxu0 %v443
    %3562 = vmatprep.subr.mxu0 0.0
    %3563 = vmatpush1.msra.mxu0 0.0
    %3564 = vmatprep.subr.mxu0 0.0
    %3565 = vmatpush1.msra.mxu0 0.0
    %3566 = vmatprep.subr.mxu0 0.0
    %3567 = vmatpush1.msra.mxu0 0.0
    %3568 = vmatprep.subr.mxu0 0.0
    %3569 = vmatpush1.msra.mxu0 0.0
    %3570 = vmatprep.subr.mxu0 0.0
    %3571 = vmatpush1.msra.mxu0 0.0
    %3572 = vmatprep.subr.mxu0 0.0
    %3573 = vmatpush1.msra.mxu0 0.0
    %3574 = vmatprep.subr.mxu0 0.0
    %3575 = vmatpush1.msra.mxu0 0.0
    %3576 = vmatprep.subr.mxu0 0.0
    %3577 = vmatpush1.msra.mxu0 0.0
    %3578 = vmatprep.subr.mxu0 0.0
    %3579 = vmatpush1.msra.mxu0 0.0
    %3580 = vmatprep.subr.mxu0 0.0
    %3581 = vmatpush1.msra.mxu0 0.0
    %3582 = vmatprep.subr.mxu0 0.0
    %3583 = vmatpush1.msra.mxu0 0.0
    %3584 = vmatprep.subr.mxu0 0.0
    %3585 = vmatpush1.msra.mxu0 0.0
    %3586 = vmatprep.subr.mxu0 0.0
    %3587 = vmatpush1.msra.mxu0 0.0
    %3588 = vmatprep.subr.mxu0 0.0
    %3589 = vmatpush1.msra.mxu0 0.0
    %3590 = vmatprep.subr.mxu0 0.0
    %3591 = vmatpush1.msra.mxu0 0.0
    %3592 = vmatprep.subr.mxu0 0.0
    %3593 = vmatpush1.msra.mxu0 0.0
    %3594 = vmatprep.mubr.f32.mxu0 0.0
    %3595 = vmatmul.mubr.f32.gmra.mrb[0].mxu0 %v3527
    %v3596 = vpop.f32.mrb[0].mxu0
    %v3597 = vadd.f32 0.0, %v3596
    %v3598 = vpop.f32.mrb[0].mxu0
    %v3599 = vadd.f32 0.0, %v3598
    %3600 = vdwg.mxu0
    %3601 = vmatprep.subr.mxu0 %v386
    %3602 = vmatpush1.msra.mxu0 %v385
    %3603 = vmatprep.subr.mxu0 %v390
    %3604 = vmatpush1.msra.mxu0 %v389
    %3605 = vmatprep.subr.mxu0 %v394
    %3606 = vmatpush1.msra.mxu0 %v393
    %3607 = vmatprep.subr.mxu0 %v398
    %3608 = vmatpush1.msra.mxu0 %v397
    %3609 = vmatprep.subr.mxu0 %v402
    %3610 = vmatpush1.msra.mxu0 %v401
    %3611 = vmatprep.subr.mxu0 %v406
    %3612 = vmatpush1.msra.mxu0 %v405
    %3613 = vmatprep.subr.mxu0 %v410
    %3614 = vmatpush1.msra.mxu0 %v409
    %3615 = vmatprep.subr.mxu0 %v414
    %3616 = vmatpush1.msra.mxu0 %v413
    %3617 = vmatprep.subr.mxu0 %v418
    %3618 = vmatpush1.msra.mxu0 %v417
    %3619 = vmatprep.subr.mxu0 %v422
    %3620 = vmatpush1.msra.mxu0 %v421
    %3621 = vmatprep.subr.mxu0 %v426
    %3622 = vmatpush1.msra.mxu0 %v425
    %3623 = vmatprep.subr.mxu0 %v430
    %3624 = vmatpush1.msra.mxu0 %v429
    %3625 = vmatprep.subr.mxu0 %v434
    %3626 = vmatpush1.msra.mxu0 %v433
    %3627 = vmatprep.subr.mxu0 %v438
    %3628 = vmatpush1.msra.mxu0 %v437
    %3629 = vmatprep.subr.mxu0 %v442
    %3630 = vmatpush1.msra.mxu0 %v441
    %3631 = vmatprep.subr.mxu0 %v446
    %3632 = vmatpush1.msra.mxu0 %v445
    %3633 = vmatprep.subr.mxu0 0.0
    %3634 = vmatpush1.msra.mxu0 0.0
    %3635 = vmatprep.subr.mxu0 0.0
    %3636 = vmatpush1.msra.mxu0 0.0
    %3637 = vmatprep.subr.mxu0 0.0
    %3638 = vmatpush1.msra.mxu0 0.0
    %3639 = vmatprep.subr.mxu0 0.0
    %3640 = vmatpush1.msra.mxu0 0.0
    %3641 = vmatprep.subr.mxu0 0.0
    %3642 = vmatpush1.msra.mxu0 0.0
    %3643 = vmatprep.subr.mxu0 0.0
    %3644 = vmatpush1.msra.mxu0 0.0
    %3645 = vmatprep.subr.mxu0 0.0
    %3646 = vmatpush1.msra.mxu0 0.0
    %3647 = vmatprep.subr.mxu0 0.0
    %3648 = vmatpush1.msra.mxu0 0.0
    %3649 = vmatprep.subr.mxu0 0.0
    %3650 = vmatpush1.msra.mxu0 0.0
    %3651 = vmatprep.subr.mxu0 0.0
    %3652 = vmatpush1.msra.mxu0 0.0
    %3653 = vmatprep.subr.mxu0 0.0
    %3654 = vmatpush1.msra.mxu0 0.0
    %3655 = vmatprep.subr.mxu0 0.0
    %3656 = vmatpush1.msra.mxu0 0.0
    %3657 = vmatprep.subr.mxu0 0.0
    %3658 = vmatpush1.msra.mxu0 0.0
    %3659 = vmatprep.subr.mxu0 0.0
    %3660 = vmatpush1.msra.mxu0 0.0
    %3661 = vmatprep.subr.mxu0 0.0
    %3662 = vmatpush1.msra.mxu0 0.0
    %3663 = vmatprep.subr.mxu0 0.0
    %3664 = vmatpush1.msra.mxu0 0.0
    %3665 = vmatprep.mubr.f32.mxu0 0.0
    %3666 = vmatmul.mubr.f32.gmra.mrb[0].mxu0 %v3527
    %v3667 = vpop.f32.mrb[0].mxu0
    %v3668 = vadd.f32 0.0, %v3667
    %v3669 = vpop.f32.mrb[0].mxu0
    %v3670 = vadd.f32 0.0, %v3669
    %3671 = vdwg.mxu0
    %v3672 = vadd.f32 %v2209, %v3597
    %v3673 = vadd.f32 %v2211, %v3599
    %v3674 = vadd.f32 %v2322, %v3668
    %v3675 = vadd.f32 %v2324, %v3670
    %v3676 = vxor.u32 %v3672, 2147483648
    %v3677 = vmul.f32 %v3676, 1.442695
    %v3678 = vpow.pop %v3677
    %v3679 = vadd.f32 %v3678, 1.0
    %v3680 = vrcp.pop %v3679
    %v3681 = vmul.f32 1.0, %v3680
    %v3682 = vxor.u32 %v3673, 2147483648
    %v3683 = vmul.f32 %v3682, 1.442695
    %v3684 = vpow.pop %v3683
    %v3685 = vadd.f32 %v3684, 1.0
    %v3686 = vrcp.pop %v3685
    %v3687 = vmul.f32 1.0, %v3686
    %v3688 = vtanh.pop %v3674
    %v3689 = vxor.u32 %v3675, 2147483648
    %v3690 = vmul.f32 %v3689, 1.442695
    %v3691 = vpow.pop %v3690
    %v3692 = vadd.f32 %v3691, 1.0
    %v3693 = vrcp.pop %v3692
    %v3694 = vmul.f32 1.0, %v3693
    %v3695 = vmul.f32 %v3687, %v3525
    %v3696 = vmul.f32 %v3681, %v3688
    %v3697 = vadd.f32 %v3695, %v3696
    %v3698 = vtanh.pop %v3697
    %v3699 = vmul.f32 %v3694, %v3698
    %v3700 = vmax.f32 %v3699, 0.0
    %v3701 = vadd.f32 %v3529, %v3700
    %v3702 = vmul.f32 %v3701, 0.125
    %v3703 = vld [vmem:[%s1] sm:$0xff]
    %v3704 = vld [vmem:[%s1 + $0x8] sm:$0xff]
    %v3705 = vld [vmem:[%s1 + $0x10] sm:$0xff]
    %v3706 = vld [vmem:[%s1 + $0x18] sm:$0xff]
    %v3707 = vld [vmem:[%s1 + $0x20] sm:$0xff]
    %v3708 = vld [vmem:[%s1 + $0x28] sm:$0xff]
    %v3709 = vld [vmem:[#allocation11] sm:$0xff]
    %v3710 = vld [vmem:[#allocation11 + $0x8] sm:$0xff]
    %v3711 = vld [vmem:[#allocation11 + $0x10] sm:$0xff]
    %v3712 = vld [vmem:[#allocation11 + $0x18] sm:$0xff]
    %v3713 = vld [vmem:[#allocation11 + $0x20] sm:$0xff]
    %v3714 = vld [vmem:[#allocation11 + $0x28] sm:$0xff]
    %v3715 = vld [vmem:[#allocation11 + $0x30] sm:$0xff]
    %v3716 = vld [vmem:[#allocation11 + $0x38] sm:$0xff]
    %v3717 = vld [vmem:[#allocation11 + $0x40] sm:$0xff]
    %v3718 = vld [vmem:[#allocation11 + $0x48] sm:$0xff]
    %v3719 = vld [vmem:[#allocation11 + $0x50] sm:$0xff]
    %v3720 = vld [vmem:[#allocation11 + $0x58] sm:$0xff]
    %v3721 = vld [vmem:[#allocation11 + $0x60] sm:$0xff]
    %v3722 = vld [vmem:[#allocation11 + $0x68] sm:$0xff]
    %v3723 = vld [vmem:[#allocation11 + $0x70] sm:$0xff]
    %v3724 = vld [vmem:[#allocation11 + $0x78] sm:$0xff]
    %v3725 = vld [vmem:[#allocation11 + $0x80] sm:$0xff]
    %v3726 = vld [vmem:[#allocation11 + $0x88] sm:$0xff]
    %v3727 = vld [vmem:[#allocation11 + $0x90] sm:$0xff]
    %v3728 = vld [vmem:[#allocation11 + $0x98] sm:$0xff]
    %v3729 = vld [vmem:[#allocation11 + $0xa0] sm:$0xff]
    %v3730 = vld [vmem:[#allocation11 + $0xa8] sm:$0xff]
    %v3731 = vld [vmem:[#allocation11 + $0xb0] sm:$0xff]
    %v3732 = vld [vmem:[#allocation11 + $0xb8] sm:$0xff]
    %v3733 = vld [vmem:[#allocation11 + $0xc0] sm:$0xff]
    %v3734 = vld [vmem:[#allocation11 + $0xc8] sm:$0xff]
    %v3735 = vld [vmem:[#allocation11 + $0xd0] sm:$0xff]
    %v3736 = vld [vmem:[#allocation11 + $0xd8] sm:$0xff]
    %v3737 = vld [vmem:[#allocation11 + $0xe0] sm:$0xff]
    %v3738 = vld [vmem:[#allocation11 + $0xe8] sm:$0xff]
    %v3739 = vld [vmem:[#allocation11 + $0xf0] sm:$0xff]
    %v3740 = vld [vmem:[#allocation11 + $0xf8] sm:$0xff]
    %v3741 = vld [vmem:[#allocation11 + $0x100] sm:$0xff]
    %v3742 = vld [vmem:[#allocation11 + $0x108] sm:$0xff]
    %v3743 = vld [vmem:[#allocation11 + $0x110] sm:$0xff]
    %v3744 = vld [vmem:[#allocation11 + $0x118] sm:$0xff]
    %v3745 = vld [vmem:[#allocation11 + $0x120] sm:$0xff]
    %v3746 = vld [vmem:[#allocation11 + $0x128] sm:$0xff]
    %v3747 = vld [vmem:[#allocation11 + $0x130] sm:$0xff]
    %v3748 = vld [vmem:[#allocation11 + $0x138] sm:$0xff]
    %v3749 = vld [vmem:[#allocation11 + $0x140] sm:$0xff]
    %v3750 = vld [vmem:[#allocation11 + $0x148] sm:$0xff]
    %v3751 = vld [vmem:[#allocation11 + $0x150] sm:$0xff]
    %v3752 = vld [vmem:[#allocation11 + $0x158] sm:$0xff]
    %v3753 = vld [vmem:[#allocation11 + $0x160] sm:$0xff]
    %v3754 = vld [vmem:[#allocation11 + $0x168] sm:$0xff]
    %v3755 = vld [vmem:[#allocation11 + $0x170] sm:$0xff]
    %v3756 = vld [vmem:[#allocation11 + $0x178] sm:$0xff]
    %v3757 = vld [vmem:[#allocation11 + $0x180] sm:$0xff]
    %v3758 = vld [vmem:[#allocation11 + $0x188] sm:$0xff]
    %v3759 = vld [vmem:[#allocation11 + $0x190] sm:$0xff]
    %v3760 = vld [vmem:[#allocation11 + $0x198] sm:$0xff]
    %v3761 = vld [vmem:[#allocation11 + $0x1a0] sm:$0xff]
    %v3762 = vld [vmem:[#allocation11 + $0x1a8] sm:$0xff]
    %v3763 = vld [vmem:[#allocation11 + $0x1b0] sm:$0xff]
    %v3764 = vld [vmem:[#allocation11 + $0x1b8] sm:$0xff]
    %v3765 = vld [vmem:[#allocation11 + $0x1c0] sm:$0xff]
    %v3766 = vld [vmem:[#allocation11 + $0x1c8] sm:$0xff]
    %v3767 = vld [vmem:[#allocation11 + $0x1d0] sm:$0xff]
    %v3768 = vld [vmem:[#allocation11 + $0x1d8] sm:$0xff]
    %v3769 = vld [vmem:[#allocation11 + $0x1e0] sm:$0xff]
    %v3770 = vld [vmem:[#allocation11 + $0x1e8] sm:$0xff]
    %v3771 = vld [vmem:[#allocation11 + $0x1f0] sm:$0xff]
    %v3772 = vld [vmem:[#allocation11 + $0x1f8] sm:$0xff]
    %v3773 = vld [vmem:[#allocation13] sm:$0xff]
    %v3774 = vld [vmem:[#allocation13 + $0x8] sm:$0xff]
    %v3775 = vld [vmem:[#allocation13 + $0x10] sm:$0xff]
    %v3776 = vld [vmem:[#allocation13 + $0x18] sm:$0xff]
    %v3777 = vld [vmem:[#allocation13 + $0x20] sm:$0xff]
    %v3778 = vld [vmem:[#allocation13 + $0x28] sm:$0xff]
    %v3779 = vld [vmem:[#allocation13 + $0x30] sm:$0xff]
    %v3780 = vld [vmem:[#allocation13 + $0x38] sm:$0xff]
    %v3781 = vld [vmem:[#allocation13 + $0x40] sm:$0xff]
    %v3782 = vld [vmem:[#allocation13 + $0x48] sm:$0xff]
    %v3783 = vld [vmem:[#allocation13 + $0x50] sm:$0xff]
    %v3784 = vld [vmem:[#allocation13 + $0x58] sm:$0xff]
    %v3785 = vld [vmem:[#allocation13 + $0x60] sm:$0xff]
    %v3786 = vld [vmem:[#allocation13 + $0x68] sm:$0xff]
    %v3787 = vld [vmem:[#allocation13 + $0x70] sm:$0xff]
    %v3788 = vld [vmem:[#allocation13 + $0x78] sm:$0xff]
    %v3789 = vld [vmem:[#allocation13 + $0x80] sm:$0xff]
    %v3790 = vld [vmem:[#allocation13 + $0x88] sm:$0xff]
    %v3791 = vld [vmem:[#allocation13 + $0x90] sm:$0xff]
    %v3792 = vld [vmem:[#allocation13 + $0x98] sm:$0xff]
    %v3793 = vld [vmem:[#allocation13 + $0xa0] sm:$0xff]
    %v3794 = vld [vmem:[#allocation13 + $0xa8] sm:$0xff]
    %v3795 = vld [vmem:[#allocation13 + $0xb0] sm:$0xff]
    %v3796 = vld [vmem:[#allocation13 + $0xb8] sm:$0xff]
    %v3797 = vld [vmem:[#allocation13 + $0xc0] sm:$0xff]
    %v3798 = vld [vmem:[#allocation13 + $0xc8] sm:$0xff]
    %v3799 = vld [vmem:[#allocation13 + $0xd0] sm:$0xff]
    %v3800 = vld [vmem:[#allocation13 + $0xd8] sm:$0xff]
    %v3801 = vld [vmem:[#allocation13 + $0xe0] sm:$0xff]
    %v3802 = vld [vmem:[#allocation13 + $0xe8] sm:$0xff]
    %v3803 = vld [vmem:[#allocation13 + $0xf0] sm:$0xff]
    %v3804 = vld [vmem:[#allocation13 + $0xf8] sm:$0xff]
    %v3805 = vld [vmem:[#allocation13 + $0x100] sm:$0xff]
    %v3806 = vld [vmem:[#allocation13 + $0x108] sm:$0xff]
    %v3807 = vld [vmem:[#allocation13 + $0x110] sm:$0xff]
    %v3808 = vld [vmem:[#allocation13 + $0x118] sm:$0xff]
    %v3809 = vld [vmem:[#allocation13 + $0x120] sm:$0xff]
    %v3810 = vld [vmem:[#allocation13 + $0x128] sm:$0xff]
    %v3811 = vld [vmem:[#allocation13 + $0x130] sm:$0xff]
    %v3812 = vld [vmem:[#allocation13 + $0x138] sm:$0xff]
    %v3813 = vld [vmem:[#allocation13 + $0x140] sm:$0xff]
    %v3814 = vld [vmem:[#allocation13 + $0x148] sm:$0xff]
    %v3815 = vld [vmem:[#allocation13 + $0x150] sm:$0xff]
    %v3816 = vld [vmem:[#allocation13 + $0x158] sm:$0xff]
    %v3817 = vld [vmem:[#allocation13 + $0x160] sm:$0xff]
    %v3818 = vld [vmem:[#allocation13 + $0x168] sm:$0xff]
    %v3819 = vld [vmem:[#allocation13 + $0x170] sm:$0xff]
    %v3820 = vld [vmem:[#allocation13 + $0x178] sm:$0xff]
    %v3821 = vld [vmem:[#allocation13 + $0x180] sm:$0xff]
    %v3822 = vld [vmem:[#allocation13 + $0x188] sm:$0xff]
    %v3823 = vld [vmem:[#allocation13 + $0x190] sm:$0xff]
    %v3824 = vld [vmem:[#allocation13 + $0x198] sm:$0xff]
    %v3825 = vld [vmem:[#allocation13 + $0x1a0] sm:$0xff]
    %v3826 = vld [vmem:[#allocation13 + $0x1a8] sm:$0xff]
    %v3827 = vld [vmem:[#allocation13 + $0x1b0] sm:$0xff]
    %v3828 = vld [vmem:[#allocation13 + $0x1b8] sm:$0xff]
    %v3829 = vld [vmem:[#allocation13 + $0x1c0] sm:$0xff]
    %v3830 = vld [vmem:[#allocation13 + $0x1c8] sm:$0xff]
    %v3831 = vld [vmem:[#allocation13 + $0x1d0] sm:$0xff]
    %v3832 = vld [vmem:[#allocation13 + $0x1d8] sm:$0xff]
    %v3833 = vld [vmem:[#allocation13 + $0x1e0] sm:$0xff]
    %v3834 = vld [vmem:[#allocation13 + $0x1e8] sm:$0xff]
    %v3835 = vld [vmem:[#allocation13 + $0x1f0] sm:$0xff]
    %v3836 = vld [vmem:[#allocation13 + $0x1f8] sm:$0xff]
    %v3837 = vld [vmem:[%s10] sm:$0xf]
    %v3838 = vld [vmem:[#allocation14] sm:$0xff]
    %v3839 = vld [vmem:[#allocation14 + $0x8] sm:$0xff]
    %v3840 = vld [vmem:[#allocation14 + $0x10] sm:$0xff]
    %v3841 = vld [vmem:[#allocation14 + $0x18] sm:$0xff]
    %v3842 = vld [vmem:[#allocation14 + $0x20] sm:$0xff]
    %v3843 = vld [vmem:[#allocation14 + $0x28] sm:$0xff]
    %v3844 = vld [vmem:[#allocation14 + $0x30] sm:$0xff]
    %v3845 = vld [vmem:[#allocation14 + $0x38] sm:$0xff]
    %v3846 = vld [vmem:[#allocation14 + $0x40] sm:$0xff]
    %v3847 = vld [vmem:[#allocation14 + $0x48] sm:$0xff]
    %v3848 = vld [vmem:[#allocation14 + $0x50] sm:$0xff]
    %v3849 = vld [vmem:[#allocation14 + $0x58] sm:$0xff]
    %v3850 = vld [vmem:[#allocation14 + $0x60] sm:$0xff]
    %v3851 = vld [vmem:[#allocation14 + $0x68] sm:$0xff]
    %v3852 = vld [vmem:[#allocation14 + $0x70] sm:$0xff]
    %v3853 = vld [vmem:[#allocation14 + $0x78] sm:$0xff]
    %v3854 = vld [vmem:[#allocation14 + $0x80] sm:$0xff]
    %v3855 = vld [vmem:[#allocation14 + $0x88] sm:$0xff]
    %v3856 = vld [vmem:[#allocation14 + $0x90] sm:$0xff]
    %v3857 = vld [vmem:[#allocation14 + $0x98] sm:$0xff]
    %v3858 = vld [vmem:[#allocation14 + $0xa0] sm:$0xff]
    %v3859 = vld [vmem:[#allocation14 + $0xa8] sm:$0xff]
    %v3860 = vld [vmem:[#allocation14 + $0xb0] sm:$0xff]
    %v3861 = vld [vmem:[#allocation14 + $0xb8] sm:$0xff]
    %v3862 = vld [vmem:[#allocation14 + $0xc0] sm:$0xff]
    %v3863 = vld [vmem:[#allocation14 + $0xc8] sm:$0xff]
    %v3864 = vld [vmem:[#allocation14 + $0xd0] sm:$0xff]
    %v3865 = vld [vmem:[#allocation14 + $0xd8] sm:$0xff]
    %v3866 = vld [vmem:[#allocation14 + $0xe0] sm:$0xff]
    %v3867 = vld [vmem:[#allocation14 + $0xe8] sm:$0xff]
    %v3868 = vld [vmem:[#allocation14 + $0xf0] sm:$0xff]
    %v3869 = vld [vmem:[#allocation14 + $0xf8] sm:$0xff]
    %v3870 = vld [vmem:[#allocation14 + $0x100] sm:$0xff]
    %v3871 = vld [vmem:[#allocation14 + $0x108] sm:$0xff]
    %v3872 = vld [vmem:[#allocation14 + $0x110] sm:$0xff]
    %v3873 = vld [vmem:[#allocation14 + $0x118] sm:$0xff]
    %v3874 = vld [vmem:[#allocation14 + $0x120] sm:$0xff]
    %v3875 = vld [vmem:[#allocation14 + $0x128] sm:$0xff]
    %v3876 = vld [vmem:[#allocation14 + $0x130] sm:$0xff]
    %v3877 = vld [vmem:[#allocation14 + $0x138] sm:$0xff]
    %v3878 = vld [vmem:[#allocation14 + $0x140] sm:$0xff]
    %v3879 = vld [vmem:[#allocation14 + $0x148] sm:$0xff]
    %v3880 = vld [vmem:[#allocation14 + $0x150] sm:$0xff]
    %v3881 = vld [vmem:[#allocation14 + $0x158] sm:$0xff]
    %v3882 = vld [vmem:[#allocation14 + $0x160] sm:$0xff]
    %v3883 = vld [vmem:[#allocation14 + $0x168] sm:$0xff]
    %v3884 = vld [vmem:[#allocation14 + $0x170] sm:$0xff]
    %v3885 = vld [vmem:[#allocation14 + $0x178] sm:$0xff]
    %v3886 = vld [vmem:[#allocation14 + $0x180] sm:$0xff]
    %v3887 = vld [vmem:[#allocation14 + $0x188] sm:$0xff]
    %v3888 = vld [vmem:[#allocation14 + $0x190] sm:$0xff]
    %v3889 = vld [vmem:[#allocation14 + $0x198] sm:$0xff]
    %v3890 = vld [vmem:[#allocation14 + $0x1a0] sm:$0xff]
    %v3891 = vld [vmem:[#allocation14 + $0x1a8] sm:$0xff]
    %v3892 = vld [vmem:[#allocation14 + $0x1b0] sm:$0xff]
    %v3893 = vld [vmem:[#allocation14 + $0x1b8] sm:$0xff]
    %v3894 = vld [vmem:[#allocation14 + $0x1c0] sm:$0xff]
    %v3895 = vld [vmem:[#allocation14 + $0x1c8] sm:$0xff]
    %v3896 = vld [vmem:[#allocation14 + $0x1d0] sm:$0xff]
    %v3897 = vld [vmem:[#allocation14 + $0x1d8] sm:$0xff]
    %v3898 = vld [vmem:[#allocation14 + $0x1e0] sm:$0xff]
    %v3899 = vld [vmem:[#allocation14 + $0x1e8] sm:$0xff]
    %v3900 = vld [vmem:[#allocation14 + $0x1f0] sm:$0xff]
    %v3901 = vld [vmem:[#allocation14 + $0x1f8] sm:$0xff]
    %v3902 = vld [vmem:[#allocation16] sm:$0xff]
    %v3903 = vld [vmem:[#allocation16 + $0x8] sm:$0xff]
    %v3904 = vld [vmem:[#allocation16 + $0x10] sm:$0xff]
    %v3905 = vld [vmem:[#allocation16 + $0x18] sm:$0xff]
    %v3906 = vld [vmem:[#allocation16 + $0x20] sm:$0xff]
    %v3907 = vld [vmem:[#allocation16 + $0x28] sm:$0xff]
    %v3908 = vld [vmem:[#allocation16 + $0x30] sm:$0xff]
    %v3909 = vld [vmem:[#allocation16 + $0x38] sm:$0xff]
    %v3910 = vld [vmem:[#allocation16 + $0x40] sm:$0xff]
    %v3911 = vld [vmem:[#allocation16 + $0x48] sm:$0xff]
    %v3912 = vld [vmem:[#allocation16 + $0x50] sm:$0xff]
    %v3913 = vld [vmem:[#allocation16 + $0x58] sm:$0xff]
    %v3914 = vld [vmem:[#allocation16 + $0x60] sm:$0xff]
    %v3915 = vld [vmem:[#allocation16 + $0x68] sm:$0xff]
    %v3916 = vld [vmem:[#allocation16 + $0x70] sm:$0xff]
    %v3917 = vld [vmem:[#allocation16 + $0x78] sm:$0xff]
    %v3918 = vld [vmem:[#allocation16 + $0x80] sm:$0xff]
    %v3919 = vld [vmem:[#allocation16 + $0x88] sm:$0xff]
    %v3920 = vld [vmem:[#allocation16 + $0x90] sm:$0xff]
    %v3921 = vld [vmem:[#allocation16 + $0x98] sm:$0xff]
    %v3922 = vld [vmem:[#allocation16 + $0xa0] sm:$0xff]
    %v3923 = vld [vmem:[#allocation16 + $0xa8] sm:$0xff]
    %v3924 = vld [vmem:[#allocation16 + $0xb0] sm:$0xff]
    %v3925 = vld [vmem:[#allocation16 + $0xb8] sm:$0xff]
    %v3926 = vld [vmem:[#allocation16 + $0xc0] sm:$0xff]
    %v3927 = vld [vmem:[#allocation16 + $0xc8] sm:$0xff]
    %v3928 = vld [vmem:[#allocation16 + $0xd0] sm:$0xff]
    %v3929 = vld [vmem:[#allocation16 + $0xd8] sm:$0xff]
    %v3930 = vld [vmem:[#allocation16 + $0xe0] sm:$0xff]
    %v3931 = vld [vmem:[#allocation16 + $0xe8] sm:$0xff]
    %v3932 = vld [vmem:[#allocation16 + $0xf0] sm:$0xff]
    %v3933 = vld [vmem:[#allocation16 + $0xf8] sm:$0xff]
    %v3934 = vld [vmem:[#allocation16 + $0x100] sm:$0xff]
    %v3935 = vld [vmem:[#allocation16 + $0x108] sm:$0xff]
    %v3936 = vld [vmem:[#allocation16 + $0x110] sm:$0xff]
    %v3937 = vld [vmem:[#allocation16 + $0x118] sm:$0xff]
    %v3938 = vld [vmem:[#allocation16 + $0x120] sm:$0xff]
    %v3939 = vld [vmem:[#allocation16 + $0x128] sm:$0xff]
    %v3940 = vld [vmem:[#allocation16 + $0x130] sm:$0xff]
    %v3941 = vld [vmem:[#allocation16 + $0x138] sm:$0xff]
    %v3942 = vld [vmem:[#allocation16 + $0x140] sm:$0xff]
    %v3943 = vld [vmem:[#allocation16 + $0x148] sm:$0xff]
    %v3944 = vld [vmem:[#allocation16 + $0x150] sm:$0xff]
    %v3945 = vld [vmem:[#allocation16 + $0x158] sm:$0xff]
    %v3946 = vld [vmem:[#allocation16 + $0x160] sm:$0xff]
    %v3947 = vld [vmem:[#allocation16 + $0x168] sm:$0xff]
    %v3948 = vld [vmem:[#allocation16 + $0x170] sm:$0xff]
    %v3949 = vld [vmem:[#allocation16 + $0x178] sm:$0xff]
    %v3950 = vld [vmem:[#allocation16 + $0x180] sm:$0xff]
    %v3951 = vld [vmem:[#allocation16 + $0x188] sm:$0xff]
    %v3952 = vld [vmem:[#allocation16 + $0x190] sm:$0xff]
    %v3953 = vld [vmem:[#allocation16 + $0x198] sm:$0xff]
    %v3954 = vld [vmem:[#allocation16 + $0x1a0] sm:$0xff]
    %v3955 = vld [vmem:[#allocation16 + $0x1a8] sm:$0xff]
    %v3956 = vld [vmem:[#allocation16 + $0x1b0] sm:$0xff]
    %v3957 = vld [vmem:[#allocation16 + $0x1b8] sm:$0xff]
    %v3958 = vld [vmem:[#allocation16 + $0x1c0] sm:$0xff]
    %v3959 = vld [vmem:[#allocation16 + $0x1c8] sm:$0xff]
    %v3960 = vld [vmem:[#allocation16 + $0x1d0] sm:$0xff]
    %v3961 = vld [vmem:[#allocation16 + $0x1d8] sm:$0xff]
    %v3962 = vld [vmem:[#allocation16 + $0x1e0] sm:$0xff]
    %v3963 = vld [vmem:[#allocation16 + $0x1e8] sm:$0xff]
    %v3964 = vld [vmem:[#allocation16 + $0x1f0] sm:$0xff]
    %v3965 = vld [vmem:[#allocation16 + $0x1f8] sm:$0xff]
    %v3966 = vld [vmem:[%s13] sm:$0xf]
    %v3968 = vlaneseq
    %v3969 = vshrl.u32 %v3968, 7
    %v3970 = vsub.s32 0, %v3969
    %v3971 = vrot.slane %v3837, %v3970
    %v3972 = vlaneseq
    %v3973 = vshrl.u32 %v3972, 7
    %v3974 = vsub.s32 1, %v3973
    %v3975 = vrot.slane %v3837, %v3974
    %v3976 = vlaneseq
    %v3977 = vshrl.u32 %v3976, 7
    %v3978 = vsub.s32 2, %v3977
    %v3979 = vrot.slane %v3837, %v3978
    %v3980 = vlaneseq
    %v3981 = vshrl.u32 %v3980, 7
    %v3982 = vsub.s32 3, %v3981
    %v3983 = vrot.slane %v3837, %v3982
    %3988 = vmatprep.subr.mxu0 %v3710
    %3989 = vmatpush1.msra.mxu0 %v3709
    %3990 = vmatprep.subr.mxu0 %v3714
    %3991 = vmatpush1.msra.mxu0 %v3713
    %3992 = vmatprep.subr.mxu0 %v3718
    %3993 = vmatpush1.msra.mxu0 %v3717
    %3994 = vmatprep.subr.mxu0 %v3722
    %3995 = vmatpush1.msra.mxu0 %v3721
    %3996 = vmatprep.subr.mxu0 %v3726
    %3997 = vmatpush1.msra.mxu0 %v3725
    %3998 = vmatprep.subr.mxu0 %v3730
    %3999 = vmatpush1.msra.mxu0 %v3729
    %4000 = vmatprep.subr.mxu0 %v3734
    %4001 = vmatpush1.msra.mxu0 %v3733
    %4002 = vmatprep.subr.mxu0 %v3738
    %4003 = vmatpush1.msra.mxu0 %v3737
    %4004 = vmatprep.subr.mxu0 %v3742
    %4005 = vmatpush1.msra.mxu0 %v3741
    %4006 = vmatprep.subr.mxu0 %v3746
    %4007 = vmatpush1.msra.mxu0 %v3745
    %4008 = vmatprep.subr.mxu0 %v3750
    %4009 = vmatpush1.msra.mxu0 %v3749
    %4010 = vmatprep.subr.mxu0 %v3754
    %4011 = vmatpush1.msra.mxu0 %v3753
    %4012 = vmatprep.subr.mxu0 %v3758
    %4013 = vmatpush1.msra.mxu0 %v3757
    %4014 = vmatprep.subr.mxu0 %v3762
    %4015 = vmatpush1.msra.mxu0 %v3761
    %4016 = vmatprep.subr.mxu0 %v3766
    %4017 = vmatpush1.msra.mxu0 %v3765
    %4018 = vmatprep.subr.mxu0 %v3770
    %4019 = vmatpush1.msra.mxu0 %v3769
    %4020 = vmatprep.subr.mxu0 0.0
    %4021 = vmatpush1.msra.mxu0 0.0
    %4022 = vmatprep.subr.mxu0 0.0
    %4023 = vmatpush1.msra.mxu0 0.0
    %4024 = vmatprep.subr.mxu0 0.0
    %4025 = vmatpush1.msra.mxu0 0.0
    %4026 = vmatprep.subr.mxu0 0.0
    %4027 = vmatpush1.msra.mxu0 0.0
    %4028 = vmatprep.subr.mxu0 0.0
    %4029 = vmatpush1.msra.mxu0 0.0
    %4030 = vmatprep.subr.mxu0 0.0
    %4031 = vmatpush1.msra.mxu0 0.0
    %4032 = vmatprep.subr.mxu0 0.0
    %4033 = vmatpush1.msra.mxu0 0.0
    %4034 = vmatprep.subr.mxu0 0.0
    %4035 = vmatpush1.msra.mxu0 0.0
    %4036 = vmatprep.subr.mxu0 0.0
    %4037 = vmatpush1.msra.mxu0 0.0
    %4038 = vmatprep.subr.mxu0 0.0
    %4039 = vmatpush1.msra.mxu0 0.0
    %4040 = vmatprep.subr.mxu0 0.0
    %4041 = vmatpush1.msra.mxu0 0.0
    %4042 = vmatprep.subr.mxu0 0.0
    %4043 = vmatpush1.msra.mxu0 0.0
    %4044 = vmatprep.subr.mxu0 0.0
    %4045 = vmatpush1.msra.mxu0 0.0
    %4046 = vmatprep.subr.mxu0 0.0
    %4047 = vmatpush1.msra.mxu0 0.0
    %4048 = vmatprep.subr.mxu0 0.0
    %4049 = vmatpush1.msra.mxu0 0.0
    %4050 = vmatprep.subr.mxu0 0.0
    %4051 = vmatpush1.msra.mxu0 0.0
    %4052 = vmatprep.mubr.f32.mxu0 0.0
    %4053 = vmatmul.mubr.f32.gmra.mrb[0].mxu0 %v3703
    %v4054 = vpop.f32.mrb[0].mxu0
    %v4055 = vadd.f32 %v3971, %v4054
    %v4056 = vpop.f32.mrb[0].mxu0
    %v4057 = vadd.f32 %v3975, %v4056
    %4058 = vmatprep.mubr.f32.mxu0 0.0
    %4059 = vmatmul.mubr.f32.gmra.mrb[0].mxu0 %v3704
    %v4060 = vpop.f32.mrb[0].mxu0
    %v4061 = vadd.f32 %v3971, %v4060
    %v4062 = vpop.f32.mrb[0].mxu0
    %v4063 = vadd.f32 %v3975, %v4062
    %4064 = vmatprep.mubr.f32.mxu0 0.0
    %4065 = vmatmul.mubr.f32.gmra.mrb[0].mxu0 %v3705
    %v4066 = vpop.f32.mrb[0].mxu0
    %v4067 = vadd.f32 %v3971, %v4066
    %v4068 = vpop.f32.mrb[0].mxu0
    %v4069 = vadd.f32 %v3975, %v4068
    %4070 = vmatprep.mubr.f32.mxu0 0.0
    %4071 = vmatmul.mubr.f32.gmra.mrb[0].mxu0 %v3706
    %v4072 = vpop.f32.mrb[0].mxu0
    %v4073 = vadd.f32 %v3971, %v4072
    %v4074 = vpop.f32.mrb[0].mxu0
    %v4075 = vadd.f32 %v3975, %v4074
    %4076 = vmatprep.mubr.f32.mxu0 0.0
    %4077 = vmatmul.mubr.f32.gmra.mrb[0].mxu0 %v3707
    %v4078 = vpop.f32.mrb[0].mxu0
    %v4079 = vadd.f32 %v3971, %v4078
    %v4080 = vpop.f32.mrb[0].mxu0
    %v4081 = vadd.f32 %v3975, %v4080
    %4082 = vmatprep.mubr.f32.mxu0 0.0
    %4083 = vmatmul.mubr.f32.gmra.mrb[0].mxu0 %v3708
    %v4084 = vpop.f32.mrb[0].mxu0
    %v4085 = vadd.f32 %v3971, %v4084
    %v4086 = vpop.f32.mrb[0].mxu0
    %v4087 = vadd.f32 %v3975, %v4086
    %4088 = vdwg.mxu0
    %4089 = vmatprep.subr.mxu0 %v3712
    %4090 = vmatpush1.msra.mxu0 %v3711
    %4091 = vmatprep.subr.mxu0 %v3716
    %4092 = vmatpush1.msra.mxu0 %v3715
    %4093 = vmatprep.subr.mxu0 %v3720
    %4094 = vmatpush1.msra.mxu0 %v3719
    %4095 = vmatprep.subr.mxu0 %v3724
    %4096 = vmatpush1.msra.mxu0 %v3723
    %4097 = vmatprep.subr.mxu0 %v3728
    %4098 = vmatpush1.msra.mxu0 %v3727
    %4099 = vmatprep.subr.mxu0 %v3732
    %4100 = vmatpush1.msra.mxu0 %v3731
    %4101 = vmatprep.subr.mxu0 %v3736
    %4102 = vmatpush1.msra.mxu0 %v3735
    %4103 = vmatprep.subr.mxu0 %v3740
    %4104 = vmatpush1.msra.mxu0 %v3739
    %4105 = vmatprep.subr.mxu0 %v3744
    %4106 = vmatpush1.msra.mxu0 %v3743
    %4107 = vmatprep.subr.mxu0 %v3748
    %4108 = vmatpush1.msra.mxu0 %v3747
    %4109 = vmatprep.subr.mxu0 %v3752
    %4110 = vmatpush1.msra.mxu0 %v3751
    %4111 = vmatprep.subr.mxu0 %v3756
    %4112 = vmatpush1.msra.mxu0 %v3755
    %4113 = vmatprep.subr.mxu0 %v3760
    %4114 = vmatpush1.msra.mxu0 %v3759
    %4115 = vmatprep.subr.mxu0 %v3764
    %4116 = vmatpush1.msra.mxu0 %v3763
    %4117 = vmatprep.subr.mxu0 %v3768
    %4118 = vmatpush1.msra.mxu0 %v3767
    %4119 = vmatprep.subr.mxu0 %v3772
    %4120 = vmatpush1.msra.mxu0 %v3771
    %4121 = vmatprep.subr.mxu0 0.0
    %4122 = vmatpush1.msra.mxu0 0.0
    %4123 = vmatprep.subr.mxu0 0.0
    %4124 = vmatpush1.msra.mxu0 0.0
    %4125 = vmatprep.subr.mxu0 0.0
    %4126 = vmatpush1.msra.mxu0 0.0
    %4127 = vmatprep.subr.mxu0 0.0
    %4128 = vmatpush1.msra.mxu0 0.0
    %4129 = vmatprep.subr.mxu0 0.0
    %4130 = vmatpush1.msra.mxu0 0.0
    %4131 = vmatprep.subr.mxu0 0.0
    %4132 = vmatpush1.msra.mxu0 0.0
    %4133 = vmatprep.subr.mxu0 0.0
    %4134 = vmatpush1.msra.mxu0 0.0
    %4135 = vmatprep.subr.mxu0 0.0
    %4136 = vmatpush1.msra.mxu0 0.0
    %4137 = vmatprep.subr.mxu0 0.0
    %4138 = vmatpush1.msra.mxu0 0.0
    %4139 = vmatprep.subr.mxu0 0.0
    %4140 = vmatpush1.msra.mxu0 0.0
    %4141 = vmatprep.subr.mxu0 0.0
    %4142 = vmatpush1.msra.mxu0 0.0
    %4143 = vmatprep.subr.mxu0 0.0
    %4144 = vmatpush1.msra.mxu0 0.0
    %4145 = vmatprep.subr.mxu0 0.0
    %4146 = vmatpush1.msra.mxu0 0.0
    %4147 = vmatprep.subr.mxu0 0.0
    %4148 = vmatpush1.msra.mxu0 0.0
    %4149 = vmatprep.subr.mxu0 0.0
    %4150 = vmatpush1.msra.mxu0 0.0
    %4151 = vmatprep.subr.mxu0 0.0
    %4152 = vmatpush1.msra.mxu0 0.0
    %4153 = vmatprep.mubr.f32.mxu0 0.0
    %4154 = vmatmul.mubr.f32.gmra.mrb[0].mxu0 %v3703
    %v4155 = vpop.f32.mrb[0].mxu0
    %v4156 = vadd.f32 %v3979, %v4155
    %v4157 = vpop.f32.mrb[0].mxu0
    %v4158 = vadd.f32 %v3983, %v4157
    %4159 = vmatprep.mubr.f32.mxu0 0.0
    %4160 = vmatmul.mubr.f32.gmra.mrb[0].mxu0 %v3704
    %v4161 = vpop.f32.mrb[0].mxu0
    %v4162 = vadd.f32 %v3979, %v4161
    %v4163 = vpop.f32.mrb[0].mxu0
    %v4164 = vadd.f32 %v3983, %v4163
    %4165 = vmatprep.mubr.f32.mxu0 0.0
    %4166 = vmatmul.mubr.f32.gmra.mrb[0].mxu0 %v3705
    %v4167 = vpop.f32.mrb[0].mxu0
    %v4168 = vadd.f32 %v3979, %v4167
    %v4169 = vpop.f32.mrb[0].mxu0
    %v4170 = vadd.f32 %v3983, %v4169
    %4171 = vmatprep.mubr.f32.mxu0 0.0
    %4172 = vmatmul.mubr.f32.gmra.mrb[0].mxu0 %v3706
    %v4173 = vpop.f32.mrb[0].mxu0
    %v4174 = vadd.f32 %v3979, %v4173
    %v4175 = vpop.f32.mrb[0].mxu0
    %v4176 = vadd.f32 %v3983, %v4175
    %4177 = vmatprep.mubr.f32.mxu0 0.0
    %4178 = vmatmul.mubr.f32.gmra.mrb[0].mxu0 %v3707
    %v4179 = vpop.f32.mrb[0].mxu0
    %v4180 = vadd.f32 %v3979, %v4179
    %v4181 = vpop.f32.mrb[0].mxu0
    %v4182 = vadd.f32 %v3983, %v4181
    %4183 = vmatprep.mubr.f32.mxu0 0.0
    %4184 = vmatmul.mubr.f32.gmra.mrb[0].mxu0 %v3708
    %v4185 = vpop.f32.mrb[0].mxu0
    %v4186 = vadd.f32 %v3979, %v4185
    %v4187 = vpop.f32.mrb[0].mxu0
    %v4188 = vadd.f32 %v3983, %v4187
    %4189 = vdwg.mxu0
    %4190 = vmatprep.subr.mxu0 %v3774
    %4191 = vmatpush1.msra.mxu0 %v3773
    %4192 = vmatprep.subr.mxu0 %v3778
    %4193 = vmatpush1.msra.mxu0 %v3777
    %4194 = vmatprep.subr.mxu0 %v3782
    %4195 = vmatpush1.msra.mxu0 %v3781
    %4196 = vmatprep.subr.mxu0 %v3786
    %4197 = vmatpush1.msra.mxu0 %v3785
    %4198 = vmatprep.subr.mxu0 %v3790
    %4199 = vmatpush1.msra.mxu0 %v3789
    %4200 = vmatprep.subr.mxu0 %v3794
    %4201 = vmatpush1.msra.mxu0 %v3793
    %4202 = vmatprep.subr.mxu0 %v3798
    %4203 = vmatpush1.msra.mxu0 %v3797
    %4204 = vmatprep.subr.mxu0 %v3802
    %4205 = vmatpush1.msra.mxu0 %v3801
    %4206 = vmatprep.subr.mxu0 %v3806
    %4207 = vmatpush1.msra.mxu0 %v3805
    %4208 = vmatprep.subr.mxu0 %v3810
    %4209 = vmatpush1.msra.mxu0 %v3809
    %4210 = vmatprep.subr.mxu0 %v3814
    %4211 = vmatpush1.msra.mxu0 %v3813
    %4212 = vmatprep.subr.mxu0 %v3818
    %4213 = vmatpush1.msra.mxu0 %v3817
    %4214 = vmatprep.subr.mxu0 %v3822
    %4215 = vmatpush1.msra.mxu0 %v3821
    %4216 = vmatprep.subr.mxu0 %v3826
    %4217 = vmatpush1.msra.mxu0 %v3825
    %4218 = vmatprep.subr.mxu0 %v3830
    %4219 = vmatpush1.msra.mxu0 %v3829
    %4220 = vmatprep.subr.mxu0 %v3834
    %4221 = vmatpush1.msra.mxu0 %v3833
    %4222 = vmatprep.subr.mxu0 0.0
    %4223 = vmatpush1.msra.mxu0 0.0
    %4224 = vmatprep.subr.mxu0 0.0
    %4225 = vmatpush1.msra.mxu0 0.0
    %4226 = vmatprep.subr.mxu0 0.0
    %4227 = vmatpush1.msra.mxu0 0.0
    %4228 = vmatprep.subr.mxu0 0.0
    %4229 = vmatpush1.msra.mxu0 0.0
    %4230 = vmatprep.subr.mxu0 0.0
    %4231 = vmatpush1.msra.mxu0 0.0
    %4232 = vmatprep.subr.mxu0 0.0
    %4233 = vmatpush1.msra.mxu0 0.0
    %4234 = vmatprep.subr.mxu0 0.0
    %4235 = vmatpush1.msra.mxu0 0.0
    %4236 = vmatprep.subr.mxu0 0.0
    %4237 = vmatpush1.msra.mxu0 0.0
    %4238 = vmatprep.subr.mxu0 0.0
    %4239 = vmatpush1.msra.mxu0 0.0
    %4240 = vmatprep.subr.mxu0 0.0
    %4241 = vmatpush1.msra.mxu0 0.0
    %4242 = vmatprep.subr.mxu0 0.0
    %4243 = vmatpush1.msra.mxu0 0.0
    %4244 = vmatprep.subr.mxu0 0.0
    %4245 = vmatpush1.msra.mxu0 0.0
    %4246 = vmatprep.subr.mxu0 0.0
    %4247 = vmatpush1.msra.mxu0 0.0
    %4248 = vmatprep.subr.mxu0 0.0
    %4249 = vmatpush1.msra.mxu0 0.0
    %4250 = vmatprep.subr.mxu0 0.0
    %4251 = vmatpush1.msra.mxu0 0.0
    %4252 = vmatprep.subr.mxu0 0.0
    %4253 = vmatpush1.msra.mxu0 0.0
    %4254 = vmatprep.mubr.f32.mxu0 0.0
    %4255 = vmatmul.mubr.f32.gmra.mrb[0].mxu0 0.0
    %v4256 = vpop.f32.mrb[0].mxu0
    %v4257 = vadd.f32 0.0, %v4256
    %v4258 = vpop.f32.mrb[0].mxu0
    %v4259 = vadd.f32 0.0, %v4258
    %4260 = vdwg.mxu0
    %4261 = vmatprep.subr.mxu0 %v3776
    %4262 = vmatpush1.msra.mxu0 %v3775
    %4263 = vmatprep.subr.mxu0 %v3780
    %4264 = vmatpush1.msra.mxu0 %v3779
    %4265 = vmatprep.subr.mxu0 %v3784
    %4266 = vmatpush1.msra.mxu0 %v3783
    %4267 = vmatprep.subr.mxu0 %v3788
    %4268 = vmatpush1.msra.mxu0 %v3787
    %4269 = vmatprep.subr.mxu0 %v3792
    %4270 = vmatpush1.msra.mxu0 %v3791
    %4271 = vmatprep.subr.mxu0 %v3796
    %4272 = vmatpush1.msra.mxu0 %v3795
    %4273 = vmatprep.subr.mxu0 %v3800
    %4274 = vmatpush1.msra.mxu0 %v3799
    %4275 = vmatprep.subr.mxu0 %v3804
    %4276 = vmatpush1.msra.mxu0 %v3803
    %4277 = vmatprep.subr.mxu0 %v3808
    %4278 = vmatpush1.msra.mxu0 %v3807
    %4279 = vmatprep.subr.mxu0 %v3812
    %4280 = vmatpush1.msra.mxu0 %v3811
    %4281 = vmatprep.subr.mxu0 %v3816
    %4282 = vmatpush1.msra.mxu0 %v3815
    %4283 = vmatprep.subr.mxu0 %v3820
    %4284 = vmatpush1.msra.mxu0 %v3819
    %4285 = vmatprep.subr.mxu0 %v3824
    %4286 = vmatpush1.msra.mxu0 %v3823
    %4287 = vmatprep.subr.mxu0 %v3828
    %4288 = vmatpush1.msra.mxu0 %v3827
    %4289 = vmatprep.subr.mxu0 %v3832
    %4290 = vmatpush1.msra.mxu0 %v3831
    %4291 = vmatprep.subr.mxu0 %v3836
    %4292 = vmatpush1.msra.mxu0 %v3835
    %4293 = vmatprep.subr.mxu0 0.0
    %4294 = vmatpush1.msra.mxu0 0.0
    %4295 = vmatprep.subr.mxu0 0.0
    %4296 = vmatpush1.msra.mxu0 0.0
    %4297 = vmatprep.subr.mxu0 0.0
    %4298 = vmatpush1.msra.mxu0 0.0
    %4299 = vmatprep.subr.mxu0 0.0
    %4300 = vmatpush1.msra.mxu0 0.0
    %4301 = vmatprep.subr.mxu0 0.0
    %4302 = vmatpush1.msra.mxu0 0.0
    %4303 = vmatprep.subr.mxu0 0.0
    %4304 = vmatpush1.msra.mxu0 0.0
    %4305 = vmatprep.subr.mxu0 0.0
    %4306 = vmatpush1.msra.mxu0 0.0
    %4307 = vmatprep.subr.mxu0 0.0
    %4308 = vmatpush1.msra.mxu0 0.0
    %4309 = vmatprep.subr.mxu0 0.0
    %4310 = vmatpush1.msra.mxu0 0.0
    %4311 = vmatprep.subr.mxu0 0.0
    %4312 = vmatpush1.msra.mxu0 0.0
    %4313 = vmatprep.subr.mxu0 0.0
    %4314 = vmatpush1.msra.mxu0 0.0
    %4315 = vmatprep.subr.mxu0 0.0
    %4316 = vmatpush1.msra.mxu0 0.0
    %4317 = vmatprep.subr.mxu0 0.0
    %4318 = vmatpush1.msra.mxu0 0.0
    %4319 = vmatprep.subr.mxu0 0.0
    %4320 = vmatpush1.msra.mxu0 0.0
    %4321 = vmatprep.subr.mxu0 0.0
    %4322 = vmatpush1.msra.mxu0 0.0
    %4323 = vmatprep.subr.mxu0 0.0
    %4324 = vmatpush1.msra.mxu0 0.0
    %4325 = vmatprep.mubr.f32.mxu0 0.0
    %4326 = vmatmul.mubr.f32.gmra.mrb[0].mxu0 0.0
    %v4327 = vpop.f32.mrb[0].mxu0
    %v4328 = vadd.f32 0.0, %v4327
    %v4329 = vpop.f32.mrb[0].mxu0
    %v4330 = vadd.f32 0.0, %v4329
    %4331 = vdwg.mxu0
    %v4332 = vadd.f32 %v4055, %v4257
    %v4333 = vadd.f32 %v4057, %v4259
    %v4334 = vadd.f32 %v4156, %v4328
    %v4335 = vadd.f32 %v4158, %v4330
    %v4336 = vxor.u32 %v4332, 2147483648
    %v4337 = vmul.f32 %v4336, 1.442695
    %v4338 = vpow.pop %v4337
    %v4339 = vadd.f32 %v4338, 1.0
    %v4340 = vrcp.pop %v4339
    %v4341 = vmul.f32 1.0, %v4340
    %v4342 = vxor.u32 %v4333, 2147483648
    %v4343 = vmul.f32 %v4342, 1.442695
    %v4344 = vpow.pop %v4343
    %v4345 = vadd.f32 %v4344, 1.0
    %v4346 = vrcp.pop %v4345
    %v4347 = vmul.f32 1.0, %v4346
    %v4348 = vtanh.pop %v4334
    %v4349 = vxor.u32 %v4335, 2147483648
    %v4350 = vmul.f32 %v4349, 1.442695
    %v4351 = vpow.pop %v4350
    %v4352 = vadd.f32 %v4351, 1.0
    %v4353 = vrcp.pop %v4352
    %v4354 = vmul.f32 1.0, %v4353
    %v4355 = vmul.f32 %v4347, 0.0
    %v4356 = vmul.f32 %v4341, %v4348
    %v4357 = vadd.f32 %v4355, %v4356
    %v4358 = vtanh.pop %v4357
    %v4359 = vmul.f32 %v4354, %v4358
    %v4360 = vmax.f32 %v4359, 0.0
    %4361 = vst [vmem:[#allocation2] sm:$0xff] %v4360
    %4362 = vmatprep.subr.mxu0 %v3774
    %4363 = vmatpush1.msra.mxu0 %v3773
    %4364 = vmatprep.subr.mxu0 %v3778
    %4365 = vmatpush1.msra.mxu0 %v3777
    %4366 = vmatprep.subr.mxu0 %v3782
    %4367 = vmatpush1.msra.mxu0 %v3781
    %4368 = vmatprep.subr.mxu0 %v3786
    %4369 = vmatpush1.msra.mxu0 %v3785
    %4370 = vmatprep.subr.mxu0 %v3790
    %4371 = vmatpush1.msra.mxu0 %v3789
    %4372 = vmatprep.subr.mxu0 %v3794
    %4373 = vmatpush1.msra.mxu0 %v3793
    %4374 = vmatprep.subr.mxu0 %v3798
    %4375 = vmatpush1.msra.mxu0 %v3797
    %4376 = vmatprep.subr.mxu0 %v3802
    %4377 = vmatpush1.msra.mxu0 %v3801
    %4378 = vmatprep.subr.mxu0 %v3806
    %4379 = vmatpush1.msra.mxu0 %v3805
    %4380 = vmatprep.subr.mxu0 %v3810
    %4381 = vmatpush1.msra.mxu0 %v3809
    %4382 = vmatprep.subr.mxu0 %v3814
    %4383 = vmatpush1.msra.mxu0 %v3813
    %4384 = vmatprep.subr.mxu0 %v3818
    %4385 = vmatpush1.msra.mxu0 %v3817
    %4386 = vmatprep.subr.mxu0 %v3822
    %4387 = vmatpush1.msra.mxu0 %v3821
    %4388 = vmatprep.subr.mxu0 %v3826
    %4389 = vmatpush1.msra.mxu0 %v3825
    %4390 = vmatprep.subr.mxu0 %v3830
    %4391 = vmatpush1.msra.mxu0 %v3829
    %4392 = vmatprep.subr.mxu0 %v3834
    %4393 = vmatpush1.msra.mxu0 %v3833
    %4394 = vmatprep.subr.mxu0 0.0
    %4395 = vmatpush1.msra.mxu0 0.0
    %4396 = vmatprep.subr.mxu0 0.0
    %4397 = vmatpush1.msra.mxu0 0.0
    %4398 = vmatprep.subr.mxu0 0.0
    %4399 = vmatpush1.msra.mxu0 0.0
    %4400 = vmatprep.subr.mxu0 0.0
    %4401 = vmatpush1.msra.mxu0 0.0
    %4402 = vmatprep.subr.mxu0 0.0
    %4403 = vmatpush1.msra.mxu0 0.0
    %4404 = vmatprep.subr.mxu0 0.0
    %4405 = vmatpush1.msra.mxu0 0.0
    %4406 = vmatprep.subr.mxu0 0.0
    %4407 = vmatpush1.msra.mxu0 0.0
    %4408 = vmatprep.subr.mxu0 0.0
    %4409 = vmatpush1.msra.mxu0 0.0
    %4410 = vmatprep.subr.mxu0 0.0
    %4411 = vmatpush1.msra.mxu0 0.0
    %4412 = vmatprep.subr.mxu0 0.0
    %4413 = vmatpush1.msra.mxu0 0.0
    %4414 = vmatprep.subr.mxu0 0.0
    %4415 = vmatpush1.msra.mxu0 0.0
    %4416 = vmatprep.subr.mxu0 0.0
    %4417 = vmatpush1.msra.mxu0 0.0
    %4418 = vmatprep.subr.mxu0 0.0
    %4419 = vmatpush1.msra.mxu0 0.0
    %4420 = vmatprep.subr.mxu0 0.0
    %4421 = vmatpush1.msra.mxu0 0.0
    %4422 = vmatprep.subr.mxu0 0.0
    %4423 = vmatpush1.msra.mxu0 0.0
    %4424 = vmatprep.subr.mxu0 0.0
    %4425 = vmatpush1.msra.mxu0 0.0
    %4426 = vmatprep.mubr.f32.mxu0 0.0
    %4427 = vmatmul.mubr.f32.gmra.mrb[0].mxu0 %v4359
    %v4428 = vpop.f32.mrb[0].mxu0
    %v4429 = vadd.f32 0.0, %v4428
    %v4430 = vpop.f32.mrb[0].mxu0
    %v4431 = vadd.f32 0.0, %v4430
    %4432 = vdwg.mxu0
    %4433 = vmatprep.subr.mxu0 %v3776
    %4434 = vmatpush1.msra.mxu0 %v3775
    %4435 = vmatprep.subr.mxu0 %v3780
    %4436 = vmatpush1.msra.mxu0 %v3779
    %4437 = vmatprep.subr.mxu0 %v3784
    %4438 = vmatpush1.msra.mxu0 %v3783
    %4439 = vmatprep.subr.mxu0 %v3788
    %4440 = vmatpush1.msra.mxu0 %v3787
    %4441 = vmatprep.subr.mxu0 %v3792
    %4442 = vmatpush1.msra.mxu0 %v3791
    %4443 = vmatprep.subr.mxu0 %v3796
    %4444 = vmatpush1.msra.mxu0 %v3795
    %4445 = vmatprep.subr.mxu0 %v3800
    %4446 = vmatpush1.msra.mxu0 %v3799
    %4447 = vmatprep.subr.mxu0 %v3804
    %4448 = vmatpush1.msra.mxu0 %v3803
    %4449 = vmatprep.subr.mxu0 %v3808
    %4450 = vmatpush1.msra.mxu0 %v3807
    %4451 = vmatprep.subr.mxu0 %v3812
    %4452 = vmatpush1.msra.mxu0 %v3811
    %4453 = vmatprep.subr.mxu0 %v3816
    %4454 = vmatpush1.msra.mxu0 %v3815
    %4455 = vmatprep.subr.mxu0 %v3820
    %4456 = vmatpush1.msra.mxu0 %v3819
    %4457 = vmatprep.subr.mxu0 %v3824
    %4458 = vmatpush1.msra.mxu0 %v3823
    %4459 = vmatprep.subr.mxu0 %v3828
    %4460 = vmatpush1.msra.mxu0 %v3827
    %4461 = vmatprep.subr.mxu0 %v3832
    %4462 = vmatpush1.msra.mxu0 %v3831
    %4463 = vmatprep.subr.mxu0 %v3836
    %4464 = vmatpush1.msra.mxu0 %v3835
    %4465 = vmatprep.subr.mxu0 0.0
    %4466 = vmatpush1.msra.mxu0 0.0
    %4467 = vmatprep.subr.mxu0 0.0
    %4468 = vmatpush1.msra.mxu0 0.0
    %4469 = vmatprep.subr.mxu0 0.0
    %4470 = vmatpush1.msra.mxu0 0.0
    %4471 = vmatprep.subr.mxu0 0.0
    %4472 = vmatpush1.msra.mxu0 0.0
    %4473 = vmatprep.subr.mxu0 0.0
    %4474 = vmatpush1.msra.mxu0 0.0
    %4475 = vmatprep.subr.mxu0 0.0
    %4476 = vmatpush1.msra.mxu0 0.0
    %4477 = vmatprep.subr.mxu0 0.0
    %4478 = vmatpush1.msra.mxu0 0.0
    %4479 = vmatprep.subr.mxu0 0.0
    %4480 = vmatpush1.msra.mxu0 0.0
    %4481 = vmatprep.subr.mxu0 0.0
    %4482 = vmatpush1.msra.mxu0 0.0
    %4483 = vmatprep.subr.mxu0 0.0
    %4484 = vmatpush1.msra.mxu0 0.0
    %4485 = vmatprep.subr.mxu0 0.0
    %4486 = vmatpush1.msra.mxu0 0.0
    %4487 = vmatprep.subr.mxu0 0.0
    %4488 = vmatpush1.msra.mxu0 0.0
    %4489 = vmatprep.subr.mxu0 0.0
    %4490 = vmatpush1.msra.mxu0 0.0
    %4491 = vmatprep.subr.mxu0 0.0
    %4492 = vmatpush1.msra.mxu0 0.0
    %4493 = vmatprep.subr.mxu0 0.0
    %4494 = vmatpush1.msra.mxu0 0.0
    %4495 = vmatprep.subr.mxu0 0.0
    %4496 = vmatpush1.msra.mxu0 0.0
    %4497 = vmatprep.mubr.f32.mxu0 0.0
    %4498 = vmatmul.mubr.f32.gmra.mrb[0].mxu0 %v4359
    %v4499 = vpop.f32.mrb[0].mxu0
    %v4500 = vadd.f32 0.0, %v4499
    %v4501 = vpop.f32.mrb[0].mxu0
    %v4502 = vadd.f32 0.0, %v4501
    %4503 = vdwg.mxu0
    %v4504 = vadd.f32 %v4061, %v4429
    %v4505 = vadd.f32 %v4063, %v4431
    %v4506 = vadd.f32 %v4162, %v4500
    %v4507 = vadd.f32 %v4164, %v4502
    %v4508 = vxor.u32 %v4504, 2147483648
    %v4509 = vmul.f32 %v4508, 1.442695
    %v4510 = vpow.pop %v4509
    %v4511 = vadd.f32 %v4510, 1.0
    %v4512 = vrcp.pop %v4511
    %v4513 = vmul.f32 1.0, %v4512
    %v4514 = vxor.u32 %v4505, 2147483648
    %v4515 = vmul.f32 %v4514, 1.442695
    %v4516 = vpow.pop %v4515
    %v4517 = vadd.f32 %v4516, 1.0
    %v4518 = vrcp.pop %v4517
    %v4519 = vmul.f32 1.0, %v4518
    %v4520 = vtanh.pop %v4506
    %v4521 = vxor.u32 %v4507, 2147483648
    %v4522 = vmul.f32 %v4521, 1.442695
    %v4523 = vpow.pop %v4522
    %v4524 = vadd.f32 %v4523, 1.0
    %v4525 = vrcp.pop %v4524
    %v4526 = vmul.f32 1.0, %v4525
    %v4527 = vmul.f32 %v4519, %v4357
    %v4528 = vmul.f32 %v4513, %v4520
    %v4529 = vadd.f32 %v4527, %v4528
    %v4530 = vtanh.pop %v4529
    %v4531 = vmul.f32 %v4526, %v4530
    %v4532 = vmax.f32 %v4531, 0.0
    %4533 = vst [vmem:[#allocation2 + $0x8] sm:$0xff] %v4532
    %4534 = vmatprep.subr.mxu0 %v3774
    %4535 = vmatpush1.msra.mxu0 %v3773
    %4536 = vmatprep.subr.mxu0 %v3778
    %4537 = vmatpush1.msra.mxu0 %v3777
    %4538 = vmatprep.subr.mxu0 %v3782
    %4539 = vmatpush1.msra.mxu0 %v3781
    %4540 = vmatprep.subr.mxu0 %v3786
    %4541 = vmatpush1.msra.mxu0 %v3785
    %4542 = vmatprep.subr.mxu0 %v3790
    %4543 = vmatpush1.msra.mxu0 %v3789
    %4544 = vmatprep.subr.mxu0 %v3794
    %4545 = vmatpush1.msra.mxu0 %v3793
    %4546 = vmatprep.subr.mxu0 %v3798
    %4547 = vmatpush1.msra.mxu0 %v3797
    %4548 = vmatprep.subr.mxu0 %v3802
    %4549 = vmatpush1.msra.mxu0 %v3801
    %4550 = vmatprep.subr.mxu0 %v3806
    %4551 = vmatpush1.msra.mxu0 %v3805
    %4552 = vmatprep.subr.mxu0 %v3810
    %4553 = vmatpush1.msra.mxu0 %v3809
    %4554 = vmatprep.subr.mxu0 %v3814
    %4555 = vmatpush1.msra.mxu0 %v3813
    %4556 = vmatprep.subr.mxu0 %v3818
    %4557 = vmatpush1.msra.mxu0 %v3817
    %4558 = vmatprep.subr.mxu0 %v3822
    %4559 = vmatpush1.msra.mxu0 %v3821
    %4560 = vmatprep.subr.mxu0 %v3826
    %4561 = vmatpush1.msra.mxu0 %v3825
    %4562 = vmatprep.subr.mxu0 %v3830
    %4563 = vmatpush1.msra.mxu0 %v3829
    %4564 = vmatprep.subr.mxu0 %v3834
    %4565 = vmatpush1.msra.mxu0 %v3833
    %4566 = vmatprep.subr.mxu0 0.0
    %4567 = vmatpush1.msra.mxu0 0.0
    %4568 = vmatprep.subr.mxu0 0.0
    %4569 = vmatpush1.msra.mxu0 0.0
    %4570 = vmatprep.subr.mxu0 0.0
    %4571 = vmatpush1.msra.mxu0 0.0
    %4572 = vmatprep.subr.mxu0 0.0
    %4573 = vmatpush1.msra.mxu0 0.0
    %4574 = vmatprep.subr.mxu0 0.0
    %4575 = vmatpush1.msra.mxu0 0.0
    %4576 = vmatprep.subr.mxu0 0.0
    %4577 = vmatpush1.msra.mxu0 0.0
    %4578 = vmatprep.subr.mxu0 0.0
    %4579 = vmatpush1.msra.mxu0 0.0
    %4580 = vmatprep.subr.mxu0 0.0
    %4581 = vmatpush1.msra.mxu0 0.0
    %4582 = vmatprep.subr.mxu0 0.0
    %4583 = vmatpush1.msra.mxu0 0.0
    %4584 = vmatprep.subr.mxu0 0.0
    %4585 = vmatpush1.msra.mxu0 0.0
    %4586 = vmatprep.subr.mxu0 0.0
    %4587 = vmatpush1.msra.mxu0 0.0
    %4588 = vmatprep.subr.mxu0 0.0
    %4589 = vmatpush1.msra.mxu0 0.0
    %4590 = vmatprep.subr.mxu0 0.0
    %4591 = vmatpush1.msra.mxu0 0.0
    %4592 = vmatprep.subr.mxu0 0.0
    %4593 = vmatpush1.msra.mxu0 0.0
    %4594 = vmatprep.subr.mxu0 0.0
    %4595 = vmatpush1.msra.mxu0 0.0
    %4596 = vmatprep.subr.mxu0 0.0
    %4597 = vmatpush1.msra.mxu0 0.0
    %4598 = vmatprep.mubr.f32.mxu0 0.0
    %4599 = vmatmul.mubr.f32.gmra.mrb[0].mxu0 %v4531
    %v4600 = vpop.f32.mrb[0].mxu0
    %v4601 = vadd.f32 0.0, %v4600
    %v4602 = vpop.f32.mrb[0].mxu0
    %v4603 = vadd.f32 0.0, %v4602
    %4604 = vdwg.mxu0
    %4605 = vmatprep.subr.mxu0 %v3776
    %4606 = vmatpush1.msra.mxu0 %v3775
    %4607 = vmatprep.subr.mxu0 %v3780
    %4608 = vmatpush1.msra.mxu0 %v3779
    %4609 = vmatprep.subr.mxu0 %v3784
    %4610 = vmatpush1.msra.mxu0 %v3783
    %4611 = vmatprep.subr.mxu0 %v3788
    %4612 = vmatpush1.msra.mxu0 %v3787
    %4613 = vmatprep.subr.mxu0 %v3792
    %4614 = vmatpush1.msra.mxu0 %v3791
    %4615 = vmatprep.subr.mxu0 %v3796
    %4616 = vmatpush1.msra.mxu0 %v3795
    %4617 = vmatprep.subr.mxu0 %v3800
    %4618 = vmatpush1.msra.mxu0 %v3799
    %4619 = vmatprep.subr.mxu0 %v3804
    %4620 = vmatpush1.msra.mxu0 %v3803
    %4621 = vmatprep.subr.mxu0 %v3808
    %4622 = vmatpush1.msra.mxu0 %v3807
    %4623 = vmatprep.subr.mxu0 %v3812
    %4624 = vmatpush1.msra.mxu0 %v3811
    %4625 = vmatprep.subr.mxu0 %v3816
    %4626 = vmatpush1.msra.mxu0 %v3815
    %4627 = vmatprep.subr.mxu0 %v3820
    %4628 = vmatpush1.msra.mxu0 %v3819
    %4629 = vmatprep.subr.mxu0 %v3824
    %4630 = vmatpush1.msra.mxu0 %v3823
    %4631 = vmatprep.subr.mxu0 %v3828
    %4632 = vmatpush1.msra.mxu0 %v3827
    %4633 = vmatprep.subr.mxu0 %v3832
    %4634 = vmatpush1.msra.mxu0 %v3831
    %4635 = vmatprep.subr.mxu0 %v3836
    %4636 = vmatpush1.msra.mxu0 %v3835
    %4637 = vmatprep.subr.mxu0 0.0
    %4638 = vmatpush1.msra.mxu0 0.0
    %4639 = vmatprep.subr.mxu0 0.0
    %4640 = vmatpush1.msra.mxu0 0.0
    %4641 = vmatprep.subr.mxu0 0.0
    %4642 = vmatpush1.msra.mxu0 0.0
    %4643 = vmatprep.subr.mxu0 0.0
    %4644 = vmatpush1.msra.mxu0 0.0
    %4645 = vmatprep.subr.mxu0 0.0
    %4646 = vmatpush1.msra.mxu0 0.0
    %4647 = vmatprep.subr.mxu0 0.0
    %4648 = vmatpush1.msra.mxu0 0.0
    %4649 = vmatprep.subr.mxu0 0.0
    %4650 = vmatpush1.msra.mxu0 0.0
    %4651 = vmatprep.subr.mxu0 0.0
    %4652 = vmatpush1.msra.mxu0 0.0
    %4653 = vmatprep.subr.mxu0 0.0
    %4654 = vmatpush1.msra.mxu0 0.0
    %4655 = vmatprep.subr.mxu0 0.0
    %4656 = vmatpush1.msra.mxu0 0.0
    %4657 = vmatprep.subr.mxu0 0.0
    %4658 = vmatpush1.msra.mxu0 0.0
    %4659 = vmatprep.subr.mxu0 0.0
    %4660 = vmatpush1.msra.mxu0 0.0
    %4661 = vmatprep.subr.mxu0 0.0
    %4662 = vmatpush1.msra.mxu0 0.0
    %4663 = vmatprep.subr.mxu0 0.0
    %4664 = vmatpush1.msra.mxu0 0.0
    %4665 = vmatprep.subr.mxu0 0.0
    %4666 = vmatpush1.msra.mxu0 0.0
    %4667 = vmatprep.subr.mxu0 0.0
    %4668 = vmatpush1.msra.mxu0 0.0
    %4669 = vmatprep.mubr.f32.mxu0 0.0
    %4670 = vmatmul.mubr.f32.gmra.mrb[0].mxu0 %v4531
    %v4671 = vpop.f32.mrb[0].mxu0
    %v4672 = vadd.f32 0.0, %v4671
    %v4673 = vpop.f32.mrb[0].mxu0
    %v4674 = vadd.f32 0.0, %v4673
    %4675 = vdwg.mxu0
    %v4676 = vadd.f32 %v4067, %v4601
    %v4677 = vadd.f32 %v4069, %v4603
    %v4678 = vadd.f32 %v4168, %v4672
    %v4679 = vadd.f32 %v4170, %v4674
    %v4680 = vxor.u32 %v4676, 2147483648
    %v4681 = vmul.f32 %v4680, 1.442695
    %v4682 = vpow.pop %v4681
    %v4683 = vadd.f32 %v4682, 1.0
    %v4684 = vrcp.pop %v4683
    %v4685 = vmul.f32 1.0, %v4684
    %v4686 = vxor.u32 %v4677, 2147483648
    %v4687 = vmul.f32 %v4686, 1.442695
    %v4688 = vpow.pop %v4687
    %v4689 = vadd.f32 %v4688, 1.0
    %v4690 = vrcp.pop %v4689
    %v4691 = vmul.f32 1.0, %v4690
    %v4692 = vtanh.pop %v4678
    %v4693 = vxor.u32 %v4679, 2147483648
    %v4694 = vmul.f32 %v4693, 1.442695
    %v4695 = vpow.pop %v4694
    %v4696 = vadd.f32 %v4695, 1.0
    %v4697 = vrcp.pop %v4696
    %v4698 = vmul.f32 1.0, %v4697
    %v4699 = vmul.f32 %v4691, %v4529
    %v4700 = vmul.f32 %v4685, %v4692
    %v4701 = vadd.f32 %v4699, %v4700
    %v4702 = vtanh.pop %v4701
    %v4703 = vmul.f32 %v4698, %v4702
    %v4704 = vmax.f32 %v4703, 0.0
    %4705 = vst [vmem:[#allocation2 + $0x10] sm:$0xff] %v4704
    %4706 = vmatprep.subr.mxu0 %v3774
    %4707 = vmatpush1.msra.mxu0 %v3773
    %4708 = vmatprep.subr.mxu0 %v3778
    %4709 = vmatpush1.msra.mxu0 %v3777
    %4710 = vmatprep.subr.mxu0 %v3782
    %4711 = vmatpush1.msra.mxu0 %v3781
    %4712 = vmatprep.subr.mxu0 %v3786
    %4713 = vmatpush1.msra.mxu0 %v3785
    %4714 = vmatprep.subr.mxu0 %v3790
    %4715 = vmatpush1.msra.mxu0 %v3789
    %4716 = vmatprep.subr.mxu0 %v3794
    %4717 = vmatpush1.msra.mxu0 %v3793
    %4718 = vmatprep.subr.mxu0 %v3798
    %4719 = vmatpush1.msra.mxu0 %v3797
    %4720 = vmatprep.subr.mxu0 %v3802
    %4721 = vmatpush1.msra.mxu0 %v3801
    %4722 = vmatprep.subr.mxu0 %v3806
    %4723 = vmatpush1.msra.mxu0 %v3805
    %4724 = vmatprep.subr.mxu0 %v3810
    %4725 = vmatpush1.msra.mxu0 %v3809
    %4726 = vmatprep.subr.mxu0 %v3814
    %4727 = vmatpush1.msra.mxu0 %v3813
    %4728 = vmatprep.subr.mxu0 %v3818
    %4729 = vmatpush1.msra.mxu0 %v3817
    %4730 = vmatprep.subr.mxu0 %v3822
    %4731 = vmatpush1.msra.mxu0 %v3821
    %4732 = vmatprep.subr.mxu0 %v3826
    %4733 = vmatpush1.msra.mxu0 %v3825
    %4734 = vmatprep.subr.mxu0 %v3830
    %4735 = vmatpush1.msra.mxu0 %v3829
    %4736 = vmatprep.subr.mxu0 %v3834
    %4737 = vmatpush1.msra.mxu0 %v3833
    %4738 = vmatprep.subr.mxu0 0.0
    %4739 = vmatpush1.msra.mxu0 0.0
    %4740 = vmatprep.subr.mxu0 0.0
    %4741 = vmatpush1.msra.mxu0 0.0
    %4742 = vmatprep.subr.mxu0 0.0
    %4743 = vmatpush1.msra.mxu0 0.0
    %4744 = vmatprep.subr.mxu0 0.0
    %4745 = vmatpush1.msra.mxu0 0.0
    %4746 = vmatprep.subr.mxu0 0.0
    %4747 = vmatpush1.msra.mxu0 0.0
    %4748 = vmatprep.subr.mxu0 0.0
    %4749 = vmatpush1.msra.mxu0 0.0
    %4750 = vmatprep.subr.mxu0 0.0
    %4751 = vmatpush1.msra.mxu0 0.0
    %4752 = vmatprep.subr.mxu0 0.0
    %4753 = vmatpush1.msra.mxu0 0.0
    %4754 = vmatprep.subr.mxu0 0.0
    %4755 = vmatpush1.msra.mxu0 0.0
    %4756 = vmatprep.subr.mxu0 0.0
    %4757 = vmatpush1.msra.mxu0 0.0
    %4758 = vmatprep.subr.mxu0 0.0
    %4759 = vmatpush1.msra.mxu0 0.0
    %4760 = vmatprep.subr.mxu0 0.0
    %4761 = vmatpush1.msra.mxu0 0.0
    %4762 = vmatprep.subr.mxu0 0.0
    %4763 = vmatpush1.msra.mxu0 0.0
    %4764 = vmatprep.subr.mxu0 0.0
    %4765 = vmatpush1.msra.mxu0 0.0
    %4766 = vmatprep.subr.mxu0 0.0
    %4767 = vmatpush1.msra.mxu0 0.0
    %4768 = vmatprep.subr.mxu0 0.0
    %4769 = vmatpush1.msra.mxu0 0.0
    %4770 = vmatprep.mubr.f32.mxu0 0.0
    %4771 = vmatmul.mubr.f32.gmra.mrb[0].mxu0 %v4703
    %v4772 = vpop.f32.mrb[0].mxu0
    %v4773 = vadd.f32 0.0, %v4772
    %v4774 = vpop.f32.mrb[0].mxu0
    %v4775 = vadd.f32 0.0, %v4774
    %4776 = vdwg.mxu0
    %4777 = vmatprep.subr.mxu0 %v3776
    %4778 = vmatpush1.msra.mxu0 %v3775
    %4779 = vmatprep.subr.mxu0 %v3780
    %4780 = vmatpush1.msra.mxu0 %v3779
    %4781 = vmatprep.subr.mxu0 %v3784
    %4782 = vmatpush1.msra.mxu0 %v3783
    %4783 = vmatprep.subr.mxu0 %v3788
    %4784 = vmatpush1.msra.mxu0 %v3787
    %4785 = vmatprep.subr.mxu0 %v3792
    %4786 = vmatpush1.msra.mxu0 %v3791
    %4787 = vmatprep.subr.mxu0 %v3796
    %4788 = vmatpush1.msra.mxu0 %v3795
    %4789 = vmatprep.subr.mxu0 %v3800
    %4790 = vmatpush1.msra.mxu0 %v3799
    %4791 = vmatprep.subr.mxu0 %v3804
    %4792 = vmatpush1.msra.mxu0 %v3803
    %4793 = vmatprep.subr.mxu0 %v3808
    %4794 = vmatpush1.msra.mxu0 %v3807
    %4795 = vmatprep.subr.mxu0 %v3812
    %4796 = vmatpush1.msra.mxu0 %v3811
    %4797 = vmatprep.subr.mxu0 %v3816
    %4798 = vmatpush1.msra.mxu0 %v3815
    %4799 = vmatprep.subr.mxu0 %v3820
    %4800 = vmatpush1.msra.mxu0 %v3819
    %4801 = vmatprep.subr.mxu0 %v3824
    %4802 = vmatpush1.msra.mxu0 %v3823
    %4803 = vmatprep.subr.mxu0 %v3828
    %4804 = vmatpush1.msra.mxu0 %v3827
    %4805 = vmatprep.subr.mxu0 %v3832
    %4806 = vmatpush1.msra.mxu0 %v3831
    %4807 = vmatprep.subr.mxu0 %v3836
    %4808 = vmatpush1.msra.mxu0 %v3835
    %4809 = vmatprep.subr.mxu0 0.0
    %4810 = vmatpush1.msra.mxu0 0.0
    %4811 = vmatprep.subr.mxu0 0.0
    %4812 = vmatpush1.msra.mxu0 0.0
    %4813 = vmatprep.subr.mxu0 0.0
    %4814 = vmatpush1.msra.mxu0 0.0
    %4815 = vmatprep.subr.mxu0 0.0
    %4816 = vmatpush1.msra.mxu0 0.0
    %4817 = vmatprep.subr.mxu0 0.0
    %4818 = vmatpush1.msra.mxu0 0.0
    %4819 = vmatprep.subr.mxu0 0.0
    %4820 = vmatpush1.msra.mxu0 0.0
    %4821 = vmatprep.subr.mxu0 0.0
    %4822 = vmatpush1.msra.mxu0 0.0
    %4823 = vmatprep.subr.mxu0 0.0
    %4824 = vmatpush1.msra.mxu0 0.0
    %4825 = vmatprep.subr.mxu0 0.0
    %4826 = vmatpush1.msra.mxu0 0.0
    %4827 = vmatprep.subr.mxu0 0.0
    %4828 = vmatpush1.msra.mxu0 0.0
    %4829 = vmatprep.subr.mxu0 0.0
    %4830 = vmatpush1.msra.mxu0 0.0
    %4831 = vmatprep.subr.mxu0 0.0
    %4832 = vmatpush1.msra.mxu0 0.0
    %4833 = vmatprep.subr.mxu0 0.0
    %4834 = vmatpush1.msra.mxu0 0.0
    %4835 = vmatprep.subr.mxu0 0.0
    %4836 = vmatpush1.msra.mxu0 0.0
    %4837 = vmatprep.subr.mxu0 0.0
    %4838 = vmatpush1.msra.mxu0 0.0
    %4839 = vmatprep.subr.mxu0 0.0
    %4840 = vmatpush1.msra.mxu0 0.0
    %4841 = vmatprep.mubr.f32.mxu0 0.0
    %4842 = vmatmul.mubr.f32.gmra.mrb[0].mxu0 %v4703
    %v4843 = vpop.f32.mrb[0].mxu0
    %v4844 = vadd.f32 0.0, %v4843
    %v4845 = vpop.f32.mrb[0].mxu0
    %v4846 = vadd.f32 0.0, %v4845
    %4847 = vdwg.mxu0
    %v4848 = vadd.f32 %v4073, %v4773
    %v4849 = vadd.f32 %v4075, %v4775
    %v4850 = vadd.f32 %v4174, %v4844
    %v4851 = vadd.f32 %v4176, %v4846
    %v4852 = vxor.u32 %v4848, 2147483648
    %v4853 = vmul.f32 %v4852, 1.442695
    %v4854 = vpow.pop %v4853
    %v4855 = vadd.f32 %v4854, 1.0
    %v4856 = vrcp.pop %v4855
    %v4857 = vmul.f32 1.0, %v4856
    %v4858 = vxor.u32 %v4849, 2147483648
    %v4859 = vmul.f32 %v4858, 1.442695
    %v4860 = vpow.pop %v4859
    %v4861 = vadd.f32 %v4860, 1.0
    %v4862 = vrcp.pop %v4861
    %v4863 = vmul.f32 1.0, %v4862
    %v4864 = vtanh.pop %v4850
    %v4865 = vxor.u32 %v4851, 2147483648
    %v4866 = vmul.f32 %v4865, 1.442695
    %v4867 = vpow.pop %v4866
    %v4868 = vadd.f32 %v4867, 1.0
    %v4869 = vrcp.pop %v4868
    %v4870 = vmul.f32 1.0, %v4869
    %v4871 = vmul.f32 %v4863, %v4701
    %v4872 = vmul.f32 %v4857, %v4864
    %v4873 = vadd.f32 %v4871, %v4872
    %v4874 = vtanh.pop %v4873
    %v4875 = vmul.f32 %v4870, %v4874
    %v4876 = vmax.f32 %v4875, 0.0
    %4877 = vst [vmem:[#allocation2 + $0x18] sm:$0xff] %v4876
    %4878 = vmatprep.subr.mxu0 %v3774
    %4879 = vmatpush1.msra.mxu0 %v3773
    %4880 = vmatprep.subr.mxu0 %v3778
    %4881 = vmatpush1.msra.mxu0 %v3777
    %4882 = vmatprep.subr.mxu0 %v3782
    %4883 = vmatpush1.msra.mxu0 %v3781
    %4884 = vmatprep.subr.mxu0 %v3786
    %4885 = vmatpush1.msra.mxu0 %v3785
    %4886 = vmatprep.subr.mxu0 %v3790
    %4887 = vmatpush1.msra.mxu0 %v3789
    %4888 = vmatprep.subr.mxu0 %v3794
    %4889 = vmatpush1.msra.mxu0 %v3793
    %4890 = vmatprep.subr.mxu0 %v3798
    %4891 = vmatpush1.msra.mxu0 %v3797
    %4892 = vmatprep.subr.mxu0 %v3802
    %4893 = vmatpush1.msra.mxu0 %v3801
    %4894 = vmatprep.subr.mxu0 %v3806
    %4895 = vmatpush1.msra.mxu0 %v3805
    %4896 = vmatprep.subr.mxu0 %v3810
    %4897 = vmatpush1.msra.mxu0 %v3809
    %4898 = vmatprep.subr.mxu0 %v3814
    %4899 = vmatpush1.msra.mxu0 %v3813
    %4900 = vmatprep.subr.mxu0 %v3818
    %4901 = vmatpush1.msra.mxu0 %v3817
    %4902 = vmatprep.subr.mxu0 %v3822
    %4903 = vmatpush1.msra.mxu0 %v3821
    %4904 = vmatprep.subr.mxu0 %v3826
    %4905 = vmatpush1.msra.mxu0 %v3825
    %4906 = vmatprep.subr.mxu0 %v3830
    %4907 = vmatpush1.msra.mxu0 %v3829
    %4908 = vmatprep.subr.mxu0 %v3834
    %4909 = vmatpush1.msra.mxu0 %v3833
    %4910 = vmatprep.subr.mxu0 0.0
    %4911 = vmatpush1.msra.mxu0 0.0
    %4912 = vmatprep.subr.mxu0 0.0
    %4913 = vmatpush1.msra.mxu0 0.0
    %4914 = vmatprep.subr.mxu0 0.0
    %4915 = vmatpush1.msra.mxu0 0.0
    %4916 = vmatprep.subr.mxu0 0.0
    %4917 = vmatpush1.msra.mxu0 0.0
    %4918 = vmatprep.subr.mxu0 0.0
    %4919 = vmatpush1.msra.mxu0 0.0
    %4920 = vmatprep.subr.mxu0 0.0
    %4921 = vmatpush1.msra.mxu0 0.0
    %4922 = vmatprep.subr.mxu0 0.0
    %4923 = vmatpush1.msra.mxu0 0.0
    %4924 = vmatprep.subr.mxu0 0.0
    %4925 = vmatpush1.msra.mxu0 0.0
    %4926 = vmatprep.subr.mxu0 0.0
    %4927 = vmatpush1.msra.mxu0 0.0
    %4928 = vmatprep.subr.mxu0 0.0
    %4929 = vmatpush1.msra.mxu0 0.0
    %4930 = vmatprep.subr.mxu0 0.0
    %4931 = vmatpush1.msra.mxu0 0.0
    %4932 = vmatprep.subr.mxu0 0.0
    %4933 = vmatpush1.msra.mxu0 0.0
    %4934 = vmatprep.subr.mxu0 0.0
    %4935 = vmatpush1.msra.mxu0 0.0
    %4936 = vmatprep.subr.mxu0 0.0
    %4937 = vmatpush1.msra.mxu0 0.0
    %4938 = vmatprep.subr.mxu0 0.0
    %4939 = vmatpush1.msra.mxu0 0.0
    %4940 = vmatprep.subr.mxu0 0.0
    %4941 = vmatpush1.msra.mxu0 0.0
    %4942 = vmatprep.mubr.f32.mxu0 0.0
    %4943 = vmatmul.mubr.f32.gmra.mrb[0].mxu0 %v4875
    %v4944 = vpop.f32.mrb[0].mxu0
    %v4945 = vadd.f32 0.0, %v4944
    %v4946 = vpop.f32.mrb[0].mxu0
    %v4947 = vadd.f32 0.0, %v4946
    %4948 = vdwg.mxu0
    %4949 = vmatprep.subr.mxu0 %v3776
    %4950 = vmatpush1.msra.mxu0 %v3775
    %4951 = vmatprep.subr.mxu0 %v3780
    %4952 = vmatpush1.msra.mxu0 %v3779
    %4953 = vmatprep.subr.mxu0 %v3784
    %4954 = vmatpush1.msra.mxu0 %v3783
    %4955 = vmatprep.subr.mxu0 %v3788
    %4956 = vmatpush1.msra.mxu0 %v3787
    %4957 = vmatprep.subr.mxu0 %v3792
    %4958 = vmatpush1.msra.mxu0 %v3791
    %4959 = vmatprep.subr.mxu0 %v3796
    %4960 = vmatpush1.msra.mxu0 %v3795
    %4961 = vmatprep.subr.mxu0 %v3800
    %4962 = vmatpush1.msra.mxu0 %v3799
    %4963 = vmatprep.subr.mxu0 %v3804
    %4964 = vmatpush1.msra.mxu0 %v3803
    %4965 = vmatprep.subr.mxu0 %v3808
    %4966 = vmatpush1.msra.mxu0 %v3807
    %4967 = vmatprep.subr.mxu0 %v3812
    %4968 = vmatpush1.msra.mxu0 %v3811
    %4969 = vmatprep.subr.mxu0 %v3816
    %4970 = vmatpush1.msra.mxu0 %v3815
    %4971 = vmatprep.subr.mxu0 %v3820
    %4972 = vmatpush1.msra.mxu0 %v3819
    %4973 = vmatprep.subr.mxu0 %v3824
    %4974 = vmatpush1.msra.mxu0 %v3823
    %4975 = vmatprep.subr.mxu0 %v3828
    %4976 = vmatpush1.msra.mxu0 %v3827
    %4977 = vmatprep.subr.mxu0 %v3832
    %4978 = vmatpush1.msra.mxu0 %v3831
    %4979 = vmatprep.subr.mxu0 %v3836
    %4980 = vmatpush1.msra.mxu0 %v3835
    %4981 = vmatprep.subr.mxu0 0.0
    %4982 = vmatpush1.msra.mxu0 0.0
    %4983 = vmatprep.subr.mxu0 0.0
    %4984 = vmatpush1.msra.mxu0 0.0
    %4985 = vmatprep.subr.mxu0 0.0
    %4986 = vmatpush1.msra.mxu0 0.0
    %4987 = vmatprep.subr.mxu0 0.0
    %4988 = vmatpush1.msra.mxu0 0.0
    %4989 = vmatprep.subr.mxu0 0.0
    %4990 = vmatpush1.msra.mxu0 0.0
    %4991 = vmatprep.subr.mxu0 0.0
    %4992 = vmatpush1.msra.mxu0 0.0
    %4993 = vmatprep.subr.mxu0 0.0
    %4994 = vmatpush1.msra.mxu0 0.0
    %4995 = vmatprep.subr.mxu0 0.0
    %4996 = vmatpush1.msra.mxu0 0.0
    %4997 = vmatprep.subr.mxu0 0.0
    %4998 = vmatpush1.msra.mxu0 0.0
    %4999 = vmatprep.subr.mxu0 0.0
    %5000 = vmatpush1.msra.mxu0 0.0
    %5001 = vmatprep.subr.mxu0 0.0
    %5002 = vmatpush1.msra.mxu0 0.0
    %5003 = vmatprep.subr.mxu0 0.0
    %5004 = vmatpush1.msra.mxu0 0.0
    %5005 = vmatprep.subr.mxu0 0.0
    %5006 = vmatpush1.msra.mxu0 0.0
    %5007 = vmatprep.subr.mxu0 0.0
    %5008 = vmatpush1.msra.mxu0 0.0
    %5009 = vmatprep.subr.mxu0 0.0
    %5010 = vmatpush1.msra.mxu0 0.0
    %5011 = vmatprep.subr.mxu0 0.0
    %5012 = vmatpush1.msra.mxu0 0.0
    %5013 = vmatprep.mubr.f32.mxu0 0.0
    %5014 = vmatmul.mubr.f32.gmra.mrb[0].mxu0 %v4875
    %v5015 = vpop.f32.mrb[0].mxu0
    %v5016 = vadd.f32 0.0, %v5015
    %v5017 = vpop.f32.mrb[0].mxu0
    %v5018 = vadd.f32 0.0, %v5017
    %5019 = vdwg.mxu0
    %v5020 = vadd.f32 %v4079, %v4945
    %v5021 = vadd.f32 %v4081, %v4947
    %v5022 = vadd.f32 %v4180, %v5016
    %v5023 = vadd.f32 %v4182, %v5018
    %v5024 = vxor.u32 %v5020, 2147483648
    %v5025 = vmul.f32 %v5024, 1.442695
    %v5026 = vpow.pop %v5025
    %v5027 = vadd.f32 %v5026, 1.0
    %v5028 = vrcp.pop %v5027
    %v5029 = vmul.f32 1.0, %v5028
    %v5030 = vxor.u32 %v5021, 2147483648
    %v5031 = vmul.f32 %v5030, 1.442695
    %v5032 = vpow.pop %v5031
    %v5033 = vadd.f32 %v5032, 1.0
    %v5034 = vrcp.pop %v5033
    %v5035 = vmul.f32 1.0, %v5034
    %v5036 = vtanh.pop %v5022
    %v5037 = vxor.u32 %v5023, 2147483648
    %v5038 = vmul.f32 %v5037, 1.442695
    %v5039 = vpow.pop %v5038
    %v5040 = vadd.f32 %v5039, 1.0
    %v5041 = vrcp.pop %v5040
    %v5042 = vmul.f32 1.0, %v5041
    %v5043 = vmul.f32 %v5035, %v4873
    %v5044 = vmul.f32 %v5029, %v5036
    %v5045 = vadd.f32 %v5043, %v5044
    %v5046 = vtanh.pop %v5045
    %v5047 = vmul.f32 %v5042, %v5046
    %v5048 = vmax.f32 %v5047, 0.0
    %5049 = vst [vmem:[#allocation2 + $0x20] sm:$0xff] %v5048
    %5050 = vmatprep.subr.mxu0 %v3774
    %5051 = vmatpush1.msra.mxu0 %v3773
    %5052 = vmatprep.subr.mxu0 %v3778
    %5053 = vmatpush1.msra.mxu0 %v3777
    %5054 = vmatprep.subr.mxu0 %v3782
    %5055 = vmatpush1.msra.mxu0 %v3781
    %5056 = vmatprep.subr.mxu0 %v3786
    %5057 = vmatpush1.msra.mxu0 %v3785
    %5058 = vmatprep.subr.mxu0 %v3790
    %5059 = vmatpush1.msra.mxu0 %v3789
    %5060 = vmatprep.subr.mxu0 %v3794
    %5061 = vmatpush1.msra.mxu0 %v3793
    %5062 = vmatprep.subr.mxu0 %v3798
    %5063 = vmatpush1.msra.mxu0 %v3797
    %5064 = vmatprep.subr.mxu0 %v3802
    %5065 = vmatpush1.msra.mxu0 %v3801
    %5066 = vmatprep.subr.mxu0 %v3806
    %5067 = vmatpush1.msra.mxu0 %v3805
    %5068 = vmatprep.subr.mxu0 %v3810
    %5069 = vmatpush1.msra.mxu0 %v3809
    %5070 = vmatprep.subr.mxu0 %v3814
    %5071 = vmatpush1.msra.mxu0 %v3813
    %5072 = vmatprep.subr.mxu0 %v3818
    %5073 = vmatpush1.msra.mxu0 %v3817
    %5074 = vmatprep.subr.mxu0 %v3822
    %5075 = vmatpush1.msra.mxu0 %v3821
    %5076 = vmatprep.subr.mxu0 %v3826
    %5077 = vmatpush1.msra.mxu0 %v3825
    %5078 = vmatprep.subr.mxu0 %v3830
    %5079 = vmatpush1.msra.mxu0 %v3829
    %5080 = vmatprep.subr.mxu0 %v3834
    %5081 = vmatpush1.msra.mxu0 %v3833
    %5082 = vmatprep.subr.mxu0 0.0
    %5083 = vmatpush1.msra.mxu0 0.0
    %5084 = vmatprep.subr.mxu0 0.0
    %5085 = vmatpush1.msra.mxu0 0.0
    %5086 = vmatprep.subr.mxu0 0.0
    %5087 = vmatpush1.msra.mxu0 0.0
    %5088 = vmatprep.subr.mxu0 0.0
    %5089 = vmatpush1.msra.mxu0 0.0
    %5090 = vmatprep.subr.mxu0 0.0
    %5091 = vmatpush1.msra.mxu0 0.0
    %5092 = vmatprep.subr.mxu0 0.0
    %5093 = vmatpush1.msra.mxu0 0.0
    %5094 = vmatprep.subr.mxu0 0.0
    %5095 = vmatpush1.msra.mxu0 0.0
    %5096 = vmatprep.subr.mxu0 0.0
    %5097 = vmatpush1.msra.mxu0 0.0
    %5098 = vmatprep.subr.mxu0 0.0
    %5099 = vmatpush1.msra.mxu0 0.0
    %5100 = vmatprep.subr.mxu0 0.0
    %5101 = vmatpush1.msra.mxu0 0.0
    %5102 = vmatprep.subr.mxu0 0.0
    %5103 = vmatpush1.msra.mxu0 0.0
    %5104 = vmatprep.subr.mxu0 0.0
    %5105 = vmatpush1.msra.mxu0 0.0
    %5106 = vmatprep.subr.mxu0 0.0
    %5107 = vmatpush1.msra.mxu0 0.0
    %5108 = vmatprep.subr.mxu0 0.0
    %5109 = vmatpush1.msra.mxu0 0.0
    %5110 = vmatprep.subr.mxu0 0.0
    %5111 = vmatpush1.msra.mxu0 0.0
    %5112 = vmatprep.subr.mxu0 0.0
    %5113 = vmatpush1.msra.mxu0 0.0
    %5114 = vmatprep.mubr.f32.mxu0 0.0
    %5115 = vmatmul.mubr.f32.gmra.mrb[0].mxu0 %v5047
    %v5116 = vpop.f32.mrb[0].mxu0
    %v5117 = vadd.f32 0.0, %v5116
    %v5118 = vpop.f32.mrb[0].mxu0
    %v5119 = vadd.f32 0.0, %v5118
    %5120 = vdwg.mxu0
    %5121 = vmatprep.subr.mxu0 %v3776
    %5122 = vmatpush1.msra.mxu0 %v3775
    %5123 = vmatprep.subr.mxu0 %v3780
    %5124 = vmatpush1.msra.mxu0 %v3779
    %5125 = vmatprep.subr.mxu0 %v3784
    %5126 = vmatpush1.msra.mxu0 %v3783
    %5127 = vmatprep.subr.mxu0 %v3788
    %5128 = vmatpush1.msra.mxu0 %v3787
    %5129 = vmatprep.subr.mxu0 %v3792
    %5130 = vmatpush1.msra.mxu0 %v3791
    %5131 = vmatprep.subr.mxu0 %v3796
    %5132 = vmatpush1.msra.mxu0 %v3795
    %5133 = vmatprep.subr.mxu0 %v3800
    %5134 = vmatpush1.msra.mxu0 %v3799
    %5135 = vmatprep.subr.mxu0 %v3804
    %5136 = vmatpush1.msra.mxu0 %v3803
    %5137 = vmatprep.subr.mxu0 %v3808
    %5138 = vmatpush1.msra.mxu0 %v3807
    %5139 = vmatprep.subr.mxu0 %v3812
    %5140 = vmatpush1.msra.mxu0 %v3811
    %5141 = vmatprep.subr.mxu0 %v3816
    %5142 = vmatpush1.msra.mxu0 %v3815
    %5143 = vmatprep.subr.mxu0 %v3820
    %5144 = vmatpush1.msra.mxu0 %v3819
    %5145 = vmatprep.subr.mxu0 %v3824
    %5146 = vmatpush1.msra.mxu0 %v3823
    %5147 = vmatprep.subr.mxu0 %v3828
    %5148 = vmatpush1.msra.mxu0 %v3827
    %5149 = vmatprep.subr.mxu0 %v3832
    %5150 = vmatpush1.msra.mxu0 %v3831
    %5151 = vmatprep.subr.mxu0 %v3836
    %5152 = vmatpush1.msra.mxu0 %v3835
    %5153 = vmatprep.subr.mxu0 0.0
    %5154 = vmatpush1.msra.mxu0 0.0
    %5155 = vmatprep.subr.mxu0 0.0
    %5156 = vmatpush1.msra.mxu0 0.0
    %5157 = vmatprep.subr.mxu0 0.0
    %5158 = vmatpush1.msra.mxu0 0.0
    %5159 = vmatprep.subr.mxu0 0.0
    %5160 = vmatpush1.msra.mxu0 0.0
    %5161 = vmatprep.subr.mxu0 0.0
    %5162 = vmatpush1.msra.mxu0 0.0
    %5163 = vmatprep.subr.mxu0 0.0
    %5164 = vmatpush1.msra.mxu0 0.0
    %5165 = vmatprep.subr.mxu0 0.0
    %5166 = vmatpush1.msra.mxu0 0.0
    %5167 = vmatprep.subr.mxu0 0.0
    %5168 = vmatpush1.msra.mxu0 0.0
    %5169 = vmatprep.subr.mxu0 0.0
    %5170 = vmatpush1.msra.mxu0 0.0
    %5171 = vmatprep.subr.mxu0 0.0
    %5172 = vmatpush1.msra.mxu0 0.0
    %5173 = vmatprep.subr.mxu0 0.0
    %5174 = vmatpush1.msra.mxu0 0.0
    %5175 = vmatprep.subr.mxu0 0.0
    %5176 = vmatpush1.msra.mxu0 0.0
    %5177 = vmatprep.subr.mxu0 0.0
    %5178 = vmatpush1.msra.mxu0 0.0
    %5179 = vmatprep.subr.mxu0 0.0
    %5180 = vmatpush1.msra.mxu0 0.0
    %5181 = vmatprep.subr.mxu0 0.0
    %5182 = vmatpush1.msra.mxu0 0.0
    %5183 = vmatprep.subr.mxu0 0.0
    %5184 = vmatpush1.msra.mxu0 0.0
    %5185 = vmatprep.mubr.f32.mxu0 0.0
    %5186 = vmatmul.mubr.f32.gmra.mrb[0].mxu0 %v5047
    %v5187 = vpop.f32.mrb[0].mxu0
    %v5188 = vadd.f32 0.0, %v5187
    %v5189 = vpop.f32.mrb[0].mxu0
    %v5190 = vadd.f32 0.0, %v5189
    %5191 = vdwg.mxu0
    %v5192 = vadd.f32 %v4085, %v5117
    %v5193 = vadd.f32 %v4087, %v5119
    %v5194 = vadd.f32 %v4186, %v5188
    %v5195 = vadd.f32 %v4188, %v5190
    %v5196 = vxor.u32 %v5192, 2147483648
    %v5197 = vmul.f32 %v5196, 1.442695
    %v5198 = vpow.pop %v5197
    %v5199 = vadd.f32 %v5198, 1.0
    %v5200 = vrcp.pop %v5199
    %v5201 = vmul.f32 1.0, %v5200
    %v5202 = vxor.u32 %v5193, 2147483648
    %v5203 = vmul.f32 %v5202, 1.442695
    %v5204 = vpow.pop %v5203
    %v5205 = vadd.f32 %v5204, 1.0
    %v5206 = vrcp.pop %v5205
    %v5207 = vmul.f32 1.0, %v5206
    %v5208 = vtanh.pop %v5194
    %v5209 = vxor.u32 %v5195, 2147483648
    %v5210 = vmul.f32 %v5209, 1.442695
    %v5211 = vpow.pop %v5210
    %v5212 = vadd.f32 %v5211, 1.0
    %v5213 = vrcp.pop %v5212
    %v5214 = vmul.f32 1.0, %v5213
    %v5215 = vmul.f32 %v5207, %v5045
    %v5216 = vmul.f32 %v5201, %v5208
    %v5217 = vadd.f32 %v5215, %v5216
    %v5218 = vtanh.pop %v5217
    %v5219 = vmul.f32 %v5214, %v5218
    %v5220 = vmax.f32 %v5219, 0.0
    %5221 = vst [vmem:[#allocation2 + $0x28] sm:$0xff] %v5220
    %v5222 = vld [vmem:[#allocation2] sm:$0xff]
    %v5223 = vld [vmem:[#allocation2 + $0x8] sm:$0xff]
    %v5224 = vld [vmem:[#allocation2 + $0x10] sm:$0xff]
    %v5225 = vld [vmem:[#allocation2 + $0x18] sm:$0xff]
    %v5226 = vld [vmem:[#allocation2 + $0x20] sm:$0xff]
    %v5227 = vld [vmem:[#allocation2 + $0x28] sm:$0xff]
    %v5229 = vlaneseq
    %v5230 = vshrl.u32 %v5229, 7
    %v5231 = vsub.s32 0, %v5230
    %v5232 = vrot.slane %v3966, %v5231
    %v5233 = vlaneseq
    %v5234 = vshrl.u32 %v5233, 7
    %v5235 = vsub.s32 1, %v5234
    %v5236 = vrot.slane %v3966, %v5235
    %v5237 = vlaneseq
    %v5238 = vshrl.u32 %v5237, 7
    %v5239 = vsub.s32 2, %v5238
    %v5240 = vrot.slane %v3966, %v5239
    %v5241 = vlaneseq
    %v5242 = vshrl.u32 %v5241, 7
    %v5243 = vsub.s32 3, %v5242
    %v5244 = vrot.slane %v3966, %v5243
    %5249 = vmatprep.subr.mxu0 %v3839
    %5250 = vmatpush1.msra.mxu0 %v3838
    %5251 = vmatprep.subr.mxu0 %v3843
    %5252 = vmatpush1.msra.mxu0 %v3842
    %5253 = vmatprep.subr.mxu0 %v3847
    %5254 = vmatpush1.msra.mxu0 %v3846
    %5255 = vmatprep.subr.mxu0 %v3851
    %5256 = vmatpush1.msra.mxu0 %v3850
    %5257 = vmatprep.subr.mxu0 %v3855
    %5258 = vmatpush1.msra.mxu0 %v3854
    %5259 = vmatprep.subr.mxu0 %v3859
    %5260 = vmatpush1.msra.mxu0 %v3858
    %5261 = vmatprep.subr.mxu0 %v3863
    %5262 = vmatpush1.msra.mxu0 %v3862
    %5263 = vmatprep.subr.mxu0 %v3867
    %5264 = vmatpush1.msra.mxu0 %v3866
    %5265 = vmatprep.subr.mxu0 %v3871
    %5266 = vmatpush1.msra.mxu0 %v3870
    %5267 = vmatprep.subr.mxu0 %v3875
    %5268 = vmatpush1.msra.mxu0 %v3874
    %5269 = vmatprep.subr.mxu0 %v3879
    %5270 = vmatpush1.msra.mxu0 %v3878
    %5271 = vmatprep.subr.mxu0 %v3883
    %5272 = vmatpush1.msra.mxu0 %v3882
    %5273 = vmatprep.subr.mxu0 %v3887
    %5274 = vmatpush1.msra.mxu0 %v3886
    %5275 = vmatprep.subr.mxu0 %v3891
    %5276 = vmatpush1.msra.mxu0 %v3890
    %5277 = vmatprep.subr.mxu0 %v3895
    %5278 = vmatpush1.msra.mxu0 %v3894
    %5279 = vmatprep.subr.mxu0 %v3899
    %5280 = vmatpush1.msra.mxu0 %v3898
    %5281 = vmatprep.subr.mxu0 0.0
    %5282 = vmatpush1.msra.mxu0 0.0
    %5283 = vmatprep.subr.mxu0 0.0
    %5284 = vmatpush1.msra.mxu0 0.0
    %5285 = vmatprep.subr.mxu0 0.0
    %5286 = vmatpush1.msra.mxu0 0.0
    %5287 = vmatprep.subr.mxu0 0.0
    %5288 = vmatpush1.msra.mxu0 0.0
    %5289 = vmatprep.subr.mxu0 0.0
    %5290 = vmatpush1.msra.mxu0 0.0
    %5291 = vmatprep.subr.mxu0 0.0
    %5292 = vmatpush1.msra.mxu0 0.0
    %5293 = vmatprep.subr.mxu0 0.0
    %5294 = vmatpush1.msra.mxu0 0.0
    %5295 = vmatprep.subr.mxu0 0.0
    %5296 = vmatpush1.msra.mxu0 0.0
    %5297 = vmatprep.subr.mxu0 0.0
    %5298 = vmatpush1.msra.mxu0 0.0
    %5299 = vmatprep.subr.mxu0 0.0
    %5300 = vmatpush1.msra.mxu0 0.0
    %5301 = vmatprep.subr.mxu0 0.0
    %5302 = vmatpush1.msra.mxu0 0.0
    %5303 = vmatprep.subr.mxu0 0.0
    %5304 = vmatpush1.msra.mxu0 0.0
    %5305 = vmatprep.subr.mxu0 0.0
    %5306 = vmatpush1.msra.mxu0 0.0
    %5307 = vmatprep.subr.mxu0 0.0
    %5308 = vmatpush1.msra.mxu0 0.0
    %5309 = vmatprep.subr.mxu0 0.0
    %5310 = vmatpush1.msra.mxu0 0.0
    %5311 = vmatprep.subr.mxu0 0.0
    %5312 = vmatpush1.msra.mxu0 0.0
    %5313 = vmatprep.mubr.f32.mxu0 0.0
    %5314 = vmatmul.mubr.f32.gmra.mrb[0].mxu0 %v5222
    %v5315 = vpop.f32.mrb[0].mxu0
    %v5316 = vadd.f32 %v5232, %v5315
    %v5317 = vpop.f32.mrb[0].mxu0
    %v5318 = vadd.f32 %v5236, %v5317
    %5319 = vmatprep.mubr.f32.mxu0 0.0
    %5320 = vmatmul.mubr.f32.gmra.mrb[0].mxu0 %v5223
    %v5321 = vpop.f32.mrb[0].mxu0
    %v5322 = vadd.f32 %v5232, %v5321
    %v5323 = vpop.f32.mrb[0].mxu0
    %v5324 = vadd.f32 %v5236, %v5323
    %5325 = vmatprep.mubr.f32.mxu0 0.0
    %5326 = vmatmul.mubr.f32.gmra.mrb[0].mxu0 %v5224
    %v5327 = vpop.f32.mrb[0].mxu0
    %v5328 = vadd.f32 %v5232, %v5327
    %v5329 = vpop.f32.mrb[0].mxu0
    %v5330 = vadd.f32 %v5236, %v5329
    %5331 = vmatprep.mubr.f32.mxu0 0.0
    %5332 = vmatmul.mubr.f32.gmra.mrb[0].mxu0 %v5225
    %v5333 = vpop.f32.mrb[0].mxu0
    %v5334 = vadd.f32 %v5232, %v5333
    %v5335 = vpop.f32.mrb[0].mxu0
    %v5336 = vadd.f32 %v5236, %v5335
    %5337 = vmatprep.mubr.f32.mxu0 0.0
    %5338 = vmatmul.mubr.f32.gmra.mrb[0].mxu0 %v5226
    %v5339 = vpop.f32.mrb[0].mxu0
    %v5340 = vadd.f32 %v5232, %v5339
    %v5341 = vpop.f32.mrb[0].mxu0
    %v5342 = vadd.f32 %v5236, %v5341
    %5343 = vmatprep.mubr.f32.mxu0 0.0
    %5344 = vmatmul.mubr.f32.gmra.mrb[0].mxu0 %v5227
    %v5345 = vpop.f32.mrb[0].mxu0
    %v5346 = vadd.f32 %v5232, %v5345
    %v5347 = vpop.f32.mrb[0].mxu0
    %v5348 = vadd.f32 %v5236, %v5347
    %5349 = vdwg.mxu0
    %5350 = vmatprep.subr.mxu0 %v3841
    %5351 = vmatpush1.msra.mxu0 %v3840
    %5352 = vmatprep.subr.mxu0 %v3845
    %5353 = vmatpush1.msra.mxu0 %v3844
    %5354 = vmatprep.subr.mxu0 %v3849
    %5355 = vmatpush1.msra.mxu0 %v3848
    %5356 = vmatprep.subr.mxu0 %v3853
    %5357 = vmatpush1.msra.mxu0 %v3852
    %5358 = vmatprep.subr.mxu0 %v3857
    %5359 = vmatpush1.msra.mxu0 %v3856
    %5360 = vmatprep.subr.mxu0 %v3861
    %5361 = vmatpush1.msra.mxu0 %v3860
    %5362 = vmatprep.subr.mxu0 %v3865
    %5363 = vmatpush1.msra.mxu0 %v3864
    %5364 = vmatprep.subr.mxu0 %v3869
    %5365 = vmatpush1.msra.mxu0 %v3868
    %5366 = vmatprep.subr.mxu0 %v3873
    %5367 = vmatpush1.msra.mxu0 %v3872
    %5368 = vmatprep.subr.mxu0 %v3877
    %5369 = vmatpush1.msra.mxu0 %v3876
    %5370 = vmatprep.subr.mxu0 %v3881
    %5371 = vmatpush1.msra.mxu0 %v3880
    %5372 = vmatprep.subr.mxu0 %v3885
    %5373 = vmatpush1.msra.mxu0 %v3884
    %5374 = vmatprep.subr.mxu0 %v3889
    %5375 = vmatpush1.msra.mxu0 %v3888
    %5376 = vmatprep.subr.mxu0 %v3893
    %5377 = vmatpush1.msra.mxu0 %v3892
    %5378 = vmatprep.subr.mxu0 %v3897
    %5379 = vmatpush1.msra.mxu0 %v3896
    %5380 = vmatprep.subr.mxu0 %v3901
    %5381 = vmatpush1.msra.mxu0 %v3900
    %5382 = vmatprep.subr.mxu0 0.0
    %5383 = vmatpush1.msra.mxu0 0.0
    %5384 = vmatprep.subr.mxu0 0.0
    %5385 = vmatpush1.msra.mxu0 0.0
    %5386 = vmatprep.subr.mxu0 0.0
    %5387 = vmatpush1.msra.mxu0 0.0
    %5388 = vmatprep.subr.mxu0 0.0
    %5389 = vmatpush1.msra.mxu0 0.0
    %5390 = vmatprep.subr.mxu0 0.0
    %5391 = vmatpush1.msra.mxu0 0.0
    %5392 = vmatprep.subr.mxu0 0.0
    %5393 = vmatpush1.msra.mxu0 0.0
    %5394 = vmatprep.subr.mxu0 0.0
    %5395 = vmatpush1.msra.mxu0 0.0
    %5396 = vmatprep.subr.mxu0 0.0
    %5397 = vmatpush1.msra.mxu0 0.0
    %5398 = vmatprep.subr.mxu0 0.0
    %5399 = vmatpush1.msra.mxu0 0.0
    %5400 = vmatprep.subr.mxu0 0.0
    %5401 = vmatpush1.msra.mxu0 0.0
    %5402 = vmatprep.subr.mxu0 0.0
    %5403 = vmatpush1.msra.mxu0 0.0
    %5404 = vmatprep.subr.mxu0 0.0
    %5405 = vmatpush1.msra.mxu0 0.0
    %5406 = vmatprep.subr.mxu0 0.0
    %5407 = vmatpush1.msra.mxu0 0.0
    %5408 = vmatprep.subr.mxu0 0.0
    %5409 = vmatpush1.msra.mxu0 0.0
    %5410 = vmatprep.subr.mxu0 0.0
    %5411 = vmatpush1.msra.mxu0 0.0
    %5412 = vmatprep.subr.mxu0 0.0
    %5413 = vmatpush1.msra.mxu0 0.0
    %5414 = vmatprep.mubr.f32.mxu0 0.0
    %5415 = vmatmul.mubr.f32.gmra.mrb[0].mxu0 %v5222
    %v5416 = vpop.f32.mrb[0].mxu0
    %v5417 = vadd.f32 %v5240, %v5416
    %v5418 = vpop.f32.mrb[0].mxu0
    %v5419 = vadd.f32 %v5244, %v5418
    %5420 = vmatprep.mubr.f32.mxu0 0.0
    %5421 = vmatmul.mubr.f32.gmra.mrb[0].mxu0 %v5223
    %v5422 = vpop.f32.mrb[0].mxu0
    %v5423 = vadd.f32 %v5240, %v5422
    %v5424 = vpop.f32.mrb[0].mxu0
    %v5425 = vadd.f32 %v5244, %v5424
    %5426 = vmatprep.mubr.f32.mxu0 0.0
    %5427 = vmatmul.mubr.f32.gmra.mrb[0].mxu0 %v5224
    %v5428 = vpop.f32.mrb[0].mxu0
    %v5429 = vadd.f32 %v5240, %v5428
    %v5430 = vpop.f32.mrb[0].mxu0
    %v5431 = vadd.f32 %v5244, %v5430
    %5432 = vmatprep.mubr.f32.mxu0 0.0
    %5433 = vmatmul.mubr.f32.gmra.mrb[0].mxu0 %v5225
    %v5434 = vpop.f32.mrb[0].mxu0
    %v5435 = vadd.f32 %v5240, %v5434
    %v5436 = vpop.f32.mrb[0].mxu0
    %v5437 = vadd.f32 %v5244, %v5436
    %5438 = vmatprep.mubr.f32.mxu0 0.0
    %5439 = vmatmul.mubr.f32.gmra.mrb[0].mxu0 %v5226
    %v5440 = vpop.f32.mrb[0].mxu0
    %v5441 = vadd.f32 %v5240, %v5440
    %v5442 = vpop.f32.mrb[0].mxu0
    %v5443 = vadd.f32 %v5244, %v5442
    %5444 = vmatprep.mubr.f32.mxu0 0.0
    %5445 = vmatmul.mubr.f32.gmra.mrb[0].mxu0 %v5227
    %v5446 = vpop.f32.mrb[0].mxu0
    %v5447 = vadd.f32 %v5240, %v5446
    %v5448 = vpop.f32.mrb[0].mxu0
    %v5449 = vadd.f32 %v5244, %v5448
    %5450 = vdwg.mxu0
    %5451 = vmatprep.subr.mxu0 %v3903
    %5452 = vmatpush1.msra.mxu0 %v3902
    %5453 = vmatprep.subr.mxu0 %v3907
    %5454 = vmatpush1.msra.mxu0 %v3906
    %5455 = vmatprep.subr.mxu0 %v3911
    %5456 = vmatpush1.msra.mxu0 %v3910
    %5457 = vmatprep.subr.mxu0 %v3915
    %5458 = vmatpush1.msra.mxu0 %v3914
    %5459 = vmatprep.subr.mxu0 %v3919
    %5460 = vmatpush1.msra.mxu0 %v3918
    %5461 = vmatprep.subr.mxu0 %v3923
    %5462 = vmatpush1.msra.mxu0 %v3922
    %5463 = vmatprep.subr.mxu0 %v3927
    %5464 = vmatpush1.msra.mxu0 %v3926
    %5465 = vmatprep.subr.mxu0 %v3931
    %5466 = vmatpush1.msra.mxu0 %v3930
    %5467 = vmatprep.subr.mxu0 %v3935
    %5468 = vmatpush1.msra.mxu0 %v3934
    %5469 = vmatprep.subr.mxu0 %v3939
    %5470 = vmatpush1.msra.mxu0 %v3938
    %5471 = vmatprep.subr.mxu0 %v3943
    %5472 = vmatpush1.msra.mxu0 %v3942
    %5473 = vmatprep.subr.mxu0 %v3947
    %5474 = vmatpush1.msra.mxu0 %v3946
    %5475 = vmatprep.subr.mxu0 %v3951
    %5476 = vmatpush1.msra.mxu0 %v3950
    %5477 = vmatprep.subr.mxu0 %v3955
    %5478 = vmatpush1.msra.mxu0 %v3954
    %5479 = vmatprep.subr.mxu0 %v3959
    %5480 = vmatpush1.msra.mxu0 %v3958
    %5481 = vmatprep.subr.mxu0 %v3963
    %5482 = vmatpush1.msra.mxu0 %v3962
    %5483 = vmatprep.subr.mxu0 0.0
    %5484 = vmatpush1.msra.mxu0 0.0
    %5485 = vmatprep.subr.mxu0 0.0
    %5486 = vmatpush1.msra.mxu0 0.0
    %5487 = vmatprep.subr.mxu0 0.0
    %5488 = vmatpush1.msra.mxu0 0.0
    %5489 = vmatprep.subr.mxu0 0.0
    %5490 = vmatpush1.msra.mxu0 0.0
    %5491 = vmatprep.subr.mxu0 0.0
    %5492 = vmatpush1.msra.mxu0 0.0
    %5493 = vmatprep.subr.mxu0 0.0
    %5494 = vmatpush1.msra.mxu0 0.0
    %5495 = vmatprep.subr.mxu0 0.0
    %5496 = vmatpush1.msra.mxu0 0.0
    %5497 = vmatprep.subr.mxu0 0.0
    %5498 = vmatpush1.msra.mxu0 0.0
    %5499 = vmatprep.subr.mxu0 0.0
    %5500 = vmatpush1.msra.mxu0 0.0
    %5501 = vmatprep.subr.mxu0 0.0
    %5502 = vmatpush1.msra.mxu0 0.0
    %5503 = vmatprep.subr.mxu0 0.0
    %5504 = vmatpush1.msra.mxu0 0.0
    %5505 = vmatprep.subr.mxu0 0.0
    %5506 = vmatpush1.msra.mxu0 0.0
    %5507 = vmatprep.subr.mxu0 0.0
    %5508 = vmatpush1.msra.mxu0 0.0
    %5509 = vmatprep.subr.mxu0 0.0
    %5510 = vmatpush1.msra.mxu0 0.0
    %5511 = vmatprep.subr.mxu0 0.0
    %5512 = vmatpush1.msra.mxu0 0.0
    %5513 = vmatprep.subr.mxu0 0.0
    %5514 = vmatpush1.msra.mxu0 0.0
    %5515 = vmatprep.mubr.f32.mxu0 0.0
    %5516 = vmatmul.mubr.f32.gmra.mrb[0].mxu0 0.0
    %v5517 = vpop.f32.mrb[0].mxu0
    %v5518 = vadd.f32 0.0, %v5517
    %v5519 = vpop.f32.mrb[0].mxu0
    %v5520 = vadd.f32 0.0, %v5519
    %5521 = vdwg.mxu0
    %5522 = vmatprep.subr.mxu0 %v3905
    %5523 = vmatpush1.msra.mxu0 %v3904
    %5524 = vmatprep.subr.mxu0 %v3909
    %5525 = vmatpush1.msra.mxu0 %v3908
    %5526 = vmatprep.subr.mxu0 %v3913
    %5527 = vmatpush1.msra.mxu0 %v3912
    %5528 = vmatprep.subr.mxu0 %v3917
    %5529 = vmatpush1.msra.mxu0 %v3916
    %5530 = vmatprep.subr.mxu0 %v3921
    %5531 = vmatpush1.msra.mxu0 %v3920
    %5532 = vmatprep.subr.mxu0 %v3925
    %5533 = vmatpush1.msra.mxu0 %v3924
    %5534 = vmatprep.subr.mxu0 %v3929
    %5535 = vmatpush1.msra.mxu0 %v3928
    %5536 = vmatprep.subr.mxu0 %v3933
    %5537 = vmatpush1.msra.mxu0 %v3932
    %5538 = vmatprep.subr.mxu0 %v3937
    %5539 = vmatpush1.msra.mxu0 %v3936
    %5540 = vmatprep.subr.mxu0 %v3941
    %5541 = vmatpush1.msra.mxu0 %v3940
    %5542 = vmatprep.subr.mxu0 %v3945
    %5543 = vmatpush1.msra.mxu0 %v3944
    %5544 = vmatprep.subr.mxu0 %v3949
    %5545 = vmatpush1.msra.mxu0 %v3948
    %5546 = vmatprep.subr.mxu0 %v3953
    %5547 = vmatpush1.msra.mxu0 %v3952
    %5548 = vmatprep.subr.mxu0 %v3957
    %5549 = vmatpush1.msra.mxu0 %v3956
    %5550 = vmatprep.subr.mxu0 %v3961
    %5551 = vmatpush1.msra.mxu0 %v3960
    %5552 = vmatprep.subr.mxu0 %v3965
    %5553 = vmatpush1.msra.mxu0 %v3964
    %5554 = vmatprep.subr.mxu0 0.0
    %5555 = vmatpush1.msra.mxu0 0.0
    %5556 = vmatprep.subr.mxu0 0.0
    %5557 = vmatpush1.msra.mxu0 0.0
    %5558 = vmatprep.subr.mxu0 0.0
    %5559 = vmatpush1.msra.mxu0 0.0
    %5560 = vmatprep.subr.mxu0 0.0
    %5561 = vmatpush1.msra.mxu0 0.0
    %5562 = vmatprep.subr.mxu0 0.0
    %5563 = vmatpush1.msra.mxu0 0.0
    %5564 = vmatprep.subr.mxu0 0.0
    %5565 = vmatpush1.msra.mxu0 0.0
    %5566 = vmatprep.subr.mxu0 0.0
    %5567 = vmatpush1.msra.mxu0 0.0
    %5568 = vmatprep.subr.mxu0 0.0
    %5569 = vmatpush1.msra.mxu0 0.0
    %5570 = vmatprep.subr.mxu0 0.0
    %5571 = vmatpush1.msra.mxu0 0.0
    %5572 = vmatprep.subr.mxu0 0.0
    %5573 = vmatpush1.msra.mxu0 0.0
    %5574 = vmatprep.subr.mxu0 0.0
    %5575 = vmatpush1.msra.mxu0 0.0
    %5576 = vmatprep.subr.mxu0 0.0
    %5577 = vmatpush1.msra.mxu0 0.0
    %5578 = vmatprep.subr.mxu0 0.0
    %5579 = vmatpush1.msra.mxu0 0.0
    %5580 = vmatprep.subr.mxu0 0.0
    %5581 = vmatpush1.msra.mxu0 0.0
    %5582 = vmatprep.subr.mxu0 0.0
    %5583 = vmatpush1.msra.mxu0 0.0
    %5584 = vmatprep.subr.mxu0 0.0
    %5585 = vmatpush1.msra.mxu0 0.0
    %5586 = vmatprep.mubr.f32.mxu0 0.0
    %5587 = vmatmul.mubr.f32.gmra.mrb[0].mxu0 0.0
    %v5588 = vpop.f32.mrb[0].mxu0
    %v5589 = vadd.f32 0.0, %v5588
    %v5590 = vpop.f32.mrb[0].mxu0
    %v5591 = vadd.f32 0.0, %v5590
    %5592 = vdwg.mxu0
    %v5593 = vadd.f32 %v5316, %v5518
    %v5594 = vadd.f32 %v5318, %v5520
    %v5595 = vadd.f32 %v5417, %v5589
    %v5596 = vadd.f32 %v5419, %v5591
    %v5597 = vxor.u32 %v5593, 2147483648
    %v5598 = vmul.f32 %v5597, 1.442695
    %v5599 = vpow.pop %v5598
    %v5600 = vadd.f32 %v5599, 1.0
    %v5601 = vrcp.pop %v5600
    %v5602 = vmul.f32 1.0, %v5601
    %v5603 = vxor.u32 %v5594, 2147483648
    %v5604 = vmul.f32 %v5603, 1.442695
    %v5605 = vpow.pop %v5604
    %v5606 = vadd.f32 %v5605, 1.0
    %v5607 = vrcp.pop %v5606
    %v5608 = vmul.f32 1.0, %v5607
    %v5609 = vtanh.pop %v5595
    %v5610 = vxor.u32 %v5596, 2147483648
    %v5611 = vmul.f32 %v5610, 1.442695
    %v5612 = vpow.pop %v5611
    %v5613 = vadd.f32 %v5612, 1.0
    %v5614 = vrcp.pop %v5613
    %v5615 = vmul.f32 1.0, %v5614
    %v5616 = vmul.f32 %v5608, 0.0
    %v5617 = vmul.f32 %v5602, %v5609
    %v5618 = vadd.f32 %v5616, %v5617
    %v5619 = vtanh.pop %v5618
    %v5620 = vmul.f32 %v5615, %v5619
    %v5621 = vmax.f32 %v5620, 0.0
    %v5622 = vadd.f32 %v5621, 0.0
    %5623 = vmatprep.subr.mxu0 %v3903
    %5624 = vmatpush1.msra.mxu0 %v3902
    %5625 = vmatprep.subr.mxu0 %v3907
    %5626 = vmatpush1.msra.mxu0 %v3906
    %5627 = vmatprep.subr.mxu0 %v3911
    %5628 = vmatpush1.msra.mxu0 %v3910
    %5629 = vmatprep.subr.mxu0 %v3915
    %5630 = vmatpush1.msra.mxu0 %v3914
    %5631 = vmatprep.subr.mxu0 %v3919
    %5632 = vmatpush1.msra.mxu0 %v3918
    %5633 = vmatprep.subr.mxu0 %v3923
    %5634 = vmatpush1.msra.mxu0 %v3922
    %5635 = vmatprep.subr.mxu0 %v3927
    %5636 = vmatpush1.msra.mxu0 %v3926
    %5637 = vmatprep.subr.mxu0 %v3931
    %5638 = vmatpush1.msra.mxu0 %v3930
    %5639 = vmatprep.subr.mxu0 %v3935
    %5640 = vmatpush1.msra.mxu0 %v3934
    %5641 = vmatprep.subr.mxu0 %v3939
    %5642 = vmatpush1.msra.mxu0 %v3938
    %5643 = vmatprep.subr.mxu0 %v3943
    %5644 = vmatpush1.msra.mxu0 %v3942
    %5645 = vmatprep.subr.mxu0 %v3947
    %5646 = vmatpush1.msra.mxu0 %v3946
    %5647 = vmatprep.subr.mxu0 %v3951
    %5648 = vmatpush1.msra.mxu0 %v3950
    %5649 = vmatprep.subr.mxu0 %v3955
    %5650 = vmatpush1.msra.mxu0 %v3954
    %5651 = vmatprep.subr.mxu0 %v3959
    %5652 = vmatpush1.msra.mxu0 %v3958
    %5653 = vmatprep.subr.mxu0 %v3963
    %5654 = vmatpush1.msra.mxu0 %v3962
    %5655 = vmatprep.subr.mxu0 0.0
    %5656 = vmatpush1.msra.mxu0 0.0
    %5657 = vmatprep.subr.mxu0 0.0
    %5658 = vmatpush1.msra.mxu0 0.0
    %5659 = vmatprep.subr.mxu0 0.0
    %5660 = vmatpush1.msra.mxu0 0.0
    %5661 = vmatprep.subr.mxu0 0.0
    %5662 = vmatpush1.msra.mxu0 0.0
    %5663 = vmatprep.subr.mxu0 0.0
    %5664 = vmatpush1.msra.mxu0 0.0
    %5665 = vmatprep.subr.mxu0 0.0
    %5666 = vmatpush1.msra.mxu0 0.0
    %5667 = vmatprep.subr.mxu0 0.0
    %5668 = vmatpush1.msra.mxu0 0.0
    %5669 = vmatprep.subr.mxu0 0.0
    %5670 = vmatpush1.msra.mxu0 0.0
    %5671 = vmatprep.subr.mxu0 0.0
    %5672 = vmatpush1.msra.mxu0 0.0
    %5673 = vmatprep.subr.mxu0 0.0
    %5674 = vmatpush1.msra.mxu0 0.0
    %5675 = vmatprep.subr.mxu0 0.0
    %5676 = vmatpush1.msra.mxu0 0.0
    %5677 = vmatprep.subr.mxu0 0.0
    %5678 = vmatpush1.msra.mxu0 0.0
    %5679 = vmatprep.subr.mxu0 0.0
    %5680 = vmatpush1.msra.mxu0 0.0
    %5681 = vmatprep.subr.mxu0 0.0
    %5682 = vmatpush1.msra.mxu0 0.0
    %5683 = vmatprep.subr.mxu0 0.0
    %5684 = vmatpush1.msra.mxu0 0.0
    %5685 = vmatprep.subr.mxu0 0.0
    %5686 = vmatpush1.msra.mxu0 0.0
    %5687 = vmatprep.mubr.f32.mxu0 0.0
    %5688 = vmatmul.mubr.f32.gmra.mrb[0].mxu0 %v5620
    %v5689 = vpop.f32.mrb[0].mxu0
    %v5690 = vadd.f32 0.0, %v5689
    %v5691 = vpop.f32.mrb[0].mxu0
    %v5692 = vadd.f32 0.0, %v5691
    %5693 = vdwg.mxu0
    %5694 = vmatprep.subr.mxu0 %v3905
    %5695 = vmatpush1.msra.mxu0 %v3904
    %5696 = vmatprep.subr.mxu0 %v3909
    %5697 = vmatpush1.msra.mxu0 %v3908
    %5698 = vmatprep.subr.mxu0 %v3913
    %5699 = vmatpush1.msra.mxu0 %v3912
    %5700 = vmatprep.subr.mxu0 %v3917
    %5701 = vmatpush1.msra.mxu0 %v3916
    %5702 = vmatprep.subr.mxu0 %v3921
    %5703 = vmatpush1.msra.mxu0 %v3920
    %5704 = vmatprep.subr.mxu0 %v3925
    %5705 = vmatpush1.msra.mxu0 %v3924
    %5706 = vmatprep.subr.mxu0 %v3929
    %5707 = vmatpush1.msra.mxu0 %v3928
    %5708 = vmatprep.subr.mxu0 %v3933
    %5709 = vmatpush1.msra.mxu0 %v3932
    %5710 = vmatprep.subr.mxu0 %v3937
    %5711 = vmatpush1.msra.mxu0 %v3936
    %5712 = vmatprep.subr.mxu0 %v3941
    %5713 = vmatpush1.msra.mxu0 %v3940
    %5714 = vmatprep.subr.mxu0 %v3945
    %5715 = vmatpush1.msra.mxu0 %v3944
    %5716 = vmatprep.subr.mxu0 %v3949
    %5717 = vmatpush1.msra.mxu0 %v3948
    %5718 = vmatprep.subr.mxu0 %v3953
    %5719 = vmatpush1.msra.mxu0 %v3952
    %5720 = vmatprep.subr.mxu0 %v3957
    %5721 = vmatpush1.msra.mxu0 %v3956
    %5722 = vmatprep.subr.mxu0 %v3961
    %5723 = vmatpush1.msra.mxu0 %v3960
    %5724 = vmatprep.subr.mxu0 %v3965
    %5725 = vmatpush1.msra.mxu0 %v3964
    %5726 = vmatprep.subr.mxu0 0.0
    %5727 = vmatpush1.msra.mxu0 0.0
    %5728 = vmatprep.subr.mxu0 0.0
    %5729 = vmatpush1.msra.mxu0 0.0
    %5730 = vmatprep.subr.mxu0 0.0
    %5731 = vmatpush1.msra.mxu0 0.0
    %5732 = vmatprep.subr.mxu0 0.0
    %5733 = vmatpush1.msra.mxu0 0.0
    %5734 = vmatprep.subr.mxu0 0.0
    %5735 = vmatpush1.msra.mxu0 0.0
    %5736 = vmatprep.subr.mxu0 0.0
    %5737 = vmatpush1.msra.mxu0 0.0
    %5738 = vmatprep.subr.mxu0 0.0
    %5739 = vmatpush1.msra.mxu0 0.0
    %5740 = vmatprep.subr.mxu0 0.0
    %5741 = vmatpush1.msra.mxu0 0.0
    %5742 = vmatprep.subr.mxu0 0.0
    %5743 = vmatpush1.msra.mxu0 0.0
    %5744 = vmatprep.subr.mxu0 0.0
    %5745 = vmatpush1.msra.mxu0 0.0
    %5746 = vmatprep.subr.mxu0 0.0
    %5747 = vmatpush1.msra.mxu0 0.0
    %5748 = vmatprep.subr.mxu0 0.0
    %5749 = vmatpush1.msra.mxu0 0.0
    %5750 = vmatprep.subr.mxu0 0.0
    %5751 = vmatpush1.msra.mxu0 0.0
    %5752 = vmatprep.subr.mxu0 0.0
    %5753 = vmatpush1.msra.mxu0 0.0
    %5754 = vmatprep.subr.mxu0 0.0
    %5755 = vmatpush1.msra.mxu0 0.0
    %5756 = vmatprep.subr.mxu0 0.0
    %5757 = vmatpush1.msra.mxu0 0.0
    %5758 = vmatprep.mubr.f32.mxu0 0.0
    %5759 = vmatmul.mubr.f32.gmra.mrb[0].mxu0 %v5620
    %v5760 = vpop.f32.mrb[0].mxu0
    %v5761 = vadd.f32 0.0, %v5760
    %v5762 = vpop.f32.mrb[0].mxu0
    %v5763 = vadd.f32 0.0, %v5762
    %5764 = vdwg.mxu0
    %v5765 = vadd.f32 %v5322, %v5690
    %v5766 = vadd.f32 %v5324, %v5692
    %v5767 = vadd.f32 %v5423, %v5761
    %v5768 = vadd.f32 %v5425, %v5763
    %v5769 = vxor.u32 %v5765, 2147483648
    %v5770 = vmul.f32 %v5769, 1.442695
    %v5771 = vpow.pop %v5770
    %v5772 = vadd.f32 %v5771, 1.0
    %v5773 = vrcp.pop %v5772
    %v5774 = vmul.f32 1.0, %v5773
    %v5775 = vxor.u32 %v5766, 2147483648
    %v5776 = vmul.f32 %v5775, 1.442695
    %v5777 = vpow.pop %v5776
    %v5778 = vadd.f32 %v5777, 1.0
    %v5779 = vrcp.pop %v5778
    %v5780 = vmul.f32 1.0, %v5779
    %v5781 = vtanh.pop %v5767
    %v5782 = vxor.u32 %v5768, 2147483648
    %v5783 = vmul.f32 %v5782, 1.442695
    %v5784 = vpow.pop %v5783
    %v5785 = vadd.f32 %v5784, 1.0
    %v5786 = vrcp.pop %v5785
    %v5787 = vmul.f32 1.0, %v5786
    %v5788 = vmul.f32 %v5780, %v5618
    %v5789 = vmul.f32 %v5774, %v5781
    %v5790 = vadd.f32 %v5788, %v5789
    %v5791 = vtanh.pop %v5790
    %v5792 = vmul.f32 %v5787, %v5791
    %v5793 = vmax.f32 %v5792, 0.0
    %v5794 = vadd.f32 %v5622, %v5793
    %5795 = vmatprep.subr.mxu0 %v3903
    %5796 = vmatpush1.msra.mxu0 %v3902
    %5797 = vmatprep.subr.mxu0 %v3907
    %5798 = vmatpush1.msra.mxu0 %v3906
    %5799 = vmatprep.subr.mxu0 %v3911
    %5800 = vmatpush1.msra.mxu0 %v3910
    %5801 = vmatprep.subr.mxu0 %v3915
    %5802 = vmatpush1.msra.mxu0 %v3914
    %5803 = vmatprep.subr.mxu0 %v3919
    %5804 = vmatpush1.msra.mxu0 %v3918
    %5805 = vmatprep.subr.mxu0 %v3923
    %5806 = vmatpush1.msra.mxu0 %v3922
    %5807 = vmatprep.subr.mxu0 %v3927
    %5808 = vmatpush1.msra.mxu0 %v3926
    %5809 = vmatprep.subr.mxu0 %v3931
    %5810 = vmatpush1.msra.mxu0 %v3930
    %5811 = vmatprep.subr.mxu0 %v3935
    %5812 = vmatpush1.msra.mxu0 %v3934
    %5813 = vmatprep.subr.mxu0 %v3939
    %5814 = vmatpush1.msra.mxu0 %v3938
    %5815 = vmatprep.subr.mxu0 %v3943
    %5816 = vmatpush1.msra.mxu0 %v3942
    %5817 = vmatprep.subr.mxu0 %v3947
    %5818 = vmatpush1.msra.mxu0 %v3946
    %5819 = vmatprep.subr.mxu0 %v3951
    %5820 = vmatpush1.msra.mxu0 %v3950
    %5821 = vmatprep.subr.mxu0 %v3955
    %5822 = vmatpush1.msra.mxu0 %v3954
    %5823 = vmatprep.subr.mxu0 %v3959
    %5824 = vmatpush1.msra.mxu0 %v3958
    %5825 = vmatprep.subr.mxu0 %v3963
    %5826 = vmatpush1.msra.mxu0 %v3962
    %5827 = vmatprep.subr.mxu0 0.0
    %5828 = vmatpush1.msra.mxu0 0.0
    %5829 = vmatprep.subr.mxu0 0.0
    %5830 = vmatpush1.msra.mxu0 0.0
    %5831 = vmatprep.subr.mxu0 0.0
    %5832 = vmatpush1.msra.mxu0 0.0
    %5833 = vmatprep.subr.mxu0 0.0
    %5834 = vmatpush1.msra.mxu0 0.0
    %5835 = vmatprep.subr.mxu0 0.0
    %5836 = vmatpush1.msra.mxu0 0.0
    %5837 = vmatprep.subr.mxu0 0.0
    %5838 = vmatpush1.msra.mxu0 0.0
    %5839 = vmatprep.subr.mxu0 0.0
    %5840 = vmatpush1.msra.mxu0 0.0
    %5841 = vmatprep.subr.mxu0 0.0
    %5842 = vmatpush1.msra.mxu0 0.0
    %5843 = vmatprep.subr.mxu0 0.0
    %5844 = vmatpush1.msra.mxu0 0.0
    %5845 = vmatprep.subr.mxu0 0.0
    %5846 = vmatpush1.msra.mxu0 0.0
    %5847 = vmatprep.subr.mxu0 0.0
    %5848 = vmatpush1.msra.mxu0 0.0
    %5849 = vmatprep.subr.mxu0 0.0
    %5850 = vmatpush1.msra.mxu0 0.0
    %5851 = vmatprep.subr.mxu0 0.0
    %5852 = vmatpush1.msra.mxu0 0.0
    %5853 = vmatprep.subr.mxu0 0.0
    %5854 = vmatpush1.msra.mxu0 0.0
    %5855 = vmatprep.subr.mxu0 0.0
    %5856 = vmatpush1.msra.mxu0 0.0
    %5857 = vmatprep.subr.mxu0 0.0
    %5858 = vmatpush1.msra.mxu0 0.0
    %5859 = vmatprep.mubr.f32.mxu0 0.0
    %5860 = vmatmul.mubr.f32.gmra.mrb[0].mxu0 %v5792
    %v5861 = vpop.f32.mrb[0].mxu0
    %v5862 = vadd.f32 0.0, %v5861
    %v5863 = vpop.f32.mrb[0].mxu0
    %v5864 = vadd.f32 0.0, %v5863
    %5865 = vdwg.mxu0
    %5866 = vmatprep.subr.mxu0 %v3905
    %5867 = vmatpush1.msra.mxu0 %v3904
    %5868 = vmatprep.subr.mxu0 %v3909
    %5869 = vmatpush1.msra.mxu0 %v3908
    %5870 = vmatprep.subr.mxu0 %v3913
    %5871 = vmatpush1.msra.mxu0 %v3912
    %5872 = vmatprep.subr.mxu0 %v3917
    %5873 = vmatpush1.msra.mxu0 %v3916
    %5874 = vmatprep.subr.mxu0 %v3921
    %5875 = vmatpush1.msra.mxu0 %v3920
    %5876 = vmatprep.subr.mxu0 %v3925
    %5877 = vmatpush1.msra.mxu0 %v3924
    %5878 = vmatprep.subr.mxu0 %v3929
    %5879 = vmatpush1.msra.mxu0 %v3928
    %5880 = vmatprep.subr.mxu0 %v3933
    %5881 = vmatpush1.msra.mxu0 %v3932
    %5882 = vmatprep.subr.mxu0 %v3937
    %5883 = vmatpush1.msra.mxu0 %v3936
    %5884 = vmatprep.subr.mxu0 %v3941
    %5885 = vmatpush1.msra.mxu0 %v3940
    %5886 = vmatprep.subr.mxu0 %v3945
    %5887 = vmatpush1.msra.mxu0 %v3944
    %5888 = vmatprep.subr.mxu0 %v3949
    %5889 = vmatpush1.msra.mxu0 %v3948
    %5890 = vmatprep.subr.mxu0 %v3953
    %5891 = vmatpush1.msra.mxu0 %v3952
    %5892 = vmatprep.subr.mxu0 %v3957
    %5893 = vmatpush1.msra.mxu0 %v3956
    %5894 = vmatprep.subr.mxu0 %v3961
    %5895 = vmatpush1.msra.mxu0 %v3960
    %5896 = vmatprep.subr.mxu0 %v3965
    %5897 = vmatpush1.msra.mxu0 %v3964
    %5898 = vmatprep.subr.mxu0 0.0
    %5899 = vmatpush1.msra.mxu0 0.0
    %5900 = vmatprep.subr.mxu0 0.0
    %5901 = vmatpush1.msra.mxu0 0.0
    %5902 = vmatprep.subr.mxu0 0.0
    %5903 = vmatpush1.msra.mxu0 0.0
    %5904 = vmatprep.subr.mxu0 0.0
    %5905 = vmatpush1.msra.mxu0 0.0
    %5906 = vmatprep.subr.mxu0 0.0
    %5907 = vmatpush1.msra.mxu0 0.0
    %5908 = vmatprep.subr.mxu0 0.0
    %5909 = vmatpush1.msra.mxu0 0.0
    %5910 = vmatprep.subr.mxu0 0.0
    %5911 = vmatpush1.msra.mxu0 0.0
    %5912 = vmatprep.subr.mxu0 0.0
    %5913 = vmatpush1.msra.mxu0 0.0
    %5914 = vmatprep.subr.mxu0 0.0
    %5915 = vmatpush1.msra.mxu0 0.0
    %5916 = vmatprep.subr.mxu0 0.0
    %5917 = vmatpush1.msra.mxu0 0.0
    %5918 = vmatprep.subr.mxu0 0.0
    %5919 = vmatpush1.msra.mxu0 0.0
    %5920 = vmatprep.subr.mxu0 0.0
    %5921 = vmatpush1.msra.mxu0 0.0
    %5922 = vmatprep.subr.mxu0 0.0
    %5923 = vmatpush1.msra.mxu0 0.0
    %5924 = vmatprep.subr.mxu0 0.0
    %5925 = vmatpush1.msra.mxu0 0.0
    %5926 = vmatprep.subr.mxu0 0.0
    %5927 = vmatpush1.msra.mxu0 0.0
    %5928 = vmatprep.subr.mxu0 0.0
    %5929 = vmatpush1.msra.mxu0 0.0
    %5930 = vmatprep.mubr.f32.mxu0 0.0
    %5931 = vmatmul.mubr.f32.gmra.mrb[0].mxu0 %v5792
    %v5932 = vpop.f32.mrb[0].mxu0
    %v5933 = vadd.f32 0.0, %v5932
    %v5934 = vpop.f32.mrb[0].mxu0
    %v5935 = vadd.f32 0.0, %v5934
    %5936 = vdwg.mxu0
    %v5937 = vadd.f32 %v5328, %v5862
    %v5938 = vadd.f32 %v5330, %v5864
    %v5939 = vadd.f32 %v5429, %v5933
    %v5940 = vadd.f32 %v5431, %v5935
    %v5941 = vxor.u32 %v5937, 2147483648
    %v5942 = vmul.f32 %v5941, 1.442695
    %v5943 = vpow.pop %v5942
    %v5944 = vadd.f32 %v5943, 1.0
    %v5945 = vrcp.pop %v5944
    %v5946 = vmul.f32 1.0, %v5945
    %v5947 = vxor.u32 %v5938, 2147483648
    %v5948 = vmul.f32 %v5947, 1.442695
    %v5949 = vpow.pop %v5948
    %v5950 = vadd.f32 %v5949, 1.0
    %v5951 = vrcp.pop %v5950
    %v5952 = vmul.f32 1.0, %v5951
    %v5953 = vtanh.pop %v5939
    %v5954 = vxor.u32 %v5940, 2147483648
    %v5955 = vmul.f32 %v5954, 1.442695
    %v5956 = vpow.pop %v5955
    %v5957 = vadd.f32 %v5956, 1.0
    %v5958 = vrcp.pop %v5957
    %v5959 = vmul.f32 1.0, %v5958
    %v5960 = vmul.f32 %v5952, %v5790
    %v5961 = vmul.f32 %v5946, %v5953
    %v5962 = vadd.f32 %v5960, %v5961
    %v5963 = vtanh.pop %v5962
    %v5964 = vmul.f32 %v5959, %v5963
    %v5965 = vmax.f32 %v5964, 0.0
    %v5966 = vadd.f32 %v5794, %v5965
    %5967 = vmatprep.subr.mxu0 %v3903
    %5968 = vmatpush1.msra.mxu0 %v3902
    %5969 = vmatprep.subr.mxu0 %v3907
    %5970 = vmatpush1.msra.mxu0 %v3906
    %5971 = vmatprep.subr.mxu0 %v3911
    %5972 = vmatpush1.msra.mxu0 %v3910
    %5973 = vmatprep.subr.mxu0 %v3915
    %5974 = vmatpush1.msra.mxu0 %v3914
    %5975 = vmatprep.subr.mxu0 %v3919
    %5976 = vmatpush1.msra.mxu0 %v3918
    %5977 = vmatprep.subr.mxu0 %v3923
    %5978 = vmatpush1.msra.mxu0 %v3922
    %5979 = vmatprep.subr.mxu0 %v3927
    %5980 = vmatpush1.msra.mxu0 %v3926
    %5981 = vmatprep.subr.mxu0 %v3931
    %5982 = vmatpush1.msra.mxu0 %v3930
    %5983 = vmatprep.subr.mxu0 %v3935
    %5984 = vmatpush1.msra.mxu0 %v3934
    %5985 = vmatprep.subr.mxu0 %v3939
    %5986 = vmatpush1.msra.mxu0 %v3938
    %5987 = vmatprep.subr.mxu0 %v3943
    %5988 = vmatpush1.msra.mxu0 %v3942
    %5989 = vmatprep.subr.mxu0 %v3947
    %5990 = vmatpush1.msra.mxu0 %v3946
    %5991 = vmatprep.subr.mxu0 %v3951
    %5992 = vmatpush1.msra.mxu0 %v3950
    %5993 = vmatprep.subr.mxu0 %v3955
    %5994 = vmatpush1.msra.mxu0 %v3954
    %5995 = vmatprep.subr.mxu0 %v3959
    %5996 = vmatpush1.msra.mxu0 %v3958
    %5997 = vmatprep.subr.mxu0 %v3963
    %5998 = vmatpush1.msra.mxu0 %v3962
    %5999 = vmatprep.subr.mxu0 0.0
    %6000 = vmatpush1.msra.mxu0 0.0
    %6001 = vmatprep.subr.mxu0 0.0
    %6002 = vmatpush1.msra.mxu0 0.0
    %6003 = vmatprep.subr.mxu0 0.0
    %6004 = vmatpush1.msra.mxu0 0.0
    %6005 = vmatprep.subr.mxu0 0.0
    %6006 = vmatpush1.msra.mxu0 0.0
    %6007 = vmatprep.subr.mxu0 0.0
    %6008 = vmatpush1.msra.mxu0 0.0
    %6009 = vmatprep.subr.mxu0 0.0
    %6010 = vmatpush1.msra.mxu0 0.0
    %6011 = vmatprep.subr.mxu0 0.0
    %6012 = vmatpush1.msra.mxu0 0.0
    %6013 = vmatprep.subr.mxu0 0.0
    %6014 = vmatpush1.msra.mxu0 0.0
    %6015 = vmatprep.subr.mxu0 0.0
    %6016 = vmatpush1.msra.mxu0 0.0
    %6017 = vmatprep.subr.mxu0 0.0
    %6018 = vmatpush1.msra.mxu0 0.0
    %6019 = vmatprep.subr.mxu0 0.0
    %6020 = vmatpush1.msra.mxu0 0.0
    %6021 = vmatprep.subr.mxu0 0.0
    %6022 = vmatpush1.msra.mxu0 0.0
    %6023 = vmatprep.subr.mxu0 0.0
    %6024 = vmatpush1.msra.mxu0 0.0
    %6025 = vmatprep.subr.mxu0 0.0
    %6026 = vmatpush1.msra.mxu0 0.0
    %6027 = vmatprep.subr.mxu0 0.0
    %6028 = vmatpush1.msra.mxu0 0.0
    %6029 = vmatprep.subr.mxu0 0.0
    %6030 = vmatpush1.msra.mxu0 0.0
    %6031 = vmatprep.mubr.f32.mxu0 0.0
    %6032 = vmatmul.mubr.f32.gmra.mrb[0].mxu0 %v5964
    %v6033 = vpop.f32.mrb[0].mxu0
    %v6034 = vadd.f32 0.0, %v6033
    %v6035 = vpop.f32.mrb[0].mxu0
    %v6036 = vadd.f32 0.0, %v6035
    %6037 = vdwg.mxu0
    %6038 = vmatprep.subr.mxu0 %v3905
    %6039 = vmatpush1.msra.mxu0 %v3904
    %6040 = vmatprep.subr.mxu0 %v3909
    %6041 = vmatpush1.msra.mxu0 %v3908
    %6042 = vmatprep.subr.mxu0 %v3913
    %6043 = vmatpush1.msra.mxu0 %v3912
    %6044 = vmatprep.subr.mxu0 %v3917
    %6045 = vmatpush1.msra.mxu0 %v3916
    %6046 = vmatprep.subr.mxu0 %v3921
    %6047 = vmatpush1.msra.mxu0 %v3920
    %6048 = vmatprep.subr.mxu0 %v3925
    %6049 = vmatpush1.msra.mxu0 %v3924
    %6050 = vmatprep.subr.mxu0 %v3929
    %6051 = vmatpush1.msra.mxu0 %v3928
    %6052 = vmatprep.subr.mxu0 %v3933
    %6053 = vmatpush1.msra.mxu0 %v3932
    %6054 = vmatprep.subr.mxu0 %v3937
    %6055 = vmatpush1.msra.mxu0 %v3936
    %6056 = vmatprep.subr.mxu0 %v3941
    %6057 = vmatpush1.msra.mxu0 %v3940
    %6058 = vmatprep.subr.mxu0 %v3945
    %6059 = vmatpush1.msra.mxu0 %v3944
    %6060 = vmatprep.subr.mxu0 %v3949
    %6061 = vmatpush1.msra.mxu0 %v3948
    %6062 = vmatprep.subr.mxu0 %v3953
    %6063 = vmatpush1.msra.mxu0 %v3952
    %6064 = vmatprep.subr.mxu0 %v3957
    %6065 = vmatpush1.msra.mxu0 %v3956
    %6066 = vmatprep.subr.mxu0 %v3961
    %6067 = vmatpush1.msra.mxu0 %v3960
    %6068 = vmatprep.subr.mxu0 %v3965
    %6069 = vmatpush1.msra.mxu0 %v3964
    %6070 = vmatprep.subr.mxu0 0.0
    %6071 = vmatpush1.msra.mxu0 0.0
    %6072 = vmatprep.subr.mxu0 0.0
    %6073 = vmatpush1.msra.mxu0 0.0
    %6074 = vmatprep.subr.mxu0 0.0
    %6075 = vmatpush1.msra.mxu0 0.0
    %6076 = vmatprep.subr.mxu0 0.0
    %6077 = vmatpush1.msra.mxu0 0.0
    %6078 = vmatprep.subr.mxu0 0.0
    %6079 = vmatpush1.msra.mxu0 0.0
    %6080 = vmatprep.subr.mxu0 0.0
    %6081 = vmatpush1.msra.mxu0 0.0
    %6082 = vmatprep.subr.mxu0 0.0
    %6083 = vmatpush1.msra.mxu0 0.0
    %6084 = vmatprep.subr.mxu0 0.0
    %6085 = vmatpush1.msra.mxu0 0.0
    %6086 = vmatprep.subr.mxu0 0.0
    %6087 = vmatpush1.msra.mxu0 0.0
    %6088 = vmatprep.subr.mxu0 0.0
    %6089 = vmatpush1.msra.mxu0 0.0
    %6090 = vmatprep.subr.mxu0 0.0
    %6091 = vmatpush1.msra.mxu0 0.0
    %6092 = vmatprep.subr.mxu0 0.0
    %6093 = vmatpush1.msra.mxu0 0.0
    %6094 = vmatprep.subr.mxu0 0.0
    %6095 = vmatpush1.msra.mxu0 0.0
    %6096 = vmatprep.subr.mxu0 0.0
    %6097 = vmatpush1.msra.mxu0 0.0
    %6098 = vmatprep.subr.mxu0 0.0
    %6099 = vmatpush1.msra.mxu0 0.0
    %6100 = vmatprep.subr.mxu0 0.0
    %6101 = vmatpush1.msra.mxu0 0.0
    %6102 = vmatprep.mubr.f32.mxu0 0.0
    %6103 = vmatmul.mubr.f32.gmra.mrb[0].mxu0 %v5964
    %v6104 = vpop.f32.mrb[0].mxu0
    %v6105 = vadd.f32 0.0, %v6104
    %v6106 = vpop.f32.mrb[0].mxu0
    %v6107 = vadd.f32 0.0, %v6106
    %6108 = vdwg.mxu0
    %v6109 = vadd.f32 %v5334, %v6034
    %v6110 = vadd.f32 %v5336, %v6036
    %v6111 = vadd.f32 %v5435, %v6105
    %v6112 = vadd.f32 %v5437, %v6107
    %v6113 = vxor.u32 %v6109, 2147483648
    %v6114 = vmul.f32 %v6113, 1.442695
    %v6115 = vpow.pop %v6114
    %v6116 = vadd.f32 %v6115, 1.0
    %v6117 = vrcp.pop %v6116
    %v6118 = vmul.f32 1.0, %v6117
    %v6119 = vxor.u32 %v6110, 2147483648
    %v6120 = vmul.f32 %v6119, 1.442695
    %v6121 = vpow.pop %v6120
    %v6122 = vadd.f32 %v6121, 1.0
    %v6123 = vrcp.pop %v6122
    %v6124 = vmul.f32 1.0, %v6123
    %v6125 = vtanh.pop %v6111
    %v6126 = vxor.u32 %v6112, 2147483648
    %v6127 = vmul.f32 %v6126, 1.442695
    %v6128 = vpow.pop %v6127
    %v6129 = vadd.f32 %v6128, 1.0
    %v6130 = vrcp.pop %v6129
    %v6131 = vmul.f32 1.0, %v6130
    %v6132 = vmul.f32 %v6124, %v5962
    %v6133 = vmul.f32 %v6118, %v6125
    %v6134 = vadd.f32 %v6132, %v6133
    %v6135 = vtanh.pop %v6134
    %v6136 = vmul.f32 %v6131, %v6135
    %v6137 = vmax.f32 %v6136, 0.0
    %v6138 = vadd.f32 %v5966, %v6137
    %6139 = vmatprep.subr.mxu0 %v3903
    %6140 = vmatpush1.msra.mxu0 %v3902
    %6141 = vmatprep.subr.mxu0 %v3907
    %6142 = vmatpush1.msra.mxu0 %v3906
    %6143 = vmatprep.subr.mxu0 %v3911
    %6144 = vmatpush1.msra.mxu0 %v3910
    %6145 = vmatprep.subr.mxu0 %v3915
    %6146 = vmatpush1.msra.mxu0 %v3914
    %6147 = vmatprep.subr.mxu0 %v3919
    %6148 = vmatpush1.msra.mxu0 %v3918
    %6149 = vmatprep.subr.mxu0 %v3923
    %6150 = vmatpush1.msra.mxu0 %v3922
    %6151 = vmatprep.subr.mxu0 %v3927
    %6152 = vmatpush1.msra.mxu0 %v3926
    %6153 = vmatprep.subr.mxu0 %v3931
    %6154 = vmatpush1.msra.mxu0 %v3930
    %6155 = vmatprep.subr.mxu0 %v3935
    %6156 = vmatpush1.msra.mxu0 %v3934
    %6157 = vmatprep.subr.mxu0 %v3939
    %6158 = vmatpush1.msra.mxu0 %v3938
    %6159 = vmatprep.subr.mxu0 %v3943
    %6160 = vmatpush1.msra.mxu0 %v3942
    %6161 = vmatprep.subr.mxu0 %v3947
    %6162 = vmatpush1.msra.mxu0 %v3946
    %6163 = vmatprep.subr.mxu0 %v3951
    %6164 = vmatpush1.msra.mxu0 %v3950
    %6165 = vmatprep.subr.mxu0 %v3955
    %6166 = vmatpush1.msra.mxu0 %v3954
    %6167 = vmatprep.subr.mxu0 %v3959
    %6168 = vmatpush1.msra.mxu0 %v3958
    %6169 = vmatprep.subr.mxu0 %v3963
    %6170 = vmatpush1.msra.mxu0 %v3962
    %6171 = vmatprep.subr.mxu0 0.0
    %6172 = vmatpush1.msra.mxu0 0.0
    %6173 = vmatprep.subr.mxu0 0.0
    %6174 = vmatpush1.msra.mxu0 0.0
    %6175 = vmatprep.subr.mxu0 0.0
    %6176 = vmatpush1.msra.mxu0 0.0
    %6177 = vmatprep.subr.mxu0 0.0
    %6178 = vmatpush1.msra.mxu0 0.0
    %6179 = vmatprep.subr.mxu0 0.0
    %6180 = vmatpush1.msra.mxu0 0.0
    %6181 = vmatprep.subr.mxu0 0.0
    %6182 = vmatpush1.msra.mxu0 0.0
    %6183 = vmatprep.subr.mxu0 0.0
    %6184 = vmatpush1.msra.mxu0 0.0
    %6185 = vmatprep.subr.mxu0 0.0
    %6186 = vmatpush1.msra.mxu0 0.0
    %6187 = vmatprep.subr.mxu0 0.0
    %6188 = vmatpush1.msra.mxu0 0.0
    %6189 = vmatprep.subr.mxu0 0.0
    %6190 = vmatpush1.msra.mxu0 0.0
    %6191 = vmatprep.subr.mxu0 0.0
    %6192 = vmatpush1.msra.mxu0 0.0
    %6193 = vmatprep.subr.mxu0 0.0
    %6194 = vmatpush1.msra.mxu0 0.0
    %6195 = vmatprep.subr.mxu0 0.0
    %6196 = vmatpush1.msra.mxu0 0.0
    %6197 = vmatprep.subr.mxu0 0.0
    %6198 = vmatpush1.msra.mxu0 0.0
    %6199 = vmatprep.subr.mxu0 0.0
    %6200 = vmatpush1.msra.mxu0 0.0
    %6201 = vmatprep.subr.mxu0 0.0
    %6202 = vmatpush1.msra.mxu0 0.0
    %6203 = vmatprep.mubr.f32.mxu0 0.0
    %6204 = vmatmul.mubr.f32.gmra.mrb[0].mxu0 %v6136
    %v6205 = vpop.f32.mrb[0].mxu0
    %v6206 = vadd.f32 0.0, %v6205
    %v6207 = vpop.f32.mrb[0].mxu0
    %v6208 = vadd.f32 0.0, %v6207
    %6209 = vdwg.mxu0
    %6210 = vmatprep.subr.mxu0 %v3905
    %6211 = vmatpush1.msra.mxu0 %v3904
    %6212 = vmatprep.subr.mxu0 %v3909
    %6213 = vmatpush1.msra.mxu0 %v3908
    %6214 = vmatprep.subr.mxu0 %v3913
    %6215 = vmatpush1.msra.mxu0 %v3912
    %6216 = vmatprep.subr.mxu0 %v3917
    %6217 = vmatpush1.msra.mxu0 %v3916
    %6218 = vmatprep.subr.mxu0 %v3921
    %6219 = vmatpush1.msra.mxu0 %v3920
    %6220 = vmatprep.subr.mxu0 %v3925
    %6221 = vmatpush1.msra.mxu0 %v3924
    %6222 = vmatprep.subr.mxu0 %v3929
    %6223 = vmatpush1.msra.mxu0 %v3928
    %6224 = vmatprep.subr.mxu0 %v3933
    %6225 = vmatpush1.msra.mxu0 %v3932
    %6226 = vmatprep.subr.mxu0 %v3937
    %6227 = vmatpush1.msra.mxu0 %v3936
    %6228 = vmatprep.subr.mxu0 %v3941
    %6229 = vmatpush1.msra.mxu0 %v3940
    %6230 = vmatprep.subr.mxu0 %v3945
    %6231 = vmatpush1.msra.mxu0 %v3944
    %6232 = vmatprep.subr.mxu0 %v3949
    %6233 = vmatpush1.msra.mxu0 %v3948
    %6234 = vmatprep.subr.mxu0 %v3953
    %6235 = vmatpush1.msra.mxu0 %v3952
    %6236 = vmatprep.subr.mxu0 %v3957
    %6237 = vmatpush1.msra.mxu0 %v3956
    %6238 = vmatprep.subr.mxu0 %v3961
    %6239 = vmatpush1.msra.mxu0 %v3960
    %6240 = vmatprep.subr.mxu0 %v3965
    %6241 = vmatpush1.msra.mxu0 %v3964
    %6242 = vmatprep.subr.mxu0 0.0
    %6243 = vmatpush1.msra.mxu0 0.0
    %6244 = vmatprep.subr.mxu0 0.0
    %6245 = vmatpush1.msra.mxu0 0.0
    %6246 = vmatprep.subr.mxu0 0.0
    %6247 = vmatpush1.msra.mxu0 0.0
    %6248 = vmatprep.subr.mxu0 0.0
    %6249 = vmatpush1.msra.mxu0 0.0
    %6250 = vmatprep.subr.mxu0 0.0
    %6251 = vmatpush1.msra.mxu0 0.0
    %6252 = vmatprep.subr.mxu0 0.0
    %6253 = vmatpush1.msra.mxu0 0.0
    %6254 = vmatprep.subr.mxu0 0.0
    %6255 = vmatpush1.msra.mxu0 0.0
    %6256 = vmatprep.subr.mxu0 0.0
    %6257 = vmatpush1.msra.mxu0 0.0
    %6258 = vmatprep.subr.mxu0 0.0
    %6259 = vmatpush1.msra.mxu0 0.0
    %6260 = vmatprep.subr.mxu0 0.0
    %6261 = vmatpush1.msra.mxu0 0.0
    %6262 = vmatprep.subr.mxu0 0.0
    %6263 = vmatpush1.msra.mxu0 0.0
    %6264 = vmatprep.subr.mxu0 0.0
    %6265 = vmatpush1.msra.mxu0 0.0
    %6266 = vmatprep.subr.mxu0 0.0
    %6267 = vmatpush1.msra.mxu0 0.0
    %6268 = vmatprep.subr.mxu0 0.0
    %6269 = vmatpush1.msra.mxu0 0.0
    %6270 = vmatprep.subr.mxu0 0.0
    %6271 = vmatpush1.msra.mxu0 0.0
    %6272 = vmatprep.subr.mxu0 0.0
    %6273 = vmatpush1.msra.mxu0 0.0
    %6274 = vmatprep.mubr.f32.mxu0 0.0
    %6275 = vmatmul.mubr.f32.gmra.mrb[0].mxu0 %v6136
    %v6276 = vpop.f32.mrb[0].mxu0
    %v6277 = vadd.f32 0.0, %v6276
    %v6278 = vpop.f32.mrb[0].mxu0
    %v6279 = vadd.f32 0.0, %v6278
    %6280 = vdwg.mxu0
    %v6281 = vadd.f32 %v5340, %v6206
    %v6282 = vadd.f32 %v5342, %v6208
    %v6283 = vadd.f32 %v5441, %v6277
    %v6284 = vadd.f32 %v5443, %v6279
    %v6285 = vxor.u32 %v6281, 2147483648
    %v6286 = vmul.f32 %v6285, 1.442695
    %v6287 = vpow.pop %v6286
    %v6288 = vadd.f32 %v6287, 1.0
    %v6289 = vrcp.pop %v6288
    %v6290 = vmul.f32 1.0, %v6289
    %v6291 = vxor.u32 %v6282, 2147483648
    %v6292 = vmul.f32 %v6291, 1.442695
    %v6293 = vpow.pop %v6292
    %v6294 = vadd.f32 %v6293, 1.0
    %v6295 = vrcp.pop %v6294
    %v6296 = vmul.f32 1.0, %v6295
    %v6297 = vtanh.pop %v6283
    %v6298 = vxor.u32 %v6284, 2147483648
    %v6299 = vmul.f32 %v6298, 1.442695
    %v6300 = vpow.pop %v6299
    %v6301 = vadd.f32 %v6300, 1.0
    %v6302 = vrcp.pop %v6301
    %v6303 = vmul.f32 1.0, %v6302
    %v6304 = vmul.f32 %v6296, %v6134
    %v6305 = vmul.f32 %v6290, %v6297
    %v6306 = vadd.f32 %v6304, %v6305
    %v6307 = vtanh.pop %v6306
    %v6308 = vmul.f32 %v6303, %v6307
    %v6309 = vmax.f32 %v6308, 0.0
    %v6310 = vadd.f32 %v6138, %v6309
    %6311 = vmatprep.subr.mxu0 %v3903
    %6312 = vmatpush1.msra.mxu0 %v3902
    %6313 = vmatprep.subr.mxu0 %v3907
    %6314 = vmatpush1.msra.mxu0 %v3906
    %6315 = vmatprep.subr.mxu0 %v3911
    %6316 = vmatpush1.msra.mxu0 %v3910
    %6317 = vmatprep.subr.mxu0 %v3915
    %6318 = vmatpush1.msra.mxu0 %v3914
    %6319 = vmatprep.subr.mxu0 %v3919
    %6320 = vmatpush1.msra.mxu0 %v3918
    %6321 = vmatprep.subr.mxu0 %v3923
    %6322 = vmatpush1.msra.mxu0 %v3922
    %6323 = vmatprep.subr.mxu0 %v3927
    %6324 = vmatpush1.msra.mxu0 %v3926
    %6325 = vmatprep.subr.mxu0 %v3931
    %6326 = vmatpush1.msra.mxu0 %v3930
    %6327 = vmatprep.subr.mxu0 %v3935
    %6328 = vmatpush1.msra.mxu0 %v3934
    %6329 = vmatprep.subr.mxu0 %v3939
    %6330 = vmatpush1.msra.mxu0 %v3938
    %6331 = vmatprep.subr.mxu0 %v3943
    %6332 = vmatpush1.msra.mxu0 %v3942
    %6333 = vmatprep.subr.mxu0 %v3947
    %6334 = vmatpush1.msra.mxu0 %v3946
    %6335 = vmatprep.subr.mxu0 %v3951
    %6336 = vmatpush1.msra.mxu0 %v3950
    %6337 = vmatprep.subr.mxu0 %v3955
    %6338 = vmatpush1.msra.mxu0 %v3954
    %6339 = vmatprep.subr.mxu0 %v3959
    %6340 = vmatpush1.msra.mxu0 %v3958
    %6341 = vmatprep.subr.mxu0 %v3963
    %6342 = vmatpush1.msra.mxu0 %v3962
    %6343 = vmatprep.subr.mxu0 0.0
    %6344 = vmatpush1.msra.mxu0 0.0
    %6345 = vmatprep.subr.mxu0 0.0
    %6346 = vmatpush1.msra.mxu0 0.0
    %6347 = vmatprep.subr.mxu0 0.0
    %6348 = vmatpush1.msra.mxu0 0.0
    %6349 = vmatprep.subr.mxu0 0.0
    %6350 = vmatpush1.msra.mxu0 0.0
    %6351 = vmatprep.subr.mxu0 0.0
    %6352 = vmatpush1.msra.mxu0 0.0
    %6353 = vmatprep.subr.mxu0 0.0
    %6354 = vmatpush1.msra.mxu0 0.0
    %6355 = vmatprep.subr.mxu0 0.0
    %6356 = vmatpush1.msra.mxu0 0.0
    %6357 = vmatprep.subr.mxu0 0.0
    %6358 = vmatpush1.msra.mxu0 0.0
    %6359 = vmatprep.subr.mxu0 0.0
    %6360 = vmatpush1.msra.mxu0 0.0
    %6361 = vmatprep.subr.mxu0 0.0
    %6362 = vmatpush1.msra.mxu0 0.0
    %6363 = vmatprep.subr.mxu0 0.0
    %6364 = vmatpush1.msra.mxu0 0.0
    %6365 = vmatprep.subr.mxu0 0.0
    %6366 = vmatpush1.msra.mxu0 0.0
    %6367 = vmatprep.subr.mxu0 0.0
    %6368 = vmatpush1.msra.mxu0 0.0
    %6369 = vmatprep.subr.mxu0 0.0
    %6370 = vmatpush1.msra.mxu0 0.0
    %6371 = vmatprep.subr.mxu0 0.0
    %6372 = vmatpush1.msra.mxu0 0.0
    %6373 = vmatprep.subr.mxu0 0.0
    %6374 = vmatpush1.msra.mxu0 0.0
    %6375 = vmatprep.mubr.f32.mxu0 0.0
    %6376 = vmatmul.mubr.f32.gmra.mrb[0].mxu0 %v6308
    %v6377 = vpop.f32.mrb[0].mxu0
    %v6378 = vadd.f32 0.0, %v6377
    %v6379 = vpop.f32.mrb[0].mxu0
    %v6380 = vadd.f32 0.0, %v6379
    %6381 = vdwg.mxu0
    %6382 = vmatprep.subr.mxu0 %v3905
    %6383 = vmatpush1.msra.mxu0 %v3904
    %6384 = vmatprep.subr.mxu0 %v3909
    %6385 = vmatpush1.msra.mxu0 %v3908
    %6386 = vmatprep.subr.mxu0 %v3913
    %6387 = vmatpush1.msra.mxu0 %v3912
    %6388 = vmatprep.subr.mxu0 %v3917
    %6389 = vmatpush1.msra.mxu0 %v3916
    %6390 = vmatprep.subr.mxu0 %v3921
    %6391 = vmatpush1.msra.mxu0 %v3920
    %6392 = vmatprep.subr.mxu0 %v3925
    %6393 = vmatpush1.msra.mxu0 %v3924
    %6394 = vmatprep.subr.mxu0 %v3929
    %6395 = vmatpush1.msra.mxu0 %v3928
    %6396 = vmatprep.subr.mxu0 %v3933
    %6397 = vmatpush1.msra.mxu0 %v3932
    %6398 = vmatprep.subr.mxu0 %v3937
    %6399 = vmatpush1.msra.mxu0 %v3936
    %6400 = vmatprep.subr.mxu0 %v3941
    %6401 = vmatpush1.msra.mxu0 %v3940
    %6402 = vmatprep.subr.mxu0 %v3945
    %6403 = vmatpush1.msra.mxu0 %v3944
    %6404 = vmatprep.subr.mxu0 %v3949
    %6405 = vmatpush1.msra.mxu0 %v3948
    %6406 = vmatprep.subr.mxu0 %v3953
    %6407 = vmatpush1.msra.mxu0 %v3952
    %6408 = vmatprep.subr.mxu0 %v3957
    %6409 = vmatpush1.msra.mxu0 %v3956
    %6410 = vmatprep.subr.mxu0 %v3961
    %6411 = vmatpush1.msra.mxu0 %v3960
    %6412 = vmatprep.subr.mxu0 %v3965
    %6413 = vmatpush1.msra.mxu0 %v3964
    %6414 = vmatprep.subr.mxu0 0.0
    %6415 = vmatpush1.msra.mxu0 0.0
    %6416 = vmatprep.subr.mxu0 0.0
    %6417 = vmatpush1.msra.mxu0 0.0
    %6418 = vmatprep.subr.mxu0 0.0
    %6419 = vmatpush1.msra.mxu0 0.0
    %6420 = vmatprep.subr.mxu0 0.0
    %6421 = vmatpush1.msra.mxu0 0.0
    %6422 = vmatprep.subr.mxu0 0.0
    %6423 = vmatpush1.msra.mxu0 0.0
    %6424 = vmatprep.subr.mxu0 0.0
    %6425 = vmatpush1.msra.mxu0 0.0
    %6426 = vmatprep.subr.mxu0 0.0
    %6427 = vmatpush1.msra.mxu0 0.0
    %6428 = vmatprep.subr.mxu0 0.0
    %6429 = vmatpush1.msra.mxu0 0.0
    %6430 = vmatprep.subr.mxu0 0.0
    %6431 = vmatpush1.msra.mxu0 0.0
    %6432 = vmatprep.subr.mxu0 0.0
    %6433 = vmatpush1.msra.mxu0 0.0
    %6434 = vmatprep.subr.mxu0 0.0
    %6435 = vmatpush1.msra.mxu0 0.0
    %6436 = vmatprep.subr.mxu0 0.0
    %6437 = vmatpush1.msra.mxu0 0.0
    %6438 = vmatprep.subr.mxu0 0.0
    %6439 = vmatpush1.msra.mxu0 0.0
    %6440 = vmatprep.subr.mxu0 0.0
    %6441 = vmatpush1.msra.mxu0 0.0
    %6442 = vmatprep.subr.mxu0 0.0
    %6443 = vmatpush1.msra.mxu0 0.0
    %6444 = vmatprep.subr.mxu0 0.0
    %6445 = vmatpush1.msra.mxu0 0.0
    %6446 = vmatprep.mubr.f32.mxu0 0.0
    %6447 = vmatmul.mubr.f32.gmra.mrb[0].mxu0 %v6308
    %v6448 = vpop.f32.mrb[0].mxu0
    %v6449 = vadd.f32 0.0, %v6448
    %v6450 = vpop.f32.mrb[0].mxu0
    %v6451 = vadd.f32 0.0, %v6450
    %6452 = vdwg.mxu0
    %v6453 = vadd.f32 %v5346, %v6378
    %v6454 = vadd.f32 %v5348, %v6380
    %v6455 = vadd.f32 %v5447, %v6449
    %v6456 = vadd.f32 %v5449, %v6451
    %v6457 = vxor.u32 %v6453, 2147483648
    %v6458 = vmul.f32 %v6457, 1.442695
    %v6459 = vpow.pop %v6458
    %v6460 = vadd.f32 %v6459, 1.0
    %v6461 = vrcp.pop %v6460
    %v6462 = vmul.f32 1.0, %v6461
    %v6463 = vxor.u32 %v6454, 2147483648
    %v6464 = vmul.f32 %v6463, 1.442695
    %v6465 = vpow.pop %v6464
    %v6466 = vadd.f32 %v6465, 1.0
    %v6467 = vrcp.pop %v6466
    %v6468 = vmul.f32 1.0, %v6467
    %v6469 = vtanh.pop %v6455
    %v6470 = vxor.u32 %v6456, 2147483648
    %v6471 = vmul.f32 %v6470, 1.442695
    %v6472 = vpow.pop %v6471
    %v6473 = vadd.f32 %v6472, 1.0
    %v6474 = vrcp.pop %v6473
    %v6475 = vmul.f32 1.0, %v6474
    %v6476 = vmul.f32 %v6468, %v6306
    %v6477 = vmul.f32 %v6462, %v6469
    %v6478 = vadd.f32 %v6476, %v6477
    %v6479 = vtanh.pop %v6478
    %v6480 = vmul.f32 %v6475, %v6479
    %v6481 = vmax.f32 %v6480, 0.0
    %v6482 = vadd.f32 %v6310, %v6481
    %v6483 = vmul.f32 %v6482, 0.16666667
    %v6484 = vld [vmem:[%s14] sm:$0xff]
    %v6485 = vld [vmem:[%s14 + $0x8] sm:$0xff]
    %v6486 = vld [vmem:[%s14 + $0x10] sm:$0xff]
    %v6487 = vld [vmem:[%s14 + $0x18] sm:$0xff]
    %v6488 = vld [vmem:[%s14 + $0x20] sm:$0xff]
    %v6489 = vld [vmem:[%s14 + $0x28] sm:$0xff]
    %v6490 = vld [vmem:[%s14 + $0x30] sm:$0xff]
    %v6491 = vld [vmem:[%s14 + $0x38] sm:$0xff]
    %v6492 = vld [vmem:[%s14 + $0x40] sm:$0xff]
    %v6493 = vld [vmem:[%s14 + $0x48] sm:$0xff]
    %v6494 = vld [vmem:[%s14 + $0x50] sm:$0xff]
    %v6495 = vld [vmem:[%s14 + $0x58] sm:$0xff]
    %v6496 = vld [vmem:[%s14 + $0x60] sm:$0xff]
    %v6497 = vld [vmem:[%s14 + $0x68] sm:$0xff]
    %v6498 = vld [vmem:[%s14 + $0x70] sm:$0xff]
    %v6499 = vld [vmem:[%s14 + $0x78] sm:$0xff]
    %v6500 = vld [vmem:[%s15] sm:$0xff]
    %v6501 = vld [vmem:[%s15 + $0x8] sm:$0xff]
    %v6502 = vld [vmem:[%s15 + $0x10] sm:$0xff]
    %v6503 = vld [vmem:[%s15 + $0x18] sm:$0xff]
    %v6504 = vld [vmem:[%s15 + $0x20] sm:$0xff]
    %v6505 = vld [vmem:[%s15 + $0x28] sm:$0xff]
    %v6506 = vld [vmem:[%s15 + $0x30] sm:$0xff]
    %v6507 = vld [vmem:[%s15 + $0x38] sm:$0xff]
    %v6508 = vld [vmem:[%s15 + $0x40] sm:$0xff]
    %v6509 = vld [vmem:[%s15 + $0x48] sm:$0xff]
    %v6510 = vld [vmem:[%s15 + $0x50] sm:$0xff]
    %v6511 = vld [vmem:[%s15 + $0x58] sm:$0xff]
    %v6512 = vld [vmem:[%s15 + $0x60] sm:$0xff]
    %v6513 = vld [vmem:[%s15 + $0x68] sm:$0xff]
    %v6514 = vld [vmem:[%s15 + $0x70] sm:$0xff]
    %v6515 = vld [vmem:[%s15 + $0x78] sm:$0xff]
    %6516 = vmatprep.subr.mxu0 0.0
    %6517 = vmatpush1.msra.mxu0 %v6500
    %6518 = vmatprep.subr.mxu0 0.0
    %6519 = vmatpush1.msra.mxu0 %v6501
    %6520 = vmatprep.subr.mxu0 0.0
    %6521 = vmatpush1.msra.mxu0 %v6502
    %6522 = vmatprep.subr.mxu0 0.0
    %6523 = vmatpush1.msra.mxu0 %v6503
    %6524 = vmatprep.subr.mxu0 0.0
    %6525 = vmatpush1.msra.mxu0 %v6504
    %6526 = vmatprep.subr.mxu0 0.0
    %6527 = vmatpush1.msra.mxu0 %v6505
    %6528 = vmatprep.subr.mxu0 0.0
    %6529 = vmatpush1.msra.mxu0 %v6506
    %6530 = vmatprep.subr.mxu0 0.0
    %6531 = vmatpush1.msra.mxu0 %v6507
    %6532 = vmatprep.subr.mxu0 0.0
    %6533 = vmatpush1.msra.mxu0 %v6508
    %6534 = vmatprep.subr.mxu0 0.0
    %6535 = vmatpush1.msra.mxu0 %v6509
    %6536 = vmatprep.subr.mxu0 0.0
    %6537 = vmatpush1.msra.mxu0 %v6510
    %6538 = vmatprep.subr.mxu0 0.0
    %6539 = vmatpush1.msra.mxu0 %v6511
    %6540 = vmatprep.subr.mxu0 0.0
    %6541 = vmatpush1.msra.mxu0 %v6512
    %6542 = vmatprep.subr.mxu0 0.0
    %6543 = vmatpush1.msra.mxu0 %v6513
    %6544 = vmatprep.subr.mxu0 0.0
    %6545 = vmatpush1.msra.mxu0 %v6514
    %6546 = vmatprep.subr.mxu0 0.0
    %6547 = vmatpush1.msra.mxu0 %v6515
    %6548 = vmatprep.subr.mxu0 0.0
    %6549 = vmatpush1.msra.mxu0 0.0
    %6550 = vmatprep.subr.mxu0 0.0
    %6551 = vmatpush1.msra.mxu0 0.0
    %6552 = vmatprep.subr.mxu0 0.0
    %6553 = vmatpush1.msra.mxu0 0.0
    %6554 = vmatprep.subr.mxu0 0.0
    %6555 = vmatpush1.msra.mxu0 0.0
    %6556 = vmatprep.subr.mxu0 0.0
    %6557 = vmatpush1.msra.mxu0 0.0
    %6558 = vmatprep.subr.mxu0 0.0
    %6559 = vmatpush1.msra.mxu0 0.0
    %6560 = vmatprep.subr.mxu0 0.0
    %6561 = vmatpush1.msra.mxu0 0.0
    %6562 = vmatprep.subr.mxu0 0.0
    %6563 = vmatpush1.msra.mxu0 0.0
    %6564 = vmatprep.subr.mxu0 0.0
    %6565 = vmatpush1.msra.mxu0 0.0
    %6566 = vmatprep.subr.mxu0 0.0
    %6567 = vmatpush1.msra.mxu0 0.0
    %6568 = vmatprep.subr.mxu0 0.0
    %6569 = vmatpush1.msra.mxu0 0.0
    %6570 = vmatprep.subr.mxu0 0.0
    %6571 = vmatpush1.msra.mxu0 0.0
    %6572 = vmatprep.subr.mxu0 0.0
    %6573 = vmatpush1.msra.mxu0 0.0
    %6574 = vmatprep.subr.mxu0 0.0
    %6575 = vmatpush1.msra.mxu0 0.0
    %6576 = vmatprep.subr.mxu0 0.0
    %6577 = vmatpush1.msra.mxu0 0.0
    %6578 = vmatprep.subr.mxu0 0.0
    %6579 = vmatpush1.msra.mxu0 0.0
    %6580 = vmatprep.mubr.f32.mxu0 0.0
    %6581 = vmatmul.mubr.f32.gmra.mrb[0].mxu0 %v6483
    %v6582 = vpop.f32.mrb[0].mxu0
    %v6583 = vadd.f32 0.0, %v6582
    %v6584 = vpop.f32.mrb[0].mxu0
    %6585 = vdwg.mxu0
    %6586 = vmatprep.subr.mxu0 0.0
    %6587 = vmatpush1.msra.mxu0 %v6484
    %6588 = vmatprep.subr.mxu0 0.0
    %6589 = vmatpush1.msra.mxu0 %v6485
    %6590 = vmatprep.subr.mxu0 0.0
    %6591 = vmatpush1.msra.mxu0 %v6486
    %6592 = vmatprep.subr.mxu0 0.0
    %6593 = vmatpush1.msra.mxu0 %v6487
    %6594 = vmatprep.subr.mxu0 0.0
    %6595 = vmatpush1.msra.mxu0 %v6488
    %6596 = vmatprep.subr.mxu0 0.0
    %6597 = vmatpush1.msra.mxu0 %v6489
    %6598 = vmatprep.subr.mxu0 0.0
    %6599 = vmatpush1.msra.mxu0 %v6490
    %6600 = vmatprep.subr.mxu0 0.0
    %6601 = vmatpush1.msra.mxu0 %v6491
    %6602 = vmatprep.subr.mxu0 0.0
    %6603 = vmatpush1.msra.mxu0 %v6492
    %6604 = vmatprep.subr.mxu0 0.0
    %6605 = vmatpush1.msra.mxu0 %v6493
    %6606 = vmatprep.subr.mxu0 0.0
    %6607 = vmatpush1.msra.mxu0 %v6494
    %6608 = vmatprep.subr.mxu0 0.0
    %6609 = vmatpush1.msra.mxu0 %v6495
    %6610 = vmatprep.subr.mxu0 0.0
    %6611 = vmatpush1.msra.mxu0 %v6496
    %6612 = vmatprep.subr.mxu0 0.0
    %6613 = vmatpush1.msra.mxu0 %v6497
    %6614 = vmatprep.subr.mxu0 0.0
    %6615 = vmatpush1.msra.mxu0 %v6498
    %6616 = vmatprep.subr.mxu0 0.0
    %6617 = vmatpush1.msra.mxu0 %v6499
    %6618 = vmatprep.subr.mxu0 0.0
    %6619 = vmatpush1.msra.mxu0 0.0
    %6620 = vmatprep.subr.mxu0 0.0
    %6621 = vmatpush1.msra.mxu0 0.0
    %6622 = vmatprep.subr.mxu0 0.0
    %6623 = vmatpush1.msra.mxu0 0.0
    %6624 = vmatprep.subr.mxu0 0.0
    %6625 = vmatpush1.msra.mxu0 0.0
    %6626 = vmatprep.subr.mxu0 0.0
    %6627 = vmatpush1.msra.mxu0 0.0
    %6628 = vmatprep.subr.mxu0 0.0
    %6629 = vmatpush1.msra.mxu0 0.0
    %6630 = vmatprep.subr.mxu0 0.0
    %6631 = vmatpush1.msra.mxu0 0.0
    %6632 = vmatprep.subr.mxu0 0.0
    %6633 = vmatpush1.msra.mxu0 0.0
    %6634 = vmatprep.subr.mxu0 0.0
    %6635 = vmatpush1.msra.mxu0 0.0
    %6636 = vmatprep.subr.mxu0 0.0
    %6637 = vmatpush1.msra.mxu0 0.0
    %6638 = vmatprep.subr.mxu0 0.0
    %6639 = vmatpush1.msra.mxu0 0.0
    %6640 = vmatprep.subr.mxu0 0.0
    %6641 = vmatpush1.msra.mxu0 0.0
    %6642 = vmatprep.subr.mxu0 0.0
    %6643 = vmatpush1.msra.mxu0 0.0
    %6644 = vmatprep.subr.mxu0 0.0
    %6645 = vmatpush1.msra.mxu0 0.0
    %6646 = vmatprep.subr.mxu0 0.0
    %6647 = vmatpush1.msra.mxu0 0.0
    %6648 = vmatprep.subr.mxu0 0.0
    %6649 = vmatpush1.msra.mxu0 0.0
    %6650 = vmatprep.mubr.f32.mxu0 0.0
    %6651 = vmatmul.mubr.f32.gmra.mrb[0].mxu0 %v3702
    %v6652 = vpop.f32.mrb[0].mxu0
    %v6653 = vadd.f32 %v6583, %v6652
    %v6654 = vpop.f32.mrb[0].mxu0
    %6655 = vdwg.mxu0
    %v6656 = vld [vmem:[%s16] sm:$0x1]
    %v6658 = vlaneseq
    %v6659 = vshrl.u32 %v6658, 7
    %v6660 = vsub.s32 0, %v6659
    %v6661 = vrot.slane %v6656, %v6660
    %v6663 = vadd.f32 %v6653, %v6661
    %v6664 = vmax.f32 %v6663, 0.0
    %v6665 = vld [vmem:[%s17] sm:$0x1]
    %v6667 = vlaneseq
    %v6668 = vshrl.u32 %v6667, 7
    %v6669 = vsub.s32 0, %v6668
    %v6670 = vrot.slane %v6665, %v6669
    %v6672 = vmul.f32 %v6664, %v6670
    %6673 = vadd.xlane.f32.xlu0 %v6672
    %v6674 = vpop.xlane.xlu0 %6673
    %v6675 = vld [vmem:[%s18] sm:$0x1]
    %v6677 = vlaneseq
    %v6678 = vshrl.u32 %v6677, 7
    %v6679 = vsub.s32 0, %v6678
    %v6680 = vrot.slane %v6675, %v6679
    %v6682 = vadd.f32 %v6674, %v6680
    %6683 = vst [vmem:[%s19] sm:$0xff] %v6682
    // Predicated region
    $region114: #{word_sent_regressor.1} parent=1 // pred_check
      _
    $region115: #{word_sent_regressor.1} parent=1 // pred_check_branch
      %6685 = sbr.rel (0) target = $region117
    $region116: #{word_sent_regressor.1} parent=1 // pred_region
      _
    $region117: #{word_sent_regressor.1} parent=1 // pred_fallthru
      _
    // Predicated region
    $region118: #{word_sent_regressor.1} parent=1 // pred_check
      _
    $region119: #{word_sent_regressor.1} parent=1 // pred_check_branch
      %6687 = sbr.rel (0) target = $region121
    $region120: #{word_sent_regressor.1} parent=1 // pred_region
      _
    $region121: #{word_sent_regressor.1} parent=1 // pred_fallthru
      _
    %6688 = vsyncpa [#allocation4], 1
    %6689 = vsyncpa [#allocation6], 1
    %6690 = vsyncpa [#allocation9], 1
    %6691 = vsyncpa [#allocation12], 1
    %6692 = vsyncpa [#allocation15], 1

</llo_original>
